<compile_context>
chip_gen: v7x
topology: tpu7x:2x2x1
jax: 0.10.0
libtpu: 0.0.40
codegen_flags: <defaults>
</compile_context>

<pallas_src>
from functools import partial

import jax
import jax.numpy as jnp
from jax.experimental import pallas as pl
from jax.experimental.pallas import tpu as pltpu


def _conv_gemm_kernel(x_ref, w_ref, b_ref, o_ref, *, apply_relu):
    """One grid step = one row tile of the im2col GEMM.

    x_ref: (TN, K*K*Cin)   im2col slab tile (taps folded into contraction dim)
    w_ref: (K*K*Cin, Cout) flattened weights (VMEM resident, constant index)
    b_ref: (1, Cout)       bias (VMEM resident)
    o_ref: (TN, Cout)      output tile
    """
    acc = jnp.dot(x_ref[...], w_ref[...], preferred_element_type=jnp.float32)
    acc = acc + b_ref[...].astype(jnp.float32)
    if apply_relu:
        acc = jnp.maximum(acc, 0.0)
    o_ref[...] = acc.astype(o_ref.dtype)


def _round_up(x, m):
    return (x + m - 1) // m * m


def _im2col_nhwc(x, k):
    """(B,H,W,C) -> (B*H*W, K*K*C) slab for a 'same', stride-1 KxK conv."""
    b, h, w, c = x.shape
    p = k // 2
    xp = jnp.pad(x, ((0, 0), (p, p), (p, p), (0, 0)))
    cols = [xp[:, kh:kh + h, kw:kw + w, :] for kh in range(k) for kw in range(k)]
    slab = jnp.concatenate(cols, axis=-1)            # (B,H,W,K*K*C), tap-major
    return slab.reshape(b * h * w, k * k * c)


def conv2d_same_nhwc(x, w, bias, apply_relu, compute_dtype=jnp.float32,
                     row_tile=512):
    """'same'-padded stride-1 conv. x: (B,H,W,Cin), w: (K,K,Cin,Cout), bias: (Cout,)."""
    b, h, ww, cin = x.shape
    k = w.shape[0]
    cout = w.shape[-1]
    n = b * h * ww
    kkc = k * k * cin

    slab = _im2col_nhwc(x, k).astype(compute_dtype)       # (N, K*K*Cin)
    w_flat = w.reshape(kkc, cout).astype(compute_dtype)   # matches tap-major slab
    b2 = bias.reshape(1, cout).astype(jnp.float32)

    # Bounded row tile (multiple of 8); pad N so the grid divides evenly.
    tn = min(_round_up(n, 8), row_tile)
    n_pad = _round_up(n, tn)
    if n_pad != n:
        slab = jnp.pad(slab, ((0, n_pad - n), (0, 0)))

    out = pl.pallas_call(
        partial(_conv_gemm_kernel, apply_relu=apply_relu),
        out_shape=jax.ShapeDtypeStruct((n_pad, cout), x.dtype),
        grid=(n_pad // tn,),
        in_specs=[
            pl.BlockSpec((tn, kkc), lambda i: (i, 0)),     # streamed slab tiles
            pl.BlockSpec((kkc, cout), lambda i: (0, 0)),   # VMEM-resident weights
            pl.BlockSpec((1, cout), lambda i: (0, 0)),     # VMEM-resident bias
        ],
        out_specs=pl.BlockSpec((tn, cout), lambda i: (i, 0)),
        compiler_params=pltpu.CompilerParams(
            dimension_semantics=("parallel",),
        ),
    )(slab, w_flat, b2)
    return out[:n].reshape(b, h, ww, cout)


def init_srcnn_params(key, kernel_pattern=(9, 5, 5), channel_pattern=(1, 64, 32, 1)):
    """Deterministic init matching nn.Conv2d default (uniform +-1/sqrt(fan_in))."""
    params = []
    for i, k in enumerate(kernel_pattern):
        cin, cout = channel_pattern[i], channel_pattern[i + 1]
        key, wk, bk = jax.random.split(key, 3)
        fan_in = cin * k * k
        bound = 1.0 / (fan_in ** 0.5)
        w = jax.random.uniform(wk, (k, k, cin, cout), jnp.float32, -bound, bound)
        b = jax.random.uniform(bk, (cout,), jnp.float32, -bound, bound)
        params.append((w, b))
    return params


def srcnn_forward(x_nchw, params, compute_dtype=jnp.float32):
    """Forward pass matching the PyTorch SRCNN.forward (input/output NCHW)."""
    x = jnp.transpose(x_nchw, (0, 2, 3, 1))  # NCHW -> NHWC
    depth = len(params)
    for i, (w, b) in enumerate(params):
        x = conv2d_same_nhwc(x, w, b, apply_relu=(i != depth - 1),
                             compute_dtype=compute_dtype)
    return jnp.transpose(x, (0, 3, 1, 2))  # NHWC -> NCHW


def _reference_forward(x_nchw, params):
    """Pure-JAX reference (lax conv) for correctness checking."""
    x = x_nchw
    depth = len(params)
    for i, (w, b) in enumerate(params):
        # w is (K, K, Cin, Cout) -> lax wants OIHW for NCHW inputs.
        w_oihw = jnp.transpose(w, (3, 2, 0, 1))
        x = jax.lax.conv_general_dilated(
            x, w_oihw, window_strides=(1, 1), padding="SAME",
            dimension_numbers=("NCHW", "OIHW", "NCHW"),
        ) + b[None, :, None, None]
        if i != depth - 1:
            x = jnp.maximum(x, 0.0)
    return x


if __name__ == "__main__":
    key = jax.random.PRNGKey(0)
    pkey, xkey = jax.random.split(key)

    # SRCNN defaults: kernels [9,5,5], channels [1,64,32,1]; small spatial dims.
    params = init_srcnn_params(pkey)
    x = jax.random.normal(xkey, (2, 1, 16, 16), jnp.float32)  # NCHW like PyTorch

    fwd = jax.jit(srcnn_forward)
    out = jax.block_until_ready(fwd(x, params))
    assert out.shape == (2, 1, 16, 16), out.shape

    ref = jax.block_until_ready(_reference_forward(x, params))
    assert jnp.allclose(out, ref, atol=1e-3, rtol=1e-3), (
        float(jnp.max(jnp.abs(out - ref)))
    )

    print("KERNEL_OK")
</pallas_src>

<mosaic_0001>
module attributes {stable_mosaic.version = 11 : i64} {
  func.func @_conv_gemm_kernel(%arg0: i32, %arg1: memref<512x81xf32, #tpu.memory_space<vmem>>, %arg2: memref<81x64xf32, #tpu.memory_space<vmem>>, %arg3: memref<1x64xf32, #tpu.memory_space<vmem>>, %arg4: memref<512x64xf32, #tpu.memory_space<vmem>>) attributes {dimension_semantics = [#tpu.dimension_semantics<parallel>], iteration_bounds = array<i64: 1>, scalar_prefetch = 0 : i64, scratch_operands = 0 : i64, tpu.core_type = #tpu.core_type<tc>, window_params = [{transform_indices = @transform_0, window_bounds = array<i64: 512, 81>}, {pipeline_mode = #tpu.pipeline_mode<synchronous>, transform_indices = @transform_1, window_bounds = array<i64: 81, 64>}, {pipeline_mode = #tpu.pipeline_mode<synchronous>, transform_indices = @transform_2, window_bounds = array<i64: 1, 64>}, {transform_indices = @transform_3, window_bounds = array<i64: 512, 64>}]} {
    %c0 = arith.constant 0 : index
    %c0_0 = arith.constant 0 : index
    %0 = vector.load %arg1[%c0, %c0_0] : memref<512x81xf32, #tpu.memory_space<vmem>>, vector<512x81xf32>
    %c0_1 = arith.constant 0 : index
    %c0_2 = arith.constant 0 : index
    %1 = vector.load %arg2[%c0_1, %c0_2] : memref<81x64xf32, #tpu.memory_space<vmem>>, vector<81x64xf32>
    %cst = arith.constant dense<0.000000e+00> : vector<512x64xf32>
    %2 = tpu.matmul %0, %1, %cst {dimension_numbers = #tpu.dot_dimension_numbers<[1], [0], [0], [1], [0, 0, 1, 1], [], []>} : vector<512x81xf32>, vector<81x64xf32>, vector<512x64xf32> -> vector<512x64xf32>
    %c0_3 = arith.constant 0 : index
    %c0_4 = arith.constant 0 : index
    %3 = vector.load %arg3[%c0_3, %c0_4] : memref<1x64xf32, #tpu.memory_space<vmem>>, vector<1x64xf32>
    %4 = vector.broadcast %3 : vector<1x64xf32> to vector<512x64xf32>
    %5 = arith.addf %2, %4 : vector<512x64xf32>
    %cst_5 = arith.constant 0.000000e+00 : f32
    %6 = vector.broadcast %cst_5 : f32 to vector<512x64xf32>
    %7 = arith.maximumf %5, %6 : vector<512x64xf32>
    %c0_6 = arith.constant 0 : index
    %c0_7 = arith.constant 0 : index
    %8 = vector.load %arg4[%c0_6, %c0_7] : memref<512x64xf32, #tpu.memory_space<vmem>>, vector<512x64xf32>
    tpu.vector_store %arg4[%c0_6, %c0_7], %7 {strides = array<i32>} : memref<512x64xf32, #tpu.memory_space<vmem>>, vector<512x64xf32>,
    return
  }
  func.func @transform_0(%arg0: i32) -> (i32, i32) {
    %c0_i32 = arith.constant 0 : i32
    %c0_i32_0 = arith.constant 0 : i32
    return %arg0, %c0_i32 : i32, i32
  }
  func.func @transform_1(%arg0: i32) -> (i32, i32) {
    %c0_i32 = arith.constant 0 : i32
    %c0_i32_0 = arith.constant 0 : i32
    %c0_i32_1 = arith.constant 0 : i32
    return %c0_i32, %c0_i32_0 : i32, i32
  }
  func.func @transform_2(%arg0: i32) -> (i32, i32) {
    %c0_i32 = arith.constant 0 : i32
    %c0_i32_0 = arith.constant 0 : i32
    %c0_i32_1 = arith.constant 0 : i32
    return %c0_i32, %c0_i32_0 : i32, i32
  }
  func.func @transform_3(%arg0: i32) -> (i32, i32) {
    %c0_i32 = arith.constant 0 : i32
    %c0_i32_0 = arith.constant 0 : i32
    return %arg0, %c0_i32 : i32, i32
  }
}

module attributes {stable_mosaic.version = 11 : i64} {
  func.func @_conv_gemm_kernel(%arg0: i32, %arg1: memref<512x1600xf32, #tpu.memory_space<vmem>>, %arg2: memref<1600x32xf32, #tpu.memory_space<vmem>>, %arg3: memref<1x32xf32, #tpu.memory_space<vmem>>, %arg4: memref<512x32xf32, #tpu.memory_space<vmem>>) attributes {dimension_semantics = [#tpu.dimension_semantics<parallel>], iteration_bounds = array<i64: 1>, scalar_prefetch = 0 : i64, scratch_operands = 0 : i64, tpu.core_type = #tpu.core_type<tc>, window_params = [{transform_indices = @transform_0, window_bounds = array<i64: 512, 1600>}, {pipeline_mode = #tpu.pipeline_mode<synchronous>, transform_indices = @transform_1, window_bounds = array<i64: 1600, 32>}, {pipeline_mode = #tpu.pipeline_mode<synchronous>, transform_indices = @transform_2, window_bounds = array<i64: 1, 32>}, {transform_indices = @transform_3, window_bounds = array<i64: 512, 32>}]} {
    %c0 = arith.constant 0 : index
    %c0_0 = arith.constant 0 : index
    %0 = vector.load %arg1[%c0, %c0_0] : memref<512x1600xf32, #tpu.memory_space<vmem>>, vector<512x1600xf32>
    %c0_1 = arith.constant 0 : index
    %c0_2 = arith.constant 0 : index
    %1 = vector.load %arg2[%c0_1, %c0_2] : memref<1600x32xf32, #tpu.memory_space<vmem>>, vector<1600x32xf32>
    %cst = arith.constant dense<0.000000e+00> : vector<512x32xf32>
    %2 = tpu.matmul %0, %1, %cst {dimension_numbers = #tpu.dot_dimension_numbers<[1], [0], [0], [1], [0, 0, 1, 1], [], []>} : vector<512x1600xf32>, vector<1600x32xf32>, vector<512x32xf32> -> vector<512x32xf32>
    %c0_3 = arith.constant 0 : index
    %c0_4 = arith.constant 0 : index
    %3 = vector.load %arg3[%c0_3, %c0_4] : memref<1x32xf32, #tpu.memory_space<vmem>>, vector<1x32xf32>
    %4 = vector.broadcast %3 : vector<1x32xf32> to vector<512x32xf32>
    %5 = arith.addf %2, %4 : vector<512x32xf32>
    %cst_5 = arith.constant 0.000000e+00 : f32
    %6 = vector.broadcast %cst_5 : f32 to vector<512x32xf32>
    %7 = arith.maximumf %5, %6 : vector<512x32xf32>
    %c0_6 = arith.constant 0 : index
    %c0_7 = arith.constant 0 : index
    %8 = vector.load %arg4[%c0_6, %c0_7] : memref<512x32xf32, #tpu.memory_space<vmem>>, vector<512x32xf32>
    tpu.vector_store %arg4[%c0_6, %c0_7], %7 {strides = array<i32>} : memref<512x32xf32, #tpu.memory_space<vmem>>, vector<512x32xf32>,
    return
  }
  func.func @transform_0(%arg0: i32) -> (i32, i32) {
    %c0_i32 = arith.constant 0 : i32
    %c0_i32_0 = arith.constant 0 : i32
    return %arg0, %c0_i32 : i32, i32
  }
  func.func @transform_1(%arg0: i32) -> (i32, i32) {
    %c0_i32 = arith.constant 0 : i32
    %c0_i32_0 = arith.constant 0 : i32
    %c0_i32_1 = arith.constant 0 : i32
    return %c0_i32, %c0_i32_0 : i32, i32
  }
  func.func @transform_2(%arg0: i32) -> (i32, i32) {
    %c0_i32 = arith.constant 0 : i32
    %c0_i32_0 = arith.constant 0 : i32
    %c0_i32_1 = arith.constant 0 : i32
    return %c0_i32, %c0_i32_0 : i32, i32
  }
  func.func @transform_3(%arg0: i32) -> (i32, i32) {
    %c0_i32 = arith.constant 0 : i32
    %c0_i32_0 = arith.constant 0 : i32
    return %arg0, %c0_i32 : i32, i32
  }
}

module attributes {stable_mosaic.version = 11 : i64} {
  func.func @_conv_gemm_kernel(%arg0: i32, %arg1: memref<512x800xf32, #tpu.memory_space<vmem>>, %arg2: memref<800x1xf32, #tpu.memory_space<vmem>>, %arg3: memref<1x1xf32, #tpu.memory_space<vmem>>, %arg4: memref<512x1xf32, #tpu.memory_space<vmem>>) attributes {dimension_semantics = [#tpu.dimension_semantics<parallel>], iteration_bounds = array<i64: 1>, scalar_prefetch = 0 : i64, scratch_operands = 0 : i64, tpu.core_type = #tpu.core_type<tc>, window_params = [{transform_indices = @transform_0, window_bounds = array<i64: 512, 800>}, {pipeline_mode = #tpu.pipeline_mode<synchronous>, transform_indices = @transform_1, window_bounds = array<i64: 800, 1>}, {pipeline_mode = #tpu.pipeline_mode<synchronous>, transform_indices = @transform_2, window_bounds = array<i64: 1, 1>}, {transform_indices = @transform_3, window_bounds = array<i64: 512, 1>}]} {
    %c0 = arith.constant 0 : index
    %c0_0 = arith.constant 0 : index
    %0 = vector.load %arg1[%c0, %c0_0] : memref<512x800xf32, #tpu.memory_space<vmem>>, vector<512x800xf32>
    %c0_1 = arith.constant 0 : index
    %c0_2 = arith.constant 0 : index
    %1 = vector.load %arg2[%c0_1, %c0_2] : memref<800x1xf32, #tpu.memory_space<vmem>>, vector<800x1xf32>
    %cst = arith.constant dense<0.000000e+00> : vector<512x1xf32>
    %2 = tpu.matmul %0, %1, %cst {dimension_numbers = #tpu.dot_dimension_numbers<[1], [0], [0], [1], [0, 0, 1, 1], [], []>} : vector<512x800xf32>, vector<800x1xf32>, vector<512x1xf32> -> vector<512x1xf32>
    %c0_3 = arith.constant 0 : index
    %c0_4 = arith.constant 0 : index
    %3 = vector.load %arg3[%c0_3, %c0_4] : memref<1x1xf32, #tpu.memory_space<vmem>>, vector<1x1xf32>
    %4 = vector.broadcast %3 : vector<1x1xf32> to vector<512x1xf32>
    %5 = arith.addf %2, %4 : vector<512x1xf32>
    %c0_5 = arith.constant 0 : index
    %c0_6 = arith.constant 0 : index
    %6 = vector.load %arg4[%c0_5, %c0_6] : memref<512x1xf32, #tpu.memory_space<vmem>>, vector<512x1xf32>
    tpu.vector_store %arg4[%c0_5, %c0_6], %5 {strides = array<i32>} : memref<512x1xf32, #tpu.memory_space<vmem>>, vector<512x1xf32>,
    return
  }
  func.func @transform_0(%arg0: i32) -> (i32, i32) {
    %c0_i32 = arith.constant 0 : i32
    %c0_i32_0 = arith.constant 0 : i32
    return %arg0, %c0_i32 : i32, i32
  }
  func.func @transform_1(%arg0: i32) -> (i32, i32) {
    %c0_i32 = arith.constant 0 : i32
    %c0_i32_0 = arith.constant 0 : i32
    %c0_i32_1 = arith.constant 0 : i32
    return %c0_i32, %c0_i32_0 : i32, i32
  }
  func.func @transform_2(%arg0: i32) -> (i32, i32) {
    %c0_i32 = arith.constant 0 : i32
    %c0_i32_0 = arith.constant 0 : i32
    %c0_i32_1 = arith.constant 0 : i32
    return %c0_i32, %c0_i32_0 : i32, i32
  }
  func.func @transform_3(%arg0: i32) -> (i32, i32) {
    %c0_i32 = arith.constant 0 : i32
    %c0_i32_0 = arith.constant 0 : i32
    return %arg0, %c0_i32 : i32, i32
  }
}

</mosaic_0001>

<llo_original>
// kernel: srcnn_forward.3
$region0: #{srcnn_forward.3}
  #allocation0 [shape = 'u32[]', space=smem, size = 0x4, offset = 0x4, fixed_abs, tag = 'smem constant byte address 0x4 - core index']
  #allocation1 [shape = 'u32[144,128]{1,0:T(1,128)}', space=vmem, size = 0x12000, scoped, tag = 'internal scratch']
  %s0 = inlined_call_operand.vmem [shape: f32[512,81], index: 0, kind: input, shape index: {}]
  %s1 = inlined_call_operand.vmem [shape: f32[81,64], index: 1, kind: input, shape index: {}]
  %s2 = inlined_call_operand.vmem [shape: f32[1,64], index: 2, kind: input, shape index: {}]
  %s3 = inlined_call_operand.vmem [shape: f32[512,64], index: 3, kind: output, shape index: {}]
  %s4 = sld [smem:[#allocation0]]
  $region22: #{srcnn_forward.3} parent=0
    _
  %s6 = ssub.s32 1, %s4
  %s7 = scalar_select 0, %s6, %s4
  // Predicated region
  $region2: #{srcnn_forward.3} parent=0 // pred_check
    _
  $region3: #{srcnn_forward.3} parent=0 // pred_check_branch
    %9 = sbr.rel (0) target = $region5
  $region4: #{srcnn_forward.3} parent=0 // pred_region
    _
  $region5: #{srcnn_forward.3} parent=0 // pred_fallthru
    _
  // Predicated region
  $region6: #{srcnn_forward.3} parent=0 // pred_check
    _
  $region7: #{srcnn_forward.3} parent=0 // pred_check_branch
    %11 = sbr.rel (0) target = $region9
  $region8: #{srcnn_forward.3} parent=0 // pred_region
    _
  $region9: #{srcnn_forward.3} parent=0 // pred_fallthru
    _
  // Predicated region
  $region10: #{srcnn_forward.3} parent=0 // pred_check
    _
  $region11: #{srcnn_forward.3} parent=0 // pred_check_branch
    %13 = sbr.rel (0) target = $region13
  $region12: #{srcnn_forward.3} parent=0 // pred_region
    _
  $region13: #{srcnn_forward.3} parent=0 // pred_fallthru
    _
  %v14 = vld [vmem:[%s0] sm:$0xff]
  %v15 = vld [vmem:[%s0 + $0x8] sm:$0xff]
  %v16 = vld [vmem:[%s0 + $0x10] sm:$0xff]
  %v17 = vld [vmem:[%s0 + $0x18] sm:$0xff]
  %v18 = vld [vmem:[%s0 + $0x20] sm:$0xff]
  %v19 = vld [vmem:[%s0 + $0x28] sm:$0xff]
  %v20 = vld [vmem:[%s0 + $0x30] sm:$0xff]
  %v21 = vld [vmem:[%s0 + $0x38] sm:$0xff]
  %v22 = vld [vmem:[%s0 + $0x40] sm:$0xff]
  %v23 = vld [vmem:[%s0 + $0x48] sm:$0xff]
  %v24 = vld [vmem:[%s0 + $0x50] sm:$0xff]
  %v25 = vld [vmem:[%s0 + $0x58] sm:$0xff]
  %v26 = vld [vmem:[%s0 + $0x60] sm:$0xff]
  %v27 = vld [vmem:[%s0 + $0x68] sm:$0xff]
  %v28 = vld [vmem:[%s0 + $0x70] sm:$0xff]
  %v29 = vld [vmem:[%s0 + $0x78] sm:$0xff]
  %v30 = vld [vmem:[%s0 + $0x80] sm:$0xff]
  %v31 = vld [vmem:[%s0 + $0x88] sm:$0xff]
  %v32 = vld [vmem:[%s0 + $0x90] sm:$0xff]
  %v33 = vld [vmem:[%s0 + $0x98] sm:$0xff]
  %v34 = vld [vmem:[%s0 + $0xa0] sm:$0xff]
  %v35 = vld [vmem:[%s0 + $0xa8] sm:$0xff]
  %v36 = vld [vmem:[%s0 + $0xb0] sm:$0xff]
  %v37 = vld [vmem:[%s0 + $0xb8] sm:$0xff]
  %v38 = vld [vmem:[%s0 + $0xc0] sm:$0xff]
  %v39 = vld [vmem:[%s0 + $0xc8] sm:$0xff]
  %v40 = vld [vmem:[%s0 + $0xd0] sm:$0xff]
  %v41 = vld [vmem:[%s0 + $0xd8] sm:$0xff]
  %v42 = vld [vmem:[%s0 + $0xe0] sm:$0xff]
  %v43 = vld [vmem:[%s0 + $0xe8] sm:$0xff]
  %v44 = vld [vmem:[%s0 + $0xf0] sm:$0xff]
  %v45 = vld [vmem:[%s0 + $0xf8] sm:$0xff]
  %v46 = vld [vmem:[%s0 + $0x100] sm:$0xff]
  %v47 = vld [vmem:[%s0 + $0x108] sm:$0xff]
  %v48 = vld [vmem:[%s0 + $0x110] sm:$0xff]
  %v49 = vld [vmem:[%s0 + $0x118] sm:$0xff]
  %v50 = vld [vmem:[%s0 + $0x120] sm:$0xff]
  %v51 = vld [vmem:[%s0 + $0x128] sm:$0xff]
  %v52 = vld [vmem:[%s0 + $0x130] sm:$0xff]
  %v53 = vld [vmem:[%s0 + $0x138] sm:$0xff]
  %v54 = vld [vmem:[%s0 + $0x140] sm:$0xff]
  %v55 = vld [vmem:[%s0 + $0x148] sm:$0xff]
  %v56 = vld [vmem:[%s0 + $0x150] sm:$0xff]
  %v57 = vld [vmem:[%s0 + $0x158] sm:$0xff]
  %v58 = vld [vmem:[%s0 + $0x160] sm:$0xff]
  %v59 = vld [vmem:[%s0 + $0x168] sm:$0xff]
  %v60 = vld [vmem:[%s0 + $0x170] sm:$0xff]
  %v61 = vld [vmem:[%s0 + $0x178] sm:$0xff]
  %v62 = vld [vmem:[%s0 + $0x180] sm:$0xff]
  %v63 = vld [vmem:[%s0 + $0x188] sm:$0xff]
  %v64 = vld [vmem:[%s0 + $0x190] sm:$0xff]
  %v65 = vld [vmem:[%s0 + $0x198] sm:$0xff]
  %v66 = vld [vmem:[%s0 + $0x1a0] sm:$0xff]
  %v67 = vld [vmem:[%s0 + $0x1a8] sm:$0xff]
  %v68 = vld [vmem:[%s0 + $0x1b0] sm:$0xff]
  %v69 = vld [vmem:[%s0 + $0x1b8] sm:$0xff]
  %v70 = vld [vmem:[%s0 + $0x1c0] sm:$0xff]
  %v71 = vld [vmem:[%s0 + $0x1c8] sm:$0xff]
  %v72 = vld [vmem:[%s0 + $0x1d0] sm:$0xff]
  %v73 = vld [vmem:[%s0 + $0x1d8] sm:$0xff]
  %v74 = vld [vmem:[%s0 + $0x1e0] sm:$0xff]
  %v75 = vld [vmem:[%s0 + $0x1e8] sm:$0xff]
  %v76 = vld [vmem:[%s0 + $0x1f0] sm:$0xff]
  %v77 = vld [vmem:[%s0 + $0x1f8] sm:$0xff]
  %v78 = vld [vmem:[%s1] sm:$0xff]
  %v79 = vld [vmem:[%s1 + $0x8] sm:$0xff]
  %v80 = vld [vmem:[%s1 + $0x10] sm:$0xff]
  %v81 = vld [vmem:[%s1 + $0x18] sm:$0xff]
  %v82 = vld [vmem:[%s1 + $0x20] sm:$0xff]
  %v83 = vld [vmem:[%s1 + $0x28] sm:$0xff]
  %v84 = vld [vmem:[%s1 + $0x30] sm:$0xff]
  %v85 = vld [vmem:[%s1 + $0x38] sm:$0xff]
  %v86 = vld [vmem:[%s1 + $0x40] sm:$0xff]
  %v87 = vld [vmem:[%s1 + $0x48] sm:$0xff]
  %v88 = vld [vmem:[%s1 + $0x50] sm:$0x1]
  %v89 = vld [vmem:[%s2] sm:$0x1]
  %v91 = vlaneseq
  %v92 = vshrl.u32 %v91, 7
  %v93 = vsub.s32 0, %v92
  %v94 = vrot.slane %v89, %v93
  %vm96 = vcmask 662528
  %v98 = vsel %vm96, %v14, 0
  %v101 = vsel %vm96, %v15, 0
  %v104 = vsel %vm96, %v16, 0
  %v107 = vsel %vm96, %v17, 0
  %v110 = vsel %vm96, %v18, 0
  %v113 = vsel %vm96, %v19, 0
  %v116 = vsel %vm96, %v20, 0
  %v119 = vsel %vm96, %v21, 0
  %v122 = vsel %vm96, %v22, 0
  %v125 = vsel %vm96, %v23, 0
  %v128 = vsel %vm96, %v24, 0
  %v131 = vsel %vm96, %v25, 0
  %v134 = vsel %vm96, %v26, 0
  %v137 = vsel %vm96, %v27, 0
  %v140 = vsel %vm96, %v28, 0
  %v143 = vsel %vm96, %v29, 0
  %v146 = vsel %vm96, %v30, 0
  %v149 = vsel %vm96, %v31, 0
  %v152 = vsel %vm96, %v32, 0
  %v155 = vsel %vm96, %v33, 0
  %v158 = vsel %vm96, %v34, 0
  %v161 = vsel %vm96, %v35, 0
  %v164 = vsel %vm96, %v36, 0
  %v167 = vsel %vm96, %v37, 0
  %v170 = vsel %vm96, %v38, 0
  %v173 = vsel %vm96, %v39, 0
  %v176 = vsel %vm96, %v40, 0
  %v179 = vsel %vm96, %v41, 0
  %v182 = vsel %vm96, %v42, 0
  %v185 = vsel %vm96, %v43, 0
  %v188 = vsel %vm96, %v44, 0
  %v191 = vsel %vm96, %v45, 0
  %v194 = vsel %vm96, %v46, 0
  %v197 = vsel %vm96, %v47, 0
  %v200 = vsel %vm96, %v48, 0
  %v203 = vsel %vm96, %v49, 0
  %v206 = vsel %vm96, %v50, 0
  %v209 = vsel %vm96, %v51, 0
  %v212 = vsel %vm96, %v52, 0
  %v215 = vsel %vm96, %v53, 0
  %v218 = vsel %vm96, %v54, 0
  %v221 = vsel %vm96, %v55, 0
  %v224 = vsel %vm96, %v56, 0
  %v227 = vsel %vm96, %v57, 0
  %v230 = vsel %vm96, %v58, 0
  %v233 = vsel %vm96, %v59, 0
  %v236 = vsel %vm96, %v60, 0
  %v239 = vsel %vm96, %v61, 0
  %v242 = vsel %vm96, %v62, 0
  %v245 = vsel %vm96, %v63, 0
  %v248 = vsel %vm96, %v64, 0
  %v251 = vsel %vm96, %v65, 0
  %v254 = vsel %vm96, %v66, 0
  %v257 = vsel %vm96, %v67, 0
  %v260 = vsel %vm96, %v68, 0
  %v263 = vsel %vm96, %v69, 0
  %v266 = vsel %vm96, %v70, 0
  %v269 = vsel %vm96, %v71, 0
  %v272 = vsel %vm96, %v72, 0
  %v275 = vsel %vm96, %v73, 0
  %v278 = vsel %vm96, %v74, 0
  %v281 = vsel %vm96, %v75, 0
  %v284 = vsel %vm96, %v76, 0
  %v287 = vsel %vm96, %v77, 0
  %vm289 = vcmask 1040384
  %v291 = vsel %vm289, %v88, 0
  %293 = vmatprep.subr.mxu0 0.0
  %294 = vmatpush1.msra.mxu0 %v78
  %295 = vmatprep.subr.mxu0 0.0
  %296 = vmatpush1.msra.mxu0 %v79
  %297 = vmatprep.subr.mxu0 0.0
  %298 = vmatpush1.msra.mxu0 %v80
  %299 = vmatprep.subr.mxu0 0.0
  %300 = vmatpush1.msra.mxu0 %v81
  %301 = vmatprep.subr.mxu0 0.0
  %302 = vmatpush1.msra.mxu0 %v82
  %303 = vmatprep.subr.mxu0 0.0
  %304 = vmatpush1.msra.mxu0 %v83
  %305 = vmatprep.subr.mxu0 0.0
  %306 = vmatpush1.msra.mxu0 %v84
  %307 = vmatprep.subr.mxu0 0.0
  %308 = vmatpush1.msra.mxu0 %v85
  %309 = vmatprep.subr.mxu0 0.0
  %310 = vmatpush1.msra.mxu0 %v86
  %311 = vmatprep.subr.mxu0 0.0
  %312 = vmatpush1.msra.mxu0 %v87
  %313 = vmatprep.subr.mxu0 0.0
  %314 = vmatpush1.msra.mxu0 %v291
  %315 = vmatprep.subr.mxu0 0.0
  %316 = vmatpush1.msra.mxu0 0.0
  %317 = vmatprep.subr.mxu0 0.0
  %318 = vmatpush1.msra.mxu0 0.0
  %319 = vmatprep.subr.mxu0 0.0
  %320 = vmatpush1.msra.mxu0 0.0
  %321 = vmatprep.subr.mxu0 0.0
  %322 = vmatpush1.msra.mxu0 0.0
  %323 = vmatprep.subr.mxu0 0.0
  %324 = vmatpush1.msra.mxu0 0.0
  %325 = vmatprep.subr.mxu0 0.0
  %326 = vmatpush1.msra.mxu0 0.0
  %327 = vmatprep.subr.mxu0 0.0
  %328 = vmatpush1.msra.mxu0 0.0
  %329 = vmatprep.subr.mxu0 0.0
  %330 = vmatpush1.msra.mxu0 0.0
  %331 = vmatprep.subr.mxu0 0.0
  %332 = vmatpush1.msra.mxu0 0.0
  %333 = vmatprep.subr.mxu0 0.0
  %334 = vmatpush1.msra.mxu0 0.0
  %335 = vmatprep.subr.mxu0 0.0
  %336 = vmatpush1.msra.mxu0 0.0
  %337 = vmatprep.subr.mxu0 0.0
  %338 = vmatpush1.msra.mxu0 0.0
  %339 = vmatprep.subr.mxu0 0.0
  %340 = vmatpush1.msra.mxu0 0.0
  %341 = vmatprep.subr.mxu0 0.0
  %342 = vmatpush1.msra.mxu0 0.0
  %343 = vmatprep.subr.mxu0 0.0
  %344 = vmatpush1.msra.mxu0 0.0
  %345 = vmatprep.subr.mxu0 0.0
  %346 = vmatpush1.msra.mxu0 0.0
  %347 = vmatprep.subr.mxu0 0.0
  %348 = vmatpush1.msra.mxu0 0.0
  %349 = vmatprep.subr.mxu0 0.0
  %350 = vmatpush1.msra.mxu0 0.0
  %351 = vmatprep.subr.mxu0 0.0
  %352 = vmatpush1.msra.mxu0 0.0
  %353 = vmatprep.subr.mxu0 0.0
  %354 = vmatpush1.msra.mxu0 0.0
  %355 = vmatprep.subr.mxu0 0.0
  %356 = vmatpush1.msra.mxu0 0.0
  %357 = vmatprep.mubr.f32.mxu0 0.0
  %358 = vmatmul.mubr.f32.gmra.mrb[0].mxu0 %v98
  %v359 = vpop.f32.mrb[0].mxu0
  %v360 = vadd.f32 %v94, %v359
  %v361 = vpop.f32.mrb[0].mxu0
  %362 = vmatprep.mubr.f32.mxu0 0.0
  %363 = vmatmul.mubr.f32.gmra.mrb[0].mxu0 %v101
  %v364 = vpop.f32.mrb[0].mxu0
  %v365 = vadd.f32 %v94, %v364
  %v366 = vpop.f32.mrb[0].mxu0
  %367 = vmatprep.mubr.f32.mxu0 0.0
  %368 = vmatmul.mubr.f32.gmra.mrb[0].mxu0 %v104
  %v369 = vpop.f32.mrb[0].mxu0
  %v370 = vadd.f32 %v94, %v369
  %v371 = vpop.f32.mrb[0].mxu0
  %372 = vmatprep.mubr.f32.mxu0 0.0
  %373 = vmatmul.mubr.f32.gmra.mrb[0].mxu0 %v107
  %v374 = vpop.f32.mrb[0].mxu0
  %v375 = vadd.f32 %v94, %v374
  %v376 = vpop.f32.mrb[0].mxu0
  %377 = vmatprep.mubr.f32.mxu0 0.0
  %378 = vmatmul.mubr.f32.gmra.mrb[0].mxu0 %v110
  %v379 = vpop.f32.mrb[0].mxu0
  %v380 = vadd.f32 %v94, %v379
  %v381 = vpop.f32.mrb[0].mxu0
  %382 = vmatprep.mubr.f32.mxu0 0.0
  %383 = vmatmul.mubr.f32.gmra.mrb[0].mxu0 %v113
  %v384 = vpop.f32.mrb[0].mxu0
  %v385 = vadd.f32 %v94, %v384
  %v386 = vpop.f32.mrb[0].mxu0
  %387 = vmatprep.mubr.f32.mxu0 0.0
  %388 = vmatmul.mubr.f32.gmra.mrb[0].mxu0 %v116
  %v389 = vpop.f32.mrb[0].mxu0
  %v390 = vadd.f32 %v94, %v389
  %v391 = vpop.f32.mrb[0].mxu0
  %392 = vmatprep.mubr.f32.mxu0 0.0
  %393 = vmatmul.mubr.f32.gmra.mrb[0].mxu0 %v119
  %v394 = vpop.f32.mrb[0].mxu0
  %v395 = vadd.f32 %v94, %v394
  %v396 = vpop.f32.mrb[0].mxu0
  %397 = vmatprep.mubr.f32.mxu0 0.0
  %398 = vmatmul.mubr.f32.gmra.mrb[0].mxu0 %v122
  %v399 = vpop.f32.mrb[0].mxu0
  %v400 = vadd.f32 %v94, %v399
  %v401 = vpop.f32.mrb[0].mxu0
  %402 = vmatprep.mubr.f32.mxu0 0.0
  %403 = vmatmul.mubr.f32.gmra.mrb[0].mxu0 %v125
  %v404 = vpop.f32.mrb[0].mxu0
  %v405 = vadd.f32 %v94, %v404
  %v406 = vpop.f32.mrb[0].mxu0
  %407 = vmatprep.mubr.f32.mxu0 0.0
  %408 = vmatmul.mubr.f32.gmra.mrb[0].mxu0 %v128
  %v409 = vpop.f32.mrb[0].mxu0
  %v410 = vadd.f32 %v94, %v409
  %v411 = vpop.f32.mrb[0].mxu0
  %412 = vmatprep.mubr.f32.mxu0 0.0
  %413 = vmatmul.mubr.f32.gmra.mrb[0].mxu0 %v131
  %v414 = vpop.f32.mrb[0].mxu0
  %v415 = vadd.f32 %v94, %v414
  %v416 = vpop.f32.mrb[0].mxu0
  %417 = vmatprep.mubr.f32.mxu0 0.0
  %418 = vmatmul.mubr.f32.gmra.mrb[0].mxu0 %v134
  %v419 = vpop.f32.mrb[0].mxu0
  %v420 = vadd.f32 %v94, %v419
  %v421 = vpop.f32.mrb[0].mxu0
  %422 = vmatprep.mubr.f32.mxu0 0.0
  %423 = vmatmul.mubr.f32.gmra.mrb[0].mxu0 %v137
  %v424 = vpop.f32.mrb[0].mxu0
  %v425 = vadd.f32 %v94, %v424
  %v426 = vpop.f32.mrb[0].mxu0
  %427 = vmatprep.mubr.f32.mxu0 0.0
  %428 = vmatmul.mubr.f32.gmra.mrb[0].mxu0 %v140
  %v429 = vpop.f32.mrb[0].mxu0
  %v430 = vadd.f32 %v94, %v429
  %v431 = vpop.f32.mrb[0].mxu0
  %432 = vmatprep.mubr.f32.mxu0 0.0
  %433 = vmatmul.mubr.f32.gmra.mrb[0].mxu0 %v143
  %v434 = vpop.f32.mrb[0].mxu0
  %v435 = vadd.f32 %v94, %v434
  %v436 = vpop.f32.mrb[0].mxu0
  %437 = vmatprep.mubr.f32.mxu0 0.0
  %438 = vmatmul.mubr.f32.gmra.mrb[0].mxu0 %v146
  %v439 = vpop.f32.mrb[0].mxu0
  %v440 = vadd.f32 %v94, %v439
  %v441 = vpop.f32.mrb[0].mxu0
  %442 = vmatprep.mubr.f32.mxu0 0.0
  %443 = vmatmul.mubr.f32.gmra.mrb[0].mxu0 %v149
  %v444 = vpop.f32.mrb[0].mxu0
  %v445 = vadd.f32 %v94, %v444
  %v446 = vpop.f32.mrb[0].mxu0
  %447 = vmatprep.mubr.f32.mxu0 0.0
  %448 = vmatmul.mubr.f32.gmra.mrb[0].mxu0 %v152
  %v449 = vpop.f32.mrb[0].mxu0
  %v450 = vadd.f32 %v94, %v449
  %v451 = vpop.f32.mrb[0].mxu0
  %452 = vmatprep.mubr.f32.mxu0 0.0
  %453 = vmatmul.mubr.f32.gmra.mrb[0].mxu0 %v155
  %v454 = vpop.f32.mrb[0].mxu0
  %v455 = vadd.f32 %v94, %v454
  %v456 = vpop.f32.mrb[0].mxu0
  %457 = vmatprep.mubr.f32.mxu0 0.0
  %458 = vmatmul.mubr.f32.gmra.mrb[0].mxu0 %v158
  %v459 = vpop.f32.mrb[0].mxu0
  %v460 = vadd.f32 %v94, %v459
  %v461 = vpop.f32.mrb[0].mxu0
  %462 = vmatprep.mubr.f32.mxu0 0.0
  %463 = vmatmul.mubr.f32.gmra.mrb[0].mxu0 %v161
  %v464 = vpop.f32.mrb[0].mxu0
  %v465 = vadd.f32 %v94, %v464
  %v466 = vpop.f32.mrb[0].mxu0
  %467 = vmatprep.mubr.f32.mxu0 0.0
  %468 = vmatmul.mubr.f32.gmra.mrb[0].mxu0 %v164
  %v469 = vpop.f32.mrb[0].mxu0
  %v470 = vadd.f32 %v94, %v469
  %v471 = vpop.f32.mrb[0].mxu0
  %472 = vmatprep.mubr.f32.mxu0 0.0
  %473 = vmatmul.mubr.f32.gmra.mrb[0].mxu0 %v167
  %v474 = vpop.f32.mrb[0].mxu0
  %v475 = vadd.f32 %v94, %v474
  %v476 = vpop.f32.mrb[0].mxu0
  %477 = vmatprep.mubr.f32.mxu0 0.0
  %478 = vmatmul.mubr.f32.gmra.mrb[0].mxu0 %v170
  %v479 = vpop.f32.mrb[0].mxu0
  %v480 = vadd.f32 %v94, %v479
  %v481 = vpop.f32.mrb[0].mxu0
  %482 = vmatprep.mubr.f32.mxu0 0.0
  %483 = vmatmul.mubr.f32.gmra.mrb[0].mxu0 %v173
  %v484 = vpop.f32.mrb[0].mxu0
  %v485 = vadd.f32 %v94, %v484
  %v486 = vpop.f32.mrb[0].mxu0
  %487 = vmatprep.mubr.f32.mxu0 0.0
  %488 = vmatmul.mubr.f32.gmra.mrb[0].mxu0 %v176
  %v489 = vpop.f32.mrb[0].mxu0
  %v490 = vadd.f32 %v94, %v489
  %v491 = vpop.f32.mrb[0].mxu0
  %492 = vmatprep.mubr.f32.mxu0 0.0
  %493 = vmatmul.mubr.f32.gmra.mrb[0].mxu0 %v179
  %v494 = vpop.f32.mrb[0].mxu0
  %v495 = vadd.f32 %v94, %v494
  %v496 = vpop.f32.mrb[0].mxu0
  %497 = vmatprep.mubr.f32.mxu0 0.0
  %498 = vmatmul.mubr.f32.gmra.mrb[0].mxu0 %v182
  %v499 = vpop.f32.mrb[0].mxu0
  %v500 = vadd.f32 %v94, %v499
  %v501 = vpop.f32.mrb[0].mxu0
  %502 = vmatprep.mubr.f32.mxu0 0.0
  %503 = vmatmul.mubr.f32.gmra.mrb[0].mxu0 %v185
  %v504 = vpop.f32.mrb[0].mxu0
  %v505 = vadd.f32 %v94, %v504
  %v506 = vpop.f32.mrb[0].mxu0
  %507 = vmatprep.mubr.f32.mxu0 0.0
  %508 = vmatmul.mubr.f32.gmra.mrb[0].mxu0 %v188
  %v509 = vpop.f32.mrb[0].mxu0
  %v510 = vadd.f32 %v94, %v509
  %v511 = vpop.f32.mrb[0].mxu0
  %512 = vmatprep.mubr.f32.mxu0 0.0
  %513 = vmatmul.mubr.f32.gmra.mrb[0].mxu0 %v191
  %v514 = vpop.f32.mrb[0].mxu0
  %v515 = vadd.f32 %v94, %v514
  %v516 = vpop.f32.mrb[0].mxu0
  %517 = vmatprep.mubr.f32.mxu0 0.0
  %518 = vmatmul.mubr.f32.gmra.mrb[0].mxu0 %v194
  %v519 = vpop.f32.mrb[0].mxu0
  %v520 = vadd.f32 %v94, %v519
  %v521 = vpop.f32.mrb[0].mxu0
  %522 = vmatprep.mubr.f32.mxu0 0.0
  %523 = vmatmul.mubr.f32.gmra.mrb[0].mxu0 %v197
  %v524 = vpop.f32.mrb[0].mxu0
  %v525 = vadd.f32 %v94, %v524
  %v526 = vpop.f32.mrb[0].mxu0
  %527 = vmatprep.mubr.f32.mxu0 0.0
  %528 = vmatmul.mubr.f32.gmra.mrb[0].mxu0 %v200
  %v529 = vpop.f32.mrb[0].mxu0
  %v530 = vadd.f32 %v94, %v529
  %v531 = vpop.f32.mrb[0].mxu0
  %532 = vmatprep.mubr.f32.mxu0 0.0
  %533 = vmatmul.mubr.f32.gmra.mrb[0].mxu0 %v203
  %v534 = vpop.f32.mrb[0].mxu0
  %v535 = vadd.f32 %v94, %v534
  %v536 = vpop.f32.mrb[0].mxu0
  %537 = vmatprep.mubr.f32.mxu0 0.0
  %538 = vmatmul.mubr.f32.gmra.mrb[0].mxu0 %v206
  %v539 = vpop.f32.mrb[0].mxu0
  %v540 = vadd.f32 %v94, %v539
  %v541 = vpop.f32.mrb[0].mxu0
  %542 = vmatprep.mubr.f32.mxu0 0.0
  %543 = vmatmul.mubr.f32.gmra.mrb[0].mxu0 %v209
  %v544 = vpop.f32.mrb[0].mxu0
  %v545 = vadd.f32 %v94, %v544
  %v546 = vpop.f32.mrb[0].mxu0
  %547 = vmatprep.mubr.f32.mxu0 0.0
  %548 = vmatmul.mubr.f32.gmra.mrb[0].mxu0 %v212
  %v549 = vpop.f32.mrb[0].mxu0
  %v550 = vadd.f32 %v94, %v549
  %v551 = vpop.f32.mrb[0].mxu0
  %552 = vmatprep.mubr.f32.mxu0 0.0
  %553 = vmatmul.mubr.f32.gmra.mrb[0].mxu0 %v215
  %v554 = vpop.f32.mrb[0].mxu0
  %v555 = vadd.f32 %v94, %v554
  %v556 = vpop.f32.mrb[0].mxu0
  %557 = vmatprep.mubr.f32.mxu0 0.0
  %558 = vmatmul.mubr.f32.gmra.mrb[0].mxu0 %v218
  %v559 = vpop.f32.mrb[0].mxu0
  %v560 = vadd.f32 %v94, %v559
  %v561 = vpop.f32.mrb[0].mxu0
  %562 = vmatprep.mubr.f32.mxu0 0.0
  %563 = vmatmul.mubr.f32.gmra.mrb[0].mxu0 %v221
  %v564 = vpop.f32.mrb[0].mxu0
  %v565 = vadd.f32 %v94, %v564
  %v566 = vpop.f32.mrb[0].mxu0
  %567 = vmatprep.mubr.f32.mxu0 0.0
  %568 = vmatmul.mubr.f32.gmra.mrb[0].mxu0 %v224
  %v569 = vpop.f32.mrb[0].mxu0
  %v570 = vadd.f32 %v94, %v569
  %v571 = vpop.f32.mrb[0].mxu0
  %572 = vmatprep.mubr.f32.mxu0 0.0
  %573 = vmatmul.mubr.f32.gmra.mrb[0].mxu0 %v227
  %v574 = vpop.f32.mrb[0].mxu0
  %v575 = vadd.f32 %v94, %v574
  %v576 = vpop.f32.mrb[0].mxu0
  %577 = vmatprep.mubr.f32.mxu0 0.0
  %578 = vmatmul.mubr.f32.gmra.mrb[0].mxu0 %v230
  %v579 = vpop.f32.mrb[0].mxu0
  %v580 = vadd.f32 %v94, %v579
  %v581 = vpop.f32.mrb[0].mxu0
  %582 = vmatprep.mubr.f32.mxu0 0.0
  %583 = vmatmul.mubr.f32.gmra.mrb[0].mxu0 %v233
  %v584 = vpop.f32.mrb[0].mxu0
  %v585 = vadd.f32 %v94, %v584
  %v586 = vpop.f32.mrb[0].mxu0
  %587 = vmatprep.mubr.f32.mxu0 0.0
  %588 = vmatmul.mubr.f32.gmra.mrb[0].mxu0 %v236
  %v589 = vpop.f32.mrb[0].mxu0
  %v590 = vadd.f32 %v94, %v589
  %v591 = vpop.f32.mrb[0].mxu0
  %592 = vmatprep.mubr.f32.mxu0 0.0
  %593 = vmatmul.mubr.f32.gmra.mrb[0].mxu0 %v239
  %v594 = vpop.f32.mrb[0].mxu0
  %v595 = vadd.f32 %v94, %v594
  %v596 = vpop.f32.mrb[0].mxu0
  %597 = vmatprep.mubr.f32.mxu0 0.0
  %598 = vmatmul.mubr.f32.gmra.mrb[0].mxu0 %v242
  %v599 = vpop.f32.mrb[0].mxu0
  %v600 = vadd.f32 %v94, %v599
  %v601 = vpop.f32.mrb[0].mxu0
  %602 = vmatprep.mubr.f32.mxu0 0.0
  %603 = vmatmul.mubr.f32.gmra.mrb[0].mxu0 %v245
  %v604 = vpop.f32.mrb[0].mxu0
  %v605 = vadd.f32 %v94, %v604
  %v606 = vpop.f32.mrb[0].mxu0
  %607 = vmatprep.mubr.f32.mxu0 0.0
  %608 = vmatmul.mubr.f32.gmra.mrb[0].mxu0 %v248
  %v609 = vpop.f32.mrb[0].mxu0
  %v610 = vadd.f32 %v94, %v609
  %v611 = vpop.f32.mrb[0].mxu0
  %612 = vmatprep.mubr.f32.mxu0 0.0
  %613 = vmatmul.mubr.f32.gmra.mrb[0].mxu0 %v251
  %v614 = vpop.f32.mrb[0].mxu0
  %v615 = vadd.f32 %v94, %v614
  %v616 = vpop.f32.mrb[0].mxu0
  %617 = vmatprep.mubr.f32.mxu0 0.0
  %618 = vmatmul.mubr.f32.gmra.mrb[0].mxu0 %v254
  %v619 = vpop.f32.mrb[0].mxu0
  %v620 = vadd.f32 %v94, %v619
  %v621 = vpop.f32.mrb[0].mxu0
  %622 = vmatprep.mubr.f32.mxu0 0.0
  %623 = vmatmul.mubr.f32.gmra.mrb[0].mxu0 %v257
  %v624 = vpop.f32.mrb[0].mxu0
  %v625 = vadd.f32 %v94, %v624
  %v626 = vpop.f32.mrb[0].mxu0
  %627 = vmatprep.mubr.f32.mxu0 0.0
  %628 = vmatmul.mubr.f32.gmra.mrb[0].mxu0 %v260
  %v629 = vpop.f32.mrb[0].mxu0
  %v630 = vadd.f32 %v94, %v629
  %v631 = vpop.f32.mrb[0].mxu0
  %632 = vmatprep.mubr.f32.mxu0 0.0
  %633 = vmatmul.mubr.f32.gmra.mrb[0].mxu0 %v263
  %v634 = vpop.f32.mrb[0].mxu0
  %v635 = vadd.f32 %v94, %v634
  %v636 = vpop.f32.mrb[0].mxu0
  %637 = vmatprep.mubr.f32.mxu0 0.0
  %638 = vmatmul.mubr.f32.gmra.mrb[0].mxu0 %v266
  %v639 = vpop.f32.mrb[0].mxu0
  %v640 = vadd.f32 %v94, %v639
  %v641 = vpop.f32.mrb[0].mxu0
  %642 = vmatprep.mubr.f32.mxu0 0.0
  %643 = vmatmul.mubr.f32.gmra.mrb[0].mxu0 %v269
  %v644 = vpop.f32.mrb[0].mxu0
  %v645 = vadd.f32 %v94, %v644
  %v646 = vpop.f32.mrb[0].mxu0
  %647 = vmatprep.mubr.f32.mxu0 0.0
  %648 = vmatmul.mubr.f32.gmra.mrb[0].mxu0 %v272
  %v649 = vpop.f32.mrb[0].mxu0
  %v650 = vadd.f32 %v94, %v649
  %v651 = vpop.f32.mrb[0].mxu0
  %652 = vmatprep.mubr.f32.mxu0 0.0
  %653 = vmatmul.mubr.f32.gmra.mrb[0].mxu0 %v275
  %v654 = vpop.f32.mrb[0].mxu0
  %v655 = vadd.f32 %v94, %v654
  %v656 = vpop.f32.mrb[0].mxu0
  %657 = vmatprep.mubr.f32.mxu0 0.0
  %658 = vmatmul.mubr.f32.gmra.mrb[0].mxu0 %v278
  %v659 = vpop.f32.mrb[0].mxu0
  %v660 = vadd.f32 %v94, %v659
  %v661 = vpop.f32.mrb[0].mxu0
  %662 = vmatprep.mubr.f32.mxu0 0.0
  %663 = vmatmul.mubr.f32.gmra.mrb[0].mxu0 %v281
  %v664 = vpop.f32.mrb[0].mxu0
  %v665 = vadd.f32 %v94, %v664
  %v666 = vpop.f32.mrb[0].mxu0
  %667 = vmatprep.mubr.f32.mxu0 0.0
  %668 = vmatmul.mubr.f32.gmra.mrb[0].mxu0 %v284
  %v669 = vpop.f32.mrb[0].mxu0
  %v670 = vadd.f32 %v94, %v669
  %v671 = vpop.f32.mrb[0].mxu0
  %672 = vmatprep.mubr.f32.mxu0 0.0
  %673 = vmatmul.mubr.f32.gmra.mrb[0].mxu0 %v287
  %v674 = vpop.f32.mrb[0].mxu0
  %v675 = vadd.f32 %v94, %v674
  %v676 = vpop.f32.mrb[0].mxu0
  %677 = vdwg.mxu0
  %v678 = vmax.f32 %v360, 0.0
  %v679 = vmax.f32 %v365, 0.0
  %v680 = vmax.f32 %v370, 0.0
  %v681 = vmax.f32 %v375, 0.0
  %v682 = vmax.f32 %v380, 0.0
  %v683 = vmax.f32 %v385, 0.0
  %v684 = vmax.f32 %v390, 0.0
  %v685 = vmax.f32 %v395, 0.0
  %v686 = vmax.f32 %v400, 0.0
  %v687 = vmax.f32 %v405, 0.0
  %v688 = vmax.f32 %v410, 0.0
  %v689 = vmax.f32 %v415, 0.0
  %v690 = vmax.f32 %v420, 0.0
  %v691 = vmax.f32 %v425, 0.0
  %v692 = vmax.f32 %v430, 0.0
  %v693 = vmax.f32 %v435, 0.0
  %v694 = vmax.f32 %v440, 0.0
  %v695 = vmax.f32 %v445, 0.0
  %v696 = vmax.f32 %v450, 0.0
  %v697 = vmax.f32 %v455, 0.0
  %v698 = vmax.f32 %v460, 0.0
  %v699 = vmax.f32 %v465, 0.0
  %v700 = vmax.f32 %v470, 0.0
  %v701 = vmax.f32 %v475, 0.0
  %v702 = vmax.f32 %v480, 0.0
  %v703 = vmax.f32 %v485, 0.0
  %v704 = vmax.f32 %v490, 0.0
  %v705 = vmax.f32 %v495, 0.0
  %v706 = vmax.f32 %v500, 0.0
  %v707 = vmax.f32 %v505, 0.0
  %v708 = vmax.f32 %v510, 0.0
  %v709 = vmax.f32 %v515, 0.0
  %v710 = vmax.f32 %v520, 0.0
  %v711 = vmax.f32 %v525, 0.0
  %v712 = vmax.f32 %v530, 0.0
  %v713 = vmax.f32 %v535, 0.0
  %v714 = vmax.f32 %v540, 0.0
  %v715 = vmax.f32 %v545, 0.0
  %v716 = vmax.f32 %v550, 0.0
  %v717 = vmax.f32 %v555, 0.0
  %v718 = vmax.f32 %v560, 0.0
  %v719 = vmax.f32 %v565, 0.0
  %v720 = vmax.f32 %v570, 0.0
  %v721 = vmax.f32 %v575, 0.0
  %v722 = vmax.f32 %v580, 0.0
  %v723 = vmax.f32 %v585, 0.0
  %v724 = vmax.f32 %v590, 0.0
  %v725 = vmax.f32 %v595, 0.0
  %v726 = vmax.f32 %v600, 0.0
  %v727 = vmax.f32 %v605, 0.0
  %v728 = vmax.f32 %v610, 0.0
  %v729 = vmax.f32 %v615, 0.0
  %v730 = vmax.f32 %v620, 0.0
  %v731 = vmax.f32 %v625, 0.0
  %v732 = vmax.f32 %v630, 0.0
  %v733 = vmax.f32 %v635, 0.0
  %v734 = vmax.f32 %v640, 0.0
  %v735 = vmax.f32 %v645, 0.0
  %v736 = vmax.f32 %v650, 0.0
  %v737 = vmax.f32 %v655, 0.0
  %v738 = vmax.f32 %v660, 0.0
  %v739 = vmax.f32 %v665, 0.0
  %v740 = vmax.f32 %v670, 0.0
  %v741 = vmax.f32 %v675, 0.0
  %vm742 = vcmask 523264
  %743 = vst.msk [vmem:[%s3] sm:$0xff] %vm742, %v678
  %744 = vst.msk [vmem:[%s3 + $0x8] sm:$0xff] %vm742, %v679
  %745 = vst.msk [vmem:[%s3 + $0x10] sm:$0xff] %vm742, %v680
  %746 = vst.msk [vmem:[%s3 + $0x18] sm:$0xff] %vm742, %v681
  %747 = vst.msk [vmem:[%s3 + $0x20] sm:$0xff] %vm742, %v682
  %748 = vst.msk [vmem:[%s3 + $0x28] sm:$0xff] %vm742, %v683
  %749 = vst.msk [vmem:[%s3 + $0x30] sm:$0xff] %vm742, %v684
  %750 = vst.msk [vmem:[%s3 + $0x38] sm:$0xff] %vm742, %v685
  %751 = vst.msk [vmem:[%s3 + $0x40] sm:$0xff] %vm742, %v686
  %752 = vst.msk [vmem:[%s3 + $0x48] sm:$0xff] %vm742, %v687
  %753 = vst.msk [vmem:[%s3 + $0x50] sm:$0xff] %vm742, %v688
  %754 = vst.msk [vmem:[%s3 + $0x58] sm:$0xff] %vm742, %v689
  %755 = vst.msk [vmem:[%s3 + $0x60] sm:$0xff] %vm742, %v690
  %756 = vst.msk [vmem:[%s3 + $0x68] sm:$0xff] %vm742, %v691
  %757 = vst.msk [vmem:[%s3 + $0x70] sm:$0xff] %vm742, %v692
  %758 = vst.msk [vmem:[%s3 + $0x78] sm:$0xff] %vm742, %v693
  %759 = vst.msk [vmem:[%s3 + $0x80] sm:$0xff] %vm742, %v694
  %760 = vst.msk [vmem:[%s3 + $0x88] sm:$0xff] %vm742, %v695
  %761 = vst.msk [vmem:[%s3 + $0x90] sm:$0xff] %vm742, %v696
  %762 = vst.msk [vmem:[%s3 + $0x98] sm:$0xff] %vm742, %v697
  %763 = vst.msk [vmem:[%s3 + $0xa0] sm:$0xff] %vm742, %v698
  %764 = vst.msk [vmem:[%s3 + $0xa8] sm:$0xff] %vm742, %v699
  %765 = vst.msk [vmem:[%s3 + $0xb0] sm:$0xff] %vm742, %v700
  %766 = vst.msk [vmem:[%s3 + $0xb8] sm:$0xff] %vm742, %v701
  %767 = vst.msk [vmem:[%s3 + $0xc0] sm:$0xff] %vm742, %v702
  %768 = vst.msk [vmem:[%s3 + $0xc8] sm:$0xff] %vm742, %v703
  %769 = vst.msk [vmem:[%s3 + $0xd0] sm:$0xff] %vm742, %v704
  %770 = vst.msk [vmem:[%s3 + $0xd8] sm:$0xff] %vm742, %v705
  %771 = vst.msk [vmem:[%s3 + $0xe0] sm:$0xff] %vm742, %v706
  %772 = vst.msk [vmem:[%s3 + $0xe8] sm:$0xff] %vm742, %v707
  %773 = vst.msk [vmem:[%s3 + $0xf0] sm:$0xff] %vm742, %v708
  %774 = vst.msk [vmem:[%s3 + $0xf8] sm:$0xff] %vm742, %v709
  %775 = vst.msk [vmem:[%s3 + $0x100] sm:$0xff] %vm742, %v710
  %776 = vst.msk [vmem:[%s3 + $0x108] sm:$0xff] %vm742, %v711
  %777 = vst.msk [vmem:[%s3 + $0x110] sm:$0xff] %vm742, %v712
  %778 = vst.msk [vmem:[%s3 + $0x118] sm:$0xff] %vm742, %v713
  %779 = vst.msk [vmem:[%s3 + $0x120] sm:$0xff] %vm742, %v714
  %780 = vst.msk [vmem:[%s3 + $0x128] sm:$0xff] %vm742, %v715
  %781 = vst.msk [vmem:[%s3 + $0x130] sm:$0xff] %vm742, %v716
  %782 = vst.msk [vmem:[%s3 + $0x138] sm:$0xff] %vm742, %v717
  %783 = vst.msk [vmem:[%s3 + $0x140] sm:$0xff] %vm742, %v718
  %784 = vst.msk [vmem:[%s3 + $0x148] sm:$0xff] %vm742, %v719
  %785 = vst.msk [vmem:[%s3 + $0x150] sm:$0xff] %vm742, %v720
  %786 = vst.msk [vmem:[%s3 + $0x158] sm:$0xff] %vm742, %v721
  %787 = vst.msk [vmem:[%s3 + $0x160] sm:$0xff] %vm742, %v722
  %788 = vst.msk [vmem:[%s3 + $0x168] sm:$0xff] %vm742, %v723
  %789 = vst.msk [vmem:[%s3 + $0x170] sm:$0xff] %vm742, %v724
  %790 = vst.msk [vmem:[%s3 + $0x178] sm:$0xff] %vm742, %v725
  %791 = vst.msk [vmem:[%s3 + $0x180] sm:$0xff] %vm742, %v726
  %792 = vst.msk [vmem:[%s3 + $0x188] sm:$0xff] %vm742, %v727
  %793 = vst.msk [vmem:[%s3 + $0x190] sm:$0xff] %vm742, %v728
  %794 = vst.msk [vmem:[%s3 + $0x198] sm:$0xff] %vm742, %v729
  %795 = vst.msk [vmem:[%s3 + $0x1a0] sm:$0xff] %vm742, %v730
  %796 = vst.msk [vmem:[%s3 + $0x1a8] sm:$0xff] %vm742, %v731
  %797 = vst.msk [vmem:[%s3 + $0x1b0] sm:$0xff] %vm742, %v732
  %798 = vst.msk [vmem:[%s3 + $0x1b8] sm:$0xff] %vm742, %v733
  %799 = vst.msk [vmem:[%s3 + $0x1c0] sm:$0xff] %vm742, %v734
  %800 = vst.msk [vmem:[%s3 + $0x1c8] sm:$0xff] %vm742, %v735
  %801 = vst.msk [vmem:[%s3 + $0x1d0] sm:$0xff] %vm742, %v736
  %802 = vst.msk [vmem:[%s3 + $0x1d8] sm:$0xff] %vm742, %v737
  %803 = vst.msk [vmem:[%s3 + $0x1e0] sm:$0xff] %vm742, %v738
  %804 = vst.msk [vmem:[%s3 + $0x1e8] sm:$0xff] %vm742, %v739
  %805 = vst.msk [vmem:[%s3 + $0x1f0] sm:$0xff] %vm742, %v740
  %806 = vst.msk [vmem:[%s3 + $0x1f8] sm:$0xff] %vm742, %v741
  // Predicated region
  $region14: #{srcnn_forward.3} parent=0 // pred_check
    _
  $region15: #{srcnn_forward.3} parent=0 // pred_check_branch
    %808 = sbr.rel (0) target = $region17
  $region16: #{srcnn_forward.3} parent=0 // pred_region
    _
  $region17: #{srcnn_forward.3} parent=0 // pred_fallthru
    _
  // Predicated region
  $region18: #{srcnn_forward.3} parent=0 // pred_check
    _
  $region19: #{srcnn_forward.3} parent=0 // pred_check_branch
    %810 = sbr.rel (0) target = $region21
  $region20: #{srcnn_forward.3} parent=0 // pred_region
    _
  $region21: #{srcnn_forward.3} parent=0 // pred_fallthru
    _

// kernel: srcnn_forward.4
$region0: #{srcnn_forward.4}
  #allocation0 [shape = 'u32[]', space=smem, size = 0x4, offset = 0x4, fixed_abs, tag = 'smem constant byte address 0x4 - core index']
  #allocation1 [shape = 'u32[144,128]{1,0:T(1,128)}', space=vmem, size = 0x12000, scoped, tag = 'internal scratch']
  %s0 = inlined_call_operand.vmem [shape: f32[512,1600], index: 0, kind: input, shape index: {}]
  %s1 = inlined_call_operand.vmem [shape: f32[1600,32], index: 1, kind: input, shape index: {}]
  %s2 = inlined_call_operand.vmem [shape: f32[1,32], index: 2, kind: input, shape index: {}]
  %s3 = inlined_call_operand.vmem [shape: f32[512,32], index: 3, kind: output, shape index: {}]
  %s4 = sld [smem:[#allocation0]]
  $region22: #{srcnn_forward.4} parent=0
    _
  %s6 = ssub.s32 1, %s4
  %s7 = scalar_select 0, %s6, %s4
  // Predicated region
  $region2: #{srcnn_forward.4} parent=0 // pred_check
    _
  $region3: #{srcnn_forward.4} parent=0 // pred_check_branch
    %9 = sbr.rel (0) target = $region5
  $region4: #{srcnn_forward.4} parent=0 // pred_region
    _
  $region5: #{srcnn_forward.4} parent=0 // pred_fallthru
    _
  // Predicated region
  $region6: #{srcnn_forward.4} parent=0 // pred_check
    _
  $region7: #{srcnn_forward.4} parent=0 // pred_check_branch
    %11 = sbr.rel (0) target = $region9
  $region8: #{srcnn_forward.4} parent=0 // pred_region
    _
  $region9: #{srcnn_forward.4} parent=0 // pred_fallthru
    _
  // Predicated region
  $region10: #{srcnn_forward.4} parent=0 // pred_check
    _
  $region11: #{srcnn_forward.4} parent=0 // pred_check_branch
    %13 = sbr.rel (0) target = $region13
  $region12: #{srcnn_forward.4} parent=0 // pred_region
    _
  $region13: #{srcnn_forward.4} parent=0 // pred_fallthru
    _
  %v14 = vld [vmem:[%s0] sm:$0xff]
  %v15 = vld [vmem:[%s0 + $0x8] sm:$0xff]
  %v16 = vld [vmem:[%s0 + $0x10] sm:$0xff]
  %v17 = vld [vmem:[%s0 + $0x18] sm:$0xff]
  %v18 = vld [vmem:[%s0 + $0x20] sm:$0xff]
  %v19 = vld [vmem:[%s0 + $0x28] sm:$0xff]
  %v20 = vld [vmem:[%s0 + $0x30] sm:$0xff]
  %v21 = vld [vmem:[%s0 + $0x38] sm:$0xff]
  %v22 = vld [vmem:[%s0 + $0x40] sm:$0xff]
  %v23 = vld [vmem:[%s0 + $0x48] sm:$0xff]
  %v24 = vld [vmem:[%s0 + $0x50] sm:$0xff]
  %v25 = vld [vmem:[%s0 + $0x58] sm:$0xff]
  %v26 = vld [vmem:[%s0 + $0x60] sm:$0xff]
  %v27 = vld [vmem:[%s0 + $0x68] sm:$0xff]
  %v28 = vld [vmem:[%s0 + $0x70] sm:$0xff]
  %v29 = vld [vmem:[%s0 + $0x78] sm:$0xff]
  %v30 = vld [vmem:[%s0 + $0x80] sm:$0xff]
  %v31 = vld [vmem:[%s0 + $0x88] sm:$0xff]
  %v32 = vld [vmem:[%s0 + $0x90] sm:$0xff]
  %v33 = vld [vmem:[%s0 + $0x98] sm:$0xff]
  %v34 = vld [vmem:[%s0 + $0xa0] sm:$0xff]
  %v35 = vld [vmem:[%s0 + $0xa8] sm:$0xff]
  %v36 = vld [vmem:[%s0 + $0xb0] sm:$0xff]
  %v37 = vld [vmem:[%s0 + $0xb8] sm:$0xff]
  %v38 = vld [vmem:[%s0 + $0xc0] sm:$0xff]
  %v39 = vld [vmem:[%s0 + $0xc8] sm:$0xff]
  %v40 = vld [vmem:[%s0 + $0xd0] sm:$0xff]
  %v41 = vld [vmem:[%s0 + $0xd8] sm:$0xff]
  %v42 = vld [vmem:[%s0 + $0xe0] sm:$0xff]
  %v43 = vld [vmem:[%s0 + $0xe8] sm:$0xff]
  %v44 = vld [vmem:[%s0 + $0xf0] sm:$0xff]
  %v45 = vld [vmem:[%s0 + $0xf8] sm:$0xff]
  %v46 = vld [vmem:[%s0 + $0x100] sm:$0xff]
  %v47 = vld [vmem:[%s0 + $0x108] sm:$0xff]
  %v48 = vld [vmem:[%s0 + $0x110] sm:$0xff]
  %v49 = vld [vmem:[%s0 + $0x118] sm:$0xff]
  %v50 = vld [vmem:[%s0 + $0x120] sm:$0xff]
  %v51 = vld [vmem:[%s0 + $0x128] sm:$0xff]
  %v52 = vld [vmem:[%s0 + $0x130] sm:$0xff]
  %v53 = vld [vmem:[%s0 + $0x138] sm:$0xff]
  %v54 = vld [vmem:[%s0 + $0x140] sm:$0xff]
  %v55 = vld [vmem:[%s0 + $0x148] sm:$0xff]
  %v56 = vld [vmem:[%s0 + $0x150] sm:$0xff]
  %v57 = vld [vmem:[%s0 + $0x158] sm:$0xff]
  %v58 = vld [vmem:[%s0 + $0x160] sm:$0xff]
  %v59 = vld [vmem:[%s0 + $0x168] sm:$0xff]
  %v60 = vld [vmem:[%s0 + $0x170] sm:$0xff]
  %v61 = vld [vmem:[%s0 + $0x178] sm:$0xff]
  %v62 = vld [vmem:[%s0 + $0x180] sm:$0xff]
  %v63 = vld [vmem:[%s0 + $0x188] sm:$0xff]
  %v64 = vld [vmem:[%s0 + $0x190] sm:$0xff]
  %v65 = vld [vmem:[%s0 + $0x198] sm:$0xff]
  %v66 = vld [vmem:[%s0 + $0x1a0] sm:$0xff]
  %v67 = vld [vmem:[%s0 + $0x1a8] sm:$0xff]
  %v68 = vld [vmem:[%s0 + $0x1b0] sm:$0xff]
  %v69 = vld [vmem:[%s0 + $0x1b8] sm:$0xff]
  %v70 = vld [vmem:[%s0 + $0x1c0] sm:$0xff]
  %v71 = vld [vmem:[%s0 + $0x1c8] sm:$0xff]
  %v72 = vld [vmem:[%s0 + $0x1d0] sm:$0xff]
  %v73 = vld [vmem:[%s0 + $0x1d8] sm:$0xff]
  %v74 = vld [vmem:[%s0 + $0x1e0] sm:$0xff]
  %v75 = vld [vmem:[%s0 + $0x1e8] sm:$0xff]
  %v76 = vld [vmem:[%s0 + $0x1f0] sm:$0xff]
  %v77 = vld [vmem:[%s0 + $0x1f8] sm:$0xff]
  %v78 = vld [vmem:[%s0 + $0x200] sm:$0xff]
  %v79 = vld [vmem:[%s0 + $0x208] sm:$0xff]
  %v80 = vld [vmem:[%s0 + $0x210] sm:$0xff]
  %v81 = vld [vmem:[%s0 + $0x218] sm:$0xff]
  %v82 = vld [vmem:[%s0 + $0x220] sm:$0xff]
  %v83 = vld [vmem:[%s0 + $0x228] sm:$0xff]
  %v84 = vld [vmem:[%s0 + $0x230] sm:$0xff]
  %v85 = vld [vmem:[%s0 + $0x238] sm:$0xff]
  %v86 = vld [vmem:[%s0 + $0x240] sm:$0xff]
  %v87 = vld [vmem:[%s0 + $0x248] sm:$0xff]
  %v88 = vld [vmem:[%s0 + $0x250] sm:$0xff]
  %v89 = vld [vmem:[%s0 + $0x258] sm:$0xff]
  %v90 = vld [vmem:[%s0 + $0x260] sm:$0xff]
  %v91 = vld [vmem:[%s0 + $0x268] sm:$0xff]
  %v92 = vld [vmem:[%s0 + $0x270] sm:$0xff]
  %v93 = vld [vmem:[%s0 + $0x278] sm:$0xff]
  %v94 = vld [vmem:[%s0 + $0x280] sm:$0xff]
  %v95 = vld [vmem:[%s0 + $0x288] sm:$0xff]
  %v96 = vld [vmem:[%s0 + $0x290] sm:$0xff]
  %v97 = vld [vmem:[%s0 + $0x298] sm:$0xff]
  %v98 = vld [vmem:[%s0 + $0x2a0] sm:$0xff]
  %v99 = vld [vmem:[%s0 + $0x2a8] sm:$0xff]
  %v100 = vld [vmem:[%s0 + $0x2b0] sm:$0xff]
  %v101 = vld [vmem:[%s0 + $0x2b8] sm:$0xff]
  %v102 = vld [vmem:[%s0 + $0x2c0] sm:$0xff]
  %v103 = vld [vmem:[%s0 + $0x2c8] sm:$0xff]
  %v104 = vld [vmem:[%s0 + $0x2d0] sm:$0xff]
  %v105 = vld [vmem:[%s0 + $0x2d8] sm:$0xff]
  %v106 = vld [vmem:[%s0 + $0x2e0] sm:$0xff]
  %v107 = vld [vmem:[%s0 + $0x2e8] sm:$0xff]
  %v108 = vld [vmem:[%s0 + $0x2f0] sm:$0xff]
  %v109 = vld [vmem:[%s0 + $0x2f8] sm:$0xff]
  %v110 = vld [vmem:[%s0 + $0x300] sm:$0xff]
  %v111 = vld [vmem:[%s0 + $0x308] sm:$0xff]
  %v112 = vld [vmem:[%s0 + $0x310] sm:$0xff]
  %v113 = vld [vmem:[%s0 + $0x318] sm:$0xff]
  %v114 = vld [vmem:[%s0 + $0x320] sm:$0xff]
  %v115 = vld [vmem:[%s0 + $0x328] sm:$0xff]
  %v116 = vld [vmem:[%s0 + $0x330] sm:$0xff]
  %v117 = vld [vmem:[%s0 + $0x338] sm:$0xff]
  %v118 = vld [vmem:[%s0 + $0x340] sm:$0xff]
  %v119 = vld [vmem:[%s0 + $0x348] sm:$0xff]
  %v120 = vld [vmem:[%s0 + $0x350] sm:$0xff]
  %v121 = vld [vmem:[%s0 + $0x358] sm:$0xff]
  %v122 = vld [vmem:[%s0 + $0x360] sm:$0xff]
  %v123 = vld [vmem:[%s0 + $0x368] sm:$0xff]
  %v124 = vld [vmem:[%s0 + $0x370] sm:$0xff]
  %v125 = vld [vmem:[%s0 + $0x378] sm:$0xff]
  %v126 = vld [vmem:[%s0 + $0x380] sm:$0xff]
  %v127 = vld [vmem:[%s0 + $0x388] sm:$0xff]
  %v128 = vld [vmem:[%s0 + $0x390] sm:$0xff]
  %v129 = vld [vmem:[%s0 + $0x398] sm:$0xff]
  %v130 = vld [vmem:[%s0 + $0x3a0] sm:$0xff]
  %v131 = vld [vmem:[%s0 + $0x3a8] sm:$0xff]
  %v132 = vld [vmem:[%s0 + $0x3b0] sm:$0xff]
  %v133 = vld [vmem:[%s0 + $0x3b8] sm:$0xff]
  %v134 = vld [vmem:[%s0 + $0x3c0] sm:$0xff]
  %v135 = vld [vmem:[%s0 + $0x3c8] sm:$0xff]
  %v136 = vld [vmem:[%s0 + $0x3d0] sm:$0xff]
  %v137 = vld [vmem:[%s0 + $0x3d8] sm:$0xff]
  %v138 = vld [vmem:[%s0 + $0x3e0] sm:$0xff]
  %v139 = vld [vmem:[%s0 + $0x3e8] sm:$0xff]
  %v140 = vld [vmem:[%s0 + $0x3f0] sm:$0xff]
  %v141 = vld [vmem:[%s0 + $0x3f8] sm:$0xff]
  %v142 = vld [vmem:[%s0 + $0x400] sm:$0xff]
  %v143 = vld [vmem:[%s0 + $0x408] sm:$0xff]
  %v144 = vld [vmem:[%s0 + $0x410] sm:$0xff]
  %v145 = vld [vmem:[%s0 + $0x418] sm:$0xff]
  %v146 = vld [vmem:[%s0 + $0x420] sm:$0xff]
  %v147 = vld [vmem:[%s0 + $0x428] sm:$0xff]
  %v148 = vld [vmem:[%s0 + $0x430] sm:$0xff]
  %v149 = vld [vmem:[%s0 + $0x438] sm:$0xff]
  %v150 = vld [vmem:[%s0 + $0x440] sm:$0xff]
  %v151 = vld [vmem:[%s0 + $0x448] sm:$0xff]
  %v152 = vld [vmem:[%s0 + $0x450] sm:$0xff]
  %v153 = vld [vmem:[%s0 + $0x458] sm:$0xff]
  %v154 = vld [vmem:[%s0 + $0x460] sm:$0xff]
  %v155 = vld [vmem:[%s0 + $0x468] sm:$0xff]
  %v156 = vld [vmem:[%s0 + $0x470] sm:$0xff]
  %v157 = vld [vmem:[%s0 + $0x478] sm:$0xff]
  %v158 = vld [vmem:[%s0 + $0x480] sm:$0xff]
  %v159 = vld [vmem:[%s0 + $0x488] sm:$0xff]
  %v160 = vld [vmem:[%s0 + $0x490] sm:$0xff]
  %v161 = vld [vmem:[%s0 + $0x498] sm:$0xff]
  %v162 = vld [vmem:[%s0 + $0x4a0] sm:$0xff]
  %v163 = vld [vmem:[%s0 + $0x4a8] sm:$0xff]
  %v164 = vld [vmem:[%s0 + $0x4b0] sm:$0xff]
  %v165 = vld [vmem:[%s0 + $0x4b8] sm:$0xff]
  %v166 = vld [vmem:[%s0 + $0x4c0] sm:$0xff]
  %v167 = vld [vmem:[%s0 + $0x4c8] sm:$0xff]
  %v168 = vld [vmem:[%s0 + $0x4d0] sm:$0xff]
  %v169 = vld [vmem:[%s0 + $0x4d8] sm:$0xff]
  %v170 = vld [vmem:[%s0 + $0x4e0] sm:$0xff]
  %v171 = vld [vmem:[%s0 + $0x4e8] sm:$0xff]
  %v172 = vld [vmem:[%s0 + $0x4f0] sm:$0xff]
  %v173 = vld [vmem:[%s0 + $0x4f8] sm:$0xff]
  %v174 = vld [vmem:[%s0 + $0x500] sm:$0xff]
  %v175 = vld [vmem:[%s0 + $0x508] sm:$0xff]
  %v176 = vld [vmem:[%s0 + $0x510] sm:$0xff]
  %v177 = vld [vmem:[%s0 + $0x518] sm:$0xff]
  %v178 = vld [vmem:[%s0 + $0x520] sm:$0xff]
  %v179 = vld [vmem:[%s0 + $0x528] sm:$0xff]
  %v180 = vld [vmem:[%s0 + $0x530] sm:$0xff]
  %v181 = vld [vmem:[%s0 + $0x538] sm:$0xff]
  %v182 = vld [vmem:[%s0 + $0x540] sm:$0xff]
  %v183 = vld [vmem:[%s0 + $0x548] sm:$0xff]
  %v184 = vld [vmem:[%s0 + $0x550] sm:$0xff]
  %v185 = vld [vmem:[%s0 + $0x558] sm:$0xff]
  %v186 = vld [vmem:[%s0 + $0x560] sm:$0xff]
  %v187 = vld [vmem:[%s0 + $0x568] sm:$0xff]
  %v188 = vld [vmem:[%s0 + $0x570] sm:$0xff]
  %v189 = vld [vmem:[%s0 + $0x578] sm:$0xff]
  %v190 = vld [vmem:[%s0 + $0x580] sm:$0xff]
  %v191 = vld [vmem:[%s0 + $0x588] sm:$0xff]
  %v192 = vld [vmem:[%s0 + $0x590] sm:$0xff]
  %v193 = vld [vmem:[%s0 + $0x598] sm:$0xff]
  %v194 = vld [vmem:[%s0 + $0x5a0] sm:$0xff]
  %v195 = vld [vmem:[%s0 + $0x5a8] sm:$0xff]
  %v196 = vld [vmem:[%s0 + $0x5b0] sm:$0xff]
  %v197 = vld [vmem:[%s0 + $0x5b8] sm:$0xff]
  %v198 = vld [vmem:[%s0 + $0x5c0] sm:$0xff]
  %v199 = vld [vmem:[%s0 + $0x5c8] sm:$0xff]
  %v200 = vld [vmem:[%s0 + $0x5d0] sm:$0xff]
  %v201 = vld [vmem:[%s0 + $0x5d8] sm:$0xff]
  %v202 = vld [vmem:[%s0 + $0x5e0] sm:$0xff]
  %v203 = vld [vmem:[%s0 + $0x5e8] sm:$0xff]
  %v204 = vld [vmem:[%s0 + $0x5f0] sm:$0xff]
  %v205 = vld [vmem:[%s0 + $0x5f8] sm:$0xff]
  %v206 = vld [vmem:[%s0 + $0x600] sm:$0xff]
  %v207 = vld [vmem:[%s0 + $0x608] sm:$0xff]
  %v208 = vld [vmem:[%s0 + $0x610] sm:$0xff]
  %v209 = vld [vmem:[%s0 + $0x618] sm:$0xff]
  %v210 = vld [vmem:[%s0 + $0x620] sm:$0xff]
  %v211 = vld [vmem:[%s0 + $0x628] sm:$0xff]
  %v212 = vld [vmem:[%s0 + $0x630] sm:$0xff]
  %v213 = vld [vmem:[%s0 + $0x638] sm:$0xff]
  %v214 = vld [vmem:[%s0 + $0x640] sm:$0xff]
  %v215 = vld [vmem:[%s0 + $0x648] sm:$0xff]
  %v216 = vld [vmem:[%s0 + $0x650] sm:$0xff]
  %v217 = vld [vmem:[%s0 + $0x658] sm:$0xff]
  %v218 = vld [vmem:[%s0 + $0x660] sm:$0xff]
  %v219 = vld [vmem:[%s0 + $0x668] sm:$0xff]
  %v220 = vld [vmem:[%s0 + $0x670] sm:$0xff]
  %v221 = vld [vmem:[%s0 + $0x678] sm:$0xff]
  %v222 = vld [vmem:[%s0 + $0x680] sm:$0xff]
  %v223 = vld [vmem:[%s0 + $0x688] sm:$0xff]
  %v224 = vld [vmem:[%s0 + $0x690] sm:$0xff]
  %v225 = vld [vmem:[%s0 + $0x698] sm:$0xff]
  %v226 = vld [vmem:[%s0 + $0x6a0] sm:$0xff]
  %v227 = vld [vmem:[%s0 + $0x6a8] sm:$0xff]
  %v228 = vld [vmem:[%s0 + $0x6b0] sm:$0xff]
  %v229 = vld [vmem:[%s0 + $0x6b8] sm:$0xff]
  %v230 = vld [vmem:[%s0 + $0x6c0] sm:$0xff]
  %v231 = vld [vmem:[%s0 + $0x6c8] sm:$0xff]
  %v232 = vld [vmem:[%s0 + $0x6d0] sm:$0xff]
  %v233 = vld [vmem:[%s0 + $0x6d8] sm:$0xff]
  %v234 = vld [vmem:[%s0 + $0x6e0] sm:$0xff]
  %v235 = vld [vmem:[%s0 + $0x6e8] sm:$0xff]
  %v236 = vld [vmem:[%s0 + $0x6f0] sm:$0xff]
  %v237 = vld [vmem:[%s0 + $0x6f8] sm:$0xff]
  %v238 = vld [vmem:[%s0 + $0x700] sm:$0xff]
  %v239 = vld [vmem:[%s0 + $0x708] sm:$0xff]
  %v240 = vld [vmem:[%s0 + $0x710] sm:$0xff]
  %v241 = vld [vmem:[%s0 + $0x718] sm:$0xff]
  %v242 = vld [vmem:[%s0 + $0x720] sm:$0xff]
  %v243 = vld [vmem:[%s0 + $0x728] sm:$0xff]
  %v244 = vld [vmem:[%s0 + $0x730] sm:$0xff]
  %v245 = vld [vmem:[%s0 + $0x738] sm:$0xff]
  %v246 = vld [vmem:[%s0 + $0x740] sm:$0xff]
  %v247 = vld [vmem:[%s0 + $0x748] sm:$0xff]
  %v248 = vld [vmem:[%s0 + $0x750] sm:$0xff]
  %v249 = vld [vmem:[%s0 + $0x758] sm:$0xff]
  %v250 = vld [vmem:[%s0 + $0x760] sm:$0xff]
  %v251 = vld [vmem:[%s0 + $0x768] sm:$0xff]
  %v252 = vld [vmem:[%s0 + $0x770] sm:$0xff]
  %v253 = vld [vmem:[%s0 + $0x778] sm:$0xff]
  %v254 = vld [vmem:[%s0 + $0x780] sm:$0xff]
  %v255 = vld [vmem:[%s0 + $0x788] sm:$0xff]
  %v256 = vld [vmem:[%s0 + $0x790] sm:$0xff]
  %v257 = vld [vmem:[%s0 + $0x798] sm:$0xff]
  %v258 = vld [vmem:[%s0 + $0x7a0] sm:$0xff]
  %v259 = vld [vmem:[%s0 + $0x7a8] sm:$0xff]
  %v260 = vld [vmem:[%s0 + $0x7b0] sm:$0xff]
  %v261 = vld [vmem:[%s0 + $0x7b8] sm:$0xff]
  %v262 = vld [vmem:[%s0 + $0x7c0] sm:$0xff]
  %v263 = vld [vmem:[%s0 + $0x7c8] sm:$0xff]
  %v264 = vld [vmem:[%s0 + $0x7d0] sm:$0xff]
  %v265 = vld [vmem:[%s0 + $0x7d8] sm:$0xff]
  %v266 = vld [vmem:[%s0 + $0x7e0] sm:$0xff]
  %v267 = vld [vmem:[%s0 + $0x7e8] sm:$0xff]
  %v268 = vld [vmem:[%s0 + $0x7f0] sm:$0xff]
  %v269 = vld [vmem:[%s0 + $0x7f8] sm:$0xff]
  %v270 = vld [vmem:[%s0 + $0x800] sm:$0xff]
  %v271 = vld [vmem:[%s0 + $0x808] sm:$0xff]
  %v272 = vld [vmem:[%s0 + $0x810] sm:$0xff]
  %v273 = vld [vmem:[%s0 + $0x818] sm:$0xff]
  %v274 = vld [vmem:[%s0 + $0x820] sm:$0xff]
  %v275 = vld [vmem:[%s0 + $0x828] sm:$0xff]
  %v276 = vld [vmem:[%s0 + $0x830] sm:$0xff]
  %v277 = vld [vmem:[%s0 + $0x838] sm:$0xff]
  %v278 = vld [vmem:[%s0 + $0x840] sm:$0xff]
  %v279 = vld [vmem:[%s0 + $0x848] sm:$0xff]
  %v280 = vld [vmem:[%s0 + $0x850] sm:$0xff]
  %v281 = vld [vmem:[%s0 + $0x858] sm:$0xff]
  %v282 = vld [vmem:[%s0 + $0x860] sm:$0xff]
  %v283 = vld [vmem:[%s0 + $0x868] sm:$0xff]
  %v284 = vld [vmem:[%s0 + $0x870] sm:$0xff]
  %v285 = vld [vmem:[%s0 + $0x878] sm:$0xff]
  %v286 = vld [vmem:[%s0 + $0x880] sm:$0xff]
  %v287 = vld [vmem:[%s0 + $0x888] sm:$0xff]
  %v288 = vld [vmem:[%s0 + $0x890] sm:$0xff]
  %v289 = vld [vmem:[%s0 + $0x898] sm:$0xff]
  %v290 = vld [vmem:[%s0 + $0x8a0] sm:$0xff]
  %v291 = vld [vmem:[%s0 + $0x8a8] sm:$0xff]
  %v292 = vld [vmem:[%s0 + $0x8b0] sm:$0xff]
  %v293 = vld [vmem:[%s0 + $0x8b8] sm:$0xff]
  %v294 = vld [vmem:[%s0 + $0x8c0] sm:$0xff]
  %v295 = vld [vmem:[%s0 + $0x8c8] sm:$0xff]
  %v296 = vld [vmem:[%s0 + $0x8d0] sm:$0xff]
  %v297 = vld [vmem:[%s0 + $0x8d8] sm:$0xff]
  %v298 = vld [vmem:[%s0 + $0x8e0] sm:$0xff]
  %v299 = vld [vmem:[%s0 + $0x8e8] sm:$0xff]
  %v300 = vld [vmem:[%s0 + $0x8f0] sm:$0xff]
  %v301 = vld [vmem:[%s0 + $0x8f8] sm:$0xff]
  %v302 = vld [vmem:[%s0 + $0x900] sm:$0xff]
  %v303 = vld [vmem:[%s0 + $0x908] sm:$0xff]
  %v304 = vld [vmem:[%s0 + $0x910] sm:$0xff]
  %v305 = vld [vmem:[%s0 + $0x918] sm:$0xff]
  %v306 = vld [vmem:[%s0 + $0x920] sm:$0xff]
  %v307 = vld [vmem:[%s0 + $0x928] sm:$0xff]
  %v308 = vld [vmem:[%s0 + $0x930] sm:$0xff]
  %v309 = vld [vmem:[%s0 + $0x938] sm:$0xff]
  %v310 = vld [vmem:[%s0 + $0x940] sm:$0xff]
  %v311 = vld [vmem:[%s0 + $0x948] sm:$0xff]
  %v312 = vld [vmem:[%s0 + $0x950] sm:$0xff]
  %v313 = vld [vmem:[%s0 + $0x958] sm:$0xff]
  %v314 = vld [vmem:[%s0 + $0x960] sm:$0xff]
  %v315 = vld [vmem:[%s0 + $0x968] sm:$0xff]
  %v316 = vld [vmem:[%s0 + $0x970] sm:$0xff]
  %v317 = vld [vmem:[%s0 + $0x978] sm:$0xff]
  %v318 = vld [vmem:[%s0 + $0x980] sm:$0xff]
  %v319 = vld [vmem:[%s0 + $0x988] sm:$0xff]
  %v320 = vld [vmem:[%s0 + $0x990] sm:$0xff]
  %v321 = vld [vmem:[%s0 + $0x998] sm:$0xff]
  %v322 = vld [vmem:[%s0 + $0x9a0] sm:$0xff]
  %v323 = vld [vmem:[%s0 + $0x9a8] sm:$0xff]
  %v324 = vld [vmem:[%s0 + $0x9b0] sm:$0xff]
  %v325 = vld [vmem:[%s0 + $0x9b8] sm:$0xff]
  %v326 = vld [vmem:[%s0 + $0x9c0] sm:$0xff]
  %v327 = vld [vmem:[%s0 + $0x9c8] sm:$0xff]
  %v328 = vld [vmem:[%s0 + $0x9d0] sm:$0xff]
  %v329 = vld [vmem:[%s0 + $0x9d8] sm:$0xff]
  %v330 = vld [vmem:[%s0 + $0x9e0] sm:$0xff]
  %v331 = vld [vmem:[%s0 + $0x9e8] sm:$0xff]
  %v332 = vld [vmem:[%s0 + $0x9f0] sm:$0xff]
  %v333 = vld [vmem:[%s0 + $0x9f8] sm:$0xff]
  %v334 = vld [vmem:[%s0 + $0xa00] sm:$0xff]
  %v335 = vld [vmem:[%s0 + $0xa08] sm:$0xff]
  %v336 = vld [vmem:[%s0 + $0xa10] sm:$0xff]
  %v337 = vld [vmem:[%s0 + $0xa18] sm:$0xff]
  %v338 = vld [vmem:[%s0 + $0xa20] sm:$0xff]
  %v339 = vld [vmem:[%s0 + $0xa28] sm:$0xff]
  %v340 = vld [vmem:[%s0 + $0xa30] sm:$0xff]
  %v341 = vld [vmem:[%s0 + $0xa38] sm:$0xff]
  %v342 = vld [vmem:[%s0 + $0xa40] sm:$0xff]
  %v343 = vld [vmem:[%s0 + $0xa48] sm:$0xff]
  %v344 = vld [vmem:[%s0 + $0xa50] sm:$0xff]
  %v345 = vld [vmem:[%s0 + $0xa58] sm:$0xff]
  %v346 = vld [vmem:[%s0 + $0xa60] sm:$0xff]
  %v347 = vld [vmem:[%s0 + $0xa68] sm:$0xff]
  %v348 = vld [vmem:[%s0 + $0xa70] sm:$0xff]
  %v349 = vld [vmem:[%s0 + $0xa78] sm:$0xff]
  %v350 = vld [vmem:[%s0 + $0xa80] sm:$0xff]
  %v351 = vld [vmem:[%s0 + $0xa88] sm:$0xff]
  %v352 = vld [vmem:[%s0 + $0xa90] sm:$0xff]
  %v353 = vld [vmem:[%s0 + $0xa98] sm:$0xff]
  %v354 = vld [vmem:[%s0 + $0xaa0] sm:$0xff]
  %v355 = vld [vmem:[%s0 + $0xaa8] sm:$0xff]
  %v356 = vld [vmem:[%s0 + $0xab0] sm:$0xff]
  %v357 = vld [vmem:[%s0 + $0xab8] sm:$0xff]
  %v358 = vld [vmem:[%s0 + $0xac0] sm:$0xff]
  %v359 = vld [vmem:[%s0 + $0xac8] sm:$0xff]
  %v360 = vld [vmem:[%s0 + $0xad0] sm:$0xff]
  %v361 = vld [vmem:[%s0 + $0xad8] sm:$0xff]
  %v362 = vld [vmem:[%s0 + $0xae0] sm:$0xff]
  %v363 = vld [vmem:[%s0 + $0xae8] sm:$0xff]
  %v364 = vld [vmem:[%s0 + $0xaf0] sm:$0xff]
  %v365 = vld [vmem:[%s0 + $0xaf8] sm:$0xff]
  %v366 = vld [vmem:[%s0 + $0xb00] sm:$0xff]
  %v367 = vld [vmem:[%s0 + $0xb08] sm:$0xff]
  %v368 = vld [vmem:[%s0 + $0xb10] sm:$0xff]
  %v369 = vld [vmem:[%s0 + $0xb18] sm:$0xff]
  %v370 = vld [vmem:[%s0 + $0xb20] sm:$0xff]
  %v371 = vld [vmem:[%s0 + $0xb28] sm:$0xff]
  %v372 = vld [vmem:[%s0 + $0xb30] sm:$0xff]
  %v373 = vld [vmem:[%s0 + $0xb38] sm:$0xff]
  %v374 = vld [vmem:[%s0 + $0xb40] sm:$0xff]
  %v375 = vld [vmem:[%s0 + $0xb48] sm:$0xff]
  %v376 = vld [vmem:[%s0 + $0xb50] sm:$0xff]
  %v377 = vld [vmem:[%s0 + $0xb58] sm:$0xff]
  %v378 = vld [vmem:[%s0 + $0xb60] sm:$0xff]
  %v379 = vld [vmem:[%s0 + $0xb68] sm:$0xff]
  %v380 = vld [vmem:[%s0 + $0xb70] sm:$0xff]
  %v381 = vld [vmem:[%s0 + $0xb78] sm:$0xff]
  %v382 = vld [vmem:[%s0 + $0xb80] sm:$0xff]
  %v383 = vld [vmem:[%s0 + $0xb88] sm:$0xff]
  %v384 = vld [vmem:[%s0 + $0xb90] sm:$0xff]
  %v385 = vld [vmem:[%s0 + $0xb98] sm:$0xff]
  %v386 = vld [vmem:[%s0 + $0xba0] sm:$0xff]
  %v387 = vld [vmem:[%s0 + $0xba8] sm:$0xff]
  %v388 = vld [vmem:[%s0 + $0xbb0] sm:$0xff]
  %v389 = vld [vmem:[%s0 + $0xbb8] sm:$0xff]
  %v390 = vld [vmem:[%s0 + $0xbc0] sm:$0xff]
  %v391 = vld [vmem:[%s0 + $0xbc8] sm:$0xff]
  %v392 = vld [vmem:[%s0 + $0xbd0] sm:$0xff]
  %v393 = vld [vmem:[%s0 + $0xbd8] sm:$0xff]
  %v394 = vld [vmem:[%s0 + $0xbe0] sm:$0xff]
  %v395 = vld [vmem:[%s0 + $0xbe8] sm:$0xff]
  %v396 = vld [vmem:[%s0 + $0xbf0] sm:$0xff]
  %v397 = vld [vmem:[%s0 + $0xbf8] sm:$0xff]
  %v398 = vld [vmem:[%s0 + $0xc00] sm:$0xff]
  %v399 = vld [vmem:[%s0 + $0xc08] sm:$0xff]
  %v400 = vld [vmem:[%s0 + $0xc10] sm:$0xff]
  %v401 = vld [vmem:[%s0 + $0xc18] sm:$0xff]
  %v402 = vld [vmem:[%s0 + $0xc20] sm:$0xff]
  %v403 = vld [vmem:[%s0 + $0xc28] sm:$0xff]
  %v404 = vld [vmem:[%s0 + $0xc30] sm:$0xff]
  %v405 = vld [vmem:[%s0 + $0xc38] sm:$0xff]
  %v406 = vld [vmem:[%s0 + $0xc40] sm:$0xff]
  %v407 = vld [vmem:[%s0 + $0xc48] sm:$0xff]
  %v408 = vld [vmem:[%s0 + $0xc50] sm:$0xff]
  %v409 = vld [vmem:[%s0 + $0xc58] sm:$0xff]
  %v410 = vld [vmem:[%s0 + $0xc60] sm:$0xff]
  %v411 = vld [vmem:[%s0 + $0xc68] sm:$0xff]
  %v412 = vld [vmem:[%s0 + $0xc70] sm:$0xff]
  %v413 = vld [vmem:[%s0 + $0xc78] sm:$0xff]
  %v414 = vld [vmem:[%s0 + $0xc80] sm:$0xff]
  %v415 = vld [vmem:[%s0 + $0xc88] sm:$0xff]
  %v416 = vld [vmem:[%s0 + $0xc90] sm:$0xff]
  %v417 = vld [vmem:[%s0 + $0xc98] sm:$0xff]
  %v418 = vld [vmem:[%s0 + $0xca0] sm:$0xff]
  %v419 = vld [vmem:[%s0 + $0xca8] sm:$0xff]
  %v420 = vld [vmem:[%s0 + $0xcb0] sm:$0xff]
  %v421 = vld [vmem:[%s0 + $0xcb8] sm:$0xff]
  %v422 = vld [vmem:[%s0 + $0xcc0] sm:$0xff]
  %v423 = vld [vmem:[%s0 + $0xcc8] sm:$0xff]
  %v424 = vld [vmem:[%s0 + $0xcd0] sm:$0xff]
  %v425 = vld [vmem:[%s0 + $0xcd8] sm:$0xff]
  %v426 = vld [vmem:[%s0 + $0xce0] sm:$0xff]
  %v427 = vld [vmem:[%s0 + $0xce8] sm:$0xff]
  %v428 = vld [vmem:[%s0 + $0xcf0] sm:$0xff]
  %v429 = vld [vmem:[%s0 + $0xcf8] sm:$0xff]
  %v430 = vld [vmem:[%s0 + $0xd00] sm:$0xff]
  %v431 = vld [vmem:[%s0 + $0xd08] sm:$0xff]
  %v432 = vld [vmem:[%s0 + $0xd10] sm:$0xff]
  %v433 = vld [vmem:[%s0 + $0xd18] sm:$0xff]
  %v434 = vld [vmem:[%s0 + $0xd20] sm:$0xff]
  %v435 = vld [vmem:[%s0 + $0xd28] sm:$0xff]
  %v436 = vld [vmem:[%s0 + $0xd30] sm:$0xff]
  %v437 = vld [vmem:[%s0 + $0xd38] sm:$0xff]
  %v438 = vld [vmem:[%s0 + $0xd40] sm:$0xff]
  %v439 = vld [vmem:[%s0 + $0xd48] sm:$0xff]
  %v440 = vld [vmem:[%s0 + $0xd50] sm:$0xff]
  %v441 = vld [vmem:[%s0 + $0xd58] sm:$0xff]
  %v442 = vld [vmem:[%s0 + $0xd60] sm:$0xff]
  %v443 = vld [vmem:[%s0 + $0xd68] sm:$0xff]
  %v444 = vld [vmem:[%s0 + $0xd70] sm:$0xff]
  %v445 = vld [vmem:[%s0 + $0xd78] sm:$0xff]
  %v446 = vld [vmem:[%s0 + $0xd80] sm:$0xff]
  %v447 = vld [vmem:[%s0 + $0xd88] sm:$0xff]
  %v448 = vld [vmem:[%s0 + $0xd90] sm:$0xff]
  %v449 = vld [vmem:[%s0 + $0xd98] sm:$0xff]
  %v450 = vld [vmem:[%s0 + $0xda0] sm:$0xff]
  %v451 = vld [vmem:[%s0 + $0xda8] sm:$0xff]
  %v452 = vld [vmem:[%s0 + $0xdb0] sm:$0xff]
  %v453 = vld [vmem:[%s0 + $0xdb8] sm:$0xff]
  %v454 = vld [vmem:[%s0 + $0xdc0] sm:$0xff]
  %v455 = vld [vmem:[%s0 + $0xdc8] sm:$0xff]
  %v456 = vld [vmem:[%s0 + $0xdd0] sm:$0xff]
  %v457 = vld [vmem:[%s0 + $0xdd8] sm:$0xff]
  %v458 = vld [vmem:[%s0 + $0xde0] sm:$0xff]
  %v459 = vld [vmem:[%s0 + $0xde8] sm:$0xff]
  %v460 = vld [vmem:[%s0 + $0xdf0] sm:$0xff]
  %v461 = vld [vmem:[%s0 + $0xdf8] sm:$0xff]
  %v462 = vld [vmem:[%s0 + $0xe00] sm:$0xff]
  %v463 = vld [vmem:[%s0 + $0xe08] sm:$0xff]
  %v464 = vld [vmem:[%s0 + $0xe10] sm:$0xff]
  %v465 = vld [vmem:[%s0 + $0xe18] sm:$0xff]
  %v466 = vld [vmem:[%s0 + $0xe20] sm:$0xff]
  %v467 = vld [vmem:[%s0 + $0xe28] sm:$0xff]
  %v468 = vld [vmem:[%s0 + $0xe30] sm:$0xff]
  %v469 = vld [vmem:[%s0 + $0xe38] sm:$0xff]
  %v470 = vld [vmem:[%s0 + $0xe40] sm:$0xff]
  %v471 = vld [vmem:[%s0 + $0xe48] sm:$0xff]
  %v472 = vld [vmem:[%s0 + $0xe50] sm:$0xff]
  %v473 = vld [vmem:[%s0 + $0xe58] sm:$0xff]
  %v474 = vld [vmem:[%s0 + $0xe60] sm:$0xff]
  %v475 = vld [vmem:[%s0 + $0xe68] sm:$0xff]
  %v476 = vld [vmem:[%s0 + $0xe70] sm:$0xff]
  %v477 = vld [vmem:[%s0 + $0xe78] sm:$0xff]
  %v478 = vld [vmem:[%s0 + $0xe80] sm:$0xff]
  %v479 = vld [vmem:[%s0 + $0xe88] sm:$0xff]
  %v480 = vld [vmem:[%s0 + $0xe90] sm:$0xff]
  %v481 = vld [vmem:[%s0 + $0xe98] sm:$0xff]
  %v482 = vld [vmem:[%s0 + $0xea0] sm:$0xff]
  %v483 = vld [vmem:[%s0 + $0xea8] sm:$0xff]
  %v484 = vld [vmem:[%s0 + $0xeb0] sm:$0xff]
  %v485 = vld [vmem:[%s0 + $0xeb8] sm:$0xff]
  %v486 = vld [vmem:[%s0 + $0xec0] sm:$0xff]
  %v487 = vld [vmem:[%s0 + $0xec8] sm:$0xff]
  %v488 = vld [vmem:[%s0 + $0xed0] sm:$0xff]
  %v489 = vld [vmem:[%s0 + $0xed8] sm:$0xff]
  %v490 = vld [vmem:[%s0 + $0xee0] sm:$0xff]
  %v491 = vld [vmem:[%s0 + $0xee8] sm:$0xff]
  %v492 = vld [vmem:[%s0 + $0xef0] sm:$0xff]
  %v493 = vld [vmem:[%s0 + $0xef8] sm:$0xff]
  %v494 = vld [vmem:[%s0 + $0xf00] sm:$0xff]
  %v495 = vld [vmem:[%s0 + $0xf08] sm:$0xff]
  %v496 = vld [vmem:[%s0 + $0xf10] sm:$0xff]
  %v497 = vld [vmem:[%s0 + $0xf18] sm:$0xff]
  %v498 = vld [vmem:[%s0 + $0xf20] sm:$0xff]
  %v499 = vld [vmem:[%s0 + $0xf28] sm:$0xff]
  %v500 = vld [vmem:[%s0 + $0xf30] sm:$0xff]
  %v501 = vld [vmem:[%s0 + $0xf38] sm:$0xff]
  %v502 = vld [vmem:[%s0 + $0xf40] sm:$0xff]
  %v503 = vld [vmem:[%s0 + $0xf48] sm:$0xff]
  %v504 = vld [vmem:[%s0 + $0xf50] sm:$0xff]
  %v505 = vld [vmem:[%s0 + $0xf58] sm:$0xff]
  %v506 = vld [vmem:[%s0 + $0xf60] sm:$0xff]
  %v507 = vld [vmem:[%s0 + $0xf68] sm:$0xff]
  %v508 = vld [vmem:[%s0 + $0xf70] sm:$0xff]
  %v509 = vld [vmem:[%s0 + $0xf78] sm:$0xff]
  %v510 = vld [vmem:[%s0 + $0xf80] sm:$0xff]
  %v511 = vld [vmem:[%s0 + $0xf88] sm:$0xff]
  %v512 = vld [vmem:[%s0 + $0xf90] sm:$0xff]
  %v513 = vld [vmem:[%s0 + $0xf98] sm:$0xff]
  %v514 = vld [vmem:[%s0 + $0xfa0] sm:$0xff]
  %v515 = vld [vmem:[%s0 + $0xfa8] sm:$0xff]
  %v516 = vld [vmem:[%s0 + $0xfb0] sm:$0xff]
  %v517 = vld [vmem:[%s0 + $0xfb8] sm:$0xff]
  %v518 = vld [vmem:[%s0 + $0xfc0] sm:$0xff]
  %v519 = vld [vmem:[%s0 + $0xfc8] sm:$0xff]
  %v520 = vld [vmem:[%s0 + $0xfd0] sm:$0xff]
  %v521 = vld [vmem:[%s0 + $0xfd8] sm:$0xff]
  %v522 = vld [vmem:[%s0 + $0xfe0] sm:$0xff]
  %v523 = vld [vmem:[%s0 + $0xfe8] sm:$0xff]
  %v524 = vld [vmem:[%s0 + $0xff0] sm:$0xff]
  %v525 = vld [vmem:[%s0 + $0xff8] sm:$0xff]
  %v526 = vld [vmem:[%s0 + $0x1000] sm:$0xff]
  %v527 = vld [vmem:[%s0 + $0x1008] sm:$0xff]
  %v528 = vld [vmem:[%s0 + $0x1010] sm:$0xff]
  %v529 = vld [vmem:[%s0 + $0x1018] sm:$0xff]
  %v530 = vld [vmem:[%s0 + $0x1020] sm:$0xff]
  %v531 = vld [vmem:[%s0 + $0x1028] sm:$0xff]
  %v532 = vld [vmem:[%s0 + $0x1030] sm:$0xff]
  %v533 = vld [vmem:[%s0 + $0x1038] sm:$0xff]
  %v534 = vld [vmem:[%s0 + $0x1040] sm:$0xff]
  %v535 = vld [vmem:[%s0 + $0x1048] sm:$0xff]
  %v536 = vld [vmem:[%s0 + $0x1050] sm:$0xff]
  %v537 = vld [vmem:[%s0 + $0x1058] sm:$0xff]
  %v538 = vld [vmem:[%s0 + $0x1060] sm:$0xff]
  %v539 = vld [vmem:[%s0 + $0x1068] sm:$0xff]
  %v540 = vld [vmem:[%s0 + $0x1070] sm:$0xff]
  %v541 = vld [vmem:[%s0 + $0x1078] sm:$0xff]
  %v542 = vld [vmem:[%s0 + $0x1080] sm:$0xff]
  %v543 = vld [vmem:[%s0 + $0x1088] sm:$0xff]
  %v544 = vld [vmem:[%s0 + $0x1090] sm:$0xff]
  %v545 = vld [vmem:[%s0 + $0x1098] sm:$0xff]
  %v546 = vld [vmem:[%s0 + $0x10a0] sm:$0xff]
  %v547 = vld [vmem:[%s0 + $0x10a8] sm:$0xff]
  %v548 = vld [vmem:[%s0 + $0x10b0] sm:$0xff]
  %v549 = vld [vmem:[%s0 + $0x10b8] sm:$0xff]
  %v550 = vld [vmem:[%s0 + $0x10c0] sm:$0xff]
  %v551 = vld [vmem:[%s0 + $0x10c8] sm:$0xff]
  %v552 = vld [vmem:[%s0 + $0x10d0] sm:$0xff]
  %v553 = vld [vmem:[%s0 + $0x10d8] sm:$0xff]
  %v554 = vld [vmem:[%s0 + $0x10e0] sm:$0xff]
  %v555 = vld [vmem:[%s0 + $0x10e8] sm:$0xff]
  %v556 = vld [vmem:[%s0 + $0x10f0] sm:$0xff]
  %v557 = vld [vmem:[%s0 + $0x10f8] sm:$0xff]
  %v558 = vld [vmem:[%s0 + $0x1100] sm:$0xff]
  %v559 = vld [vmem:[%s0 + $0x1108] sm:$0xff]
  %v560 = vld [vmem:[%s0 + $0x1110] sm:$0xff]
  %v561 = vld [vmem:[%s0 + $0x1118] sm:$0xff]
  %v562 = vld [vmem:[%s0 + $0x1120] sm:$0xff]
  %v563 = vld [vmem:[%s0 + $0x1128] sm:$0xff]
  %v564 = vld [vmem:[%s0 + $0x1130] sm:$0xff]
  %v565 = vld [vmem:[%s0 + $0x1138] sm:$0xff]
  %v566 = vld [vmem:[%s0 + $0x1140] sm:$0xff]
  %v567 = vld [vmem:[%s0 + $0x1148] sm:$0xff]
  %v568 = vld [vmem:[%s0 + $0x1150] sm:$0xff]
  %v569 = vld [vmem:[%s0 + $0x1158] sm:$0xff]
  %v570 = vld [vmem:[%s0 + $0x1160] sm:$0xff]
  %v571 = vld [vmem:[%s0 + $0x1168] sm:$0xff]
  %v572 = vld [vmem:[%s0 + $0x1170] sm:$0xff]
  %v573 = vld [vmem:[%s0 + $0x1178] sm:$0xff]
  %v574 = vld [vmem:[%s0 + $0x1180] sm:$0xff]
  %v575 = vld [vmem:[%s0 + $0x1188] sm:$0xff]
  %v576 = vld [vmem:[%s0 + $0x1190] sm:$0xff]
  %v577 = vld [vmem:[%s0 + $0x1198] sm:$0xff]
  %v578 = vld [vmem:[%s0 + $0x11a0] sm:$0xff]
  %v579 = vld [vmem:[%s0 + $0x11a8] sm:$0xff]
  %v580 = vld [vmem:[%s0 + $0x11b0] sm:$0xff]
  %v581 = vld [vmem:[%s0 + $0x11b8] sm:$0xff]
  %v582 = vld [vmem:[%s0 + $0x11c0] sm:$0xff]
  %v583 = vld [vmem:[%s0 + $0x11c8] sm:$0xff]
  %v584 = vld [vmem:[%s0 + $0x11d0] sm:$0xff]
  %v585 = vld [vmem:[%s0 + $0x11d8] sm:$0xff]
  %v586 = vld [vmem:[%s0 + $0x11e0] sm:$0xff]
  %v587 = vld [vmem:[%s0 + $0x11e8] sm:$0xff]
  %v588 = vld [vmem:[%s0 + $0x11f0] sm:$0xff]
  %v589 = vld [vmem:[%s0 + $0x11f8] sm:$0xff]
  %v590 = vld [vmem:[%s0 + $0x1200] sm:$0xff]
  %v591 = vld [vmem:[%s0 + $0x1208] sm:$0xff]
  %v592 = vld [vmem:[%s0 + $0x1210] sm:$0xff]
  %v593 = vld [vmem:[%s0 + $0x1218] sm:$0xff]
  %v594 = vld [vmem:[%s0 + $0x1220] sm:$0xff]
  %v595 = vld [vmem:[%s0 + $0x1228] sm:$0xff]
  %v596 = vld [vmem:[%s0 + $0x1230] sm:$0xff]
  %v597 = vld [vmem:[%s0 + $0x1238] sm:$0xff]
  %v598 = vld [vmem:[%s0 + $0x1240] sm:$0xff]
  %v599 = vld [vmem:[%s0 + $0x1248] sm:$0xff]
  %v600 = vld [vmem:[%s0 + $0x1250] sm:$0xff]
  %v601 = vld [vmem:[%s0 + $0x1258] sm:$0xff]
  %v602 = vld [vmem:[%s0 + $0x1260] sm:$0xff]
  %v603 = vld [vmem:[%s0 + $0x1268] sm:$0xff]
  %v604 = vld [vmem:[%s0 + $0x1270] sm:$0xff]
  %v605 = vld [vmem:[%s0 + $0x1278] sm:$0xff]
  %v606 = vld [vmem:[%s0 + $0x1280] sm:$0xff]
  %v607 = vld [vmem:[%s0 + $0x1288] sm:$0xff]
  %v608 = vld [vmem:[%s0 + $0x1290] sm:$0xff]
  %v609 = vld [vmem:[%s0 + $0x1298] sm:$0xff]
  %v610 = vld [vmem:[%s0 + $0x12a0] sm:$0xff]
  %v611 = vld [vmem:[%s0 + $0x12a8] sm:$0xff]
  %v612 = vld [vmem:[%s0 + $0x12b0] sm:$0xff]
  %v613 = vld [vmem:[%s0 + $0x12b8] sm:$0xff]
  %v614 = vld [vmem:[%s0 + $0x12c0] sm:$0xff]
  %v615 = vld [vmem:[%s0 + $0x12c8] sm:$0xff]
  %v616 = vld [vmem:[%s0 + $0x12d0] sm:$0xff]
  %v617 = vld [vmem:[%s0 + $0x12d8] sm:$0xff]
  %v618 = vld [vmem:[%s0 + $0x12e0] sm:$0xff]
  %v619 = vld [vmem:[%s0 + $0x12e8] sm:$0xff]
  %v620 = vld [vmem:[%s0 + $0x12f0] sm:$0xff]
  %v621 = vld [vmem:[%s0 + $0x12f8] sm:$0xff]
  %v622 = vld [vmem:[%s0 + $0x1300] sm:$0xff]
  %v623 = vld [vmem:[%s0 + $0x1308] sm:$0xff]
  %v624 = vld [vmem:[%s0 + $0x1310] sm:$0xff]
  %v625 = vld [vmem:[%s0 + $0x1318] sm:$0xff]
  %v626 = vld [vmem:[%s0 + $0x1320] sm:$0xff]
  %v627 = vld [vmem:[%s0 + $0x1328] sm:$0xff]
  %v628 = vld [vmem:[%s0 + $0x1330] sm:$0xff]
  %v629 = vld [vmem:[%s0 + $0x1338] sm:$0xff]
  %v630 = vld [vmem:[%s0 + $0x1340] sm:$0xff]
  %v631 = vld [vmem:[%s0 + $0x1348] sm:$0xff]
  %v632 = vld [vmem:[%s0 + $0x1350] sm:$0xff]
  %v633 = vld [vmem:[%s0 + $0x1358] sm:$0xff]
  %v634 = vld [vmem:[%s0 + $0x1360] sm:$0xff]
  %v635 = vld [vmem:[%s0 + $0x1368] sm:$0xff]
  %v636 = vld [vmem:[%s0 + $0x1370] sm:$0xff]
  %v637 = vld [vmem:[%s0 + $0x1378] sm:$0xff]
  %v638 = vld [vmem:[%s0 + $0x1380] sm:$0xff]
  %v639 = vld [vmem:[%s0 + $0x1388] sm:$0xff]
  %v640 = vld [vmem:[%s0 + $0x1390] sm:$0xff]
  %v641 = vld [vmem:[%s0 + $0x1398] sm:$0xff]
  %v642 = vld [vmem:[%s0 + $0x13a0] sm:$0xff]
  %v643 = vld [vmem:[%s0 + $0x13a8] sm:$0xff]
  %v644 = vld [vmem:[%s0 + $0x13b0] sm:$0xff]
  %v645 = vld [vmem:[%s0 + $0x13b8] sm:$0xff]
  %v646 = vld [vmem:[%s0 + $0x13c0] sm:$0xff]
  %v647 = vld [vmem:[%s0 + $0x13c8] sm:$0xff]
  %v648 = vld [vmem:[%s0 + $0x13d0] sm:$0xff]
  %v649 = vld [vmem:[%s0 + $0x13d8] sm:$0xff]
  %v650 = vld [vmem:[%s0 + $0x13e0] sm:$0xff]
  %v651 = vld [vmem:[%s0 + $0x13e8] sm:$0xff]
  %v652 = vld [vmem:[%s0 + $0x13f0] sm:$0xff]
  %v653 = vld [vmem:[%s0 + $0x13f8] sm:$0xff]
  %v654 = vld [vmem:[%s0 + $0x1400] sm:$0xff]
  %v655 = vld [vmem:[%s0 + $0x1408] sm:$0xff]
  %v656 = vld [vmem:[%s0 + $0x1410] sm:$0xff]
  %v657 = vld [vmem:[%s0 + $0x1418] sm:$0xff]
  %v658 = vld [vmem:[%s0 + $0x1420] sm:$0xff]
  %v659 = vld [vmem:[%s0 + $0x1428] sm:$0xff]
  %v660 = vld [vmem:[%s0 + $0x1430] sm:$0xff]
  %v661 = vld [vmem:[%s0 + $0x1438] sm:$0xff]
  %v662 = vld [vmem:[%s0 + $0x1440] sm:$0xff]
  %v663 = vld [vmem:[%s0 + $0x1448] sm:$0xff]
  %v664 = vld [vmem:[%s0 + $0x1450] sm:$0xff]
  %v665 = vld [vmem:[%s0 + $0x1458] sm:$0xff]
  %v666 = vld [vmem:[%s0 + $0x1460] sm:$0xff]
  %v667 = vld [vmem:[%s0 + $0x1468] sm:$0xff]
  %v668 = vld [vmem:[%s0 + $0x1470] sm:$0xff]
  %v669 = vld [vmem:[%s0 + $0x1478] sm:$0xff]
  %v670 = vld [vmem:[%s0 + $0x1480] sm:$0xff]
  %v671 = vld [vmem:[%s0 + $0x1488] sm:$0xff]
  %v672 = vld [vmem:[%s0 + $0x1490] sm:$0xff]
  %v673 = vld [vmem:[%s0 + $0x1498] sm:$0xff]
  %v674 = vld [vmem:[%s0 + $0x14a0] sm:$0xff]
  %v675 = vld [vmem:[%s0 + $0x14a8] sm:$0xff]
  %v676 = vld [vmem:[%s0 + $0x14b0] sm:$0xff]
  %v677 = vld [vmem:[%s0 + $0x14b8] sm:$0xff]
  %v678 = vld [vmem:[%s0 + $0x14c0] sm:$0xff]
  %v679 = vld [vmem:[%s0 + $0x14c8] sm:$0xff]
  %v680 = vld [vmem:[%s0 + $0x14d0] sm:$0xff]
  %v681 = vld [vmem:[%s0 + $0x14d8] sm:$0xff]
  %v682 = vld [vmem:[%s0 + $0x14e0] sm:$0xff]
  %v683 = vld [vmem:[%s0 + $0x14e8] sm:$0xff]
  %v684 = vld [vmem:[%s0 + $0x14f0] sm:$0xff]
  %v685 = vld [vmem:[%s0 + $0x14f8] sm:$0xff]
  %v686 = vld [vmem:[%s0 + $0x1500] sm:$0xff]
  %v687 = vld [vmem:[%s0 + $0x1508] sm:$0xff]
  %v688 = vld [vmem:[%s0 + $0x1510] sm:$0xff]
  %v689 = vld [vmem:[%s0 + $0x1518] sm:$0xff]
  %v690 = vld [vmem:[%s0 + $0x1520] sm:$0xff]
  %v691 = vld [vmem:[%s0 + $0x1528] sm:$0xff]
  %v692 = vld [vmem:[%s0 + $0x1530] sm:$0xff]
  %v693 = vld [vmem:[%s0 + $0x1538] sm:$0xff]
  %v694 = vld [vmem:[%s0 + $0x1540] sm:$0xff]
  %v695 = vld [vmem:[%s0 + $0x1548] sm:$0xff]
  %v696 = vld [vmem:[%s0 + $0x1550] sm:$0xff]
  %v697 = vld [vmem:[%s0 + $0x1558] sm:$0xff]
  %v698 = vld [vmem:[%s0 + $0x1560] sm:$0xff]
  %v699 = vld [vmem:[%s0 + $0x1568] sm:$0xff]
  %v700 = vld [vmem:[%s0 + $0x1570] sm:$0xff]
  %v701 = vld [vmem:[%s0 + $0x1578] sm:$0xff]
  %v702 = vld [vmem:[%s0 + $0x1580] sm:$0xff]
  %v703 = vld [vmem:[%s0 + $0x1588] sm:$0xff]
  %v704 = vld [vmem:[%s0 + $0x1590] sm:$0xff]
  %v705 = vld [vmem:[%s0 + $0x1598] sm:$0xff]
  %v706 = vld [vmem:[%s0 + $0x15a0] sm:$0xff]
  %v707 = vld [vmem:[%s0 + $0x15a8] sm:$0xff]
  %v708 = vld [vmem:[%s0 + $0x15b0] sm:$0xff]
  %v709 = vld [vmem:[%s0 + $0x15b8] sm:$0xff]
  %v710 = vld [vmem:[%s0 + $0x15c0] sm:$0xff]
  %v711 = vld [vmem:[%s0 + $0x15c8] sm:$0xff]
  %v712 = vld [vmem:[%s0 + $0x15d0] sm:$0xff]
  %v713 = vld [vmem:[%s0 + $0x15d8] sm:$0xff]
  %v714 = vld [vmem:[%s0 + $0x15e0] sm:$0xff]
  %v715 = vld [vmem:[%s0 + $0x15e8] sm:$0xff]
  %v716 = vld [vmem:[%s0 + $0x15f0] sm:$0xff]
  %v717 = vld [vmem:[%s0 + $0x15f8] sm:$0xff]
  %v718 = vld [vmem:[%s0 + $0x1600] sm:$0xff]
  %v719 = vld [vmem:[%s0 + $0x1608] sm:$0xff]
  %v720 = vld [vmem:[%s0 + $0x1610] sm:$0xff]
  %v721 = vld [vmem:[%s0 + $0x1618] sm:$0xff]
  %v722 = vld [vmem:[%s0 + $0x1620] sm:$0xff]
  %v723 = vld [vmem:[%s0 + $0x1628] sm:$0xff]
  %v724 = vld [vmem:[%s0 + $0x1630] sm:$0xff]
  %v725 = vld [vmem:[%s0 + $0x1638] sm:$0xff]
  %v726 = vld [vmem:[%s0 + $0x1640] sm:$0xff]
  %v727 = vld [vmem:[%s0 + $0x1648] sm:$0xff]
  %v728 = vld [vmem:[%s0 + $0x1650] sm:$0xff]
  %v729 = vld [vmem:[%s0 + $0x1658] sm:$0xff]
  %v730 = vld [vmem:[%s0 + $0x1660] sm:$0xff]
  %v731 = vld [vmem:[%s0 + $0x1668] sm:$0xff]
  %v732 = vld [vmem:[%s0 + $0x1670] sm:$0xff]
  %v733 = vld [vmem:[%s0 + $0x1678] sm:$0xff]
  %v734 = vld [vmem:[%s0 + $0x1680] sm:$0xff]
  %v735 = vld [vmem:[%s0 + $0x1688] sm:$0xff]
  %v736 = vld [vmem:[%s0 + $0x1690] sm:$0xff]
  %v737 = vld [vmem:[%s0 + $0x1698] sm:$0xff]
  %v738 = vld [vmem:[%s0 + $0x16a0] sm:$0xff]
  %v739 = vld [vmem:[%s0 + $0x16a8] sm:$0xff]
  %v740 = vld [vmem:[%s0 + $0x16b0] sm:$0xff]
  %v741 = vld [vmem:[%s0 + $0x16b8] sm:$0xff]
  %v742 = vld [vmem:[%s0 + $0x16c0] sm:$0xff]
  %v743 = vld [vmem:[%s0 + $0x16c8] sm:$0xff]
  %v744 = vld [vmem:[%s0 + $0x16d0] sm:$0xff]
  %v745 = vld [vmem:[%s0 + $0x16d8] sm:$0xff]
  %v746 = vld [vmem:[%s0 + $0x16e0] sm:$0xff]
  %v747 = vld [vmem:[%s0 + $0x16e8] sm:$0xff]
  %v748 = vld [vmem:[%s0 + $0x16f0] sm:$0xff]
  %v749 = vld [vmem:[%s0 + $0x16f8] sm:$0xff]
  %v750 = vld [vmem:[%s0 + $0x1700] sm:$0xff]
  %v751 = vld [vmem:[%s0 + $0x1708] sm:$0xff]
  %v752 = vld [vmem:[%s0 + $0x1710] sm:$0xff]
  %v753 = vld [vmem:[%s0 + $0x1718] sm:$0xff]
  %v754 = vld [vmem:[%s0 + $0x1720] sm:$0xff]
  %v755 = vld [vmem:[%s0 + $0x1728] sm:$0xff]
  %v756 = vld [vmem:[%s0 + $0x1730] sm:$0xff]
  %v757 = vld [vmem:[%s0 + $0x1738] sm:$0xff]
  %v758 = vld [vmem:[%s0 + $0x1740] sm:$0xff]
  %v759 = vld [vmem:[%s0 + $0x1748] sm:$0xff]
  %v760 = vld [vmem:[%s0 + $0x1750] sm:$0xff]
  %v761 = vld [vmem:[%s0 + $0x1758] sm:$0xff]
  %v762 = vld [vmem:[%s0 + $0x1760] sm:$0xff]
  %v763 = vld [vmem:[%s0 + $0x1768] sm:$0xff]
  %v764 = vld [vmem:[%s0 + $0x1770] sm:$0xff]
  %v765 = vld [vmem:[%s0 + $0x1778] sm:$0xff]
  %v766 = vld [vmem:[%s0 + $0x1780] sm:$0xff]
  %v767 = vld [vmem:[%s0 + $0x1788] sm:$0xff]
  %v768 = vld [vmem:[%s0 + $0x1790] sm:$0xff]
  %v769 = vld [vmem:[%s0 + $0x1798] sm:$0xff]
  %v770 = vld [vmem:[%s0 + $0x17a0] sm:$0xff]
  %v771 = vld [vmem:[%s0 + $0x17a8] sm:$0xff]
  %v772 = vld [vmem:[%s0 + $0x17b0] sm:$0xff]
  %v773 = vld [vmem:[%s0 + $0x17b8] sm:$0xff]
  %v774 = vld [vmem:[%s0 + $0x17c0] sm:$0xff]
  %v775 = vld [vmem:[%s0 + $0x17c8] sm:$0xff]
  %v776 = vld [vmem:[%s0 + $0x17d0] sm:$0xff]
  %v777 = vld [vmem:[%s0 + $0x17d8] sm:$0xff]
  %v778 = vld [vmem:[%s0 + $0x17e0] sm:$0xff]
  %v779 = vld [vmem:[%s0 + $0x17e8] sm:$0xff]
  %v780 = vld [vmem:[%s0 + $0x17f0] sm:$0xff]
  %v781 = vld [vmem:[%s0 + $0x17f8] sm:$0xff]
  %v782 = vld [vmem:[%s0 + $0x1800] sm:$0xff]
  %v783 = vld [vmem:[%s0 + $0x1808] sm:$0xff]
  %v784 = vld [vmem:[%s0 + $0x1810] sm:$0xff]
  %v785 = vld [vmem:[%s0 + $0x1818] sm:$0xff]
  %v786 = vld [vmem:[%s0 + $0x1820] sm:$0xff]
  %v787 = vld [vmem:[%s0 + $0x1828] sm:$0xff]
  %v788 = vld [vmem:[%s0 + $0x1830] sm:$0xff]
  %v789 = vld [vmem:[%s0 + $0x1838] sm:$0xff]
  %v790 = vld [vmem:[%s0 + $0x1840] sm:$0xff]
  %v791 = vld [vmem:[%s0 + $0x1848] sm:$0xff]
  %v792 = vld [vmem:[%s0 + $0x1850] sm:$0xff]
  %v793 = vld [vmem:[%s0 + $0x1858] sm:$0xff]
  %v794 = vld [vmem:[%s0 + $0x1860] sm:$0xff]
  %v795 = vld [vmem:[%s0 + $0x1868] sm:$0xff]
  %v796 = vld [vmem:[%s0 + $0x1870] sm:$0xff]
  %v797 = vld [vmem:[%s0 + $0x1878] sm:$0xff]
  %v798 = vld [vmem:[%s0 + $0x1880] sm:$0xff]
  %v799 = vld [vmem:[%s0 + $0x1888] sm:$0xff]
  %v800 = vld [vmem:[%s0 + $0x1890] sm:$0xff]
  %v801 = vld [vmem:[%s0 + $0x1898] sm:$0xff]
  %v802 = vld [vmem:[%s0 + $0x18a0] sm:$0xff]
  %v803 = vld [vmem:[%s0 + $0x18a8] sm:$0xff]
  %v804 = vld [vmem:[%s0 + $0x18b0] sm:$0xff]
  %v805 = vld [vmem:[%s0 + $0x18b8] sm:$0xff]
  %v806 = vld [vmem:[%s0 + $0x18c0] sm:$0xff]
  %v807 = vld [vmem:[%s0 + $0x18c8] sm:$0xff]
  %v808 = vld [vmem:[%s0 + $0x18d0] sm:$0xff]
  %v809 = vld [vmem:[%s0 + $0x18d8] sm:$0xff]
  %v810 = vld [vmem:[%s0 + $0x18e0] sm:$0xff]
  %v811 = vld [vmem:[%s0 + $0x18e8] sm:$0xff]
  %v812 = vld [vmem:[%s0 + $0x18f0] sm:$0xff]
  %v813 = vld [vmem:[%s0 + $0x18f8] sm:$0xff]
  %v814 = vld [vmem:[%s0 + $0x1900] sm:$0xff]
  %v815 = vld [vmem:[%s0 + $0x1908] sm:$0xff]
  %v816 = vld [vmem:[%s0 + $0x1910] sm:$0xff]
  %v817 = vld [vmem:[%s0 + $0x1918] sm:$0xff]
  %v818 = vld [vmem:[%s0 + $0x1920] sm:$0xff]
  %v819 = vld [vmem:[%s0 + $0x1928] sm:$0xff]
  %v820 = vld [vmem:[%s0 + $0x1930] sm:$0xff]
  %v821 = vld [vmem:[%s0 + $0x1938] sm:$0xff]
  %v822 = vld [vmem:[%s0 + $0x1940] sm:$0xff]
  %v823 = vld [vmem:[%s0 + $0x1948] sm:$0xff]
  %v824 = vld [vmem:[%s0 + $0x1950] sm:$0xff]
  %v825 = vld [vmem:[%s0 + $0x1958] sm:$0xff]
  %v826 = vld [vmem:[%s0 + $0x1960] sm:$0xff]
  %v827 = vld [vmem:[%s0 + $0x1968] sm:$0xff]
  %v828 = vld [vmem:[%s0 + $0x1970] sm:$0xff]
  %v829 = vld [vmem:[%s0 + $0x1978] sm:$0xff]
  %v830 = vld [vmem:[%s0 + $0x1980] sm:$0xff]
  %v831 = vld [vmem:[%s0 + $0x1988] sm:$0xff]
  %v832 = vld [vmem:[%s0 + $0x1990] sm:$0xff]
  %v833 = vld [vmem:[%s0 + $0x1998] sm:$0xff]
  %v834 = vld [vmem:[%s0 + $0x19a0] sm:$0xff]
  %v835 = vld [vmem:[%s0 + $0x19a8] sm:$0xff]
  %v836 = vld [vmem:[%s0 + $0x19b0] sm:$0xff]
  %v837 = vld [vmem:[%s0 + $0x19b8] sm:$0xff]
  %v838 = vld [vmem:[%s0 + $0x19c0] sm:$0xff]
  %v839 = vld [vmem:[%s0 + $0x19c8] sm:$0xff]
  %v840 = vld [vmem:[%s0 + $0x19d0] sm:$0xff]
  %v841 = vld [vmem:[%s0 + $0x19d8] sm:$0xff]
  %v842 = vld [vmem:[%s0 + $0x19e0] sm:$0xff]
  %v843 = vld [vmem:[%s0 + $0x19e8] sm:$0xff]
  %v844 = vld [vmem:[%s0 + $0x19f0] sm:$0xff]
  %v845 = vld [vmem:[%s0 + $0x19f8] sm:$0xff]
  %v846 = vld [vmem:[%s1] sm:$0xff]
  %v847 = vld [vmem:[%s1 + $0x8] sm:$0xff]
  %v848 = vld [vmem:[%s1 + $0x10] sm:$0xff]
  %v849 = vld [vmem:[%s1 + $0x18] sm:$0xff]
  %v850 = vld [vmem:[%s1 + $0x20] sm:$0xff]
  %v851 = vld [vmem:[%s1 + $0x28] sm:$0xff]
  %v852 = vld [vmem:[%s1 + $0x30] sm:$0xff]
  %v853 = vld [vmem:[%s1 + $0x38] sm:$0xff]
  %v854 = vld [vmem:[%s1 + $0x40] sm:$0xff]
  %v855 = vld [vmem:[%s1 + $0x48] sm:$0xff]
  %v856 = vld [vmem:[%s1 + $0x50] sm:$0xff]
  %v857 = vld [vmem:[%s1 + $0x58] sm:$0xff]
  %v858 = vld [vmem:[%s1 + $0x60] sm:$0xff]
  %v859 = vld [vmem:[%s1 + $0x68] sm:$0xff]
  %v860 = vld [vmem:[%s1 + $0x70] sm:$0xff]
  %v861 = vld [vmem:[%s1 + $0x78] sm:$0xff]
  %v862 = vld [vmem:[%s1 + $0x80] sm:$0xff]
  %v863 = vld [vmem:[%s1 + $0x88] sm:$0xff]
  %v864 = vld [vmem:[%s1 + $0x90] sm:$0xff]
  %v865 = vld [vmem:[%s1 + $0x98] sm:$0xff]
  %v866 = vld [vmem:[%s1 + $0xa0] sm:$0xff]
  %v867 = vld [vmem:[%s1 + $0xa8] sm:$0xff]
  %v868 = vld [vmem:[%s1 + $0xb0] sm:$0xff]
  %v869 = vld [vmem:[%s1 + $0xb8] sm:$0xff]
  %v870 = vld [vmem:[%s1 + $0xc0] sm:$0xff]
  %v871 = vld [vmem:[%s1 + $0xc8] sm:$0xff]
  %v872 = vld [vmem:[%s1 + $0xd0] sm:$0xff]
  %v873 = vld [vmem:[%s1 + $0xd8] sm:$0xff]
  %v874 = vld [vmem:[%s1 + $0xe0] sm:$0xff]
  %v875 = vld [vmem:[%s1 + $0xe8] sm:$0xff]
  %v876 = vld [vmem:[%s1 + $0xf0] sm:$0xff]
  %v877 = vld [vmem:[%s1 + $0xf8] sm:$0xff]
  %v878 = vld [vmem:[%s1 + $0x100] sm:$0xff]
  %v879 = vld [vmem:[%s1 + $0x108] sm:$0xff]
  %v880 = vld [vmem:[%s1 + $0x110] sm:$0xff]
  %v881 = vld [vmem:[%s1 + $0x118] sm:$0xff]
  %v882 = vld [vmem:[%s1 + $0x120] sm:$0xff]
  %v883 = vld [vmem:[%s1 + $0x128] sm:$0xff]
  %v884 = vld [vmem:[%s1 + $0x130] sm:$0xff]
  %v885 = vld [vmem:[%s1 + $0x138] sm:$0xff]
  %v886 = vld [vmem:[%s1 + $0x140] sm:$0xff]
  %v887 = vld [vmem:[%s1 + $0x148] sm:$0xff]
  %v888 = vld [vmem:[%s1 + $0x150] sm:$0xff]
  %v889 = vld [vmem:[%s1 + $0x158] sm:$0xff]
  %v890 = vld [vmem:[%s1 + $0x160] sm:$0xff]
  %v891 = vld [vmem:[%s1 + $0x168] sm:$0xff]
  %v892 = vld [vmem:[%s1 + $0x170] sm:$0xff]
  %v893 = vld [vmem:[%s1 + $0x178] sm:$0xff]
  %v894 = vld [vmem:[%s1 + $0x180] sm:$0xff]
  %v895 = vld [vmem:[%s1 + $0x188] sm:$0xff]
  %v896 = vld [vmem:[%s1 + $0x190] sm:$0xff]
  %v897 = vld [vmem:[%s1 + $0x198] sm:$0xff]
  %v898 = vld [vmem:[%s1 + $0x1a0] sm:$0xff]
  %v899 = vld [vmem:[%s1 + $0x1a8] sm:$0xff]
  %v900 = vld [vmem:[%s1 + $0x1b0] sm:$0xff]
  %v901 = vld [vmem:[%s1 + $0x1b8] sm:$0xff]
  %v902 = vld [vmem:[%s1 + $0x1c0] sm:$0xff]
  %v903 = vld [vmem:[%s1 + $0x1c8] sm:$0xff]
  %v904 = vld [vmem:[%s1 + $0x1d0] sm:$0xff]
  %v905 = vld [vmem:[%s1 + $0x1d8] sm:$0xff]
  %v906 = vld [vmem:[%s1 + $0x1e0] sm:$0xff]
  %v907 = vld [vmem:[%s1 + $0x1e8] sm:$0xff]
  %v908 = vld [vmem:[%s1 + $0x1f0] sm:$0xff]
  %v909 = vld [vmem:[%s1 + $0x1f8] sm:$0xff]
  %v910 = vld [vmem:[%s1 + $0x200] sm:$0xff]
  %v911 = vld [vmem:[%s1 + $0x208] sm:$0xff]
  %v912 = vld [vmem:[%s1 + $0x210] sm:$0xff]
  %v913 = vld [vmem:[%s1 + $0x218] sm:$0xff]
  %v914 = vld [vmem:[%s1 + $0x220] sm:$0xff]
  %v915 = vld [vmem:[%s1 + $0x228] sm:$0xff]
  %v916 = vld [vmem:[%s1 + $0x230] sm:$0xff]
  %v917 = vld [vmem:[%s1 + $0x238] sm:$0xff]
  %v918 = vld [vmem:[%s1 + $0x240] sm:$0xff]
  %v919 = vld [vmem:[%s1 + $0x248] sm:$0xff]
  %v920 = vld [vmem:[%s1 + $0x250] sm:$0xff]
  %v921 = vld [vmem:[%s1 + $0x258] sm:$0xff]
  %v922 = vld [vmem:[%s1 + $0x260] sm:$0xff]
  %v923 = vld [vmem:[%s1 + $0x268] sm:$0xff]
  %v924 = vld [vmem:[%s1 + $0x270] sm:$0xff]
  %v925 = vld [vmem:[%s1 + $0x278] sm:$0xff]
  %v926 = vld [vmem:[%s1 + $0x280] sm:$0xff]
  %v927 = vld [vmem:[%s1 + $0x288] sm:$0xff]
  %v928 = vld [vmem:[%s1 + $0x290] sm:$0xff]
  %v929 = vld [vmem:[%s1 + $0x298] sm:$0xff]
  %v930 = vld [vmem:[%s1 + $0x2a0] sm:$0xff]
  %v931 = vld [vmem:[%s1 + $0x2a8] sm:$0xff]
  %v932 = vld [vmem:[%s1 + $0x2b0] sm:$0xff]
  %v933 = vld [vmem:[%s1 + $0x2b8] sm:$0xff]
  %v934 = vld [vmem:[%s1 + $0x2c0] sm:$0xff]
  %v935 = vld [vmem:[%s1 + $0x2c8] sm:$0xff]
  %v936 = vld [vmem:[%s1 + $0x2d0] sm:$0xff]
  %v937 = vld [vmem:[%s1 + $0x2d8] sm:$0xff]
  %v938 = vld [vmem:[%s1 + $0x2e0] sm:$0xff]
  %v939 = vld [vmem:[%s1 + $0x2e8] sm:$0xff]
  %v940 = vld [vmem:[%s1 + $0x2f0] sm:$0xff]
  %v941 = vld [vmem:[%s1 + $0x2f8] sm:$0xff]
  %v942 = vld [vmem:[%s1 + $0x300] sm:$0xff]
  %v943 = vld [vmem:[%s1 + $0x308] sm:$0xff]
  %v944 = vld [vmem:[%s1 + $0x310] sm:$0xff]
  %v945 = vld [vmem:[%s1 + $0x318] sm:$0xff]
  %v946 = vld [vmem:[%s1 + $0x320] sm:$0xff]
  %v947 = vld [vmem:[%s1 + $0x328] sm:$0xff]
  %v948 = vld [vmem:[%s1 + $0x330] sm:$0xff]
  %v949 = vld [vmem:[%s1 + $0x338] sm:$0xff]
  %v950 = vld [vmem:[%s1 + $0x340] sm:$0xff]
  %v951 = vld [vmem:[%s1 + $0x348] sm:$0xff]
  %v952 = vld [vmem:[%s1 + $0x350] sm:$0xff]
  %v953 = vld [vmem:[%s1 + $0x358] sm:$0xff]
  %v954 = vld [vmem:[%s1 + $0x360] sm:$0xff]
  %v955 = vld [vmem:[%s1 + $0x368] sm:$0xff]
  %v956 = vld [vmem:[%s1 + $0x370] sm:$0xff]
  %v957 = vld [vmem:[%s1 + $0x378] sm:$0xff]
  %v958 = vld [vmem:[%s1 + $0x380] sm:$0xff]
  %v959 = vld [vmem:[%s1 + $0x388] sm:$0xff]
  %v960 = vld [vmem:[%s1 + $0x390] sm:$0xff]
  %v961 = vld [vmem:[%s1 + $0x398] sm:$0xff]
  %v962 = vld [vmem:[%s1 + $0x3a0] sm:$0xff]
  %v963 = vld [vmem:[%s1 + $0x3a8] sm:$0xff]
  %v964 = vld [vmem:[%s1 + $0x3b0] sm:$0xff]
  %v965 = vld [vmem:[%s1 + $0x3b8] sm:$0xff]
  %v966 = vld [vmem:[%s1 + $0x3c0] sm:$0xff]
  %v967 = vld [vmem:[%s1 + $0x3c8] sm:$0xff]
  %v968 = vld [vmem:[%s1 + $0x3d0] sm:$0xff]
  %v969 = vld [vmem:[%s1 + $0x3d8] sm:$0xff]
  %v970 = vld [vmem:[%s1 + $0x3e0] sm:$0xff]
  %v971 = vld [vmem:[%s1 + $0x3e8] sm:$0xff]
  %v972 = vld [vmem:[%s1 + $0x3f0] sm:$0xff]
  %v973 = vld [vmem:[%s1 + $0x3f8] sm:$0xff]
  %v974 = vld [vmem:[%s1 + $0x400] sm:$0xff]
  %v975 = vld [vmem:[%s1 + $0x408] sm:$0xff]
  %v976 = vld [vmem:[%s1 + $0x410] sm:$0xff]
  %v977 = vld [vmem:[%s1 + $0x418] sm:$0xff]
  %v978 = vld [vmem:[%s1 + $0x420] sm:$0xff]
  %v979 = vld [vmem:[%s1 + $0x428] sm:$0xff]
  %v980 = vld [vmem:[%s1 + $0x430] sm:$0xff]
  %v981 = vld [vmem:[%s1 + $0x438] sm:$0xff]
  %v982 = vld [vmem:[%s1 + $0x440] sm:$0xff]
  %v983 = vld [vmem:[%s1 + $0x448] sm:$0xff]
  %v984 = vld [vmem:[%s1 + $0x450] sm:$0xff]
  %v985 = vld [vmem:[%s1 + $0x458] sm:$0xff]
  %v986 = vld [vmem:[%s1 + $0x460] sm:$0xff]
  %v987 = vld [vmem:[%s1 + $0x468] sm:$0xff]
  %v988 = vld [vmem:[%s1 + $0x470] sm:$0xff]
  %v989 = vld [vmem:[%s1 + $0x478] sm:$0xff]
  %v990 = vld [vmem:[%s1 + $0x480] sm:$0xff]
  %v991 = vld [vmem:[%s1 + $0x488] sm:$0xff]
  %v992 = vld [vmem:[%s1 + $0x490] sm:$0xff]
  %v993 = vld [vmem:[%s1 + $0x498] sm:$0xff]
  %v994 = vld [vmem:[%s1 + $0x4a0] sm:$0xff]
  %v995 = vld [vmem:[%s1 + $0x4a8] sm:$0xff]
  %v996 = vld [vmem:[%s1 + $0x4b0] sm:$0xff]
  %v997 = vld [vmem:[%s1 + $0x4b8] sm:$0xff]
  %v998 = vld [vmem:[%s1 + $0x4c0] sm:$0xff]
  %v999 = vld [vmem:[%s1 + $0x4c8] sm:$0xff]
  %v1000 = vld [vmem:[%s1 + $0x4d0] sm:$0xff]
  %v1001 = vld [vmem:[%s1 + $0x4d8] sm:$0xff]
  %v1002 = vld [vmem:[%s1 + $0x4e0] sm:$0xff]
  %v1003 = vld [vmem:[%s1 + $0x4e8] sm:$0xff]
  %v1004 = vld [vmem:[%s1 + $0x4f0] sm:$0xff]
  %v1005 = vld [vmem:[%s1 + $0x4f8] sm:$0xff]
  %v1006 = vld [vmem:[%s1 + $0x500] sm:$0xff]
  %v1007 = vld [vmem:[%s1 + $0x508] sm:$0xff]
  %v1008 = vld [vmem:[%s1 + $0x510] sm:$0xff]
  %v1009 = vld [vmem:[%s1 + $0x518] sm:$0xff]
  %v1010 = vld [vmem:[%s1 + $0x520] sm:$0xff]
  %v1011 = vld [vmem:[%s1 + $0x528] sm:$0xff]
  %v1012 = vld [vmem:[%s1 + $0x530] sm:$0xff]
  %v1013 = vld [vmem:[%s1 + $0x538] sm:$0xff]
  %v1014 = vld [vmem:[%s1 + $0x540] sm:$0xff]
  %v1015 = vld [vmem:[%s1 + $0x548] sm:$0xff]
  %v1016 = vld [vmem:[%s1 + $0x550] sm:$0xff]
  %v1017 = vld [vmem:[%s1 + $0x558] sm:$0xff]
  %v1018 = vld [vmem:[%s1 + $0x560] sm:$0xff]
  %v1019 = vld [vmem:[%s1 + $0x568] sm:$0xff]
  %v1020 = vld [vmem:[%s1 + $0x570] sm:$0xff]
  %v1021 = vld [vmem:[%s1 + $0x578] sm:$0xff]
  %v1022 = vld [vmem:[%s1 + $0x580] sm:$0xff]
  %v1023 = vld [vmem:[%s1 + $0x588] sm:$0xff]
  %v1024 = vld [vmem:[%s1 + $0x590] sm:$0xff]
  %v1025 = vld [vmem:[%s1 + $0x598] sm:$0xff]
  %v1026 = vld [vmem:[%s1 + $0x5a0] sm:$0xff]
  %v1027 = vld [vmem:[%s1 + $0x5a8] sm:$0xff]
  %v1028 = vld [vmem:[%s1 + $0x5b0] sm:$0xff]
  %v1029 = vld [vmem:[%s1 + $0x5b8] sm:$0xff]
  %v1030 = vld [vmem:[%s1 + $0x5c0] sm:$0xff]
  %v1031 = vld [vmem:[%s1 + $0x5c8] sm:$0xff]
  %v1032 = vld [vmem:[%s1 + $0x5d0] sm:$0xff]
  %v1033 = vld [vmem:[%s1 + $0x5d8] sm:$0xff]
  %v1034 = vld [vmem:[%s1 + $0x5e0] sm:$0xff]
  %v1035 = vld [vmem:[%s1 + $0x5e8] sm:$0xff]
  %v1036 = vld [vmem:[%s1 + $0x5f0] sm:$0xff]
  %v1037 = vld [vmem:[%s1 + $0x5f8] sm:$0xff]
  %v1038 = vld [vmem:[%s1 + $0x600] sm:$0xff]
  %v1039 = vld [vmem:[%s1 + $0x608] sm:$0xff]
  %v1040 = vld [vmem:[%s1 + $0x610] sm:$0xff]
  %v1041 = vld [vmem:[%s1 + $0x618] sm:$0xff]
  %v1042 = vld [vmem:[%s1 + $0x620] sm:$0xff]
  %v1043 = vld [vmem:[%s1 + $0x628] sm:$0xff]
  %v1044 = vld [vmem:[%s1 + $0x630] sm:$0xff]
  %v1045 = vld [vmem:[%s1 + $0x638] sm:$0xff]
  %v1046 = vld [vmem:[%s2] sm:$0x1]
  %v1048 = vlaneseq
  %v1049 = vshrl.u32 %v1048, 7
  %v1050 = vsub.s32 0, %v1049
  %v1051 = vrot.slane %v1046, %v1050
  %vm1053 = vcmask 523264
  %v1055 = vsel %vm1053, %v26, 0
  %v1058 = vsel %vm1053, %v39, 0
  %v1061 = vsel %vm1053, %v52, 0
  %v1064 = vsel %vm1053, %v65, 0
  %v1067 = vsel %vm1053, %v78, 0
  %v1070 = vsel %vm1053, %v91, 0
  %v1073 = vsel %vm1053, %v104, 0
  %v1076 = vsel %vm1053, %v117, 0
  %v1079 = vsel %vm1053, %v130, 0
  %v1082 = vsel %vm1053, %v143, 0
  %v1085 = vsel %vm1053, %v156, 0
  %v1088 = vsel %vm1053, %v169, 0
  %v1091 = vsel %vm1053, %v182, 0
  %v1094 = vsel %vm1053, %v195, 0
  %v1097 = vsel %vm1053, %v208, 0
  %v1100 = vsel %vm1053, %v221, 0
  %v1103 = vsel %vm1053, %v234, 0
  %v1106 = vsel %vm1053, %v247, 0
  %v1109 = vsel %vm1053, %v260, 0
  %v1112 = vsel %vm1053, %v273, 0
  %v1115 = vsel %vm1053, %v286, 0
  %v1118 = vsel %vm1053, %v299, 0
  %v1121 = vsel %vm1053, %v312, 0
  %v1124 = vsel %vm1053, %v325, 0
  %v1127 = vsel %vm1053, %v338, 0
  %v1130 = vsel %vm1053, %v351, 0
  %v1133 = vsel %vm1053, %v364, 0
  %v1136 = vsel %vm1053, %v377, 0
  %v1139 = vsel %vm1053, %v390, 0
  %v1142 = vsel %vm1053, %v403, 0
  %v1145 = vsel %vm1053, %v416, 0
  %v1148 = vsel %vm1053, %v429, 0
  %v1151 = vsel %vm1053, %v442, 0
  %v1154 = vsel %vm1053, %v455, 0
  %v1157 = vsel %vm1053, %v468, 0
  %v1160 = vsel %vm1053, %v481, 0
  %v1163 = vsel %vm1053, %v494, 0
  %v1166 = vsel %vm1053, %v507, 0
  %v1169 = vsel %vm1053, %v520, 0
  %v1172 = vsel %vm1053, %v533, 0
  %v1175 = vsel %vm1053, %v546, 0
  %v1178 = vsel %vm1053, %v559, 0
  %v1181 = vsel %vm1053, %v572, 0
  %v1184 = vsel %vm1053, %v585, 0
  %v1187 = vsel %vm1053, %v598, 0
  %v1190 = vsel %vm1053, %v611, 0
  %v1193 = vsel %vm1053, %v624, 0
  %v1196 = vsel %vm1053, %v637, 0
  %v1199 = vsel %vm1053, %v650, 0
  %v1202 = vsel %vm1053, %v663, 0
  %v1205 = vsel %vm1053, %v676, 0
  %v1208 = vsel %vm1053, %v689, 0
  %v1211 = vsel %vm1053, %v702, 0
  %v1214 = vsel %vm1053, %v715, 0
  %v1217 = vsel %vm1053, %v728, 0
  %v1220 = vsel %vm1053, %v741, 0
  %v1223 = vsel %vm1053, %v754, 0
  %v1226 = vsel %vm1053, %v767, 0
  %v1229 = vsel %vm1053, %v780, 0
  %v1232 = vsel %vm1053, %v793, 0
  %v1235 = vsel %vm1053, %v806, 0
  %v1238 = vsel %vm1053, %v819, 0
  %v1241 = vsel %vm1053, %v832, 0
  %v1244 = vsel %vm1053, %v845, 0
  %1246 = vmatprep.subr.mxu0 0.0
  %1247 = vmatpush1.msra.mxu0 %v846
  %1248 = vmatprep.subr.mxu0 0.0
  %1249 = vmatpush1.msra.mxu0 %v847
  %1250 = vmatprep.subr.mxu0 0.0
  %1251 = vmatpush1.msra.mxu0 %v848
  %1252 = vmatprep.subr.mxu0 0.0
  %1253 = vmatpush1.msra.mxu0 %v849
  %1254 = vmatprep.subr.mxu0 0.0
  %1255 = vmatpush1.msra.mxu0 %v850
  %1256 = vmatprep.subr.mxu0 0.0
  %1257 = vmatpush1.msra.mxu0 %v851
  %1258 = vmatprep.subr.mxu0 0.0
  %1259 = vmatpush1.msra.mxu0 %v852
  %1260 = vmatprep.subr.mxu0 0.0
  %1261 = vmatpush1.msra.mxu0 %v853
  %1262 = vmatprep.subr.mxu0 0.0
  %1263 = vmatpush1.msra.mxu0 %v854
  %1264 = vmatprep.subr.mxu0 0.0
  %1265 = vmatpush1.msra.mxu0 %v855
  %1266 = vmatprep.subr.mxu0 0.0
  %1267 = vmatpush1.msra.mxu0 %v856
  %1268 = vmatprep.subr.mxu0 0.0
  %1269 = vmatpush1.msra.mxu0 %v857
  %1270 = vmatprep.subr.mxu0 0.0
  %1271 = vmatpush1.msra.mxu0 %v858
  %1272 = vmatprep.subr.mxu0 0.0
  %1273 = vmatpush1.msra.mxu0 %v859
  %1274 = vmatprep.subr.mxu0 0.0
  %1275 = vmatpush1.msra.mxu0 %v860
  %1276 = vmatprep.subr.mxu0 0.0
  %1277 = vmatpush1.msra.mxu0 %v861
  %1278 = vmatprep.subr.mxu0 0.0
  %1279 = vmatpush1.msra.mxu0 %v862
  %1280 = vmatprep.subr.mxu0 0.0
  %1281 = vmatpush1.msra.mxu0 %v863
  %1282 = vmatprep.subr.mxu0 0.0
  %1283 = vmatpush1.msra.mxu0 %v864
  %1284 = vmatprep.subr.mxu0 0.0
  %1285 = vmatpush1.msra.mxu0 %v865
  %1286 = vmatprep.subr.mxu0 0.0
  %1287 = vmatpush1.msra.mxu0 %v866
  %1288 = vmatprep.subr.mxu0 0.0
  %1289 = vmatpush1.msra.mxu0 %v867
  %1290 = vmatprep.subr.mxu0 0.0
  %1291 = vmatpush1.msra.mxu0 %v868
  %1292 = vmatprep.subr.mxu0 0.0
  %1293 = vmatpush1.msra.mxu0 %v869
  %1294 = vmatprep.subr.mxu0 0.0
  %1295 = vmatpush1.msra.mxu0 %v870
  %1296 = vmatprep.subr.mxu0 0.0
  %1297 = vmatpush1.msra.mxu0 %v871
  %1298 = vmatprep.subr.mxu0 0.0
  %1299 = vmatpush1.msra.mxu0 %v872
  %1300 = vmatprep.subr.mxu0 0.0
  %1301 = vmatpush1.msra.mxu0 %v873
  %1302 = vmatprep.subr.mxu0 0.0
  %1303 = vmatpush1.msra.mxu0 %v874
  %1304 = vmatprep.subr.mxu0 0.0
  %1305 = vmatpush1.msra.mxu0 %v875
  %1306 = vmatprep.subr.mxu0 0.0
  %1307 = vmatpush1.msra.mxu0 %v876
  %1308 = vmatprep.subr.mxu0 0.0
  %1309 = vmatpush1.msra.mxu0 %v877
  %1310 = vmatprep.mubr.f32.mxu0 %v15
  %1311 = vmatmul.mubr.f32.gmra.mrb[0].mxu0 %v14
  %v1312 = vpop.f32.mrb[0].mxu0
  %v1313 = vadd.f32 %v1051, %v1312
  %v1314 = vpop.f32.mrb[0].mxu0
  %1315 = vmatprep.mubr.f32.mxu0 %v28
  %1316 = vmatmul.mubr.f32.gmra.mrb[0].mxu0 %v27
  %v1317 = vpop.f32.mrb[0].mxu0
  %v1318 = vadd.f32 %v1051, %v1317
  %v1319 = vpop.f32.mrb[0].mxu0
  %1320 = vmatprep.mubr.f32.mxu0 %v41
  %1321 = vmatmul.mubr.f32.gmra.mrb[0].mxu0 %v40
  %v1322 = vpop.f32.mrb[0].mxu0
  %v1323 = vadd.f32 %v1051, %v1322
  %v1324 = vpop.f32.mrb[0].mxu0
  %1325 = vmatprep.mubr.f32.mxu0 %v54
  %1326 = vmatmul.mubr.f32.gmra.mrb[0].mxu0 %v53
  %v1327 = vpop.f32.mrb[0].mxu0
  %v1328 = vadd.f32 %v1051, %v1327
  %v1329 = vpop.f32.mrb[0].mxu0
  %1330 = vmatprep.mubr.f32.mxu0 %v67
  %1331 = vmatmul.mubr.f32.gmra.mrb[0].mxu0 %v66
  %v1332 = vpop.f32.mrb[0].mxu0
  %v1333 = vadd.f32 %v1051, %v1332
  %v1334 = vpop.f32.mrb[0].mxu0
  %1335 = vmatprep.mubr.f32.mxu0 %v80
  %1336 = vmatmul.mubr.f32.gmra.mrb[0].mxu0 %v79
  %v1337 = vpop.f32.mrb[0].mxu0
  %v1338 = vadd.f32 %v1051, %v1337
  %v1339 = vpop.f32.mrb[0].mxu0
  %1340 = vmatprep.mubr.f32.mxu0 %v93
  %1341 = vmatmul.mubr.f32.gmra.mrb[0].mxu0 %v92
  %v1342 = vpop.f32.mrb[0].mxu0
  %v1343 = vadd.f32 %v1051, %v1342
  %v1344 = vpop.f32.mrb[0].mxu0
  %1345 = vmatprep.mubr.f32.mxu0 %v106
  %1346 = vmatmul.mubr.f32.gmra.mrb[0].mxu0 %v105
  %v1347 = vpop.f32.mrb[0].mxu0
  %v1348 = vadd.f32 %v1051, %v1347
  %v1349 = vpop.f32.mrb[0].mxu0
  %1350 = vmatprep.mubr.f32.mxu0 %v119
  %1351 = vmatmul.mubr.f32.gmra.mrb[0].mxu0 %v118
  %v1352 = vpop.f32.mrb[0].mxu0
  %v1353 = vadd.f32 %v1051, %v1352
  %v1354 = vpop.f32.mrb[0].mxu0
  %1355 = vmatprep.mubr.f32.mxu0 %v132
  %1356 = vmatmul.mubr.f32.gmra.mrb[0].mxu0 %v131
  %v1357 = vpop.f32.mrb[0].mxu0
  %v1358 = vadd.f32 %v1051, %v1357
  %v1359 = vpop.f32.mrb[0].mxu0
  %1360 = vmatprep.mubr.f32.mxu0 %v145
  %1361 = vmatmul.mubr.f32.gmra.mrb[0].mxu0 %v144
  %v1362 = vpop.f32.mrb[0].mxu0
  %v1363 = vadd.f32 %v1051, %v1362
  %v1364 = vpop.f32.mrb[0].mxu0
  %1365 = vmatprep.mubr.f32.mxu0 %v158
  %1366 = vmatmul.mubr.f32.gmra.mrb[0].mxu0 %v157
  %v1367 = vpop.f32.mrb[0].mxu0
  %v1368 = vadd.f32 %v1051, %v1367
  %v1369 = vpop.f32.mrb[0].mxu0
  %1370 = vmatprep.mubr.f32.mxu0 %v171
  %1371 = vmatmul.mubr.f32.gmra.mrb[0].mxu0 %v170
  %v1372 = vpop.f32.mrb[0].mxu0
  %v1373 = vadd.f32 %v1051, %v1372
  %v1374 = vpop.f32.mrb[0].mxu0
  %1375 = vmatprep.mubr.f32.mxu0 %v184
  %1376 = vmatmul.mubr.f32.gmra.mrb[0].mxu0 %v183
  %v1377 = vpop.f32.mrb[0].mxu0
  %v1378 = vadd.f32 %v1051, %v1377
  %v1379 = vpop.f32.mrb[0].mxu0
  %1380 = vmatprep.mubr.f32.mxu0 %v197
  %1381 = vmatmul.mubr.f32.gmra.mrb[0].mxu0 %v196
  %v1382 = vpop.f32.mrb[0].mxu0
  %v1383 = vadd.f32 %v1051, %v1382
  %v1384 = vpop.f32.mrb[0].mxu0
  %1385 = vmatprep.mubr.f32.mxu0 %v210
  %1386 = vmatmul.mubr.f32.gmra.mrb[0].mxu0 %v209
  %v1387 = vpop.f32.mrb[0].mxu0
  %v1388 = vadd.f32 %v1051, %v1387
  %v1389 = vpop.f32.mrb[0].mxu0
  %1390 = vmatprep.mubr.f32.mxu0 %v223
  %1391 = vmatmul.mubr.f32.gmra.mrb[0].mxu0 %v222
  %v1392 = vpop.f32.mrb[0].mxu0
  %v1393 = vadd.f32 %v1051, %v1392
  %v1394 = vpop.f32.mrb[0].mxu0
  %1395 = vmatprep.mubr.f32.mxu0 %v236
  %1396 = vmatmul.mubr.f32.gmra.mrb[0].mxu0 %v235
  %v1397 = vpop.f32.mrb[0].mxu0
  %v1398 = vadd.f32 %v1051, %v1397
  %v1399 = vpop.f32.mrb[0].mxu0
  %1400 = vmatprep.mubr.f32.mxu0 %v249
  %1401 = vmatmul.mubr.f32.gmra.mrb[0].mxu0 %v248
  %v1402 = vpop.f32.mrb[0].mxu0
  %v1403 = vadd.f32 %v1051, %v1402
  %v1404 = vpop.f32.mrb[0].mxu0
  %1405 = vmatprep.mubr.f32.mxu0 %v262
  %1406 = vmatmul.mubr.f32.gmra.mrb[0].mxu0 %v261
  %v1407 = vpop.f32.mrb[0].mxu0
  %v1408 = vadd.f32 %v1051, %v1407
  %v1409 = vpop.f32.mrb[0].mxu0
  %1410 = vmatprep.mubr.f32.mxu0 %v275
  %1411 = vmatmul.mubr.f32.gmra.mrb[0].mxu0 %v274
  %v1412 = vpop.f32.mrb[0].mxu0
  %v1413 = vadd.f32 %v1051, %v1412
  %v1414 = vpop.f32.mrb[0].mxu0
  %1415 = vmatprep.mubr.f32.mxu0 %v288
  %1416 = vmatmul.mubr.f32.gmra.mrb[0].mxu0 %v287
  %v1417 = vpop.f32.mrb[0].mxu0
  %v1418 = vadd.f32 %v1051, %v1417
  %v1419 = vpop.f32.mrb[0].mxu0
  %1420 = vmatprep.mubr.f32.mxu0 %v301
  %1421 = vmatmul.mubr.f32.gmra.mrb[0].mxu0 %v300
  %v1422 = vpop.f32.mrb[0].mxu0
  %v1423 = vadd.f32 %v1051, %v1422
  %v1424 = vpop.f32.mrb[0].mxu0
  %1425 = vmatprep.mubr.f32.mxu0 %v314
  %1426 = vmatmul.mubr.f32.gmra.mrb[0].mxu0 %v313
  %v1427 = vpop.f32.mrb[0].mxu0
  %v1428 = vadd.f32 %v1051, %v1427
  %v1429 = vpop.f32.mrb[0].mxu0
  %1430 = vmatprep.mubr.f32.mxu0 %v327
  %1431 = vmatmul.mubr.f32.gmra.mrb[0].mxu0 %v326
  %v1432 = vpop.f32.mrb[0].mxu0
  %v1433 = vadd.f32 %v1051, %v1432
  %v1434 = vpop.f32.mrb[0].mxu0
  %1435 = vmatprep.mubr.f32.mxu0 %v340
  %1436 = vmatmul.mubr.f32.gmra.mrb[0].mxu0 %v339
  %v1437 = vpop.f32.mrb[0].mxu0
  %v1438 = vadd.f32 %v1051, %v1437
  %v1439 = vpop.f32.mrb[0].mxu0
  %1440 = vmatprep.mubr.f32.mxu0 %v353
  %1441 = vmatmul.mubr.f32.gmra.mrb[0].mxu0 %v352
  %v1442 = vpop.f32.mrb[0].mxu0
  %v1443 = vadd.f32 %v1051, %v1442
  %v1444 = vpop.f32.mrb[0].mxu0
  %1445 = vmatprep.mubr.f32.mxu0 %v366
  %1446 = vmatmul.mubr.f32.gmra.mrb[0].mxu0 %v365
  %v1447 = vpop.f32.mrb[0].mxu0
  %v1448 = vadd.f32 %v1051, %v1447
  %v1449 = vpop.f32.mrb[0].mxu0
  %1450 = vmatprep.mubr.f32.mxu0 %v379
  %1451 = vmatmul.mubr.f32.gmra.mrb[0].mxu0 %v378
  %v1452 = vpop.f32.mrb[0].mxu0
  %v1453 = vadd.f32 %v1051, %v1452
  %v1454 = vpop.f32.mrb[0].mxu0
  %1455 = vmatprep.mubr.f32.mxu0 %v392
  %1456 = vmatmul.mubr.f32.gmra.mrb[0].mxu0 %v391
  %v1457 = vpop.f32.mrb[0].mxu0
  %v1458 = vadd.f32 %v1051, %v1457
  %v1459 = vpop.f32.mrb[0].mxu0
  %1460 = vmatprep.mubr.f32.mxu0 %v405
  %1461 = vmatmul.mubr.f32.gmra.mrb[0].mxu0 %v404
  %v1462 = vpop.f32.mrb[0].mxu0
  %v1463 = vadd.f32 %v1051, %v1462
  %v1464 = vpop.f32.mrb[0].mxu0
  %1465 = vmatprep.mubr.f32.mxu0 %v418
  %1466 = vmatmul.mubr.f32.gmra.mrb[0].mxu0 %v417
  %v1467 = vpop.f32.mrb[0].mxu0
  %v1468 = vadd.f32 %v1051, %v1467
  %v1469 = vpop.f32.mrb[0].mxu0
  %1470 = vmatprep.mubr.f32.mxu0 %v431
  %1471 = vmatmul.mubr.f32.gmra.mrb[0].mxu0 %v430
  %v1472 = vpop.f32.mrb[0].mxu0
  %v1473 = vadd.f32 %v1051, %v1472
  %v1474 = vpop.f32.mrb[0].mxu0
  %1475 = vmatprep.mubr.f32.mxu0 %v444
  %1476 = vmatmul.mubr.f32.gmra.mrb[0].mxu0 %v443
  %v1477 = vpop.f32.mrb[0].mxu0
  %v1478 = vadd.f32 %v1051, %v1477
  %v1479 = vpop.f32.mrb[0].mxu0
  %1480 = vmatprep.mubr.f32.mxu0 %v457
  %1481 = vmatmul.mubr.f32.gmra.mrb[0].mxu0 %v456
  %v1482 = vpop.f32.mrb[0].mxu0
  %v1483 = vadd.f32 %v1051, %v1482
  %v1484 = vpop.f32.mrb[0].mxu0
  %1485 = vmatprep.mubr.f32.mxu0 %v470
  %1486 = vmatmul.mubr.f32.gmra.mrb[0].mxu0 %v469
  %v1487 = vpop.f32.mrb[0].mxu0
  %v1488 = vadd.f32 %v1051, %v1487
  %v1489 = vpop.f32.mrb[0].mxu0
  %1490 = vmatprep.mubr.f32.mxu0 %v483
  %1491 = vmatmul.mubr.f32.gmra.mrb[0].mxu0 %v482
  %v1492 = vpop.f32.mrb[0].mxu0
  %v1493 = vadd.f32 %v1051, %v1492
  %v1494 = vpop.f32.mrb[0].mxu0
  %1495 = vmatprep.mubr.f32.mxu0 %v496
  %1496 = vmatmul.mubr.f32.gmra.mrb[0].mxu0 %v495
  %v1497 = vpop.f32.mrb[0].mxu0
  %v1498 = vadd.f32 %v1051, %v1497
  %v1499 = vpop.f32.mrb[0].mxu0
  %1500 = vmatprep.mubr.f32.mxu0 %v509
  %1501 = vmatmul.mubr.f32.gmra.mrb[0].mxu0 %v508
  %v1502 = vpop.f32.mrb[0].mxu0
  %v1503 = vadd.f32 %v1051, %v1502
  %v1504 = vpop.f32.mrb[0].mxu0
  %1505 = vmatprep.mubr.f32.mxu0 %v522
  %1506 = vmatmul.mubr.f32.gmra.mrb[0].mxu0 %v521
  %v1507 = vpop.f32.mrb[0].mxu0
  %v1508 = vadd.f32 %v1051, %v1507
  %v1509 = vpop.f32.mrb[0].mxu0
  %1510 = vmatprep.mubr.f32.mxu0 %v535
  %1511 = vmatmul.mubr.f32.gmra.mrb[0].mxu0 %v534
  %v1512 = vpop.f32.mrb[0].mxu0
  %v1513 = vadd.f32 %v1051, %v1512
  %v1514 = vpop.f32.mrb[0].mxu0
  %1515 = vmatprep.mubr.f32.mxu0 %v548
  %1516 = vmatmul.mubr.f32.gmra.mrb[0].mxu0 %v547
  %v1517 = vpop.f32.mrb[0].mxu0
  %v1518 = vadd.f32 %v1051, %v1517
  %v1519 = vpop.f32.mrb[0].mxu0
  %1520 = vmatprep.mubr.f32.mxu0 %v561
  %1521 = vmatmul.mubr.f32.gmra.mrb[0].mxu0 %v560
  %v1522 = vpop.f32.mrb[0].mxu0
  %v1523 = vadd.f32 %v1051, %v1522
  %v1524 = vpop.f32.mrb[0].mxu0
  %1525 = vmatprep.mubr.f32.mxu0 %v574
  %1526 = vmatmul.mubr.f32.gmra.mrb[0].mxu0 %v573
  %v1527 = vpop.f32.mrb[0].mxu0
  %v1528 = vadd.f32 %v1051, %v1527
  %v1529 = vpop.f32.mrb[0].mxu0
  %1530 = vmatprep.mubr.f32.mxu0 %v587
  %1531 = vmatmul.mubr.f32.gmra.mrb[0].mxu0 %v586
  %v1532 = vpop.f32.mrb[0].mxu0
  %v1533 = vadd.f32 %v1051, %v1532
  %v1534 = vpop.f32.mrb[0].mxu0
  %1535 = vmatprep.mubr.f32.mxu0 %v600
  %1536 = vmatmul.mubr.f32.gmra.mrb[0].mxu0 %v599
  %v1537 = vpop.f32.mrb[0].mxu0
  %v1538 = vadd.f32 %v1051, %v1537
  %v1539 = vpop.f32.mrb[0].mxu0
  %1540 = vmatprep.mubr.f32.mxu0 %v613
  %1541 = vmatmul.mubr.f32.gmra.mrb[0].mxu0 %v612
  %v1542 = vpop.f32.mrb[0].mxu0
  %v1543 = vadd.f32 %v1051, %v1542
  %v1544 = vpop.f32.mrb[0].mxu0
  %1545 = vmatprep.mubr.f32.mxu0 %v626
  %1546 = vmatmul.mubr.f32.gmra.mrb[0].mxu0 %v625
  %v1547 = vpop.f32.mrb[0].mxu0
  %v1548 = vadd.f32 %v1051, %v1547
  %v1549 = vpop.f32.mrb[0].mxu0
  %1550 = vmatprep.mubr.f32.mxu0 %v639
  %1551 = vmatmul.mubr.f32.gmra.mrb[0].mxu0 %v638
  %v1552 = vpop.f32.mrb[0].mxu0
  %v1553 = vadd.f32 %v1051, %v1552
  %v1554 = vpop.f32.mrb[0].mxu0
  %1555 = vmatprep.mubr.f32.mxu0 %v652
  %1556 = vmatmul.mubr.f32.gmra.mrb[0].mxu0 %v651
  %v1557 = vpop.f32.mrb[0].mxu0
  %v1558 = vadd.f32 %v1051, %v1557
  %v1559 = vpop.f32.mrb[0].mxu0
  %1560 = vmatprep.mubr.f32.mxu0 %v665
  %1561 = vmatmul.mubr.f32.gmra.mrb[0].mxu0 %v664
  %v1562 = vpop.f32.mrb[0].mxu0
  %v1563 = vadd.f32 %v1051, %v1562
  %v1564 = vpop.f32.mrb[0].mxu0
  %1565 = vmatprep.mubr.f32.mxu0 %v678
  %1566 = vmatmul.mubr.f32.gmra.mrb[0].mxu0 %v677
  %v1567 = vpop.f32.mrb[0].mxu0
  %v1568 = vadd.f32 %v1051, %v1567
  %v1569 = vpop.f32.mrb[0].mxu0
  %1570 = vmatprep.mubr.f32.mxu0 %v691
  %1571 = vmatmul.mubr.f32.gmra.mrb[0].mxu0 %v690
  %v1572 = vpop.f32.mrb[0].mxu0
  %v1573 = vadd.f32 %v1051, %v1572
  %v1574 = vpop.f32.mrb[0].mxu0
  %1575 = vmatprep.mubr.f32.mxu0 %v704
  %1576 = vmatmul.mubr.f32.gmra.mrb[0].mxu0 %v703
  %v1577 = vpop.f32.mrb[0].mxu0
  %v1578 = vadd.f32 %v1051, %v1577
  %v1579 = vpop.f32.mrb[0].mxu0
  %1580 = vmatprep.mubr.f32.mxu0 %v717
  %1581 = vmatmul.mubr.f32.gmra.mrb[0].mxu0 %v716
  %v1582 = vpop.f32.mrb[0].mxu0
  %v1583 = vadd.f32 %v1051, %v1582
  %v1584 = vpop.f32.mrb[0].mxu0
  %1585 = vmatprep.mubr.f32.mxu0 %v730
  %1586 = vmatmul.mubr.f32.gmra.mrb[0].mxu0 %v729
  %v1587 = vpop.f32.mrb[0].mxu0
  %v1588 = vadd.f32 %v1051, %v1587
  %v1589 = vpop.f32.mrb[0].mxu0
  %1590 = vmatprep.mubr.f32.mxu0 %v743
  %1591 = vmatmul.mubr.f32.gmra.mrb[0].mxu0 %v742
  %v1592 = vpop.f32.mrb[0].mxu0
  %v1593 = vadd.f32 %v1051, %v1592
  %v1594 = vpop.f32.mrb[0].mxu0
  %1595 = vmatprep.mubr.f32.mxu0 %v756
  %1596 = vmatmul.mubr.f32.gmra.mrb[0].mxu0 %v755
  %v1597 = vpop.f32.mrb[0].mxu0
  %v1598 = vadd.f32 %v1051, %v1597
  %v1599 = vpop.f32.mrb[0].mxu0
  %1600 = vmatprep.mubr.f32.mxu0 %v769
  %1601 = vmatmul.mubr.f32.gmra.mrb[0].mxu0 %v768
  %v1602 = vpop.f32.mrb[0].mxu0
  %v1603 = vadd.f32 %v1051, %v1602
  %v1604 = vpop.f32.mrb[0].mxu0
  %1605 = vmatprep.mubr.f32.mxu0 %v782
  %1606 = vmatmul.mubr.f32.gmra.mrb[0].mxu0 %v781
  %v1607 = vpop.f32.mrb[0].mxu0
  %v1608 = vadd.f32 %v1051, %v1607
  %v1609 = vpop.f32.mrb[0].mxu0
  %1610 = vmatprep.mubr.f32.mxu0 %v795
  %1611 = vmatmul.mubr.f32.gmra.mrb[0].mxu0 %v794
  %v1612 = vpop.f32.mrb[0].mxu0
  %v1613 = vadd.f32 %v1051, %v1612
  %v1614 = vpop.f32.mrb[0].mxu0
  %1615 = vmatprep.mubr.f32.mxu0 %v808
  %1616 = vmatmul.mubr.f32.gmra.mrb[0].mxu0 %v807
  %v1617 = vpop.f32.mrb[0].mxu0
  %v1618 = vadd.f32 %v1051, %v1617
  %v1619 = vpop.f32.mrb[0].mxu0
  %1620 = vmatprep.mubr.f32.mxu0 %v821
  %1621 = vmatmul.mubr.f32.gmra.mrb[0].mxu0 %v820
  %v1622 = vpop.f32.mrb[0].mxu0
  %v1623 = vadd.f32 %v1051, %v1622
  %v1624 = vpop.f32.mrb[0].mxu0
  %1625 = vmatprep.mubr.f32.mxu0 %v834
  %1626 = vmatmul.mubr.f32.gmra.mrb[0].mxu0 %v833
  %v1627 = vpop.f32.mrb[0].mxu0
  %v1628 = vadd.f32 %v1051, %v1627
  %v1629 = vpop.f32.mrb[0].mxu0
  %1630 = vdwg.mxu0
  %1631 = vmatprep.subr.mxu0 0.0
  %1632 = vmatpush1.msra.mxu0 %v878
  %1633 = vmatprep.subr.mxu0 0.0
  %1634 = vmatpush1.msra.mxu0 %v879
  %1635 = vmatprep.subr.mxu0 0.0
  %1636 = vmatpush1.msra.mxu0 %v880
  %1637 = vmatprep.subr.mxu0 0.0
  %1638 = vmatpush1.msra.mxu0 %v881
  %1639 = vmatprep.subr.mxu0 0.0
  %1640 = vmatpush1.msra.mxu0 %v882
  %1641 = vmatprep.subr.mxu0 0.0
  %1642 = vmatpush1.msra.mxu0 %v883
  %1643 = vmatprep.subr.mxu0 0.0
  %1644 = vmatpush1.msra.mxu0 %v884
  %1645 = vmatprep.subr.mxu0 0.0
  %1646 = vmatpush1.msra.mxu0 %v885
  %1647 = vmatprep.subr.mxu0 0.0
  %1648 = vmatpush1.msra.mxu0 %v886
  %1649 = vmatprep.subr.mxu0 0.0
  %1650 = vmatpush1.msra.mxu0 %v887
  %1651 = vmatprep.subr.mxu0 0.0
  %1652 = vmatpush1.msra.mxu0 %v888
  %1653 = vmatprep.subr.mxu0 0.0
  %1654 = vmatpush1.msra.mxu0 %v889
  %1655 = vmatprep.subr.mxu0 0.0
  %1656 = vmatpush1.msra.mxu0 %v890
  %1657 = vmatprep.subr.mxu0 0.0
  %1658 = vmatpush1.msra.mxu0 %v891
  %1659 = vmatprep.subr.mxu0 0.0
  %1660 = vmatpush1.msra.mxu0 %v892
  %1661 = vmatprep.subr.mxu0 0.0
  %1662 = vmatpush1.msra.mxu0 %v893
  %1663 = vmatprep.subr.mxu0 0.0
  %1664 = vmatpush1.msra.mxu0 %v894
  %1665 = vmatprep.subr.mxu0 0.0
  %1666 = vmatpush1.msra.mxu0 %v895
  %1667 = vmatprep.subr.mxu0 0.0
  %1668 = vmatpush1.msra.mxu0 %v896
  %1669 = vmatprep.subr.mxu0 0.0
  %1670 = vmatpush1.msra.mxu0 %v897
  %1671 = vmatprep.subr.mxu0 0.0
  %1672 = vmatpush1.msra.mxu0 %v898
  %1673 = vmatprep.subr.mxu0 0.0
  %1674 = vmatpush1.msra.mxu0 %v899
  %1675 = vmatprep.subr.mxu0 0.0
  %1676 = vmatpush1.msra.mxu0 %v900
  %1677 = vmatprep.subr.mxu0 0.0
  %1678 = vmatpush1.msra.mxu0 %v901
  %1679 = vmatprep.subr.mxu0 0.0
  %1680 = vmatpush1.msra.mxu0 %v902
  %1681 = vmatprep.subr.mxu0 0.0
  %1682 = vmatpush1.msra.mxu0 %v903
  %1683 = vmatprep.subr.mxu0 0.0
  %1684 = vmatpush1.msra.mxu0 %v904
  %1685 = vmatprep.subr.mxu0 0.0
  %1686 = vmatpush1.msra.mxu0 %v905
  %1687 = vmatprep.subr.mxu0 0.0
  %1688 = vmatpush1.msra.mxu0 %v906
  %1689 = vmatprep.subr.mxu0 0.0
  %1690 = vmatpush1.msra.mxu0 %v907
  %1691 = vmatprep.subr.mxu0 0.0
  %1692 = vmatpush1.msra.mxu0 %v908
  %1693 = vmatprep.subr.mxu0 0.0
  %1694 = vmatpush1.msra.mxu0 %v909
  %1695 = vmatprep.mubr.f32.mxu0 %v17
  %1696 = vmatmul.mubr.f32.gmra.mrb[0].mxu0 %v16
  %v1697 = vpop.f32.mrb[0].mxu0
  %v1698 = vadd.f32 %v1313, %v1697
  %v1699 = vpop.f32.mrb[0].mxu0
  %1700 = vmatprep.mubr.f32.mxu0 %v30
  %1701 = vmatmul.mubr.f32.gmra.mrb[0].mxu0 %v29
  %v1702 = vpop.f32.mrb[0].mxu0
  %v1703 = vadd.f32 %v1318, %v1702
  %v1704 = vpop.f32.mrb[0].mxu0
  %1705 = vmatprep.mubr.f32.mxu0 %v43
  %1706 = vmatmul.mubr.f32.gmra.mrb[0].mxu0 %v42
  %v1707 = vpop.f32.mrb[0].mxu0
  %v1708 = vadd.f32 %v1323, %v1707
  %v1709 = vpop.f32.mrb[0].mxu0
  %1710 = vmatprep.mubr.f32.mxu0 %v56
  %1711 = vmatmul.mubr.f32.gmra.mrb[0].mxu0 %v55
  %v1712 = vpop.f32.mrb[0].mxu0
  %v1713 = vadd.f32 %v1328, %v1712
  %v1714 = vpop.f32.mrb[0].mxu0
  %1715 = vmatprep.mubr.f32.mxu0 %v69
  %1716 = vmatmul.mubr.f32.gmra.mrb[0].mxu0 %v68
  %v1717 = vpop.f32.mrb[0].mxu0
  %v1718 = vadd.f32 %v1333, %v1717
  %v1719 = vpop.f32.mrb[0].mxu0
  %1720 = vmatprep.mubr.f32.mxu0 %v82
  %1721 = vmatmul.mubr.f32.gmra.mrb[0].mxu0 %v81
  %v1722 = vpop.f32.mrb[0].mxu0
  %v1723 = vadd.f32 %v1338, %v1722
  %v1724 = vpop.f32.mrb[0].mxu0
  %1725 = vmatprep.mubr.f32.mxu0 %v95
  %1726 = vmatmul.mubr.f32.gmra.mrb[0].mxu0 %v94
  %v1727 = vpop.f32.mrb[0].mxu0
  %v1728 = vadd.f32 %v1343, %v1727
  %v1729 = vpop.f32.mrb[0].mxu0
  %1730 = vmatprep.mubr.f32.mxu0 %v108
  %1731 = vmatmul.mubr.f32.gmra.mrb[0].mxu0 %v107
  %v1732 = vpop.f32.mrb[0].mxu0
  %v1733 = vadd.f32 %v1348, %v1732
  %v1734 = vpop.f32.mrb[0].mxu0
  %1735 = vmatprep.mubr.f32.mxu0 %v121
  %1736 = vmatmul.mubr.f32.gmra.mrb[0].mxu0 %v120
  %v1737 = vpop.f32.mrb[0].mxu0
  %v1738 = vadd.f32 %v1353, %v1737
  %v1739 = vpop.f32.mrb[0].mxu0
  %1740 = vmatprep.mubr.f32.mxu0 %v134
  %1741 = vmatmul.mubr.f32.gmra.mrb[0].mxu0 %v133
  %v1742 = vpop.f32.mrb[0].mxu0
  %v1743 = vadd.f32 %v1358, %v1742
  %v1744 = vpop.f32.mrb[0].mxu0
  %1745 = vmatprep.mubr.f32.mxu0 %v147
  %1746 = vmatmul.mubr.f32.gmra.mrb[0].mxu0 %v146
  %v1747 = vpop.f32.mrb[0].mxu0
  %v1748 = vadd.f32 %v1363, %v1747
  %v1749 = vpop.f32.mrb[0].mxu0
  %1750 = vmatprep.mubr.f32.mxu0 %v160
  %1751 = vmatmul.mubr.f32.gmra.mrb[0].mxu0 %v159
  %v1752 = vpop.f32.mrb[0].mxu0
  %v1753 = vadd.f32 %v1368, %v1752
  %v1754 = vpop.f32.mrb[0].mxu0
  %1755 = vmatprep.mubr.f32.mxu0 %v173
  %1756 = vmatmul.mubr.f32.gmra.mrb[0].mxu0 %v172
  %v1757 = vpop.f32.mrb[0].mxu0
  %v1758 = vadd.f32 %v1373, %v1757
  %v1759 = vpop.f32.mrb[0].mxu0
  %1760 = vmatprep.mubr.f32.mxu0 %v186
  %1761 = vmatmul.mubr.f32.gmra.mrb[0].mxu0 %v185
  %v1762 = vpop.f32.mrb[0].mxu0
  %v1763 = vadd.f32 %v1378, %v1762
  %v1764 = vpop.f32.mrb[0].mxu0
  %1765 = vmatprep.mubr.f32.mxu0 %v199
  %1766 = vmatmul.mubr.f32.gmra.mrb[0].mxu0 %v198
  %v1767 = vpop.f32.mrb[0].mxu0
  %v1768 = vadd.f32 %v1383, %v1767
  %v1769 = vpop.f32.mrb[0].mxu0
  %1770 = vmatprep.mubr.f32.mxu0 %v212
  %1771 = vmatmul.mubr.f32.gmra.mrb[0].mxu0 %v211
  %v1772 = vpop.f32.mrb[0].mxu0
  %v1773 = vadd.f32 %v1388, %v1772
  %v1774 = vpop.f32.mrb[0].mxu0
  %1775 = vmatprep.mubr.f32.mxu0 %v225
  %1776 = vmatmul.mubr.f32.gmra.mrb[0].mxu0 %v224
  %v1777 = vpop.f32.mrb[0].mxu0
  %v1778 = vadd.f32 %v1393, %v1777
  %v1779 = vpop.f32.mrb[0].mxu0
  %1780 = vmatprep.mubr.f32.mxu0 %v238
  %1781 = vmatmul.mubr.f32.gmra.mrb[0].mxu0 %v237
  %v1782 = vpop.f32.mrb[0].mxu0
  %v1783 = vadd.f32 %v1398, %v1782
  %v1784 = vpop.f32.mrb[0].mxu0
  %1785 = vmatprep.mubr.f32.mxu0 %v251
  %1786 = vmatmul.mubr.f32.gmra.mrb[0].mxu0 %v250
  %v1787 = vpop.f32.mrb[0].mxu0
  %v1788 = vadd.f32 %v1403, %v1787
  %v1789 = vpop.f32.mrb[0].mxu0
  %1790 = vmatprep.mubr.f32.mxu0 %v264
  %1791 = vmatmul.mubr.f32.gmra.mrb[0].mxu0 %v263
  %v1792 = vpop.f32.mrb[0].mxu0
  %v1793 = vadd.f32 %v1408, %v1792
  %v1794 = vpop.f32.mrb[0].mxu0
  %1795 = vmatprep.mubr.f32.mxu0 %v277
  %1796 = vmatmul.mubr.f32.gmra.mrb[0].mxu0 %v276
  %v1797 = vpop.f32.mrb[0].mxu0
  %v1798 = vadd.f32 %v1413, %v1797
  %v1799 = vpop.f32.mrb[0].mxu0
  %1800 = vmatprep.mubr.f32.mxu0 %v290
  %1801 = vmatmul.mubr.f32.gmra.mrb[0].mxu0 %v289
  %v1802 = vpop.f32.mrb[0].mxu0
  %v1803 = vadd.f32 %v1418, %v1802
  %v1804 = vpop.f32.mrb[0].mxu0
  %1805 = vmatprep.mubr.f32.mxu0 %v303
  %1806 = vmatmul.mubr.f32.gmra.mrb[0].mxu0 %v302
  %v1807 = vpop.f32.mrb[0].mxu0
  %v1808 = vadd.f32 %v1423, %v1807
  %v1809 = vpop.f32.mrb[0].mxu0
  %1810 = vmatprep.mubr.f32.mxu0 %v316
  %1811 = vmatmul.mubr.f32.gmra.mrb[0].mxu0 %v315
  %v1812 = vpop.f32.mrb[0].mxu0
  %v1813 = vadd.f32 %v1428, %v1812
  %v1814 = vpop.f32.mrb[0].mxu0
  %1815 = vmatprep.mubr.f32.mxu0 %v329
  %1816 = vmatmul.mubr.f32.gmra.mrb[0].mxu0 %v328
  %v1817 = vpop.f32.mrb[0].mxu0
  %v1818 = vadd.f32 %v1433, %v1817
  %v1819 = vpop.f32.mrb[0].mxu0
  %1820 = vmatprep.mubr.f32.mxu0 %v342
  %1821 = vmatmul.mubr.f32.gmra.mrb[0].mxu0 %v341
  %v1822 = vpop.f32.mrb[0].mxu0
  %v1823 = vadd.f32 %v1438, %v1822
  %v1824 = vpop.f32.mrb[0].mxu0
  %1825 = vmatprep.mubr.f32.mxu0 %v355
  %1826 = vmatmul.mubr.f32.gmra.mrb[0].mxu0 %v354
  %v1827 = vpop.f32.mrb[0].mxu0
  %v1828 = vadd.f32 %v1443, %v1827
  %v1829 = vpop.f32.mrb[0].mxu0
  %1830 = vmatprep.mubr.f32.mxu0 %v368
  %1831 = vmatmul.mubr.f32.gmra.mrb[0].mxu0 %v367
  %v1832 = vpop.f32.mrb[0].mxu0
  %v1833 = vadd.f32 %v1448, %v1832
  %v1834 = vpop.f32.mrb[0].mxu0
  %1835 = vmatprep.mubr.f32.mxu0 %v381
  %1836 = vmatmul.mubr.f32.gmra.mrb[0].mxu0 %v380
  %v1837 = vpop.f32.mrb[0].mxu0
  %v1838 = vadd.f32 %v1453, %v1837
  %v1839 = vpop.f32.mrb[0].mxu0
  %1840 = vmatprep.mubr.f32.mxu0 %v394
  %1841 = vmatmul.mubr.f32.gmra.mrb[0].mxu0 %v393
  %v1842 = vpop.f32.mrb[0].mxu0
  %v1843 = vadd.f32 %v1458, %v1842
  %v1844 = vpop.f32.mrb[0].mxu0
  %1845 = vmatprep.mubr.f32.mxu0 %v407
  %1846 = vmatmul.mubr.f32.gmra.mrb[0].mxu0 %v406
  %v1847 = vpop.f32.mrb[0].mxu0
  %v1848 = vadd.f32 %v1463, %v1847
  %v1849 = vpop.f32.mrb[0].mxu0
  %1850 = vmatprep.mubr.f32.mxu0 %v420
  %1851 = vmatmul.mubr.f32.gmra.mrb[0].mxu0 %v419
  %v1852 = vpop.f32.mrb[0].mxu0
  %v1853 = vadd.f32 %v1468, %v1852
  %v1854 = vpop.f32.mrb[0].mxu0
  %1855 = vmatprep.mubr.f32.mxu0 %v433
  %1856 = vmatmul.mubr.f32.gmra.mrb[0].mxu0 %v432
  %v1857 = vpop.f32.mrb[0].mxu0
  %v1858 = vadd.f32 %v1473, %v1857
  %v1859 = vpop.f32.mrb[0].mxu0
  %1860 = vmatprep.mubr.f32.mxu0 %v446
  %1861 = vmatmul.mubr.f32.gmra.mrb[0].mxu0 %v445
  %v1862 = vpop.f32.mrb[0].mxu0
  %v1863 = vadd.f32 %v1478, %v1862
  %v1864 = vpop.f32.mrb[0].mxu0
  %1865 = vmatprep.mubr.f32.mxu0 %v459
  %1866 = vmatmul.mubr.f32.gmra.mrb[0].mxu0 %v458
  %v1867 = vpop.f32.mrb[0].mxu0
  %v1868 = vadd.f32 %v1483, %v1867
  %v1869 = vpop.f32.mrb[0].mxu0
  %1870 = vmatprep.mubr.f32.mxu0 %v472
  %1871 = vmatmul.mubr.f32.gmra.mrb[0].mxu0 %v471
  %v1872 = vpop.f32.mrb[0].mxu0
  %v1873 = vadd.f32 %v1488, %v1872
  %v1874 = vpop.f32.mrb[0].mxu0
  %1875 = vmatprep.mubr.f32.mxu0 %v485
  %1876 = vmatmul.mubr.f32.gmra.mrb[0].mxu0 %v484
  %v1877 = vpop.f32.mrb[0].mxu0
  %v1878 = vadd.f32 %v1493, %v1877
  %v1879 = vpop.f32.mrb[0].mxu0
  %1880 = vmatprep.mubr.f32.mxu0 %v498
  %1881 = vmatmul.mubr.f32.gmra.mrb[0].mxu0 %v497
  %v1882 = vpop.f32.mrb[0].mxu0
  %v1883 = vadd.f32 %v1498, %v1882
  %v1884 = vpop.f32.mrb[0].mxu0
  %1885 = vmatprep.mubr.f32.mxu0 %v511
  %1886 = vmatmul.mubr.f32.gmra.mrb[0].mxu0 %v510
  %v1887 = vpop.f32.mrb[0].mxu0
  %v1888 = vadd.f32 %v1503, %v1887
  %v1889 = vpop.f32.mrb[0].mxu0
  %1890 = vmatprep.mubr.f32.mxu0 %v524
  %1891 = vmatmul.mubr.f32.gmra.mrb[0].mxu0 %v523
  %v1892 = vpop.f32.mrb[0].mxu0
  %v1893 = vadd.f32 %v1508, %v1892
  %v1894 = vpop.f32.mrb[0].mxu0
  %1895 = vmatprep.mubr.f32.mxu0 %v537
  %1896 = vmatmul.mubr.f32.gmra.mrb[0].mxu0 %v536
  %v1897 = vpop.f32.mrb[0].mxu0
  %v1898 = vadd.f32 %v1513, %v1897
  %v1899 = vpop.f32.mrb[0].mxu0
  %1900 = vmatprep.mubr.f32.mxu0 %v550
  %1901 = vmatmul.mubr.f32.gmra.mrb[0].mxu0 %v549
  %v1902 = vpop.f32.mrb[0].mxu0
  %v1903 = vadd.f32 %v1518, %v1902
  %v1904 = vpop.f32.mrb[0].mxu0
  %1905 = vmatprep.mubr.f32.mxu0 %v563
  %1906 = vmatmul.mubr.f32.gmra.mrb[0].mxu0 %v562
  %v1907 = vpop.f32.mrb[0].mxu0
  %v1908 = vadd.f32 %v1523, %v1907
  %v1909 = vpop.f32.mrb[0].mxu0
  %1910 = vmatprep.mubr.f32.mxu0 %v576
  %1911 = vmatmul.mubr.f32.gmra.mrb[0].mxu0 %v575
  %v1912 = vpop.f32.mrb[0].mxu0
  %v1913 = vadd.f32 %v1528, %v1912
  %v1914 = vpop.f32.mrb[0].mxu0
  %1915 = vmatprep.mubr.f32.mxu0 %v589
  %1916 = vmatmul.mubr.f32.gmra.mrb[0].mxu0 %v588
  %v1917 = vpop.f32.mrb[0].mxu0
  %v1918 = vadd.f32 %v1533, %v1917
  %v1919 = vpop.f32.mrb[0].mxu0
  %1920 = vmatprep.mubr.f32.mxu0 %v602
  %1921 = vmatmul.mubr.f32.gmra.mrb[0].mxu0 %v601
  %v1922 = vpop.f32.mrb[0].mxu0
  %v1923 = vadd.f32 %v1538, %v1922
  %v1924 = vpop.f32.mrb[0].mxu0
  %1925 = vmatprep.mubr.f32.mxu0 %v615
  %1926 = vmatmul.mubr.f32.gmra.mrb[0].mxu0 %v614
  %v1927 = vpop.f32.mrb[0].mxu0
  %v1928 = vadd.f32 %v1543, %v1927
  %v1929 = vpop.f32.mrb[0].mxu0
  %1930 = vmatprep.mubr.f32.mxu0 %v628
  %1931 = vmatmul.mubr.f32.gmra.mrb[0].mxu0 %v627
  %v1932 = vpop.f32.mrb[0].mxu0
  %v1933 = vadd.f32 %v1548, %v1932
  %v1934 = vpop.f32.mrb[0].mxu0
  %1935 = vmatprep.mubr.f32.mxu0 %v641
  %1936 = vmatmul.mubr.f32.gmra.mrb[0].mxu0 %v640
  %v1937 = vpop.f32.mrb[0].mxu0
  %v1938 = vadd.f32 %v1553, %v1937
  %v1939 = vpop.f32.mrb[0].mxu0
  %1940 = vmatprep.mubr.f32.mxu0 %v654
  %1941 = vmatmul.mubr.f32.gmra.mrb[0].mxu0 %v653
  %v1942 = vpop.f32.mrb[0].mxu0
  %v1943 = vadd.f32 %v1558, %v1942
  %v1944 = vpop.f32.mrb[0].mxu0
  %1945 = vmatprep.mubr.f32.mxu0 %v667
  %1946 = vmatmul.mubr.f32.gmra.mrb[0].mxu0 %v666
  %v1947 = vpop.f32.mrb[0].mxu0
  %v1948 = vadd.f32 %v1563, %v1947
  %v1949 = vpop.f32.mrb[0].mxu0
  %1950 = vmatprep.mubr.f32.mxu0 %v680
  %1951 = vmatmul.mubr.f32.gmra.mrb[0].mxu0 %v679
  %v1952 = vpop.f32.mrb[0].mxu0
  %v1953 = vadd.f32 %v1568, %v1952
  %v1954 = vpop.f32.mrb[0].mxu0
  %1955 = vmatprep.mubr.f32.mxu0 %v693
  %1956 = vmatmul.mubr.f32.gmra.mrb[0].mxu0 %v692
  %v1957 = vpop.f32.mrb[0].mxu0
  %v1958 = vadd.f32 %v1573, %v1957
  %v1959 = vpop.f32.mrb[0].mxu0
  %1960 = vmatprep.mubr.f32.mxu0 %v706
  %1961 = vmatmul.mubr.f32.gmra.mrb[0].mxu0 %v705
  %v1962 = vpop.f32.mrb[0].mxu0
  %v1963 = vadd.f32 %v1578, %v1962
  %v1964 = vpop.f32.mrb[0].mxu0
  %1965 = vmatprep.mubr.f32.mxu0 %v719
  %1966 = vmatmul.mubr.f32.gmra.mrb[0].mxu0 %v718
  %v1967 = vpop.f32.mrb[0].mxu0
  %v1968 = vadd.f32 %v1583, %v1967
  %v1969 = vpop.f32.mrb[0].mxu0
  %1970 = vmatprep.mubr.f32.mxu0 %v732
  %1971 = vmatmul.mubr.f32.gmra.mrb[0].mxu0 %v731
  %v1972 = vpop.f32.mrb[0].mxu0
  %v1973 = vadd.f32 %v1588, %v1972
  %v1974 = vpop.f32.mrb[0].mxu0
  %1975 = vmatprep.mubr.f32.mxu0 %v745
  %1976 = vmatmul.mubr.f32.gmra.mrb[0].mxu0 %v744
  %v1977 = vpop.f32.mrb[0].mxu0
  %v1978 = vadd.f32 %v1593, %v1977
  %v1979 = vpop.f32.mrb[0].mxu0
  %1980 = vmatprep.mubr.f32.mxu0 %v758
  %1981 = vmatmul.mubr.f32.gmra.mrb[0].mxu0 %v757
  %v1982 = vpop.f32.mrb[0].mxu0
  %v1983 = vadd.f32 %v1598, %v1982
  %v1984 = vpop.f32.mrb[0].mxu0
  %1985 = vmatprep.mubr.f32.mxu0 %v771
  %1986 = vmatmul.mubr.f32.gmra.mrb[0].mxu0 %v770
  %v1987 = vpop.f32.mrb[0].mxu0
  %v1988 = vadd.f32 %v1603, %v1987
  %v1989 = vpop.f32.mrb[0].mxu0
  %1990 = vmatprep.mubr.f32.mxu0 %v784
  %1991 = vmatmul.mubr.f32.gmra.mrb[0].mxu0 %v783
  %v1992 = vpop.f32.mrb[0].mxu0
  %v1993 = vadd.f32 %v1608, %v1992
  %v1994 = vpop.f32.mrb[0].mxu0
  %1995 = vmatprep.mubr.f32.mxu0 %v797
  %1996 = vmatmul.mubr.f32.gmra.mrb[0].mxu0 %v796
  %v1997 = vpop.f32.mrb[0].mxu0
  %v1998 = vadd.f32 %v1613, %v1997
  %v1999 = vpop.f32.mrb[0].mxu0
  %2000 = vmatprep.mubr.f32.mxu0 %v810
  %2001 = vmatmul.mubr.f32.gmra.mrb[0].mxu0 %v809
  %v2002 = vpop.f32.mrb[0].mxu0
  %v2003 = vadd.f32 %v1618, %v2002
  %v2004 = vpop.f32.mrb[0].mxu0
  %2005 = vmatprep.mubr.f32.mxu0 %v823
  %2006 = vmatmul.mubr.f32.gmra.mrb[0].mxu0 %v822
  %v2007 = vpop.f32.mrb[0].mxu0
  %v2008 = vadd.f32 %v1623, %v2007
  %v2009 = vpop.f32.mrb[0].mxu0
  %2010 = vmatprep.mubr.f32.mxu0 %v836
  %2011 = vmatmul.mubr.f32.gmra.mrb[0].mxu0 %v835
  %v2012 = vpop.f32.mrb[0].mxu0
  %v2013 = vadd.f32 %v1628, %v2012
  %v2014 = vpop.f32.mrb[0].mxu0
  %2015 = vdwg.mxu0
  %2016 = vmatprep.subr.mxu0 0.0
  %2017 = vmatpush1.msra.mxu0 %v910
  %2018 = vmatprep.subr.mxu0 0.0
  %2019 = vmatpush1.msra.mxu0 %v911
  %2020 = vmatprep.subr.mxu0 0.0
  %2021 = vmatpush1.msra.mxu0 %v912
  %2022 = vmatprep.subr.mxu0 0.0
  %2023 = vmatpush1.msra.mxu0 %v913
  %2024 = vmatprep.subr.mxu0 0.0
  %2025 = vmatpush1.msra.mxu0 %v914
  %2026 = vmatprep.subr.mxu0 0.0
  %2027 = vmatpush1.msra.mxu0 %v915
  %2028 = vmatprep.subr.mxu0 0.0
  %2029 = vmatpush1.msra.mxu0 %v916
  %2030 = vmatprep.subr.mxu0 0.0
  %2031 = vmatpush1.msra.mxu0 %v917
  %2032 = vmatprep.subr.mxu0 0.0
  %2033 = vmatpush1.msra.mxu0 %v918
  %2034 = vmatprep.subr.mxu0 0.0
  %2035 = vmatpush1.msra.mxu0 %v919
  %2036 = vmatprep.subr.mxu0 0.0
  %2037 = vmatpush1.msra.mxu0 %v920
  %2038 = vmatprep.subr.mxu0 0.0
  %2039 = vmatpush1.msra.mxu0 %v921
  %2040 = vmatprep.subr.mxu0 0.0
  %2041 = vmatpush1.msra.mxu0 %v922
  %2042 = vmatprep.subr.mxu0 0.0
  %2043 = vmatpush1.msra.mxu0 %v923
  %2044 = vmatprep.subr.mxu0 0.0
  %2045 = vmatpush1.msra.mxu0 %v924
  %2046 = vmatprep.subr.mxu0 0.0
  %2047 = vmatpush1.msra.mxu0 %v925
  %2048 = vmatprep.subr.mxu0 0.0
  %2049 = vmatpush1.msra.mxu0 %v926
  %2050 = vmatprep.subr.mxu0 0.0
  %2051 = vmatpush1.msra.mxu0 %v927
  %2052 = vmatprep.subr.mxu0 0.0
  %2053 = vmatpush1.msra.mxu0 %v928
  %2054 = vmatprep.subr.mxu0 0.0
  %2055 = vmatpush1.msra.mxu0 %v929
  %2056 = vmatprep.subr.mxu0 0.0
  %2057 = vmatpush1.msra.mxu0 %v930
  %2058 = vmatprep.subr.mxu0 0.0
  %2059 = vmatpush1.msra.mxu0 %v931
  %2060 = vmatprep.subr.mxu0 0.0
  %2061 = vmatpush1.msra.mxu0 %v932
  %2062 = vmatprep.subr.mxu0 0.0
  %2063 = vmatpush1.msra.mxu0 %v933
  %2064 = vmatprep.subr.mxu0 0.0
  %2065 = vmatpush1.msra.mxu0 %v934
  %2066 = vmatprep.subr.mxu0 0.0
  %2067 = vmatpush1.msra.mxu0 %v935
  %2068 = vmatprep.subr.mxu0 0.0
  %2069 = vmatpush1.msra.mxu0 %v936
  %2070 = vmatprep.subr.mxu0 0.0
  %2071 = vmatpush1.msra.mxu0 %v937
  %2072 = vmatprep.subr.mxu0 0.0
  %2073 = vmatpush1.msra.mxu0 %v938
  %2074 = vmatprep.subr.mxu0 0.0
  %2075 = vmatpush1.msra.mxu0 %v939
  %2076 = vmatprep.subr.mxu0 0.0
  %2077 = vmatpush1.msra.mxu0 %v940
  %2078 = vmatprep.subr.mxu0 0.0
  %2079 = vmatpush1.msra.mxu0 %v941
  %2080 = vmatprep.mubr.f32.mxu0 %v19
  %2081 = vmatmul.mubr.f32.gmra.mrb[0].mxu0 %v18
  %v2082 = vpop.f32.mrb[0].mxu0
  %v2083 = vadd.f32 %v1698, %v2082
  %v2084 = vpop.f32.mrb[0].mxu0
  %2085 = vmatprep.mubr.f32.mxu0 %v32
  %2086 = vmatmul.mubr.f32.gmra.mrb[0].mxu0 %v31
  %v2087 = vpop.f32.mrb[0].mxu0
  %v2088 = vadd.f32 %v1703, %v2087
  %v2089 = vpop.f32.mrb[0].mxu0
  %2090 = vmatprep.mubr.f32.mxu0 %v45
  %2091 = vmatmul.mubr.f32.gmra.mrb[0].mxu0 %v44
  %v2092 = vpop.f32.mrb[0].mxu0
  %v2093 = vadd.f32 %v1708, %v2092
  %v2094 = vpop.f32.mrb[0].mxu0
  %2095 = vmatprep.mubr.f32.mxu0 %v58
  %2096 = vmatmul.mubr.f32.gmra.mrb[0].mxu0 %v57
  %v2097 = vpop.f32.mrb[0].mxu0
  %v2098 = vadd.f32 %v1713, %v2097
  %v2099 = vpop.f32.mrb[0].mxu0
  %2100 = vmatprep.mubr.f32.mxu0 %v71
  %2101 = vmatmul.mubr.f32.gmra.mrb[0].mxu0 %v70
  %v2102 = vpop.f32.mrb[0].mxu0
  %v2103 = vadd.f32 %v1718, %v2102
  %v2104 = vpop.f32.mrb[0].mxu0
  %2105 = vmatprep.mubr.f32.mxu0 %v84
  %2106 = vmatmul.mubr.f32.gmra.mrb[0].mxu0 %v83
  %v2107 = vpop.f32.mrb[0].mxu0
  %v2108 = vadd.f32 %v1723, %v2107
  %v2109 = vpop.f32.mrb[0].mxu0
  %2110 = vmatprep.mubr.f32.mxu0 %v97
  %2111 = vmatmul.mubr.f32.gmra.mrb[0].mxu0 %v96
  %v2112 = vpop.f32.mrb[0].mxu0
  %v2113 = vadd.f32 %v1728, %v2112
  %v2114 = vpop.f32.mrb[0].mxu0
  %2115 = vmatprep.mubr.f32.mxu0 %v110
  %2116 = vmatmul.mubr.f32.gmra.mrb[0].mxu0 %v109
  %v2117 = vpop.f32.mrb[0].mxu0
  %v2118 = vadd.f32 %v1733, %v2117
  %v2119 = vpop.f32.mrb[0].mxu0
  %2120 = vmatprep.mubr.f32.mxu0 %v123
  %2121 = vmatmul.mubr.f32.gmra.mrb[0].mxu0 %v122
  %v2122 = vpop.f32.mrb[0].mxu0
  %v2123 = vadd.f32 %v1738, %v2122
  %v2124 = vpop.f32.mrb[0].mxu0
  %2125 = vmatprep.mubr.f32.mxu0 %v136
  %2126 = vmatmul.mubr.f32.gmra.mrb[0].mxu0 %v135
  %v2127 = vpop.f32.mrb[0].mxu0
  %v2128 = vadd.f32 %v1743, %v2127
  %v2129 = vpop.f32.mrb[0].mxu0
  %2130 = vmatprep.mubr.f32.mxu0 %v149
  %2131 = vmatmul.mubr.f32.gmra.mrb[0].mxu0 %v148
  %v2132 = vpop.f32.mrb[0].mxu0
  %v2133 = vadd.f32 %v1748, %v2132
  %v2134 = vpop.f32.mrb[0].mxu0
  %2135 = vmatprep.mubr.f32.mxu0 %v162
  %2136 = vmatmul.mubr.f32.gmra.mrb[0].mxu0 %v161
  %v2137 = vpop.f32.mrb[0].mxu0
  %v2138 = vadd.f32 %v1753, %v2137
  %v2139 = vpop.f32.mrb[0].mxu0
  %2140 = vmatprep.mubr.f32.mxu0 %v175
  %2141 = vmatmul.mubr.f32.gmra.mrb[0].mxu0 %v174
  %v2142 = vpop.f32.mrb[0].mxu0
  %v2143 = vadd.f32 %v1758, %v2142
  %v2144 = vpop.f32.mrb[0].mxu0
  %2145 = vmatprep.mubr.f32.mxu0 %v188
  %2146 = vmatmul.mubr.f32.gmra.mrb[0].mxu0 %v187
  %v2147 = vpop.f32.mrb[0].mxu0
  %v2148 = vadd.f32 %v1763, %v2147
  %v2149 = vpop.f32.mrb[0].mxu0
  %2150 = vmatprep.mubr.f32.mxu0 %v201
  %2151 = vmatmul.mubr.f32.gmra.mrb[0].mxu0 %v200
  %v2152 = vpop.f32.mrb[0].mxu0
  %v2153 = vadd.f32 %v1768, %v2152
  %v2154 = vpop.f32.mrb[0].mxu0
  %2155 = vmatprep.mubr.f32.mxu0 %v214
  %2156 = vmatmul.mubr.f32.gmra.mrb[0].mxu0 %v213
  %v2157 = vpop.f32.mrb[0].mxu0
  %v2158 = vadd.f32 %v1773, %v2157
  %v2159 = vpop.f32.mrb[0].mxu0
  %2160 = vmatprep.mubr.f32.mxu0 %v227
  %2161 = vmatmul.mubr.f32.gmra.mrb[0].mxu0 %v226
  %v2162 = vpop.f32.mrb[0].mxu0
  %v2163 = vadd.f32 %v1778, %v2162
  %v2164 = vpop.f32.mrb[0].mxu0
  %2165 = vmatprep.mubr.f32.mxu0 %v240
  %2166 = vmatmul.mubr.f32.gmra.mrb[0].mxu0 %v239
  %v2167 = vpop.f32.mrb[0].mxu0
  %v2168 = vadd.f32 %v1783, %v2167
  %v2169 = vpop.f32.mrb[0].mxu0
  %2170 = vmatprep.mubr.f32.mxu0 %v253
  %2171 = vmatmul.mubr.f32.gmra.mrb[0].mxu0 %v252
  %v2172 = vpop.f32.mrb[0].mxu0
  %v2173 = vadd.f32 %v1788, %v2172
  %v2174 = vpop.f32.mrb[0].mxu0
  %2175 = vmatprep.mubr.f32.mxu0 %v266
  %2176 = vmatmul.mubr.f32.gmra.mrb[0].mxu0 %v265
  %v2177 = vpop.f32.mrb[0].mxu0
  %v2178 = vadd.f32 %v1793, %v2177
  %v2179 = vpop.f32.mrb[0].mxu0
  %2180 = vmatprep.mubr.f32.mxu0 %v279
  %2181 = vmatmul.mubr.f32.gmra.mrb[0].mxu0 %v278
  %v2182 = vpop.f32.mrb[0].mxu0
  %v2183 = vadd.f32 %v1798, %v2182
  %v2184 = vpop.f32.mrb[0].mxu0
  %2185 = vmatprep.mubr.f32.mxu0 %v292
  %2186 = vmatmul.mubr.f32.gmra.mrb[0].mxu0 %v291
  %v2187 = vpop.f32.mrb[0].mxu0
  %v2188 = vadd.f32 %v1803, %v2187
  %v2189 = vpop.f32.mrb[0].mxu0
  %2190 = vmatprep.mubr.f32.mxu0 %v305
  %2191 = vmatmul.mubr.f32.gmra.mrb[0].mxu0 %v304
  %v2192 = vpop.f32.mrb[0].mxu0
  %v2193 = vadd.f32 %v1808, %v2192
  %v2194 = vpop.f32.mrb[0].mxu0
  %2195 = vmatprep.mubr.f32.mxu0 %v318
  %2196 = vmatmul.mubr.f32.gmra.mrb[0].mxu0 %v317
  %v2197 = vpop.f32.mrb[0].mxu0
  %v2198 = vadd.f32 %v1813, %v2197
  %v2199 = vpop.f32.mrb[0].mxu0
  %2200 = vmatprep.mubr.f32.mxu0 %v331
  %2201 = vmatmul.mubr.f32.gmra.mrb[0].mxu0 %v330
  %v2202 = vpop.f32.mrb[0].mxu0
  %v2203 = vadd.f32 %v1818, %v2202
  %v2204 = vpop.f32.mrb[0].mxu0
  %2205 = vmatprep.mubr.f32.mxu0 %v344
  %2206 = vmatmul.mubr.f32.gmra.mrb[0].mxu0 %v343
  %v2207 = vpop.f32.mrb[0].mxu0
  %v2208 = vadd.f32 %v1823, %v2207
  %v2209 = vpop.f32.mrb[0].mxu0
  %2210 = vmatprep.mubr.f32.mxu0 %v357
  %2211 = vmatmul.mubr.f32.gmra.mrb[0].mxu0 %v356
  %v2212 = vpop.f32.mrb[0].mxu0
  %v2213 = vadd.f32 %v1828, %v2212
  %v2214 = vpop.f32.mrb[0].mxu0
  %2215 = vmatprep.mubr.f32.mxu0 %v370
  %2216 = vmatmul.mubr.f32.gmra.mrb[0].mxu0 %v369
  %v2217 = vpop.f32.mrb[0].mxu0
  %v2218 = vadd.f32 %v1833, %v2217
  %v2219 = vpop.f32.mrb[0].mxu0
  %2220 = vmatprep.mubr.f32.mxu0 %v383
  %2221 = vmatmul.mubr.f32.gmra.mrb[0].mxu0 %v382
  %v2222 = vpop.f32.mrb[0].mxu0
  %v2223 = vadd.f32 %v1838, %v2222
  %v2224 = vpop.f32.mrb[0].mxu0
  %2225 = vmatprep.mubr.f32.mxu0 %v396
  %2226 = vmatmul.mubr.f32.gmra.mrb[0].mxu0 %v395
  %v2227 = vpop.f32.mrb[0].mxu0
  %v2228 = vadd.f32 %v1843, %v2227
  %v2229 = vpop.f32.mrb[0].mxu0
  %2230 = vmatprep.mubr.f32.mxu0 %v409
  %2231 = vmatmul.mubr.f32.gmra.mrb[0].mxu0 %v408
  %v2232 = vpop.f32.mrb[0].mxu0
  %v2233 = vadd.f32 %v1848, %v2232
  %v2234 = vpop.f32.mrb[0].mxu0
  %2235 = vmatprep.mubr.f32.mxu0 %v422
  %2236 = vmatmul.mubr.f32.gmra.mrb[0].mxu0 %v421
  %v2237 = vpop.f32.mrb[0].mxu0
  %v2238 = vadd.f32 %v1853, %v2237
  %v2239 = vpop.f32.mrb[0].mxu0
  %2240 = vmatprep.mubr.f32.mxu0 %v435
  %2241 = vmatmul.mubr.f32.gmra.mrb[0].mxu0 %v434
  %v2242 = vpop.f32.mrb[0].mxu0
  %v2243 = vadd.f32 %v1858, %v2242
  %v2244 = vpop.f32.mrb[0].mxu0
  %2245 = vmatprep.mubr.f32.mxu0 %v448
  %2246 = vmatmul.mubr.f32.gmra.mrb[0].mxu0 %v447
  %v2247 = vpop.f32.mrb[0].mxu0
  %v2248 = vadd.f32 %v1863, %v2247
  %v2249 = vpop.f32.mrb[0].mxu0
  %2250 = vmatprep.mubr.f32.mxu0 %v461
  %2251 = vmatmul.mubr.f32.gmra.mrb[0].mxu0 %v460
  %v2252 = vpop.f32.mrb[0].mxu0
  %v2253 = vadd.f32 %v1868, %v2252
  %v2254 = vpop.f32.mrb[0].mxu0
  %2255 = vmatprep.mubr.f32.mxu0 %v474
  %2256 = vmatmul.mubr.f32.gmra.mrb[0].mxu0 %v473
  %v2257 = vpop.f32.mrb[0].mxu0
  %v2258 = vadd.f32 %v1873, %v2257
  %v2259 = vpop.f32.mrb[0].mxu0
  %2260 = vmatprep.mubr.f32.mxu0 %v487
  %2261 = vmatmul.mubr.f32.gmra.mrb[0].mxu0 %v486
  %v2262 = vpop.f32.mrb[0].mxu0
  %v2263 = vadd.f32 %v1878, %v2262
  %v2264 = vpop.f32.mrb[0].mxu0
  %2265 = vmatprep.mubr.f32.mxu0 %v500
  %2266 = vmatmul.mubr.f32.gmra.mrb[0].mxu0 %v499
  %v2267 = vpop.f32.mrb[0].mxu0
  %v2268 = vadd.f32 %v1883, %v2267
  %v2269 = vpop.f32.mrb[0].mxu0
  %2270 = vmatprep.mubr.f32.mxu0 %v513
  %2271 = vmatmul.mubr.f32.gmra.mrb[0].mxu0 %v512
  %v2272 = vpop.f32.mrb[0].mxu0
  %v2273 = vadd.f32 %v1888, %v2272
  %v2274 = vpop.f32.mrb[0].mxu0
  %2275 = vmatprep.mubr.f32.mxu0 %v526
  %2276 = vmatmul.mubr.f32.gmra.mrb[0].mxu0 %v525
  %v2277 = vpop.f32.mrb[0].mxu0
  %v2278 = vadd.f32 %v1893, %v2277
  %v2279 = vpop.f32.mrb[0].mxu0
  %2280 = vmatprep.mubr.f32.mxu0 %v539
  %2281 = vmatmul.mubr.f32.gmra.mrb[0].mxu0 %v538
  %v2282 = vpop.f32.mrb[0].mxu0
  %v2283 = vadd.f32 %v1898, %v2282
  %v2284 = vpop.f32.mrb[0].mxu0
  %2285 = vmatprep.mubr.f32.mxu0 %v552
  %2286 = vmatmul.mubr.f32.gmra.mrb[0].mxu0 %v551
  %v2287 = vpop.f32.mrb[0].mxu0
  %v2288 = vadd.f32 %v1903, %v2287
  %v2289 = vpop.f32.mrb[0].mxu0
  %2290 = vmatprep.mubr.f32.mxu0 %v565
  %2291 = vmatmul.mubr.f32.gmra.mrb[0].mxu0 %v564
  %v2292 = vpop.f32.mrb[0].mxu0
  %v2293 = vadd.f32 %v1908, %v2292
  %v2294 = vpop.f32.mrb[0].mxu0
  %2295 = vmatprep.mubr.f32.mxu0 %v578
  %2296 = vmatmul.mubr.f32.gmra.mrb[0].mxu0 %v577
  %v2297 = vpop.f32.mrb[0].mxu0
  %v2298 = vadd.f32 %v1913, %v2297
  %v2299 = vpop.f32.mrb[0].mxu0
  %2300 = vmatprep.mubr.f32.mxu0 %v591
  %2301 = vmatmul.mubr.f32.gmra.mrb[0].mxu0 %v590
  %v2302 = vpop.f32.mrb[0].mxu0
  %v2303 = vadd.f32 %v1918, %v2302
  %v2304 = vpop.f32.mrb[0].mxu0
  %2305 = vmatprep.mubr.f32.mxu0 %v604
  %2306 = vmatmul.mubr.f32.gmra.mrb[0].mxu0 %v603
  %v2307 = vpop.f32.mrb[0].mxu0
  %v2308 = vadd.f32 %v1923, %v2307
  %v2309 = vpop.f32.mrb[0].mxu0
  %2310 = vmatprep.mubr.f32.mxu0 %v617
  %2311 = vmatmul.mubr.f32.gmra.mrb[0].mxu0 %v616
  %v2312 = vpop.f32.mrb[0].mxu0
  %v2313 = vadd.f32 %v1928, %v2312
  %v2314 = vpop.f32.mrb[0].mxu0
  %2315 = vmatprep.mubr.f32.mxu0 %v630
  %2316 = vmatmul.mubr.f32.gmra.mrb[0].mxu0 %v629
  %v2317 = vpop.f32.mrb[0].mxu0
  %v2318 = vadd.f32 %v1933, %v2317
  %v2319 = vpop.f32.mrb[0].mxu0
  %2320 = vmatprep.mubr.f32.mxu0 %v643
  %2321 = vmatmul.mubr.f32.gmra.mrb[0].mxu0 %v642
  %v2322 = vpop.f32.mrb[0].mxu0
  %v2323 = vadd.f32 %v1938, %v2322
  %v2324 = vpop.f32.mrb[0].mxu0
  %2325 = vmatprep.mubr.f32.mxu0 %v656
  %2326 = vmatmul.mubr.f32.gmra.mrb[0].mxu0 %v655
  %v2327 = vpop.f32.mrb[0].mxu0
  %v2328 = vadd.f32 %v1943, %v2327
  %v2329 = vpop.f32.mrb[0].mxu0
  %2330 = vmatprep.mubr.f32.mxu0 %v669
  %2331 = vmatmul.mubr.f32.gmra.mrb[0].mxu0 %v668
  %v2332 = vpop.f32.mrb[0].mxu0
  %v2333 = vadd.f32 %v1948, %v2332
  %v2334 = vpop.f32.mrb[0].mxu0
  %2335 = vmatprep.mubr.f32.mxu0 %v682
  %2336 = vmatmul.mubr.f32.gmra.mrb[0].mxu0 %v681
  %v2337 = vpop.f32.mrb[0].mxu0
  %v2338 = vadd.f32 %v1953, %v2337
  %v2339 = vpop.f32.mrb[0].mxu0
  %2340 = vmatprep.mubr.f32.mxu0 %v695
  %2341 = vmatmul.mubr.f32.gmra.mrb[0].mxu0 %v694
  %v2342 = vpop.f32.mrb[0].mxu0
  %v2343 = vadd.f32 %v1958, %v2342
  %v2344 = vpop.f32.mrb[0].mxu0
  %2345 = vmatprep.mubr.f32.mxu0 %v708
  %2346 = vmatmul.mubr.f32.gmra.mrb[0].mxu0 %v707
  %v2347 = vpop.f32.mrb[0].mxu0
  %v2348 = vadd.f32 %v1963, %v2347
  %v2349 = vpop.f32.mrb[0].mxu0
  %2350 = vmatprep.mubr.f32.mxu0 %v721
  %2351 = vmatmul.mubr.f32.gmra.mrb[0].mxu0 %v720
  %v2352 = vpop.f32.mrb[0].mxu0
  %v2353 = vadd.f32 %v1968, %v2352
  %v2354 = vpop.f32.mrb[0].mxu0
  %2355 = vmatprep.mubr.f32.mxu0 %v734
  %2356 = vmatmul.mubr.f32.gmra.mrb[0].mxu0 %v733
  %v2357 = vpop.f32.mrb[0].mxu0
  %v2358 = vadd.f32 %v1973, %v2357
  %v2359 = vpop.f32.mrb[0].mxu0
  %2360 = vmatprep.mubr.f32.mxu0 %v747
  %2361 = vmatmul.mubr.f32.gmra.mrb[0].mxu0 %v746
  %v2362 = vpop.f32.mrb[0].mxu0
  %v2363 = vadd.f32 %v1978, %v2362
  %v2364 = vpop.f32.mrb[0].mxu0
  %2365 = vmatprep.mubr.f32.mxu0 %v760
  %2366 = vmatmul.mubr.f32.gmra.mrb[0].mxu0 %v759
  %v2367 = vpop.f32.mrb[0].mxu0
  %v2368 = vadd.f32 %v1983, %v2367
  %v2369 = vpop.f32.mrb[0].mxu0
  %2370 = vmatprep.mubr.f32.mxu0 %v773
  %2371 = vmatmul.mubr.f32.gmra.mrb[0].mxu0 %v772
  %v2372 = vpop.f32.mrb[0].mxu0
  %v2373 = vadd.f32 %v1988, %v2372
  %v2374 = vpop.f32.mrb[0].mxu0
  %2375 = vmatprep.mubr.f32.mxu0 %v786
  %2376 = vmatmul.mubr.f32.gmra.mrb[0].mxu0 %v785
  %v2377 = vpop.f32.mrb[0].mxu0
  %v2378 = vadd.f32 %v1993, %v2377
  %v2379 = vpop.f32.mrb[0].mxu0
  %2380 = vmatprep.mubr.f32.mxu0 %v799
  %2381 = vmatmul.mubr.f32.gmra.mrb[0].mxu0 %v798
  %v2382 = vpop.f32.mrb[0].mxu0
  %v2383 = vadd.f32 %v1998, %v2382
  %v2384 = vpop.f32.mrb[0].mxu0
  %2385 = vmatprep.mubr.f32.mxu0 %v812
  %2386 = vmatmul.mubr.f32.gmra.mrb[0].mxu0 %v811
  %v2387 = vpop.f32.mrb[0].mxu0
  %v2388 = vadd.f32 %v2003, %v2387
  %v2389 = vpop.f32.mrb[0].mxu0
  %2390 = vmatprep.mubr.f32.mxu0 %v825
  %2391 = vmatmul.mubr.f32.gmra.mrb[0].mxu0 %v824
  %v2392 = vpop.f32.mrb[0].mxu0
  %v2393 = vadd.f32 %v2008, %v2392
  %v2394 = vpop.f32.mrb[0].mxu0
  %2395 = vmatprep.mubr.f32.mxu0 %v838
  %2396 = vmatmul.mubr.f32.gmra.mrb[0].mxu0 %v837
  %v2397 = vpop.f32.mrb[0].mxu0
  %v2398 = vadd.f32 %v2013, %v2397
  %v2399 = vpop.f32.mrb[0].mxu0
  %2400 = vdwg.mxu0
  %2401 = vmatprep.subr.mxu0 0.0
  %2402 = vmatpush1.msra.mxu0 %v942
  %2403 = vmatprep.subr.mxu0 0.0
  %2404 = vmatpush1.msra.mxu0 %v943
  %2405 = vmatprep.subr.mxu0 0.0
  %2406 = vmatpush1.msra.mxu0 %v944
  %2407 = vmatprep.subr.mxu0 0.0
  %2408 = vmatpush1.msra.mxu0 %v945
  %2409 = vmatprep.subr.mxu0 0.0
  %2410 = vmatpush1.msra.mxu0 %v946
  %2411 = vmatprep.subr.mxu0 0.0
  %2412 = vmatpush1.msra.mxu0 %v947
  %2413 = vmatprep.subr.mxu0 0.0
  %2414 = vmatpush1.msra.mxu0 %v948
  %2415 = vmatprep.subr.mxu0 0.0
  %2416 = vmatpush1.msra.mxu0 %v949
  %2417 = vmatprep.subr.mxu0 0.0
  %2418 = vmatpush1.msra.mxu0 %v950
  %2419 = vmatprep.subr.mxu0 0.0
  %2420 = vmatpush1.msra.mxu0 %v951
  %2421 = vmatprep.subr.mxu0 0.0
  %2422 = vmatpush1.msra.mxu0 %v952
  %2423 = vmatprep.subr.mxu0 0.0
  %2424 = vmatpush1.msra.mxu0 %v953
  %2425 = vmatprep.subr.mxu0 0.0
  %2426 = vmatpush1.msra.mxu0 %v954
  %2427 = vmatprep.subr.mxu0 0.0
  %2428 = vmatpush1.msra.mxu0 %v955
  %2429 = vmatprep.subr.mxu0 0.0
  %2430 = vmatpush1.msra.mxu0 %v956
  %2431 = vmatprep.subr.mxu0 0.0
  %2432 = vmatpush1.msra.mxu0 %v957
  %2433 = vmatprep.subr.mxu0 0.0
  %2434 = vmatpush1.msra.mxu0 %v958
  %2435 = vmatprep.subr.mxu0 0.0
  %2436 = vmatpush1.msra.mxu0 %v959
  %2437 = vmatprep.subr.mxu0 0.0
  %2438 = vmatpush1.msra.mxu0 %v960
  %2439 = vmatprep.subr.mxu0 0.0
  %2440 = vmatpush1.msra.mxu0 %v961
  %2441 = vmatprep.subr.mxu0 0.0
  %2442 = vmatpush1.msra.mxu0 %v962
  %2443 = vmatprep.subr.mxu0 0.0
  %2444 = vmatpush1.msra.mxu0 %v963
  %2445 = vmatprep.subr.mxu0 0.0
  %2446 = vmatpush1.msra.mxu0 %v964
  %2447 = vmatprep.subr.mxu0 0.0
  %2448 = vmatpush1.msra.mxu0 %v965
  %2449 = vmatprep.subr.mxu0 0.0
  %2450 = vmatpush1.msra.mxu0 %v966
  %2451 = vmatprep.subr.mxu0 0.0
  %2452 = vmatpush1.msra.mxu0 %v967
  %2453 = vmatprep.subr.mxu0 0.0
  %2454 = vmatpush1.msra.mxu0 %v968
  %2455 = vmatprep.subr.mxu0 0.0
  %2456 = vmatpush1.msra.mxu0 %v969
  %2457 = vmatprep.subr.mxu0 0.0
  %2458 = vmatpush1.msra.mxu0 %v970
  %2459 = vmatprep.subr.mxu0 0.0
  %2460 = vmatpush1.msra.mxu0 %v971
  %2461 = vmatprep.subr.mxu0 0.0
  %2462 = vmatpush1.msra.mxu0 %v972
  %2463 = vmatprep.subr.mxu0 0.0
  %2464 = vmatpush1.msra.mxu0 %v973
  %2465 = vmatprep.mubr.f32.mxu0 %v21
  %2466 = vmatmul.mubr.f32.gmra.mrb[0].mxu0 %v20
  %v2467 = vpop.f32.mrb[0].mxu0
  %v2468 = vadd.f32 %v2083, %v2467
  %v2469 = vpop.f32.mrb[0].mxu0
  %2470 = vmatprep.mubr.f32.mxu0 %v34
  %2471 = vmatmul.mubr.f32.gmra.mrb[0].mxu0 %v33
  %v2472 = vpop.f32.mrb[0].mxu0
  %v2473 = vadd.f32 %v2088, %v2472
  %v2474 = vpop.f32.mrb[0].mxu0
  %2475 = vmatprep.mubr.f32.mxu0 %v47
  %2476 = vmatmul.mubr.f32.gmra.mrb[0].mxu0 %v46
  %v2477 = vpop.f32.mrb[0].mxu0
  %v2478 = vadd.f32 %v2093, %v2477
  %v2479 = vpop.f32.mrb[0].mxu0
  %2480 = vmatprep.mubr.f32.mxu0 %v60
  %2481 = vmatmul.mubr.f32.gmra.mrb[0].mxu0 %v59
  %v2482 = vpop.f32.mrb[0].mxu0
  %v2483 = vadd.f32 %v2098, %v2482
  %v2484 = vpop.f32.mrb[0].mxu0
  %2485 = vmatprep.mubr.f32.mxu0 %v73
  %2486 = vmatmul.mubr.f32.gmra.mrb[0].mxu0 %v72
  %v2487 = vpop.f32.mrb[0].mxu0
  %v2488 = vadd.f32 %v2103, %v2487
  %v2489 = vpop.f32.mrb[0].mxu0
  %2490 = vmatprep.mubr.f32.mxu0 %v86
  %2491 = vmatmul.mubr.f32.gmra.mrb[0].mxu0 %v85
  %v2492 = vpop.f32.mrb[0].mxu0
  %v2493 = vadd.f32 %v2108, %v2492
  %v2494 = vpop.f32.mrb[0].mxu0
  %2495 = vmatprep.mubr.f32.mxu0 %v99
  %2496 = vmatmul.mubr.f32.gmra.mrb[0].mxu0 %v98
  %v2497 = vpop.f32.mrb[0].mxu0
  %v2498 = vadd.f32 %v2113, %v2497
  %v2499 = vpop.f32.mrb[0].mxu0
  %2500 = vmatprep.mubr.f32.mxu0 %v112
  %2501 = vmatmul.mubr.f32.gmra.mrb[0].mxu0 %v111
  %v2502 = vpop.f32.mrb[0].mxu0
  %v2503 = vadd.f32 %v2118, %v2502
  %v2504 = vpop.f32.mrb[0].mxu0
  %2505 = vmatprep.mubr.f32.mxu0 %v125
  %2506 = vmatmul.mubr.f32.gmra.mrb[0].mxu0 %v124
  %v2507 = vpop.f32.mrb[0].mxu0
  %v2508 = vadd.f32 %v2123, %v2507
  %v2509 = vpop.f32.mrb[0].mxu0
  %2510 = vmatprep.mubr.f32.mxu0 %v138
  %2511 = vmatmul.mubr.f32.gmra.mrb[0].mxu0 %v137
  %v2512 = vpop.f32.mrb[0].mxu0
  %v2513 = vadd.f32 %v2128, %v2512
  %v2514 = vpop.f32.mrb[0].mxu0
  %2515 = vmatprep.mubr.f32.mxu0 %v151
  %2516 = vmatmul.mubr.f32.gmra.mrb[0].mxu0 %v150
  %v2517 = vpop.f32.mrb[0].mxu0
  %v2518 = vadd.f32 %v2133, %v2517
  %v2519 = vpop.f32.mrb[0].mxu0
  %2520 = vmatprep.mubr.f32.mxu0 %v164
  %2521 = vmatmul.mubr.f32.gmra.mrb[0].mxu0 %v163
  %v2522 = vpop.f32.mrb[0].mxu0
  %v2523 = vadd.f32 %v2138, %v2522
  %v2524 = vpop.f32.mrb[0].mxu0
  %2525 = vmatprep.mubr.f32.mxu0 %v177
  %2526 = vmatmul.mubr.f32.gmra.mrb[0].mxu0 %v176
  %v2527 = vpop.f32.mrb[0].mxu0
  %v2528 = vadd.f32 %v2143, %v2527
  %v2529 = vpop.f32.mrb[0].mxu0
  %2530 = vmatprep.mubr.f32.mxu0 %v190
  %2531 = vmatmul.mubr.f32.gmra.mrb[0].mxu0 %v189
  %v2532 = vpop.f32.mrb[0].mxu0
  %v2533 = vadd.f32 %v2148, %v2532
  %v2534 = vpop.f32.mrb[0].mxu0
  %2535 = vmatprep.mubr.f32.mxu0 %v203
  %2536 = vmatmul.mubr.f32.gmra.mrb[0].mxu0 %v202
  %v2537 = vpop.f32.mrb[0].mxu0
  %v2538 = vadd.f32 %v2153, %v2537
  %v2539 = vpop.f32.mrb[0].mxu0
  %2540 = vmatprep.mubr.f32.mxu0 %v216
  %2541 = vmatmul.mubr.f32.gmra.mrb[0].mxu0 %v215
  %v2542 = vpop.f32.mrb[0].mxu0
  %v2543 = vadd.f32 %v2158, %v2542
  %v2544 = vpop.f32.mrb[0].mxu0
  %2545 = vmatprep.mubr.f32.mxu0 %v229
  %2546 = vmatmul.mubr.f32.gmra.mrb[0].mxu0 %v228
  %v2547 = vpop.f32.mrb[0].mxu0
  %v2548 = vadd.f32 %v2163, %v2547
  %v2549 = vpop.f32.mrb[0].mxu0
  %2550 = vmatprep.mubr.f32.mxu0 %v242
  %2551 = vmatmul.mubr.f32.gmra.mrb[0].mxu0 %v241
  %v2552 = vpop.f32.mrb[0].mxu0
  %v2553 = vadd.f32 %v2168, %v2552
  %v2554 = vpop.f32.mrb[0].mxu0
  %2555 = vmatprep.mubr.f32.mxu0 %v255
  %2556 = vmatmul.mubr.f32.gmra.mrb[0].mxu0 %v254
  %v2557 = vpop.f32.mrb[0].mxu0
  %v2558 = vadd.f32 %v2173, %v2557
  %v2559 = vpop.f32.mrb[0].mxu0
  %2560 = vmatprep.mubr.f32.mxu0 %v268
  %2561 = vmatmul.mubr.f32.gmra.mrb[0].mxu0 %v267
  %v2562 = vpop.f32.mrb[0].mxu0
  %v2563 = vadd.f32 %v2178, %v2562
  %v2564 = vpop.f32.mrb[0].mxu0
  %2565 = vmatprep.mubr.f32.mxu0 %v281
  %2566 = vmatmul.mubr.f32.gmra.mrb[0].mxu0 %v280
  %v2567 = vpop.f32.mrb[0].mxu0
  %v2568 = vadd.f32 %v2183, %v2567
  %v2569 = vpop.f32.mrb[0].mxu0
  %2570 = vmatprep.mubr.f32.mxu0 %v294
  %2571 = vmatmul.mubr.f32.gmra.mrb[0].mxu0 %v293
  %v2572 = vpop.f32.mrb[0].mxu0
  %v2573 = vadd.f32 %v2188, %v2572
  %v2574 = vpop.f32.mrb[0].mxu0
  %2575 = vmatprep.mubr.f32.mxu0 %v307
  %2576 = vmatmul.mubr.f32.gmra.mrb[0].mxu0 %v306
  %v2577 = vpop.f32.mrb[0].mxu0
  %v2578 = vadd.f32 %v2193, %v2577
  %v2579 = vpop.f32.mrb[0].mxu0
  %2580 = vmatprep.mubr.f32.mxu0 %v320
  %2581 = vmatmul.mubr.f32.gmra.mrb[0].mxu0 %v319
  %v2582 = vpop.f32.mrb[0].mxu0
  %v2583 = vadd.f32 %v2198, %v2582
  %v2584 = vpop.f32.mrb[0].mxu0
  %2585 = vmatprep.mubr.f32.mxu0 %v333
  %2586 = vmatmul.mubr.f32.gmra.mrb[0].mxu0 %v332
  %v2587 = vpop.f32.mrb[0].mxu0
  %v2588 = vadd.f32 %v2203, %v2587
  %v2589 = vpop.f32.mrb[0].mxu0
  %2590 = vmatprep.mubr.f32.mxu0 %v346
  %2591 = vmatmul.mubr.f32.gmra.mrb[0].mxu0 %v345
  %v2592 = vpop.f32.mrb[0].mxu0
  %v2593 = vadd.f32 %v2208, %v2592
  %v2594 = vpop.f32.mrb[0].mxu0
  %2595 = vmatprep.mubr.f32.mxu0 %v359
  %2596 = vmatmul.mubr.f32.gmra.mrb[0].mxu0 %v358
  %v2597 = vpop.f32.mrb[0].mxu0
  %v2598 = vadd.f32 %v2213, %v2597
  %v2599 = vpop.f32.mrb[0].mxu0
  %2600 = vmatprep.mubr.f32.mxu0 %v372
  %2601 = vmatmul.mubr.f32.gmra.mrb[0].mxu0 %v371
  %v2602 = vpop.f32.mrb[0].mxu0
  %v2603 = vadd.f32 %v2218, %v2602
  %v2604 = vpop.f32.mrb[0].mxu0
  %2605 = vmatprep.mubr.f32.mxu0 %v385
  %2606 = vmatmul.mubr.f32.gmra.mrb[0].mxu0 %v384
  %v2607 = vpop.f32.mrb[0].mxu0
  %v2608 = vadd.f32 %v2223, %v2607
  %v2609 = vpop.f32.mrb[0].mxu0
  %2610 = vmatprep.mubr.f32.mxu0 %v398
  %2611 = vmatmul.mubr.f32.gmra.mrb[0].mxu0 %v397
  %v2612 = vpop.f32.mrb[0].mxu0
  %v2613 = vadd.f32 %v2228, %v2612
  %v2614 = vpop.f32.mrb[0].mxu0
  %2615 = vmatprep.mubr.f32.mxu0 %v411
  %2616 = vmatmul.mubr.f32.gmra.mrb[0].mxu0 %v410
  %v2617 = vpop.f32.mrb[0].mxu0
  %v2618 = vadd.f32 %v2233, %v2617
  %v2619 = vpop.f32.mrb[0].mxu0
  %2620 = vmatprep.mubr.f32.mxu0 %v424
  %2621 = vmatmul.mubr.f32.gmra.mrb[0].mxu0 %v423
  %v2622 = vpop.f32.mrb[0].mxu0
  %v2623 = vadd.f32 %v2238, %v2622
  %v2624 = vpop.f32.mrb[0].mxu0
  %2625 = vmatprep.mubr.f32.mxu0 %v437
  %2626 = vmatmul.mubr.f32.gmra.mrb[0].mxu0 %v436
  %v2627 = vpop.f32.mrb[0].mxu0
  %v2628 = vadd.f32 %v2243, %v2627
  %v2629 = vpop.f32.mrb[0].mxu0
  %2630 = vmatprep.mubr.f32.mxu0 %v450
  %2631 = vmatmul.mubr.f32.gmra.mrb[0].mxu0 %v449
  %v2632 = vpop.f32.mrb[0].mxu0
  %v2633 = vadd.f32 %v2248, %v2632
  %v2634 = vpop.f32.mrb[0].mxu0
  %2635 = vmatprep.mubr.f32.mxu0 %v463
  %2636 = vmatmul.mubr.f32.gmra.mrb[0].mxu0 %v462
  %v2637 = vpop.f32.mrb[0].mxu0
  %v2638 = vadd.f32 %v2253, %v2637
  %v2639 = vpop.f32.mrb[0].mxu0
  %2640 = vmatprep.mubr.f32.mxu0 %v476
  %2641 = vmatmul.mubr.f32.gmra.mrb[0].mxu0 %v475
  %v2642 = vpop.f32.mrb[0].mxu0
  %v2643 = vadd.f32 %v2258, %v2642
  %v2644 = vpop.f32.mrb[0].mxu0
  %2645 = vmatprep.mubr.f32.mxu0 %v489
  %2646 = vmatmul.mubr.f32.gmra.mrb[0].mxu0 %v488
  %v2647 = vpop.f32.mrb[0].mxu0
  %v2648 = vadd.f32 %v2263, %v2647
  %v2649 = vpop.f32.mrb[0].mxu0
  %2650 = vmatprep.mubr.f32.mxu0 %v502
  %2651 = vmatmul.mubr.f32.gmra.mrb[0].mxu0 %v501
  %v2652 = vpop.f32.mrb[0].mxu0
  %v2653 = vadd.f32 %v2268, %v2652
  %v2654 = vpop.f32.mrb[0].mxu0
  %2655 = vmatprep.mubr.f32.mxu0 %v515
  %2656 = vmatmul.mubr.f32.gmra.mrb[0].mxu0 %v514
  %v2657 = vpop.f32.mrb[0].mxu0
  %v2658 = vadd.f32 %v2273, %v2657
  %v2659 = vpop.f32.mrb[0].mxu0
  %2660 = vmatprep.mubr.f32.mxu0 %v528
  %2661 = vmatmul.mubr.f32.gmra.mrb[0].mxu0 %v527
  %v2662 = vpop.f32.mrb[0].mxu0
  %v2663 = vadd.f32 %v2278, %v2662
  %v2664 = vpop.f32.mrb[0].mxu0
  %2665 = vmatprep.mubr.f32.mxu0 %v541
  %2666 = vmatmul.mubr.f32.gmra.mrb[0].mxu0 %v540
  %v2667 = vpop.f32.mrb[0].mxu0
  %v2668 = vadd.f32 %v2283, %v2667
  %v2669 = vpop.f32.mrb[0].mxu0
  %2670 = vmatprep.mubr.f32.mxu0 %v554
  %2671 = vmatmul.mubr.f32.gmra.mrb[0].mxu0 %v553
  %v2672 = vpop.f32.mrb[0].mxu0
  %v2673 = vadd.f32 %v2288, %v2672
  %v2674 = vpop.f32.mrb[0].mxu0
  %2675 = vmatprep.mubr.f32.mxu0 %v567
  %2676 = vmatmul.mubr.f32.gmra.mrb[0].mxu0 %v566
  %v2677 = vpop.f32.mrb[0].mxu0
  %v2678 = vadd.f32 %v2293, %v2677
  %v2679 = vpop.f32.mrb[0].mxu0
  %2680 = vmatprep.mubr.f32.mxu0 %v580
  %2681 = vmatmul.mubr.f32.gmra.mrb[0].mxu0 %v579
  %v2682 = vpop.f32.mrb[0].mxu0
  %v2683 = vadd.f32 %v2298, %v2682
  %v2684 = vpop.f32.mrb[0].mxu0
  %2685 = vmatprep.mubr.f32.mxu0 %v593
  %2686 = vmatmul.mubr.f32.gmra.mrb[0].mxu0 %v592
  %v2687 = vpop.f32.mrb[0].mxu0
  %v2688 = vadd.f32 %v2303, %v2687
  %v2689 = vpop.f32.mrb[0].mxu0
  %2690 = vmatprep.mubr.f32.mxu0 %v606
  %2691 = vmatmul.mubr.f32.gmra.mrb[0].mxu0 %v605
  %v2692 = vpop.f32.mrb[0].mxu0
  %v2693 = vadd.f32 %v2308, %v2692
  %v2694 = vpop.f32.mrb[0].mxu0
  %2695 = vmatprep.mubr.f32.mxu0 %v619
  %2696 = vmatmul.mubr.f32.gmra.mrb[0].mxu0 %v618
  %v2697 = vpop.f32.mrb[0].mxu0
  %v2698 = vadd.f32 %v2313, %v2697
  %v2699 = vpop.f32.mrb[0].mxu0
  %2700 = vmatprep.mubr.f32.mxu0 %v632
  %2701 = vmatmul.mubr.f32.gmra.mrb[0].mxu0 %v631
  %v2702 = vpop.f32.mrb[0].mxu0
  %v2703 = vadd.f32 %v2318, %v2702
  %v2704 = vpop.f32.mrb[0].mxu0
  %2705 = vmatprep.mubr.f32.mxu0 %v645
  %2706 = vmatmul.mubr.f32.gmra.mrb[0].mxu0 %v644
  %v2707 = vpop.f32.mrb[0].mxu0
  %v2708 = vadd.f32 %v2323, %v2707
  %v2709 = vpop.f32.mrb[0].mxu0
  %2710 = vmatprep.mubr.f32.mxu0 %v658
  %2711 = vmatmul.mubr.f32.gmra.mrb[0].mxu0 %v657
  %v2712 = vpop.f32.mrb[0].mxu0
  %v2713 = vadd.f32 %v2328, %v2712
  %v2714 = vpop.f32.mrb[0].mxu0
  %2715 = vmatprep.mubr.f32.mxu0 %v671
  %2716 = vmatmul.mubr.f32.gmra.mrb[0].mxu0 %v670
  %v2717 = vpop.f32.mrb[0].mxu0
  %v2718 = vadd.f32 %v2333, %v2717
  %v2719 = vpop.f32.mrb[0].mxu0
  %2720 = vmatprep.mubr.f32.mxu0 %v684
  %2721 = vmatmul.mubr.f32.gmra.mrb[0].mxu0 %v683
  %v2722 = vpop.f32.mrb[0].mxu0
  %v2723 = vadd.f32 %v2338, %v2722
  %v2724 = vpop.f32.mrb[0].mxu0
  %2725 = vmatprep.mubr.f32.mxu0 %v697
  %2726 = vmatmul.mubr.f32.gmra.mrb[0].mxu0 %v696
  %v2727 = vpop.f32.mrb[0].mxu0
  %v2728 = vadd.f32 %v2343, %v2727
  %v2729 = vpop.f32.mrb[0].mxu0
  %2730 = vmatprep.mubr.f32.mxu0 %v710
  %2731 = vmatmul.mubr.f32.gmra.mrb[0].mxu0 %v709
  %v2732 = vpop.f32.mrb[0].mxu0
  %v2733 = vadd.f32 %v2348, %v2732
  %v2734 = vpop.f32.mrb[0].mxu0
  %2735 = vmatprep.mubr.f32.mxu0 %v723
  %2736 = vmatmul.mubr.f32.gmra.mrb[0].mxu0 %v722
  %v2737 = vpop.f32.mrb[0].mxu0
  %v2738 = vadd.f32 %v2353, %v2737
  %v2739 = vpop.f32.mrb[0].mxu0
  %2740 = vmatprep.mubr.f32.mxu0 %v736
  %2741 = vmatmul.mubr.f32.gmra.mrb[0].mxu0 %v735
  %v2742 = vpop.f32.mrb[0].mxu0
  %v2743 = vadd.f32 %v2358, %v2742
  %v2744 = vpop.f32.mrb[0].mxu0
  %2745 = vmatprep.mubr.f32.mxu0 %v749
  %2746 = vmatmul.mubr.f32.gmra.mrb[0].mxu0 %v748
  %v2747 = vpop.f32.mrb[0].mxu0
  %v2748 = vadd.f32 %v2363, %v2747
  %v2749 = vpop.f32.mrb[0].mxu0
  %2750 = vmatprep.mubr.f32.mxu0 %v762
  %2751 = vmatmul.mubr.f32.gmra.mrb[0].mxu0 %v761
  %v2752 = vpop.f32.mrb[0].mxu0
  %v2753 = vadd.f32 %v2368, %v2752
  %v2754 = vpop.f32.mrb[0].mxu0
  %2755 = vmatprep.mubr.f32.mxu0 %v775
  %2756 = vmatmul.mubr.f32.gmra.mrb[0].mxu0 %v774
  %v2757 = vpop.f32.mrb[0].mxu0
  %v2758 = vadd.f32 %v2373, %v2757
  %v2759 = vpop.f32.mrb[0].mxu0
  %2760 = vmatprep.mubr.f32.mxu0 %v788
  %2761 = vmatmul.mubr.f32.gmra.mrb[0].mxu0 %v787
  %v2762 = vpop.f32.mrb[0].mxu0
  %v2763 = vadd.f32 %v2378, %v2762
  %v2764 = vpop.f32.mrb[0].mxu0
  %2765 = vmatprep.mubr.f32.mxu0 %v801
  %2766 = vmatmul.mubr.f32.gmra.mrb[0].mxu0 %v800
  %v2767 = vpop.f32.mrb[0].mxu0
  %v2768 = vadd.f32 %v2383, %v2767
  %v2769 = vpop.f32.mrb[0].mxu0
  %2770 = vmatprep.mubr.f32.mxu0 %v814
  %2771 = vmatmul.mubr.f32.gmra.mrb[0].mxu0 %v813
  %v2772 = vpop.f32.mrb[0].mxu0
  %v2773 = vadd.f32 %v2388, %v2772
  %v2774 = vpop.f32.mrb[0].mxu0
  %2775 = vmatprep.mubr.f32.mxu0 %v827
  %2776 = vmatmul.mubr.f32.gmra.mrb[0].mxu0 %v826
  %v2777 = vpop.f32.mrb[0].mxu0
  %v2778 = vadd.f32 %v2393, %v2777
  %v2779 = vpop.f32.mrb[0].mxu0
  %2780 = vmatprep.mubr.f32.mxu0 %v840
  %2781 = vmatmul.mubr.f32.gmra.mrb[0].mxu0 %v839
  %v2782 = vpop.f32.mrb[0].mxu0
  %v2783 = vadd.f32 %v2398, %v2782
  %v2784 = vpop.f32.mrb[0].mxu0
  %2785 = vdwg.mxu0
  %2786 = vmatprep.subr.mxu0 0.0
  %2787 = vmatpush1.msra.mxu0 %v974
  %2788 = vmatprep.subr.mxu0 0.0
  %2789 = vmatpush1.msra.mxu0 %v975
  %2790 = vmatprep.subr.mxu0 0.0
  %2791 = vmatpush1.msra.mxu0 %v976
  %2792 = vmatprep.subr.mxu0 0.0
  %2793 = vmatpush1.msra.mxu0 %v977
  %2794 = vmatprep.subr.mxu0 0.0
  %2795 = vmatpush1.msra.mxu0 %v978
  %2796 = vmatprep.subr.mxu0 0.0
  %2797 = vmatpush1.msra.mxu0 %v979
  %2798 = vmatprep.subr.mxu0 0.0
  %2799 = vmatpush1.msra.mxu0 %v980
  %2800 = vmatprep.subr.mxu0 0.0
  %2801 = vmatpush1.msra.mxu0 %v981
  %2802 = vmatprep.subr.mxu0 0.0
  %2803 = vmatpush1.msra.mxu0 %v982
  %2804 = vmatprep.subr.mxu0 0.0
  %2805 = vmatpush1.msra.mxu0 %v983
  %2806 = vmatprep.subr.mxu0 0.0
  %2807 = vmatpush1.msra.mxu0 %v984
  %2808 = vmatprep.subr.mxu0 0.0
  %2809 = vmatpush1.msra.mxu0 %v985
  %2810 = vmatprep.subr.mxu0 0.0
  %2811 = vmatpush1.msra.mxu0 %v986
  %2812 = vmatprep.subr.mxu0 0.0
  %2813 = vmatpush1.msra.mxu0 %v987
  %2814 = vmatprep.subr.mxu0 0.0
  %2815 = vmatpush1.msra.mxu0 %v988
  %2816 = vmatprep.subr.mxu0 0.0
  %2817 = vmatpush1.msra.mxu0 %v989
  %2818 = vmatprep.subr.mxu0 0.0
  %2819 = vmatpush1.msra.mxu0 %v990
  %2820 = vmatprep.subr.mxu0 0.0
  %2821 = vmatpush1.msra.mxu0 %v991
  %2822 = vmatprep.subr.mxu0 0.0
  %2823 = vmatpush1.msra.mxu0 %v992
  %2824 = vmatprep.subr.mxu0 0.0
  %2825 = vmatpush1.msra.mxu0 %v993
  %2826 = vmatprep.subr.mxu0 0.0
  %2827 = vmatpush1.msra.mxu0 %v994
  %2828 = vmatprep.subr.mxu0 0.0
  %2829 = vmatpush1.msra.mxu0 %v995
  %2830 = vmatprep.subr.mxu0 0.0
  %2831 = vmatpush1.msra.mxu0 %v996
  %2832 = vmatprep.subr.mxu0 0.0
  %2833 = vmatpush1.msra.mxu0 %v997
  %2834 = vmatprep.subr.mxu0 0.0
  %2835 = vmatpush1.msra.mxu0 %v998
  %2836 = vmatprep.subr.mxu0 0.0
  %2837 = vmatpush1.msra.mxu0 %v999
  %2838 = vmatprep.subr.mxu0 0.0
  %2839 = vmatpush1.msra.mxu0 %v1000
  %2840 = vmatprep.subr.mxu0 0.0
  %2841 = vmatpush1.msra.mxu0 %v1001
  %2842 = vmatprep.subr.mxu0 0.0
  %2843 = vmatpush1.msra.mxu0 %v1002
  %2844 = vmatprep.subr.mxu0 0.0
  %2845 = vmatpush1.msra.mxu0 %v1003
  %2846 = vmatprep.subr.mxu0 0.0
  %2847 = vmatpush1.msra.mxu0 %v1004
  %2848 = vmatprep.subr.mxu0 0.0
  %2849 = vmatpush1.msra.mxu0 %v1005
  %2850 = vmatprep.mubr.f32.mxu0 %v23
  %2851 = vmatmul.mubr.f32.gmra.mrb[0].mxu0 %v22
  %v2852 = vpop.f32.mrb[0].mxu0
  %v2853 = vadd.f32 %v2468, %v2852
  %v2854 = vpop.f32.mrb[0].mxu0
  %2855 = vmatprep.mubr.f32.mxu0 %v36
  %2856 = vmatmul.mubr.f32.gmra.mrb[0].mxu0 %v35
  %v2857 = vpop.f32.mrb[0].mxu0
  %v2858 = vadd.f32 %v2473, %v2857
  %v2859 = vpop.f32.mrb[0].mxu0
  %2860 = vmatprep.mubr.f32.mxu0 %v49
  %2861 = vmatmul.mubr.f32.gmra.mrb[0].mxu0 %v48
  %v2862 = vpop.f32.mrb[0].mxu0
  %v2863 = vadd.f32 %v2478, %v2862
  %v2864 = vpop.f32.mrb[0].mxu0
  %2865 = vmatprep.mubr.f32.mxu0 %v62
  %2866 = vmatmul.mubr.f32.gmra.mrb[0].mxu0 %v61
  %v2867 = vpop.f32.mrb[0].mxu0
  %v2868 = vadd.f32 %v2483, %v2867
  %v2869 = vpop.f32.mrb[0].mxu0
  %2870 = vmatprep.mubr.f32.mxu0 %v75
  %2871 = vmatmul.mubr.f32.gmra.mrb[0].mxu0 %v74
  %v2872 = vpop.f32.mrb[0].mxu0
  %v2873 = vadd.f32 %v2488, %v2872
  %v2874 = vpop.f32.mrb[0].mxu0
  %2875 = vmatprep.mubr.f32.mxu0 %v88
  %2876 = vmatmul.mubr.f32.gmra.mrb[0].mxu0 %v87
  %v2877 = vpop.f32.mrb[0].mxu0
  %v2878 = vadd.f32 %v2493, %v2877
  %v2879 = vpop.f32.mrb[0].mxu0
  %2880 = vmatprep.mubr.f32.mxu0 %v101
  %2881 = vmatmul.mubr.f32.gmra.mrb[0].mxu0 %v100
  %v2882 = vpop.f32.mrb[0].mxu0
  %v2883 = vadd.f32 %v2498, %v2882
  %v2884 = vpop.f32.mrb[0].mxu0
  %2885 = vmatprep.mubr.f32.mxu0 %v114
  %2886 = vmatmul.mubr.f32.gmra.mrb[0].mxu0 %v113
  %v2887 = vpop.f32.mrb[0].mxu0
  %v2888 = vadd.f32 %v2503, %v2887
  %v2889 = vpop.f32.mrb[0].mxu0
  %2890 = vmatprep.mubr.f32.mxu0 %v127
  %2891 = vmatmul.mubr.f32.gmra.mrb[0].mxu0 %v126
  %v2892 = vpop.f32.mrb[0].mxu0
  %v2893 = vadd.f32 %v2508, %v2892
  %v2894 = vpop.f32.mrb[0].mxu0
  %2895 = vmatprep.mubr.f32.mxu0 %v140
  %2896 = vmatmul.mubr.f32.gmra.mrb[0].mxu0 %v139
  %v2897 = vpop.f32.mrb[0].mxu0
  %v2898 = vadd.f32 %v2513, %v2897
  %v2899 = vpop.f32.mrb[0].mxu0
  %2900 = vmatprep.mubr.f32.mxu0 %v153
  %2901 = vmatmul.mubr.f32.gmra.mrb[0].mxu0 %v152
  %v2902 = vpop.f32.mrb[0].mxu0
  %v2903 = vadd.f32 %v2518, %v2902
  %v2904 = vpop.f32.mrb[0].mxu0
  %2905 = vmatprep.mubr.f32.mxu0 %v166
  %2906 = vmatmul.mubr.f32.gmra.mrb[0].mxu0 %v165
  %v2907 = vpop.f32.mrb[0].mxu0
  %v2908 = vadd.f32 %v2523, %v2907
  %v2909 = vpop.f32.mrb[0].mxu0
  %2910 = vmatprep.mubr.f32.mxu0 %v179
  %2911 = vmatmul.mubr.f32.gmra.mrb[0].mxu0 %v178
  %v2912 = vpop.f32.mrb[0].mxu0
  %v2913 = vadd.f32 %v2528, %v2912
  %v2914 = vpop.f32.mrb[0].mxu0
  %2915 = vmatprep.mubr.f32.mxu0 %v192
  %2916 = vmatmul.mubr.f32.gmra.mrb[0].mxu0 %v191
  %v2917 = vpop.f32.mrb[0].mxu0
  %v2918 = vadd.f32 %v2533, %v2917
  %v2919 = vpop.f32.mrb[0].mxu0
  %2920 = vmatprep.mubr.f32.mxu0 %v205
  %2921 = vmatmul.mubr.f32.gmra.mrb[0].mxu0 %v204
  %v2922 = vpop.f32.mrb[0].mxu0
  %v2923 = vadd.f32 %v2538, %v2922
  %v2924 = vpop.f32.mrb[0].mxu0
  %2925 = vmatprep.mubr.f32.mxu0 %v218
  %2926 = vmatmul.mubr.f32.gmra.mrb[0].mxu0 %v217
  %v2927 = vpop.f32.mrb[0].mxu0
  %v2928 = vadd.f32 %v2543, %v2927
  %v2929 = vpop.f32.mrb[0].mxu0
  %2930 = vmatprep.mubr.f32.mxu0 %v231
  %2931 = vmatmul.mubr.f32.gmra.mrb[0].mxu0 %v230
  %v2932 = vpop.f32.mrb[0].mxu0
  %v2933 = vadd.f32 %v2548, %v2932
  %v2934 = vpop.f32.mrb[0].mxu0
  %2935 = vmatprep.mubr.f32.mxu0 %v244
  %2936 = vmatmul.mubr.f32.gmra.mrb[0].mxu0 %v243
  %v2937 = vpop.f32.mrb[0].mxu0
  %v2938 = vadd.f32 %v2553, %v2937
  %v2939 = vpop.f32.mrb[0].mxu0
  %2940 = vmatprep.mubr.f32.mxu0 %v257
  %2941 = vmatmul.mubr.f32.gmra.mrb[0].mxu0 %v256
  %v2942 = vpop.f32.mrb[0].mxu0
  %v2943 = vadd.f32 %v2558, %v2942
  %v2944 = vpop.f32.mrb[0].mxu0
  %2945 = vmatprep.mubr.f32.mxu0 %v270
  %2946 = vmatmul.mubr.f32.gmra.mrb[0].mxu0 %v269
  %v2947 = vpop.f32.mrb[0].mxu0
  %v2948 = vadd.f32 %v2563, %v2947
  %v2949 = vpop.f32.mrb[0].mxu0
  %2950 = vmatprep.mubr.f32.mxu0 %v283
  %2951 = vmatmul.mubr.f32.gmra.mrb[0].mxu0 %v282
  %v2952 = vpop.f32.mrb[0].mxu0
  %v2953 = vadd.f32 %v2568, %v2952
  %v2954 = vpop.f32.mrb[0].mxu0
  %2955 = vmatprep.mubr.f32.mxu0 %v296
  %2956 = vmatmul.mubr.f32.gmra.mrb[0].mxu0 %v295
  %v2957 = vpop.f32.mrb[0].mxu0
  %v2958 = vadd.f32 %v2573, %v2957
  %v2959 = vpop.f32.mrb[0].mxu0
  %2960 = vmatprep.mubr.f32.mxu0 %v309
  %2961 = vmatmul.mubr.f32.gmra.mrb[0].mxu0 %v308
  %v2962 = vpop.f32.mrb[0].mxu0
  %v2963 = vadd.f32 %v2578, %v2962
  %v2964 = vpop.f32.mrb[0].mxu0
  %2965 = vmatprep.mubr.f32.mxu0 %v322
  %2966 = vmatmul.mubr.f32.gmra.mrb[0].mxu0 %v321
  %v2967 = vpop.f32.mrb[0].mxu0
  %v2968 = vadd.f32 %v2583, %v2967
  %v2969 = vpop.f32.mrb[0].mxu0
  %2970 = vmatprep.mubr.f32.mxu0 %v335
  %2971 = vmatmul.mubr.f32.gmra.mrb[0].mxu0 %v334
  %v2972 = vpop.f32.mrb[0].mxu0
  %v2973 = vadd.f32 %v2588, %v2972
  %v2974 = vpop.f32.mrb[0].mxu0
  %2975 = vmatprep.mubr.f32.mxu0 %v348
  %2976 = vmatmul.mubr.f32.gmra.mrb[0].mxu0 %v347
  %v2977 = vpop.f32.mrb[0].mxu0
  %v2978 = vadd.f32 %v2593, %v2977
  %v2979 = vpop.f32.mrb[0].mxu0
  %2980 = vmatprep.mubr.f32.mxu0 %v361
  %2981 = vmatmul.mubr.f32.gmra.mrb[0].mxu0 %v360
  %v2982 = vpop.f32.mrb[0].mxu0
  %v2983 = vadd.f32 %v2598, %v2982
  %v2984 = vpop.f32.mrb[0].mxu0
  %2985 = vmatprep.mubr.f32.mxu0 %v374
  %2986 = vmatmul.mubr.f32.gmra.mrb[0].mxu0 %v373
  %v2987 = vpop.f32.mrb[0].mxu0
  %v2988 = vadd.f32 %v2603, %v2987
  %v2989 = vpop.f32.mrb[0].mxu0
  %2990 = vmatprep.mubr.f32.mxu0 %v387
  %2991 = vmatmul.mubr.f32.gmra.mrb[0].mxu0 %v386
  %v2992 = vpop.f32.mrb[0].mxu0
  %v2993 = vadd.f32 %v2608, %v2992
  %v2994 = vpop.f32.mrb[0].mxu0
  %2995 = vmatprep.mubr.f32.mxu0 %v400
  %2996 = vmatmul.mubr.f32.gmra.mrb[0].mxu0 %v399
  %v2997 = vpop.f32.mrb[0].mxu0
  %v2998 = vadd.f32 %v2613, %v2997
  %v2999 = vpop.f32.mrb[0].mxu0
  %3000 = vmatprep.mubr.f32.mxu0 %v413
  %3001 = vmatmul.mubr.f32.gmra.mrb[0].mxu0 %v412
  %v3002 = vpop.f32.mrb[0].mxu0
  %v3003 = vadd.f32 %v2618, %v3002
  %v3004 = vpop.f32.mrb[0].mxu0
  %3005 = vmatprep.mubr.f32.mxu0 %v426
  %3006 = vmatmul.mubr.f32.gmra.mrb[0].mxu0 %v425
  %v3007 = vpop.f32.mrb[0].mxu0
  %v3008 = vadd.f32 %v2623, %v3007
  %v3009 = vpop.f32.mrb[0].mxu0
  %3010 = vmatprep.mubr.f32.mxu0 %v439
  %3011 = vmatmul.mubr.f32.gmra.mrb[0].mxu0 %v438
  %v3012 = vpop.f32.mrb[0].mxu0
  %v3013 = vadd.f32 %v2628, %v3012
  %v3014 = vpop.f32.mrb[0].mxu0
  %3015 = vmatprep.mubr.f32.mxu0 %v452
  %3016 = vmatmul.mubr.f32.gmra.mrb[0].mxu0 %v451
  %v3017 = vpop.f32.mrb[0].mxu0
  %v3018 = vadd.f32 %v2633, %v3017
  %v3019 = vpop.f32.mrb[0].mxu0
  %3020 = vmatprep.mubr.f32.mxu0 %v465
  %3021 = vmatmul.mubr.f32.gmra.mrb[0].mxu0 %v464
  %v3022 = vpop.f32.mrb[0].mxu0
  %v3023 = vadd.f32 %v2638, %v3022
  %v3024 = vpop.f32.mrb[0].mxu0
  %3025 = vmatprep.mubr.f32.mxu0 %v478
  %3026 = vmatmul.mubr.f32.gmra.mrb[0].mxu0 %v477
  %v3027 = vpop.f32.mrb[0].mxu0
  %v3028 = vadd.f32 %v2643, %v3027
  %v3029 = vpop.f32.mrb[0].mxu0
  %3030 = vmatprep.mubr.f32.mxu0 %v491
  %3031 = vmatmul.mubr.f32.gmra.mrb[0].mxu0 %v490
  %v3032 = vpop.f32.mrb[0].mxu0
  %v3033 = vadd.f32 %v2648, %v3032
  %v3034 = vpop.f32.mrb[0].mxu0
  %3035 = vmatprep.mubr.f32.mxu0 %v504
  %3036 = vmatmul.mubr.f32.gmra.mrb[0].mxu0 %v503
  %v3037 = vpop.f32.mrb[0].mxu0
  %v3038 = vadd.f32 %v2653, %v3037
  %v3039 = vpop.f32.mrb[0].mxu0
  %3040 = vmatprep.mubr.f32.mxu0 %v517
  %3041 = vmatmul.mubr.f32.gmra.mrb[0].mxu0 %v516
  %v3042 = vpop.f32.mrb[0].mxu0
  %v3043 = vadd.f32 %v2658, %v3042
  %v3044 = vpop.f32.mrb[0].mxu0
  %3045 = vmatprep.mubr.f32.mxu0 %v530
  %3046 = vmatmul.mubr.f32.gmra.mrb[0].mxu0 %v529
  %v3047 = vpop.f32.mrb[0].mxu0
  %v3048 = vadd.f32 %v2663, %v3047
  %v3049 = vpop.f32.mrb[0].mxu0
  %3050 = vmatprep.mubr.f32.mxu0 %v543
  %3051 = vmatmul.mubr.f32.gmra.mrb[0].mxu0 %v542
  %v3052 = vpop.f32.mrb[0].mxu0
  %v3053 = vadd.f32 %v2668, %v3052
  %v3054 = vpop.f32.mrb[0].mxu0
  %3055 = vmatprep.mubr.f32.mxu0 %v556
  %3056 = vmatmul.mubr.f32.gmra.mrb[0].mxu0 %v555
  %v3057 = vpop.f32.mrb[0].mxu0
  %v3058 = vadd.f32 %v2673, %v3057
  %v3059 = vpop.f32.mrb[0].mxu0
  %3060 = vmatprep.mubr.f32.mxu0 %v569
  %3061 = vmatmul.mubr.f32.gmra.mrb[0].mxu0 %v568
  %v3062 = vpop.f32.mrb[0].mxu0
  %v3063 = vadd.f32 %v2678, %v3062
  %v3064 = vpop.f32.mrb[0].mxu0
  %3065 = vmatprep.mubr.f32.mxu0 %v582
  %3066 = vmatmul.mubr.f32.gmra.mrb[0].mxu0 %v581
  %v3067 = vpop.f32.mrb[0].mxu0
  %v3068 = vadd.f32 %v2683, %v3067
  %v3069 = vpop.f32.mrb[0].mxu0
  %3070 = vmatprep.mubr.f32.mxu0 %v595
  %3071 = vmatmul.mubr.f32.gmra.mrb[0].mxu0 %v594
  %v3072 = vpop.f32.mrb[0].mxu0
  %v3073 = vadd.f32 %v2688, %v3072
  %v3074 = vpop.f32.mrb[0].mxu0
  %3075 = vmatprep.mubr.f32.mxu0 %v608
  %3076 = vmatmul.mubr.f32.gmra.mrb[0].mxu0 %v607
  %v3077 = vpop.f32.mrb[0].mxu0
  %v3078 = vadd.f32 %v2693, %v3077
  %v3079 = vpop.f32.mrb[0].mxu0
  %3080 = vmatprep.mubr.f32.mxu0 %v621
  %3081 = vmatmul.mubr.f32.gmra.mrb[0].mxu0 %v620
  %v3082 = vpop.f32.mrb[0].mxu0
  %v3083 = vadd.f32 %v2698, %v3082
  %v3084 = vpop.f32.mrb[0].mxu0
  %3085 = vmatprep.mubr.f32.mxu0 %v634
  %3086 = vmatmul.mubr.f32.gmra.mrb[0].mxu0 %v633
  %v3087 = vpop.f32.mrb[0].mxu0
  %v3088 = vadd.f32 %v2703, %v3087
  %v3089 = vpop.f32.mrb[0].mxu0
  %3090 = vmatprep.mubr.f32.mxu0 %v647
  %3091 = vmatmul.mubr.f32.gmra.mrb[0].mxu0 %v646
  %v3092 = vpop.f32.mrb[0].mxu0
  %v3093 = vadd.f32 %v2708, %v3092
  %v3094 = vpop.f32.mrb[0].mxu0
  %3095 = vmatprep.mubr.f32.mxu0 %v660
  %3096 = vmatmul.mubr.f32.gmra.mrb[0].mxu0 %v659
  %v3097 = vpop.f32.mrb[0].mxu0
  %v3098 = vadd.f32 %v2713, %v3097
  %v3099 = vpop.f32.mrb[0].mxu0
  %3100 = vmatprep.mubr.f32.mxu0 %v673
  %3101 = vmatmul.mubr.f32.gmra.mrb[0].mxu0 %v672
  %v3102 = vpop.f32.mrb[0].mxu0
  %v3103 = vadd.f32 %v2718, %v3102
  %v3104 = vpop.f32.mrb[0].mxu0
  %3105 = vmatprep.mubr.f32.mxu0 %v686
  %3106 = vmatmul.mubr.f32.gmra.mrb[0].mxu0 %v685
  %v3107 = vpop.f32.mrb[0].mxu0
  %v3108 = vadd.f32 %v2723, %v3107
  %v3109 = vpop.f32.mrb[0].mxu0
  %3110 = vmatprep.mubr.f32.mxu0 %v699
  %3111 = vmatmul.mubr.f32.gmra.mrb[0].mxu0 %v698
  %v3112 = vpop.f32.mrb[0].mxu0
  %v3113 = vadd.f32 %v2728, %v3112
  %v3114 = vpop.f32.mrb[0].mxu0
  %3115 = vmatprep.mubr.f32.mxu0 %v712
  %3116 = vmatmul.mubr.f32.gmra.mrb[0].mxu0 %v711
  %v3117 = vpop.f32.mrb[0].mxu0
  %v3118 = vadd.f32 %v2733, %v3117
  %v3119 = vpop.f32.mrb[0].mxu0
  %3120 = vmatprep.mubr.f32.mxu0 %v725
  %3121 = vmatmul.mubr.f32.gmra.mrb[0].mxu0 %v724
  %v3122 = vpop.f32.mrb[0].mxu0
  %v3123 = vadd.f32 %v2738, %v3122
  %v3124 = vpop.f32.mrb[0].mxu0
  %3125 = vmatprep.mubr.f32.mxu0 %v738
  %3126 = vmatmul.mubr.f32.gmra.mrb[0].mxu0 %v737
  %v3127 = vpop.f32.mrb[0].mxu0
  %v3128 = vadd.f32 %v2743, %v3127
  %v3129 = vpop.f32.mrb[0].mxu0
  %3130 = vmatprep.mubr.f32.mxu0 %v751
  %3131 = vmatmul.mubr.f32.gmra.mrb[0].mxu0 %v750
  %v3132 = vpop.f32.mrb[0].mxu0
  %v3133 = vadd.f32 %v2748, %v3132
  %v3134 = vpop.f32.mrb[0].mxu0
  %3135 = vmatprep.mubr.f32.mxu0 %v764
  %3136 = vmatmul.mubr.f32.gmra.mrb[0].mxu0 %v763
  %v3137 = vpop.f32.mrb[0].mxu0
  %v3138 = vadd.f32 %v2753, %v3137
  %v3139 = vpop.f32.mrb[0].mxu0
  %3140 = vmatprep.mubr.f32.mxu0 %v777
  %3141 = vmatmul.mubr.f32.gmra.mrb[0].mxu0 %v776
  %v3142 = vpop.f32.mrb[0].mxu0
  %v3143 = vadd.f32 %v2758, %v3142
  %v3144 = vpop.f32.mrb[0].mxu0
  %3145 = vmatprep.mubr.f32.mxu0 %v790
  %3146 = vmatmul.mubr.f32.gmra.mrb[0].mxu0 %v789
  %v3147 = vpop.f32.mrb[0].mxu0
  %v3148 = vadd.f32 %v2763, %v3147
  %v3149 = vpop.f32.mrb[0].mxu0
  %3150 = vmatprep.mubr.f32.mxu0 %v803
  %3151 = vmatmul.mubr.f32.gmra.mrb[0].mxu0 %v802
  %v3152 = vpop.f32.mrb[0].mxu0
  %v3153 = vadd.f32 %v2768, %v3152
  %v3154 = vpop.f32.mrb[0].mxu0
  %3155 = vmatprep.mubr.f32.mxu0 %v816
  %3156 = vmatmul.mubr.f32.gmra.mrb[0].mxu0 %v815
  %v3157 = vpop.f32.mrb[0].mxu0
  %v3158 = vadd.f32 %v2773, %v3157
  %v3159 = vpop.f32.mrb[0].mxu0
  %3160 = vmatprep.mubr.f32.mxu0 %v829
  %3161 = vmatmul.mubr.f32.gmra.mrb[0].mxu0 %v828
  %v3162 = vpop.f32.mrb[0].mxu0
  %v3163 = vadd.f32 %v2778, %v3162
  %v3164 = vpop.f32.mrb[0].mxu0
  %3165 = vmatprep.mubr.f32.mxu0 %v842
  %3166 = vmatmul.mubr.f32.gmra.mrb[0].mxu0 %v841
  %v3167 = vpop.f32.mrb[0].mxu0
  %v3168 = vadd.f32 %v2783, %v3167
  %v3169 = vpop.f32.mrb[0].mxu0
  %3170 = vdwg.mxu0
  %3171 = vmatprep.subr.mxu0 0.0
  %3172 = vmatpush1.msra.mxu0 %v1006
  %3173 = vmatprep.subr.mxu0 0.0
  %3174 = vmatpush1.msra.mxu0 %v1007
  %3175 = vmatprep.subr.mxu0 0.0
  %3176 = vmatpush1.msra.mxu0 %v1008
  %3177 = vmatprep.subr.mxu0 0.0
  %3178 = vmatpush1.msra.mxu0 %v1009
  %3179 = vmatprep.subr.mxu0 0.0
  %3180 = vmatpush1.msra.mxu0 %v1010
  %3181 = vmatprep.subr.mxu0 0.0
  %3182 = vmatpush1.msra.mxu0 %v1011
  %3183 = vmatprep.subr.mxu0 0.0
  %3184 = vmatpush1.msra.mxu0 %v1012
  %3185 = vmatprep.subr.mxu0 0.0
  %3186 = vmatpush1.msra.mxu0 %v1013
  %3187 = vmatprep.subr.mxu0 0.0
  %3188 = vmatpush1.msra.mxu0 %v1014
  %3189 = vmatprep.subr.mxu0 0.0
  %3190 = vmatpush1.msra.mxu0 %v1015
  %3191 = vmatprep.subr.mxu0 0.0
  %3192 = vmatpush1.msra.mxu0 %v1016
  %3193 = vmatprep.subr.mxu0 0.0
  %3194 = vmatpush1.msra.mxu0 %v1017
  %3195 = vmatprep.subr.mxu0 0.0
  %3196 = vmatpush1.msra.mxu0 %v1018
  %3197 = vmatprep.subr.mxu0 0.0
  %3198 = vmatpush1.msra.mxu0 %v1019
  %3199 = vmatprep.subr.mxu0 0.0
  %3200 = vmatpush1.msra.mxu0 %v1020
  %3201 = vmatprep.subr.mxu0 0.0
  %3202 = vmatpush1.msra.mxu0 %v1021
  %3203 = vmatprep.subr.mxu0 0.0
  %3204 = vmatpush1.msra.mxu0 %v1022
  %3205 = vmatprep.subr.mxu0 0.0
  %3206 = vmatpush1.msra.mxu0 %v1023
  %3207 = vmatprep.subr.mxu0 0.0
  %3208 = vmatpush1.msra.mxu0 %v1024
  %3209 = vmatprep.subr.mxu0 0.0
  %3210 = vmatpush1.msra.mxu0 %v1025
  %3211 = vmatprep.subr.mxu0 0.0
  %3212 = vmatpush1.msra.mxu0 %v1026
  %3213 = vmatprep.subr.mxu0 0.0
  %3214 = vmatpush1.msra.mxu0 %v1027
  %3215 = vmatprep.subr.mxu0 0.0
  %3216 = vmatpush1.msra.mxu0 %v1028
  %3217 = vmatprep.subr.mxu0 0.0
  %3218 = vmatpush1.msra.mxu0 %v1029
  %3219 = vmatprep.subr.mxu0 0.0
  %3220 = vmatpush1.msra.mxu0 %v1030
  %3221 = vmatprep.subr.mxu0 0.0
  %3222 = vmatpush1.msra.mxu0 %v1031
  %3223 = vmatprep.subr.mxu0 0.0
  %3224 = vmatpush1.msra.mxu0 %v1032
  %3225 = vmatprep.subr.mxu0 0.0
  %3226 = vmatpush1.msra.mxu0 %v1033
  %3227 = vmatprep.subr.mxu0 0.0
  %3228 = vmatpush1.msra.mxu0 %v1034
  %3229 = vmatprep.subr.mxu0 0.0
  %3230 = vmatpush1.msra.mxu0 %v1035
  %3231 = vmatprep.subr.mxu0 0.0
  %3232 = vmatpush1.msra.mxu0 %v1036
  %3233 = vmatprep.subr.mxu0 0.0
  %3234 = vmatpush1.msra.mxu0 %v1037
  %3235 = vmatprep.mubr.f32.mxu0 %v25
  %3236 = vmatmul.mubr.f32.gmra.mrb[0].mxu0 %v24
  %v3237 = vpop.f32.mrb[0].mxu0
  %v3238 = vadd.f32 %v2853, %v3237
  %v3239 = vpop.f32.mrb[0].mxu0
  %3240 = vmatprep.mubr.f32.mxu0 %v38
  %3241 = vmatmul.mubr.f32.gmra.mrb[0].mxu0 %v37
  %v3242 = vpop.f32.mrb[0].mxu0
  %v3243 = vadd.f32 %v2858, %v3242
  %v3244 = vpop.f32.mrb[0].mxu0
  %3245 = vmatprep.mubr.f32.mxu0 %v51
  %3246 = vmatmul.mubr.f32.gmra.mrb[0].mxu0 %v50
  %v3247 = vpop.f32.mrb[0].mxu0
  %v3248 = vadd.f32 %v2863, %v3247
  %v3249 = vpop.f32.mrb[0].mxu0
  %3250 = vmatprep.mubr.f32.mxu0 %v64
  %3251 = vmatmul.mubr.f32.gmra.mrb[0].mxu0 %v63
  %v3252 = vpop.f32.mrb[0].mxu0
  %v3253 = vadd.f32 %v2868, %v3252
  %v3254 = vpop.f32.mrb[0].mxu0
  %3255 = vmatprep.mubr.f32.mxu0 %v77
  %3256 = vmatmul.mubr.f32.gmra.mrb[0].mxu0 %v76
  %v3257 = vpop.f32.mrb[0].mxu0
  %v3258 = vadd.f32 %v2873, %v3257
  %v3259 = vpop.f32.mrb[0].mxu0
  %3260 = vmatprep.mubr.f32.mxu0 %v90
  %3261 = vmatmul.mubr.f32.gmra.mrb[0].mxu0 %v89
  %v3262 = vpop.f32.mrb[0].mxu0
  %v3263 = vadd.f32 %v2878, %v3262
  %v3264 = vpop.f32.mrb[0].mxu0
  %3265 = vmatprep.mubr.f32.mxu0 %v103
  %3266 = vmatmul.mubr.f32.gmra.mrb[0].mxu0 %v102
  %v3267 = vpop.f32.mrb[0].mxu0
  %v3268 = vadd.f32 %v2883, %v3267
  %v3269 = vpop.f32.mrb[0].mxu0
  %3270 = vmatprep.mubr.f32.mxu0 %v116
  %3271 = vmatmul.mubr.f32.gmra.mrb[0].mxu0 %v115
  %v3272 = vpop.f32.mrb[0].mxu0
  %v3273 = vadd.f32 %v2888, %v3272
  %v3274 = vpop.f32.mrb[0].mxu0
  %3275 = vmatprep.mubr.f32.mxu0 %v129
  %3276 = vmatmul.mubr.f32.gmra.mrb[0].mxu0 %v128
  %v3277 = vpop.f32.mrb[0].mxu0
  %v3278 = vadd.f32 %v2893, %v3277
  %v3279 = vpop.f32.mrb[0].mxu0
  %3280 = vmatprep.mubr.f32.mxu0 %v142
  %3281 = vmatmul.mubr.f32.gmra.mrb[0].mxu0 %v141
  %v3282 = vpop.f32.mrb[0].mxu0
  %v3283 = vadd.f32 %v2898, %v3282
  %v3284 = vpop.f32.mrb[0].mxu0
  %3285 = vmatprep.mubr.f32.mxu0 %v155
  %3286 = vmatmul.mubr.f32.gmra.mrb[0].mxu0 %v154
  %v3287 = vpop.f32.mrb[0].mxu0
  %v3288 = vadd.f32 %v2903, %v3287
  %v3289 = vpop.f32.mrb[0].mxu0
  %3290 = vmatprep.mubr.f32.mxu0 %v168
  %3291 = vmatmul.mubr.f32.gmra.mrb[0].mxu0 %v167
  %v3292 = vpop.f32.mrb[0].mxu0
  %v3293 = vadd.f32 %v2908, %v3292
  %v3294 = vpop.f32.mrb[0].mxu0
  %3295 = vmatprep.mubr.f32.mxu0 %v181
  %3296 = vmatmul.mubr.f32.gmra.mrb[0].mxu0 %v180
  %v3297 = vpop.f32.mrb[0].mxu0
  %v3298 = vadd.f32 %v2913, %v3297
  %v3299 = vpop.f32.mrb[0].mxu0
  %3300 = vmatprep.mubr.f32.mxu0 %v194
  %3301 = vmatmul.mubr.f32.gmra.mrb[0].mxu0 %v193
  %v3302 = vpop.f32.mrb[0].mxu0
  %v3303 = vadd.f32 %v2918, %v3302
  %v3304 = vpop.f32.mrb[0].mxu0
  %3305 = vmatprep.mubr.f32.mxu0 %v207
  %3306 = vmatmul.mubr.f32.gmra.mrb[0].mxu0 %v206
  %v3307 = vpop.f32.mrb[0].mxu0
  %v3308 = vadd.f32 %v2923, %v3307
  %v3309 = vpop.f32.mrb[0].mxu0
  %3310 = vmatprep.mubr.f32.mxu0 %v220
  %3311 = vmatmul.mubr.f32.gmra.mrb[0].mxu0 %v219
  %v3312 = vpop.f32.mrb[0].mxu0
  %v3313 = vadd.f32 %v2928, %v3312
  %v3314 = vpop.f32.mrb[0].mxu0
  %3315 = vmatprep.mubr.f32.mxu0 %v233
  %3316 = vmatmul.mubr.f32.gmra.mrb[0].mxu0 %v232
  %v3317 = vpop.f32.mrb[0].mxu0
  %v3318 = vadd.f32 %v2933, %v3317
  %v3319 = vpop.f32.mrb[0].mxu0
  %3320 = vmatprep.mubr.f32.mxu0 %v246
  %3321 = vmatmul.mubr.f32.gmra.mrb[0].mxu0 %v245
  %v3322 = vpop.f32.mrb[0].mxu0
  %v3323 = vadd.f32 %v2938, %v3322
  %v3324 = vpop.f32.mrb[0].mxu0
  %3325 = vmatprep.mubr.f32.mxu0 %v259
  %3326 = vmatmul.mubr.f32.gmra.mrb[0].mxu0 %v258
  %v3327 = vpop.f32.mrb[0].mxu0
  %v3328 = vadd.f32 %v2943, %v3327
  %v3329 = vpop.f32.mrb[0].mxu0
  %3330 = vmatprep.mubr.f32.mxu0 %v272
  %3331 = vmatmul.mubr.f32.gmra.mrb[0].mxu0 %v271
  %v3332 = vpop.f32.mrb[0].mxu0
  %v3333 = vadd.f32 %v2948, %v3332
  %v3334 = vpop.f32.mrb[0].mxu0
  %3335 = vmatprep.mubr.f32.mxu0 %v285
  %3336 = vmatmul.mubr.f32.gmra.mrb[0].mxu0 %v284
  %v3337 = vpop.f32.mrb[0].mxu0
  %v3338 = vadd.f32 %v2953, %v3337
  %v3339 = vpop.f32.mrb[0].mxu0
  %3340 = vmatprep.mubr.f32.mxu0 %v298
  %3341 = vmatmul.mubr.f32.gmra.mrb[0].mxu0 %v297
  %v3342 = vpop.f32.mrb[0].mxu0
  %v3343 = vadd.f32 %v2958, %v3342
  %v3344 = vpop.f32.mrb[0].mxu0
  %3345 = vmatprep.mubr.f32.mxu0 %v311
  %3346 = vmatmul.mubr.f32.gmra.mrb[0].mxu0 %v310
  %v3347 = vpop.f32.mrb[0].mxu0
  %v3348 = vadd.f32 %v2963, %v3347
  %v3349 = vpop.f32.mrb[0].mxu0
  %3350 = vmatprep.mubr.f32.mxu0 %v324
  %3351 = vmatmul.mubr.f32.gmra.mrb[0].mxu0 %v323
  %v3352 = vpop.f32.mrb[0].mxu0
  %v3353 = vadd.f32 %v2968, %v3352
  %v3354 = vpop.f32.mrb[0].mxu0
  %3355 = vmatprep.mubr.f32.mxu0 %v337
  %3356 = vmatmul.mubr.f32.gmra.mrb[0].mxu0 %v336
  %v3357 = vpop.f32.mrb[0].mxu0
  %v3358 = vadd.f32 %v2973, %v3357
  %v3359 = vpop.f32.mrb[0].mxu0
  %3360 = vmatprep.mubr.f32.mxu0 %v350
  %3361 = vmatmul.mubr.f32.gmra.mrb[0].mxu0 %v349
  %v3362 = vpop.f32.mrb[0].mxu0
  %v3363 = vadd.f32 %v2978, %v3362
  %v3364 = vpop.f32.mrb[0].mxu0
  %3365 = vmatprep.mubr.f32.mxu0 %v363
  %3366 = vmatmul.mubr.f32.gmra.mrb[0].mxu0 %v362
  %v3367 = vpop.f32.mrb[0].mxu0
  %v3368 = vadd.f32 %v2983, %v3367
  %v3369 = vpop.f32.mrb[0].mxu0
  %3370 = vmatprep.mubr.f32.mxu0 %v376
  %3371 = vmatmul.mubr.f32.gmra.mrb[0].mxu0 %v375
  %v3372 = vpop.f32.mrb[0].mxu0
  %v3373 = vadd.f32 %v2988, %v3372
  %v3374 = vpop.f32.mrb[0].mxu0
  %3375 = vmatprep.mubr.f32.mxu0 %v389
  %3376 = vmatmul.mubr.f32.gmra.mrb[0].mxu0 %v388
  %v3377 = vpop.f32.mrb[0].mxu0
  %v3378 = vadd.f32 %v2993, %v3377
  %v3379 = vpop.f32.mrb[0].mxu0
  %3380 = vmatprep.mubr.f32.mxu0 %v402
  %3381 = vmatmul.mubr.f32.gmra.mrb[0].mxu0 %v401
  %v3382 = vpop.f32.mrb[0].mxu0
  %v3383 = vadd.f32 %v2998, %v3382
  %v3384 = vpop.f32.mrb[0].mxu0
  %3385 = vmatprep.mubr.f32.mxu0 %v415
  %3386 = vmatmul.mubr.f32.gmra.mrb[0].mxu0 %v414
  %v3387 = vpop.f32.mrb[0].mxu0
  %v3388 = vadd.f32 %v3003, %v3387
  %v3389 = vpop.f32.mrb[0].mxu0
  %3390 = vmatprep.mubr.f32.mxu0 %v428
  %3391 = vmatmul.mubr.f32.gmra.mrb[0].mxu0 %v427
  %v3392 = vpop.f32.mrb[0].mxu0
  %v3393 = vadd.f32 %v3008, %v3392
  %v3394 = vpop.f32.mrb[0].mxu0
  %3395 = vmatprep.mubr.f32.mxu0 %v441
  %3396 = vmatmul.mubr.f32.gmra.mrb[0].mxu0 %v440
  %v3397 = vpop.f32.mrb[0].mxu0
  %v3398 = vadd.f32 %v3013, %v3397
  %v3399 = vpop.f32.mrb[0].mxu0
  %3400 = vmatprep.mubr.f32.mxu0 %v454
  %3401 = vmatmul.mubr.f32.gmra.mrb[0].mxu0 %v453
  %v3402 = vpop.f32.mrb[0].mxu0
  %v3403 = vadd.f32 %v3018, %v3402
  %v3404 = vpop.f32.mrb[0].mxu0
  %3405 = vmatprep.mubr.f32.mxu0 %v467
  %3406 = vmatmul.mubr.f32.gmra.mrb[0].mxu0 %v466
  %v3407 = vpop.f32.mrb[0].mxu0
  %v3408 = vadd.f32 %v3023, %v3407
  %v3409 = vpop.f32.mrb[0].mxu0
  %3410 = vmatprep.mubr.f32.mxu0 %v480
  %3411 = vmatmul.mubr.f32.gmra.mrb[0].mxu0 %v479
  %v3412 = vpop.f32.mrb[0].mxu0
  %v3413 = vadd.f32 %v3028, %v3412
  %v3414 = vpop.f32.mrb[0].mxu0
  %3415 = vmatprep.mubr.f32.mxu0 %v493
  %3416 = vmatmul.mubr.f32.gmra.mrb[0].mxu0 %v492
  %v3417 = vpop.f32.mrb[0].mxu0
  %v3418 = vadd.f32 %v3033, %v3417
  %v3419 = vpop.f32.mrb[0].mxu0
  %3420 = vmatprep.mubr.f32.mxu0 %v506
  %3421 = vmatmul.mubr.f32.gmra.mrb[0].mxu0 %v505
  %v3422 = vpop.f32.mrb[0].mxu0
  %v3423 = vadd.f32 %v3038, %v3422
  %v3424 = vpop.f32.mrb[0].mxu0
  %3425 = vmatprep.mubr.f32.mxu0 %v519
  %3426 = vmatmul.mubr.f32.gmra.mrb[0].mxu0 %v518
  %v3427 = vpop.f32.mrb[0].mxu0
  %v3428 = vadd.f32 %v3043, %v3427
  %v3429 = vpop.f32.mrb[0].mxu0
  %3430 = vmatprep.mubr.f32.mxu0 %v532
  %3431 = vmatmul.mubr.f32.gmra.mrb[0].mxu0 %v531
  %v3432 = vpop.f32.mrb[0].mxu0
  %v3433 = vadd.f32 %v3048, %v3432
  %v3434 = vpop.f32.mrb[0].mxu0
  %3435 = vmatprep.mubr.f32.mxu0 %v545
  %3436 = vmatmul.mubr.f32.gmra.mrb[0].mxu0 %v544
  %v3437 = vpop.f32.mrb[0].mxu0
  %v3438 = vadd.f32 %v3053, %v3437
  %v3439 = vpop.f32.mrb[0].mxu0
  %3440 = vmatprep.mubr.f32.mxu0 %v558
  %3441 = vmatmul.mubr.f32.gmra.mrb[0].mxu0 %v557
  %v3442 = vpop.f32.mrb[0].mxu0
  %v3443 = vadd.f32 %v3058, %v3442
  %v3444 = vpop.f32.mrb[0].mxu0
  %3445 = vmatprep.mubr.f32.mxu0 %v571
  %3446 = vmatmul.mubr.f32.gmra.mrb[0].mxu0 %v570
  %v3447 = vpop.f32.mrb[0].mxu0
  %v3448 = vadd.f32 %v3063, %v3447
  %v3449 = vpop.f32.mrb[0].mxu0
  %3450 = vmatprep.mubr.f32.mxu0 %v584
  %3451 = vmatmul.mubr.f32.gmra.mrb[0].mxu0 %v583
  %v3452 = vpop.f32.mrb[0].mxu0
  %v3453 = vadd.f32 %v3068, %v3452
  %v3454 = vpop.f32.mrb[0].mxu0
  %3455 = vmatprep.mubr.f32.mxu0 %v597
  %3456 = vmatmul.mubr.f32.gmra.mrb[0].mxu0 %v596
  %v3457 = vpop.f32.mrb[0].mxu0
  %v3458 = vadd.f32 %v3073, %v3457
  %v3459 = vpop.f32.mrb[0].mxu0
  %3460 = vmatprep.mubr.f32.mxu0 %v610
  %3461 = vmatmul.mubr.f32.gmra.mrb[0].mxu0 %v609
  %v3462 = vpop.f32.mrb[0].mxu0
  %v3463 = vadd.f32 %v3078, %v3462
  %v3464 = vpop.f32.mrb[0].mxu0
  %3465 = vmatprep.mubr.f32.mxu0 %v623
  %3466 = vmatmul.mubr.f32.gmra.mrb[0].mxu0 %v622
  %v3467 = vpop.f32.mrb[0].mxu0
  %v3468 = vadd.f32 %v3083, %v3467
  %v3469 = vpop.f32.mrb[0].mxu0
  %3470 = vmatprep.mubr.f32.mxu0 %v636
  %3471 = vmatmul.mubr.f32.gmra.mrb[0].mxu0 %v635
  %v3472 = vpop.f32.mrb[0].mxu0
  %v3473 = vadd.f32 %v3088, %v3472
  %v3474 = vpop.f32.mrb[0].mxu0
  %3475 = vmatprep.mubr.f32.mxu0 %v649
  %3476 = vmatmul.mubr.f32.gmra.mrb[0].mxu0 %v648
  %v3477 = vpop.f32.mrb[0].mxu0
  %v3478 = vadd.f32 %v3093, %v3477
  %v3479 = vpop.f32.mrb[0].mxu0
  %3480 = vmatprep.mubr.f32.mxu0 %v662
  %3481 = vmatmul.mubr.f32.gmra.mrb[0].mxu0 %v661
  %v3482 = vpop.f32.mrb[0].mxu0
  %v3483 = vadd.f32 %v3098, %v3482
  %v3484 = vpop.f32.mrb[0].mxu0
  %3485 = vmatprep.mubr.f32.mxu0 %v675
  %3486 = vmatmul.mubr.f32.gmra.mrb[0].mxu0 %v674
  %v3487 = vpop.f32.mrb[0].mxu0
  %v3488 = vadd.f32 %v3103, %v3487
  %v3489 = vpop.f32.mrb[0].mxu0
  %3490 = vmatprep.mubr.f32.mxu0 %v688
  %3491 = vmatmul.mubr.f32.gmra.mrb[0].mxu0 %v687
  %v3492 = vpop.f32.mrb[0].mxu0
  %v3493 = vadd.f32 %v3108, %v3492
  %v3494 = vpop.f32.mrb[0].mxu0
  %3495 = vmatprep.mubr.f32.mxu0 %v701
  %3496 = vmatmul.mubr.f32.gmra.mrb[0].mxu0 %v700
  %v3497 = vpop.f32.mrb[0].mxu0
  %v3498 = vadd.f32 %v3113, %v3497
  %v3499 = vpop.f32.mrb[0].mxu0
  %3500 = vmatprep.mubr.f32.mxu0 %v714
  %3501 = vmatmul.mubr.f32.gmra.mrb[0].mxu0 %v713
  %v3502 = vpop.f32.mrb[0].mxu0
  %v3503 = vadd.f32 %v3118, %v3502
  %v3504 = vpop.f32.mrb[0].mxu0
  %3505 = vmatprep.mubr.f32.mxu0 %v727
  %3506 = vmatmul.mubr.f32.gmra.mrb[0].mxu0 %v726
  %v3507 = vpop.f32.mrb[0].mxu0
  %v3508 = vadd.f32 %v3123, %v3507
  %v3509 = vpop.f32.mrb[0].mxu0
  %3510 = vmatprep.mubr.f32.mxu0 %v740
  %3511 = vmatmul.mubr.f32.gmra.mrb[0].mxu0 %v739
  %v3512 = vpop.f32.mrb[0].mxu0
  %v3513 = vadd.f32 %v3128, %v3512
  %v3514 = vpop.f32.mrb[0].mxu0
  %3515 = vmatprep.mubr.f32.mxu0 %v753
  %3516 = vmatmul.mubr.f32.gmra.mrb[0].mxu0 %v752
  %v3517 = vpop.f32.mrb[0].mxu0
  %v3518 = vadd.f32 %v3133, %v3517
  %v3519 = vpop.f32.mrb[0].mxu0
  %3520 = vmatprep.mubr.f32.mxu0 %v766
  %3521 = vmatmul.mubr.f32.gmra.mrb[0].mxu0 %v765
  %v3522 = vpop.f32.mrb[0].mxu0
  %v3523 = vadd.f32 %v3138, %v3522
  %v3524 = vpop.f32.mrb[0].mxu0
  %3525 = vmatprep.mubr.f32.mxu0 %v779
  %3526 = vmatmul.mubr.f32.gmra.mrb[0].mxu0 %v778
  %v3527 = vpop.f32.mrb[0].mxu0
  %v3528 = vadd.f32 %v3143, %v3527
  %v3529 = vpop.f32.mrb[0].mxu0
  %3530 = vmatprep.mubr.f32.mxu0 %v792
  %3531 = vmatmul.mubr.f32.gmra.mrb[0].mxu0 %v791
  %v3532 = vpop.f32.mrb[0].mxu0
  %v3533 = vadd.f32 %v3148, %v3532
  %v3534 = vpop.f32.mrb[0].mxu0
  %3535 = vmatprep.mubr.f32.mxu0 %v805
  %3536 = vmatmul.mubr.f32.gmra.mrb[0].mxu0 %v804
  %v3537 = vpop.f32.mrb[0].mxu0
  %v3538 = vadd.f32 %v3153, %v3537
  %v3539 = vpop.f32.mrb[0].mxu0
  %3540 = vmatprep.mubr.f32.mxu0 %v818
  %3541 = vmatmul.mubr.f32.gmra.mrb[0].mxu0 %v817
  %v3542 = vpop.f32.mrb[0].mxu0
  %v3543 = vadd.f32 %v3158, %v3542
  %v3544 = vpop.f32.mrb[0].mxu0
  %3545 = vmatprep.mubr.f32.mxu0 %v831
  %3546 = vmatmul.mubr.f32.gmra.mrb[0].mxu0 %v830
  %v3547 = vpop.f32.mrb[0].mxu0
  %v3548 = vadd.f32 %v3163, %v3547
  %v3549 = vpop.f32.mrb[0].mxu0
  %3550 = vmatprep.mubr.f32.mxu0 %v844
  %3551 = vmatmul.mubr.f32.gmra.mrb[0].mxu0 %v843
  %v3552 = vpop.f32.mrb[0].mxu0
  %v3553 = vadd.f32 %v3168, %v3552
  %v3554 = vpop.f32.mrb[0].mxu0
  %3555 = vdwg.mxu0
  %3556 = vmatprep.subr.mxu0 0.0
  %3557 = vmatpush1.msra.mxu0 %v1038
  %3558 = vmatprep.subr.mxu0 0.0
  %3559 = vmatpush1.msra.mxu0 %v1039
  %3560 = vmatprep.subr.mxu0 0.0
  %3561 = vmatpush1.msra.mxu0 %v1040
  %3562 = vmatprep.subr.mxu0 0.0
  %3563 = vmatpush1.msra.mxu0 %v1041
  %3564 = vmatprep.subr.mxu0 0.0
  %3565 = vmatpush1.msra.mxu0 %v1042
  %3566 = vmatprep.subr.mxu0 0.0
  %3567 = vmatpush1.msra.mxu0 %v1043
  %3568 = vmatprep.subr.mxu0 0.0
  %3569 = vmatpush1.msra.mxu0 %v1044
  %3570 = vmatprep.subr.mxu0 0.0
  %3571 = vmatpush1.msra.mxu0 %v1045
  %3572 = vmatprep.subr.mxu0 0.0
  %3573 = vmatpush1.msra.mxu0 0.0
  %3574 = vmatprep.subr.mxu0 0.0
  %3575 = vmatpush1.msra.mxu0 0.0
  %3576 = vmatprep.subr.mxu0 0.0
  %3577 = vmatpush1.msra.mxu0 0.0
  %3578 = vmatprep.subr.mxu0 0.0
  %3579 = vmatpush1.msra.mxu0 0.0
  %3580 = vmatprep.subr.mxu0 0.0
  %3581 = vmatpush1.msra.mxu0 0.0
  %3582 = vmatprep.subr.mxu0 0.0
  %3583 = vmatpush1.msra.mxu0 0.0
  %3584 = vmatprep.subr.mxu0 0.0
  %3585 = vmatpush1.msra.mxu0 0.0
  %3586 = vmatprep.subr.mxu0 0.0
  %3587 = vmatpush1.msra.mxu0 0.0
  %3588 = vmatprep.subr.mxu0 0.0
  %3589 = vmatpush1.msra.mxu0 0.0
  %3590 = vmatprep.subr.mxu0 0.0
  %3591 = vmatpush1.msra.mxu0 0.0
  %3592 = vmatprep.subr.mxu0 0.0
  %3593 = vmatpush1.msra.mxu0 0.0
  %3594 = vmatprep.subr.mxu0 0.0
  %3595 = vmatpush1.msra.mxu0 0.0
  %3596 = vmatprep.subr.mxu0 0.0
  %3597 = vmatpush1.msra.mxu0 0.0
  %3598 = vmatprep.subr.mxu0 0.0
  %3599 = vmatpush1.msra.mxu0 0.0
  %3600 = vmatprep.subr.mxu0 0.0
  %3601 = vmatpush1.msra.mxu0 0.0
  %3602 = vmatprep.subr.mxu0 0.0
  %3603 = vmatpush1.msra.mxu0 0.0
  %3604 = vmatprep.subr.mxu0 0.0
  %3605 = vmatpush1.msra.mxu0 0.0
  %3606 = vmatprep.subr.mxu0 0.0
  %3607 = vmatpush1.msra.mxu0 0.0
  %3608 = vmatprep.subr.mxu0 0.0
  %3609 = vmatpush1.msra.mxu0 0.0
  %3610 = vmatprep.subr.mxu0 0.0
  %3611 = vmatpush1.msra.mxu0 0.0
  %3612 = vmatprep.subr.mxu0 0.0
  %3613 = vmatpush1.msra.mxu0 0.0
  %3614 = vmatprep.subr.mxu0 0.0
  %3615 = vmatpush1.msra.mxu0 0.0
  %3616 = vmatprep.subr.mxu0 0.0
  %3617 = vmatpush1.msra.mxu0 0.0
  %3618 = vmatprep.subr.mxu0 0.0
  %3619 = vmatpush1.msra.mxu0 0.0
  %3620 = vmatprep.mubr.f32.mxu0 0.0
  %3621 = vmatmul.mubr.f32.gmra.mrb[0].mxu0 %v1055
  %v3622 = vpop.f32.mrb[0].mxu0
  %v3623 = vadd.f32 %v3238, %v3622
  %v3624 = vpop.f32.mrb[0].mxu0
  %3625 = vmatprep.mubr.f32.mxu0 0.0
  %3626 = vmatmul.mubr.f32.gmra.mrb[0].mxu0 %v1058
  %v3627 = vpop.f32.mrb[0].mxu0
  %v3628 = vadd.f32 %v3243, %v3627
  %v3629 = vpop.f32.mrb[0].mxu0
  %3630 = vmatprep.mubr.f32.mxu0 0.0
  %3631 = vmatmul.mubr.f32.gmra.mrb[0].mxu0 %v1061
  %v3632 = vpop.f32.mrb[0].mxu0
  %v3633 = vadd.f32 %v3248, %v3632
  %v3634 = vpop.f32.mrb[0].mxu0
  %3635 = vmatprep.mubr.f32.mxu0 0.0
  %3636 = vmatmul.mubr.f32.gmra.mrb[0].mxu0 %v1064
  %v3637 = vpop.f32.mrb[0].mxu0
  %v3638 = vadd.f32 %v3253, %v3637
  %v3639 = vpop.f32.mrb[0].mxu0
  %3640 = vmatprep.mubr.f32.mxu0 0.0
  %3641 = vmatmul.mubr.f32.gmra.mrb[0].mxu0 %v1067
  %v3642 = vpop.f32.mrb[0].mxu0
  %v3643 = vadd.f32 %v3258, %v3642
  %v3644 = vpop.f32.mrb[0].mxu0
  %3645 = vmatprep.mubr.f32.mxu0 0.0
  %3646 = vmatmul.mubr.f32.gmra.mrb[0].mxu0 %v1070
  %v3647 = vpop.f32.mrb[0].mxu0
  %v3648 = vadd.f32 %v3263, %v3647
  %v3649 = vpop.f32.mrb[0].mxu0
  %3650 = vmatprep.mubr.f32.mxu0 0.0
  %3651 = vmatmul.mubr.f32.gmra.mrb[0].mxu0 %v1073
  %v3652 = vpop.f32.mrb[0].mxu0
  %v3653 = vadd.f32 %v3268, %v3652
  %v3654 = vpop.f32.mrb[0].mxu0
  %3655 = vmatprep.mubr.f32.mxu0 0.0
  %3656 = vmatmul.mubr.f32.gmra.mrb[0].mxu0 %v1076
  %v3657 = vpop.f32.mrb[0].mxu0
  %v3658 = vadd.f32 %v3273, %v3657
  %v3659 = vpop.f32.mrb[0].mxu0
  %3660 = vmatprep.mubr.f32.mxu0 0.0
  %3661 = vmatmul.mubr.f32.gmra.mrb[0].mxu0 %v1079
  %v3662 = vpop.f32.mrb[0].mxu0
  %v3663 = vadd.f32 %v3278, %v3662
  %v3664 = vpop.f32.mrb[0].mxu0
  %3665 = vmatprep.mubr.f32.mxu0 0.0
  %3666 = vmatmul.mubr.f32.gmra.mrb[0].mxu0 %v1082
  %v3667 = vpop.f32.mrb[0].mxu0
  %v3668 = vadd.f32 %v3283, %v3667
  %v3669 = vpop.f32.mrb[0].mxu0
  %3670 = vmatprep.mubr.f32.mxu0 0.0
  %3671 = vmatmul.mubr.f32.gmra.mrb[0].mxu0 %v1085
  %v3672 = vpop.f32.mrb[0].mxu0
  %v3673 = vadd.f32 %v3288, %v3672
  %v3674 = vpop.f32.mrb[0].mxu0
  %3675 = vmatprep.mubr.f32.mxu0 0.0
  %3676 = vmatmul.mubr.f32.gmra.mrb[0].mxu0 %v1088
  %v3677 = vpop.f32.mrb[0].mxu0
  %v3678 = vadd.f32 %v3293, %v3677
  %v3679 = vpop.f32.mrb[0].mxu0
  %3680 = vmatprep.mubr.f32.mxu0 0.0
  %3681 = vmatmul.mubr.f32.gmra.mrb[0].mxu0 %v1091
  %v3682 = vpop.f32.mrb[0].mxu0
  %v3683 = vadd.f32 %v3298, %v3682
  %v3684 = vpop.f32.mrb[0].mxu0
  %3685 = vmatprep.mubr.f32.mxu0 0.0
  %3686 = vmatmul.mubr.f32.gmra.mrb[0].mxu0 %v1094
  %v3687 = vpop.f32.mrb[0].mxu0
  %v3688 = vadd.f32 %v3303, %v3687
  %v3689 = vpop.f32.mrb[0].mxu0
  %3690 = vmatprep.mubr.f32.mxu0 0.0
  %3691 = vmatmul.mubr.f32.gmra.mrb[0].mxu0 %v1097
  %v3692 = vpop.f32.mrb[0].mxu0
  %v3693 = vadd.f32 %v3308, %v3692
  %v3694 = vpop.f32.mrb[0].mxu0
  %3695 = vmatprep.mubr.f32.mxu0 0.0
  %3696 = vmatmul.mubr.f32.gmra.mrb[0].mxu0 %v1100
  %v3697 = vpop.f32.mrb[0].mxu0
  %v3698 = vadd.f32 %v3313, %v3697
  %v3699 = vpop.f32.mrb[0].mxu0
  %3700 = vmatprep.mubr.f32.mxu0 0.0
  %3701 = vmatmul.mubr.f32.gmra.mrb[0].mxu0 %v1103
  %v3702 = vpop.f32.mrb[0].mxu0
  %v3703 = vadd.f32 %v3318, %v3702
  %v3704 = vpop.f32.mrb[0].mxu0
  %3705 = vmatprep.mubr.f32.mxu0 0.0
  %3706 = vmatmul.mubr.f32.gmra.mrb[0].mxu0 %v1106
  %v3707 = vpop.f32.mrb[0].mxu0
  %v3708 = vadd.f32 %v3323, %v3707
  %v3709 = vpop.f32.mrb[0].mxu0
  %3710 = vmatprep.mubr.f32.mxu0 0.0
  %3711 = vmatmul.mubr.f32.gmra.mrb[0].mxu0 %v1109
  %v3712 = vpop.f32.mrb[0].mxu0
  %v3713 = vadd.f32 %v3328, %v3712
  %v3714 = vpop.f32.mrb[0].mxu0
  %3715 = vmatprep.mubr.f32.mxu0 0.0
  %3716 = vmatmul.mubr.f32.gmra.mrb[0].mxu0 %v1112
  %v3717 = vpop.f32.mrb[0].mxu0
  %v3718 = vadd.f32 %v3333, %v3717
  %v3719 = vpop.f32.mrb[0].mxu0
  %3720 = vmatprep.mubr.f32.mxu0 0.0
  %3721 = vmatmul.mubr.f32.gmra.mrb[0].mxu0 %v1115
  %v3722 = vpop.f32.mrb[0].mxu0
  %v3723 = vadd.f32 %v3338, %v3722
  %v3724 = vpop.f32.mrb[0].mxu0
  %3725 = vmatprep.mubr.f32.mxu0 0.0
  %3726 = vmatmul.mubr.f32.gmra.mrb[0].mxu0 %v1118
  %v3727 = vpop.f32.mrb[0].mxu0
  %v3728 = vadd.f32 %v3343, %v3727
  %v3729 = vpop.f32.mrb[0].mxu0
  %3730 = vmatprep.mubr.f32.mxu0 0.0
  %3731 = vmatmul.mubr.f32.gmra.mrb[0].mxu0 %v1121
  %v3732 = vpop.f32.mrb[0].mxu0
  %v3733 = vadd.f32 %v3348, %v3732
  %v3734 = vpop.f32.mrb[0].mxu0
  %3735 = vmatprep.mubr.f32.mxu0 0.0
  %3736 = vmatmul.mubr.f32.gmra.mrb[0].mxu0 %v1124
  %v3737 = vpop.f32.mrb[0].mxu0
  %v3738 = vadd.f32 %v3353, %v3737
  %v3739 = vpop.f32.mrb[0].mxu0
  %3740 = vmatprep.mubr.f32.mxu0 0.0
  %3741 = vmatmul.mubr.f32.gmra.mrb[0].mxu0 %v1127
  %v3742 = vpop.f32.mrb[0].mxu0
  %v3743 = vadd.f32 %v3358, %v3742
  %v3744 = vpop.f32.mrb[0].mxu0
  %3745 = vmatprep.mubr.f32.mxu0 0.0
  %3746 = vmatmul.mubr.f32.gmra.mrb[0].mxu0 %v1130
  %v3747 = vpop.f32.mrb[0].mxu0
  %v3748 = vadd.f32 %v3363, %v3747
  %v3749 = vpop.f32.mrb[0].mxu0
  %3750 = vmatprep.mubr.f32.mxu0 0.0
  %3751 = vmatmul.mubr.f32.gmra.mrb[0].mxu0 %v1133
  %v3752 = vpop.f32.mrb[0].mxu0
  %v3753 = vadd.f32 %v3368, %v3752
  %v3754 = vpop.f32.mrb[0].mxu0
  %3755 = vmatprep.mubr.f32.mxu0 0.0
  %3756 = vmatmul.mubr.f32.gmra.mrb[0].mxu0 %v1136
  %v3757 = vpop.f32.mrb[0].mxu0
  %v3758 = vadd.f32 %v3373, %v3757
  %v3759 = vpop.f32.mrb[0].mxu0
  %3760 = vmatprep.mubr.f32.mxu0 0.0
  %3761 = vmatmul.mubr.f32.gmra.mrb[0].mxu0 %v1139
  %v3762 = vpop.f32.mrb[0].mxu0
  %v3763 = vadd.f32 %v3378, %v3762
  %v3764 = vpop.f32.mrb[0].mxu0
  %3765 = vmatprep.mubr.f32.mxu0 0.0
  %3766 = vmatmul.mubr.f32.gmra.mrb[0].mxu0 %v1142
  %v3767 = vpop.f32.mrb[0].mxu0
  %v3768 = vadd.f32 %v3383, %v3767
  %v3769 = vpop.f32.mrb[0].mxu0
  %3770 = vmatprep.mubr.f32.mxu0 0.0
  %3771 = vmatmul.mubr.f32.gmra.mrb[0].mxu0 %v1145
  %v3772 = vpop.f32.mrb[0].mxu0
  %v3773 = vadd.f32 %v3388, %v3772
  %v3774 = vpop.f32.mrb[0].mxu0
  %3775 = vmatprep.mubr.f32.mxu0 0.0
  %3776 = vmatmul.mubr.f32.gmra.mrb[0].mxu0 %v1148
  %v3777 = vpop.f32.mrb[0].mxu0
  %v3778 = vadd.f32 %v3393, %v3777
  %v3779 = vpop.f32.mrb[0].mxu0
  %3780 = vmatprep.mubr.f32.mxu0 0.0
  %3781 = vmatmul.mubr.f32.gmra.mrb[0].mxu0 %v1151
  %v3782 = vpop.f32.mrb[0].mxu0
  %v3783 = vadd.f32 %v3398, %v3782
  %v3784 = vpop.f32.mrb[0].mxu0
  %3785 = vmatprep.mubr.f32.mxu0 0.0
  %3786 = vmatmul.mubr.f32.gmra.mrb[0].mxu0 %v1154
  %v3787 = vpop.f32.mrb[0].mxu0
  %v3788 = vadd.f32 %v3403, %v3787
  %v3789 = vpop.f32.mrb[0].mxu0
  %3790 = vmatprep.mubr.f32.mxu0 0.0
  %3791 = vmatmul.mubr.f32.gmra.mrb[0].mxu0 %v1157
  %v3792 = vpop.f32.mrb[0].mxu0
  %v3793 = vadd.f32 %v3408, %v3792
  %v3794 = vpop.f32.mrb[0].mxu0
  %3795 = vmatprep.mubr.f32.mxu0 0.0
  %3796 = vmatmul.mubr.f32.gmra.mrb[0].mxu0 %v1160
  %v3797 = vpop.f32.mrb[0].mxu0
  %v3798 = vadd.f32 %v3413, %v3797
  %v3799 = vpop.f32.mrb[0].mxu0
  %3800 = vmatprep.mubr.f32.mxu0 0.0
  %3801 = vmatmul.mubr.f32.gmra.mrb[0].mxu0 %v1163
  %v3802 = vpop.f32.mrb[0].mxu0
  %v3803 = vadd.f32 %v3418, %v3802
  %v3804 = vpop.f32.mrb[0].mxu0
  %3805 = vmatprep.mubr.f32.mxu0 0.0
  %3806 = vmatmul.mubr.f32.gmra.mrb[0].mxu0 %v1166
  %v3807 = vpop.f32.mrb[0].mxu0
  %v3808 = vadd.f32 %v3423, %v3807
  %v3809 = vpop.f32.mrb[0].mxu0
  %3810 = vmatprep.mubr.f32.mxu0 0.0
  %3811 = vmatmul.mubr.f32.gmra.mrb[0].mxu0 %v1169
  %v3812 = vpop.f32.mrb[0].mxu0
  %v3813 = vadd.f32 %v3428, %v3812
  %v3814 = vpop.f32.mrb[0].mxu0
  %3815 = vmatprep.mubr.f32.mxu0 0.0
  %3816 = vmatmul.mubr.f32.gmra.mrb[0].mxu0 %v1172
  %v3817 = vpop.f32.mrb[0].mxu0
  %v3818 = vadd.f32 %v3433, %v3817
  %v3819 = vpop.f32.mrb[0].mxu0
  %3820 = vmatprep.mubr.f32.mxu0 0.0
  %3821 = vmatmul.mubr.f32.gmra.mrb[0].mxu0 %v1175
  %v3822 = vpop.f32.mrb[0].mxu0
  %v3823 = vadd.f32 %v3438, %v3822
  %v3824 = vpop.f32.mrb[0].mxu0
  %3825 = vmatprep.mubr.f32.mxu0 0.0
  %3826 = vmatmul.mubr.f32.gmra.mrb[0].mxu0 %v1178
  %v3827 = vpop.f32.mrb[0].mxu0
  %v3828 = vadd.f32 %v3443, %v3827
  %v3829 = vpop.f32.mrb[0].mxu0
  %3830 = vmatprep.mubr.f32.mxu0 0.0
  %3831 = vmatmul.mubr.f32.gmra.mrb[0].mxu0 %v1181
  %v3832 = vpop.f32.mrb[0].mxu0
  %v3833 = vadd.f32 %v3448, %v3832
  %v3834 = vpop.f32.mrb[0].mxu0
  %3835 = vmatprep.mubr.f32.mxu0 0.0
  %3836 = vmatmul.mubr.f32.gmra.mrb[0].mxu0 %v1184
  %v3837 = vpop.f32.mrb[0].mxu0
  %v3838 = vadd.f32 %v3453, %v3837
  %v3839 = vpop.f32.mrb[0].mxu0
  %3840 = vmatprep.mubr.f32.mxu0 0.0
  %3841 = vmatmul.mubr.f32.gmra.mrb[0].mxu0 %v1187
  %v3842 = vpop.f32.mrb[0].mxu0
  %v3843 = vadd.f32 %v3458, %v3842
  %v3844 = vpop.f32.mrb[0].mxu0
  %3845 = vmatprep.mubr.f32.mxu0 0.0
  %3846 = vmatmul.mubr.f32.gmra.mrb[0].mxu0 %v1190
  %v3847 = vpop.f32.mrb[0].mxu0
  %v3848 = vadd.f32 %v3463, %v3847
  %v3849 = vpop.f32.mrb[0].mxu0
  %3850 = vmatprep.mubr.f32.mxu0 0.0
  %3851 = vmatmul.mubr.f32.gmra.mrb[0].mxu0 %v1193
  %v3852 = vpop.f32.mrb[0].mxu0
  %v3853 = vadd.f32 %v3468, %v3852
  %v3854 = vpop.f32.mrb[0].mxu0
  %3855 = vmatprep.mubr.f32.mxu0 0.0
  %3856 = vmatmul.mubr.f32.gmra.mrb[0].mxu0 %v1196
  %v3857 = vpop.f32.mrb[0].mxu0
  %v3858 = vadd.f32 %v3473, %v3857
  %v3859 = vpop.f32.mrb[0].mxu0
  %3860 = vmatprep.mubr.f32.mxu0 0.0
  %3861 = vmatmul.mubr.f32.gmra.mrb[0].mxu0 %v1199
  %v3862 = vpop.f32.mrb[0].mxu0
  %v3863 = vadd.f32 %v3478, %v3862
  %v3864 = vpop.f32.mrb[0].mxu0
  %3865 = vmatprep.mubr.f32.mxu0 0.0
  %3866 = vmatmul.mubr.f32.gmra.mrb[0].mxu0 %v1202
  %v3867 = vpop.f32.mrb[0].mxu0
  %v3868 = vadd.f32 %v3483, %v3867
  %v3869 = vpop.f32.mrb[0].mxu0
  %3870 = vmatprep.mubr.f32.mxu0 0.0
  %3871 = vmatmul.mubr.f32.gmra.mrb[0].mxu0 %v1205
  %v3872 = vpop.f32.mrb[0].mxu0
  %v3873 = vadd.f32 %v3488, %v3872
  %v3874 = vpop.f32.mrb[0].mxu0
  %3875 = vmatprep.mubr.f32.mxu0 0.0
  %3876 = vmatmul.mubr.f32.gmra.mrb[0].mxu0 %v1208
  %v3877 = vpop.f32.mrb[0].mxu0
  %v3878 = vadd.f32 %v3493, %v3877
  %v3879 = vpop.f32.mrb[0].mxu0
  %3880 = vmatprep.mubr.f32.mxu0 0.0
  %3881 = vmatmul.mubr.f32.gmra.mrb[0].mxu0 %v1211
  %v3882 = vpop.f32.mrb[0].mxu0
  %v3883 = vadd.f32 %v3498, %v3882
  %v3884 = vpop.f32.mrb[0].mxu0
  %3885 = vmatprep.mubr.f32.mxu0 0.0
  %3886 = vmatmul.mubr.f32.gmra.mrb[0].mxu0 %v1214
  %v3887 = vpop.f32.mrb[0].mxu0
  %v3888 = vadd.f32 %v3503, %v3887
  %v3889 = vpop.f32.mrb[0].mxu0
  %3890 = vmatprep.mubr.f32.mxu0 0.0
  %3891 = vmatmul.mubr.f32.gmra.mrb[0].mxu0 %v1217
  %v3892 = vpop.f32.mrb[0].mxu0
  %v3893 = vadd.f32 %v3508, %v3892
  %v3894 = vpop.f32.mrb[0].mxu0
  %3895 = vmatprep.mubr.f32.mxu0 0.0
  %3896 = vmatmul.mubr.f32.gmra.mrb[0].mxu0 %v1220
  %v3897 = vpop.f32.mrb[0].mxu0
  %v3898 = vadd.f32 %v3513, %v3897
  %v3899 = vpop.f32.mrb[0].mxu0
  %3900 = vmatprep.mubr.f32.mxu0 0.0
  %3901 = vmatmul.mubr.f32.gmra.mrb[0].mxu0 %v1223
  %v3902 = vpop.f32.mrb[0].mxu0
  %v3903 = vadd.f32 %v3518, %v3902
  %v3904 = vpop.f32.mrb[0].mxu0
  %3905 = vmatprep.mubr.f32.mxu0 0.0
  %3906 = vmatmul.mubr.f32.gmra.mrb[0].mxu0 %v1226
  %v3907 = vpop.f32.mrb[0].mxu0
  %v3908 = vadd.f32 %v3523, %v3907
  %v3909 = vpop.f32.mrb[0].mxu0
  %3910 = vmatprep.mubr.f32.mxu0 0.0
  %3911 = vmatmul.mubr.f32.gmra.mrb[0].mxu0 %v1229
  %v3912 = vpop.f32.mrb[0].mxu0
  %v3913 = vadd.f32 %v3528, %v3912
  %v3914 = vpop.f32.mrb[0].mxu0
  %3915 = vmatprep.mubr.f32.mxu0 0.0
  %3916 = vmatmul.mubr.f32.gmra.mrb[0].mxu0 %v1232
  %v3917 = vpop.f32.mrb[0].mxu0
  %v3918 = vadd.f32 %v3533, %v3917
  %v3919 = vpop.f32.mrb[0].mxu0
  %3920 = vmatprep.mubr.f32.mxu0 0.0
  %3921 = vmatmul.mubr.f32.gmra.mrb[0].mxu0 %v1235
  %v3922 = vpop.f32.mrb[0].mxu0
  %v3923 = vadd.f32 %v3538, %v3922
  %v3924 = vpop.f32.mrb[0].mxu0
  %3925 = vmatprep.mubr.f32.mxu0 0.0
  %3926 = vmatmul.mubr.f32.gmra.mrb[0].mxu0 %v1238
  %v3927 = vpop.f32.mrb[0].mxu0
  %v3928 = vadd.f32 %v3543, %v3927
  %v3929 = vpop.f32.mrb[0].mxu0
  %3930 = vmatprep.mubr.f32.mxu0 0.0
  %3931 = vmatmul.mubr.f32.gmra.mrb[0].mxu0 %v1241
  %v3932 = vpop.f32.mrb[0].mxu0
  %v3933 = vadd.f32 %v3548, %v3932
  %v3934 = vpop.f32.mrb[0].mxu0
  %3935 = vmatprep.mubr.f32.mxu0 0.0
  %3936 = vmatmul.mubr.f32.gmra.mrb[0].mxu0 %v1244
  %v3937 = vpop.f32.mrb[0].mxu0
  %v3938 = vadd.f32 %v3553, %v3937
  %v3939 = vpop.f32.mrb[0].mxu0
  %3940 = vdwg.mxu0
  %v3941 = vmax.f32 %v3623, 0.0
  %v3942 = vmax.f32 %v3628, 0.0
  %v3943 = vmax.f32 %v3633, 0.0
  %v3944 = vmax.f32 %v3638, 0.0
  %v3945 = vmax.f32 %v3643, 0.0
  %v3946 = vmax.f32 %v3648, 0.0
  %v3947 = vmax.f32 %v3653, 0.0
  %v3948 = vmax.f32 %v3658, 0.0
  %v3949 = vmax.f32 %v3663, 0.0
  %v3950 = vmax.f32 %v3668, 0.0
  %v3951 = vmax.f32 %v3673, 0.0
  %v3952 = vmax.f32 %v3678, 0.0
  %v3953 = vmax.f32 %v3683, 0.0
  %v3954 = vmax.f32 %v3688, 0.0
  %v3955 = vmax.f32 %v3693, 0.0
  %v3956 = vmax.f32 %v3698, 0.0
  %v3957 = vmax.f32 %v3703, 0.0
  %v3958 = vmax.f32 %v3708, 0.0
  %v3959 = vmax.f32 %v3713, 0.0
  %v3960 = vmax.f32 %v3718, 0.0
  %v3961 = vmax.f32 %v3723, 0.0
  %v3962 = vmax.f32 %v3728, 0.0
  %v3963 = vmax.f32 %v3733, 0.0
  %v3964 = vmax.f32 %v3738, 0.0
  %v3965 = vmax.f32 %v3743, 0.0
  %v3966 = vmax.f32 %v3748, 0.0
  %v3967 = vmax.f32 %v3753, 0.0
  %v3968 = vmax.f32 %v3758, 0.0
  %v3969 = vmax.f32 %v3763, 0.0
  %v3970 = vmax.f32 %v3768, 0.0
  %v3971 = vmax.f32 %v3773, 0.0
  %v3972 = vmax.f32 %v3778, 0.0
  %v3973 = vmax.f32 %v3783, 0.0
  %v3974 = vmax.f32 %v3788, 0.0
  %v3975 = vmax.f32 %v3793, 0.0
  %v3976 = vmax.f32 %v3798, 0.0
  %v3977 = vmax.f32 %v3803, 0.0
  %v3978 = vmax.f32 %v3808, 0.0
  %v3979 = vmax.f32 %v3813, 0.0
  %v3980 = vmax.f32 %v3818, 0.0
  %v3981 = vmax.f32 %v3823, 0.0
  %v3982 = vmax.f32 %v3828, 0.0
  %v3983 = vmax.f32 %v3833, 0.0
  %v3984 = vmax.f32 %v3838, 0.0
  %v3985 = vmax.f32 %v3843, 0.0
  %v3986 = vmax.f32 %v3848, 0.0
  %v3987 = vmax.f32 %v3853, 0.0
  %v3988 = vmax.f32 %v3858, 0.0
  %v3989 = vmax.f32 %v3863, 0.0
  %v3990 = vmax.f32 %v3868, 0.0
  %v3991 = vmax.f32 %v3873, 0.0
  %v3992 = vmax.f32 %v3878, 0.0
  %v3993 = vmax.f32 %v3883, 0.0
  %v3994 = vmax.f32 %v3888, 0.0
  %v3995 = vmax.f32 %v3893, 0.0
  %v3996 = vmax.f32 %v3898, 0.0
  %v3997 = vmax.f32 %v3903, 0.0
  %v3998 = vmax.f32 %v3908, 0.0
  %v3999 = vmax.f32 %v3913, 0.0
  %v4000 = vmax.f32 %v3918, 0.0
  %v4001 = vmax.f32 %v3923, 0.0
  %v4002 = vmax.f32 %v3928, 0.0
  %v4003 = vmax.f32 %v3933, 0.0
  %v4004 = vmax.f32 %v3938, 0.0
  %vm4005 = vcmask 261120
  %4006 = vst.msk [vmem:[%s3] sm:$0xff] %vm4005, %v3941
  %4007 = vst.msk [vmem:[%s3 + $0x8] sm:$0xff] %vm4005, %v3942
  %4008 = vst.msk [vmem:[%s3 + $0x10] sm:$0xff] %vm4005, %v3943
  %4009 = vst.msk [vmem:[%s3 + $0x18] sm:$0xff] %vm4005, %v3944
  %4010 = vst.msk [vmem:[%s3 + $0x20] sm:$0xff] %vm4005, %v3945
  %4011 = vst.msk [vmem:[%s3 + $0x28] sm:$0xff] %vm4005, %v3946
  %4012 = vst.msk [vmem:[%s3 + $0x30] sm:$0xff] %vm4005, %v3947
  %4013 = vst.msk [vmem:[%s3 + $0x38] sm:$0xff] %vm4005, %v3948
  %4014 = vst.msk [vmem:[%s3 + $0x40] sm:$0xff] %vm4005, %v3949
  %4015 = vst.msk [vmem:[%s3 + $0x48] sm:$0xff] %vm4005, %v3950
  %4016 = vst.msk [vmem:[%s3 + $0x50] sm:$0xff] %vm4005, %v3951
  %4017 = vst.msk [vmem:[%s3 + $0x58] sm:$0xff] %vm4005, %v3952
  %4018 = vst.msk [vmem:[%s3 + $0x60] sm:$0xff] %vm4005, %v3953
  %4019 = vst.msk [vmem:[%s3 + $0x68] sm:$0xff] %vm4005, %v3954
  %4020 = vst.msk [vmem:[%s3 + $0x70] sm:$0xff] %vm4005, %v3955
  %4021 = vst.msk [vmem:[%s3 + $0x78] sm:$0xff] %vm4005, %v3956
  %4022 = vst.msk [vmem:[%s3 + $0x80] sm:$0xff] %vm4005, %v3957
  %4023 = vst.msk [vmem:[%s3 + $0x88] sm:$0xff] %vm4005, %v3958
  %4024 = vst.msk [vmem:[%s3 + $0x90] sm:$0xff] %vm4005, %v3959
  %4025 = vst.msk [vmem:[%s3 + $0x98] sm:$0xff] %vm4005, %v3960
  %4026 = vst.msk [vmem:[%s3 + $0xa0] sm:$0xff] %vm4005, %v3961
  %4027 = vst.msk [vmem:[%s3 + $0xa8] sm:$0xff] %vm4005, %v3962
  %4028 = vst.msk [vmem:[%s3 + $0xb0] sm:$0xff] %vm4005, %v3963
  %4029 = vst.msk [vmem:[%s3 + $0xb8] sm:$0xff] %vm4005, %v3964
  %4030 = vst.msk [vmem:[%s3 + $0xc0] sm:$0xff] %vm4005, %v3965
  %4031 = vst.msk [vmem:[%s3 + $0xc8] sm:$0xff] %vm4005, %v3966
  %4032 = vst.msk [vmem:[%s3 + $0xd0] sm:$0xff] %vm4005, %v3967
  %4033 = vst.msk [vmem:[%s3 + $0xd8] sm:$0xff] %vm4005, %v3968
  %4034 = vst.msk [vmem:[%s3 + $0xe0] sm:$0xff] %vm4005, %v3969
  %4035 = vst.msk [vmem:[%s3 + $0xe8] sm:$0xff] %vm4005, %v3970
  %4036 = vst.msk [vmem:[%s3 + $0xf0] sm:$0xff] %vm4005, %v3971
  %4037 = vst.msk [vmem:[%s3 + $0xf8] sm:$0xff] %vm4005, %v3972
  %4038 = vst.msk [vmem:[%s3 + $0x100] sm:$0xff] %vm4005, %v3973
  %4039 = vst.msk [vmem:[%s3 + $0x108] sm:$0xff] %vm4005, %v3974
  %4040 = vst.msk [vmem:[%s3 + $0x110] sm:$0xff] %vm4005, %v3975
  %4041 = vst.msk [vmem:[%s3 + $0x118] sm:$0xff] %vm4005, %v3976
  %4042 = vst.msk [vmem:[%s3 + $0x120] sm:$0xff] %vm4005, %v3977
  %4043 = vst.msk [vmem:[%s3 + $0x128] sm:$0xff] %vm4005, %v3978
  %4044 = vst.msk [vmem:[%s3 + $0x130] sm:$0xff] %vm4005, %v3979
  %4045 = vst.msk [vmem:[%s3 + $0x138] sm:$0xff] %vm4005, %v3980
  %4046 = vst.msk [vmem:[%s3 + $0x140] sm:$0xff] %vm4005, %v3981
  %4047 = vst.msk [vmem:[%s3 + $0x148] sm:$0xff] %vm4005, %v3982
  %4048 = vst.msk [vmem:[%s3 + $0x150] sm:$0xff] %vm4005, %v3983
  %4049 = vst.msk [vmem:[%s3 + $0x158] sm:$0xff] %vm4005, %v3984
  %4050 = vst.msk [vmem:[%s3 + $0x160] sm:$0xff] %vm4005, %v3985
  %4051 = vst.msk [vmem:[%s3 + $0x168] sm:$0xff] %vm4005, %v3986
  %4052 = vst.msk [vmem:[%s3 + $0x170] sm:$0xff] %vm4005, %v3987
  %4053 = vst.msk [vmem:[%s3 + $0x178] sm:$0xff] %vm4005, %v3988
  %4054 = vst.msk [vmem:[%s3 + $0x180] sm:$0xff] %vm4005, %v3989
  %4055 = vst.msk [vmem:[%s3 + $0x188] sm:$0xff] %vm4005, %v3990
  %4056 = vst.msk [vmem:[%s3 + $0x190] sm:$0xff] %vm4005, %v3991
  %4057 = vst.msk [vmem:[%s3 + $0x198] sm:$0xff] %vm4005, %v3992
  %4058 = vst.msk [vmem:[%s3 + $0x1a0] sm:$0xff] %vm4005, %v3993
  %4059 = vst.msk [vmem:[%s3 + $0x1a8] sm:$0xff] %vm4005, %v3994
  %4060 = vst.msk [vmem:[%s3 + $0x1b0] sm:$0xff] %vm4005, %v3995
  %4061 = vst.msk [vmem:[%s3 + $0x1b8] sm:$0xff] %vm4005, %v3996
  %4062 = vst.msk [vmem:[%s3 + $0x1c0] sm:$0xff] %vm4005, %v3997
  %4063 = vst.msk [vmem:[%s3 + $0x1c8] sm:$0xff] %vm4005, %v3998
  %4064 = vst.msk [vmem:[%s3 + $0x1d0] sm:$0xff] %vm4005, %v3999
  %4065 = vst.msk [vmem:[%s3 + $0x1d8] sm:$0xff] %vm4005, %v4000
  %4066 = vst.msk [vmem:[%s3 + $0x1e0] sm:$0xff] %vm4005, %v4001
  %4067 = vst.msk [vmem:[%s3 + $0x1e8] sm:$0xff] %vm4005, %v4002
  %4068 = vst.msk [vmem:[%s3 + $0x1f0] sm:$0xff] %vm4005, %v4003
  %4069 = vst.msk [vmem:[%s3 + $0x1f8] sm:$0xff] %vm4005, %v4004
  // Predicated region
  $region14: #{srcnn_forward.4} parent=0 // pred_check
    _
  $region15: #{srcnn_forward.4} parent=0 // pred_check_branch
    %4071 = sbr.rel (0) target = $region17
  $region16: #{srcnn_forward.4} parent=0 // pred_region
    _
  $region17: #{srcnn_forward.4} parent=0 // pred_fallthru
    _
  // Predicated region
  $region18: #{srcnn_forward.4} parent=0 // pred_check
    _
  $region19: #{srcnn_forward.4} parent=0 // pred_check_branch
    %4073 = sbr.rel (0) target = $region21
  $region20: #{srcnn_forward.4} parent=0 // pred_region
    _
  $region21: #{srcnn_forward.4} parent=0 // pred_fallthru
    _

// kernel: srcnn_forward.5
$region0: #{srcnn_forward.5}
  #allocation0 [shape = 'u32[]', space=smem, size = 0x4, offset = 0x4, fixed_abs, tag = 'smem constant byte address 0x4 - core index']
  #allocation1 [shape = 'u32[144,128]{1,0:T(1,128)}', space=vmem, size = 0x12000, scoped, tag = 'internal scratch']
  #allocation2 [shape = 'f32[1,1]{1,0:T(1,128)S(1)}', space=vmem, size = 0x200, scoped, tag = 'scoped memory for srcnn_forward.5']
  %s0 = inlined_call_operand.vmem [shape: f32[512,800], index: 0, kind: input, shape index: {}]
  %s1 = inlined_call_operand.vmem [shape: f32[800,1], index: 1, kind: input, shape index: {}]
  %s2 = inlined_call_operand.<no memory space> [shape: f32[1,1], index: 2, kind: input, shape index: {}]
  %s3 = inlined_call_operand.vmem [shape: f32[512,1], index: 3, kind: output, shape index: {}]
  %s4 = sld [smem:[#allocation0]]
  $region22: #{srcnn_forward.5} parent=0
    _
  %s6 = ssub.s32 1, %s4
  %s7 = scalar_select 0, %s6, %s4
  %v8 = vstv %s2
  %9 = vst [vmem:[#allocation2] sm:$0x1] %v8
  // Predicated region
  $region2: #{srcnn_forward.5} parent=0 // pred_check
    _
  $region3: #{srcnn_forward.5} parent=0 // pred_check_branch
    %11 = sbr.rel (0) target = $region5
  $region4: #{srcnn_forward.5} parent=0 // pred_region
    _
  $region5: #{srcnn_forward.5} parent=0 // pred_fallthru
    _
  // Predicated region
  $region6: #{srcnn_forward.5} parent=0 // pred_check
    _
  $region7: #{srcnn_forward.5} parent=0 // pred_check_branch
    %13 = sbr.rel (0) target = $region9
  $region8: #{srcnn_forward.5} parent=0 // pred_region
    _
  $region9: #{srcnn_forward.5} parent=0 // pred_fallthru
    _
  // Predicated region
  $region10: #{srcnn_forward.5} parent=0 // pred_check
    _
  $region11: #{srcnn_forward.5} parent=0 // pred_check_branch
    %15 = sbr.rel (0) target = $region13
  $region12: #{srcnn_forward.5} parent=0 // pred_region
    _
  $region13: #{srcnn_forward.5} parent=0 // pred_fallthru
    _
  %v16 = vld [vmem:[%s0] sm:$0xff]
  %v17 = vld [vmem:[%s0 + $0x8] sm:$0xff]
  %v18 = vld [vmem:[%s0 + $0x10] sm:$0xff]
  %v19 = vld [vmem:[%s0 + $0x18] sm:$0xff]
  %v20 = vld [vmem:[%s0 + $0x20] sm:$0xff]
  %v21 = vld [vmem:[%s0 + $0x28] sm:$0xff]
  %v22 = vld [vmem:[%s0 + $0x30] sm:$0xff]
  %v23 = vld [vmem:[%s0 + $0x38] sm:$0xff]
  %v24 = vld [vmem:[%s0 + $0x40] sm:$0xff]
  %v25 = vld [vmem:[%s0 + $0x48] sm:$0xff]
  %v26 = vld [vmem:[%s0 + $0x50] sm:$0xff]
  %v27 = vld [vmem:[%s0 + $0x58] sm:$0xff]
  %v28 = vld [vmem:[%s0 + $0x60] sm:$0xff]
  %v29 = vld [vmem:[%s0 + $0x68] sm:$0xff]
  %v30 = vld [vmem:[%s0 + $0x70] sm:$0xff]
  %v31 = vld [vmem:[%s0 + $0x78] sm:$0xff]
  %v32 = vld [vmem:[%s0 + $0x80] sm:$0xff]
  %v33 = vld [vmem:[%s0 + $0x88] sm:$0xff]
  %v34 = vld [vmem:[%s0 + $0x90] sm:$0xff]
  %v35 = vld [vmem:[%s0 + $0x98] sm:$0xff]
  %v36 = vld [vmem:[%s0 + $0xa0] sm:$0xff]
  %v37 = vld [vmem:[%s0 + $0xa8] sm:$0xff]
  %v38 = vld [vmem:[%s0 + $0xb0] sm:$0xff]
  %v39 = vld [vmem:[%s0 + $0xb8] sm:$0xff]
  %v40 = vld [vmem:[%s0 + $0xc0] sm:$0xff]
  %v41 = vld [vmem:[%s0 + $0xc8] sm:$0xff]
  %v42 = vld [vmem:[%s0 + $0xd0] sm:$0xff]
  %v43 = vld [vmem:[%s0 + $0xd8] sm:$0xff]
  %v44 = vld [vmem:[%s0 + $0xe0] sm:$0xff]
  %v45 = vld [vmem:[%s0 + $0xe8] sm:$0xff]
  %v46 = vld [vmem:[%s0 + $0xf0] sm:$0xff]
  %v47 = vld [vmem:[%s0 + $0xf8] sm:$0xff]
  %v48 = vld [vmem:[%s0 + $0x100] sm:$0xff]
  %v49 = vld [vmem:[%s0 + $0x108] sm:$0xff]
  %v50 = vld [vmem:[%s0 + $0x110] sm:$0xff]
  %v51 = vld [vmem:[%s0 + $0x118] sm:$0xff]
  %v52 = vld [vmem:[%s0 + $0x120] sm:$0xff]
  %v53 = vld [vmem:[%s0 + $0x128] sm:$0xff]
  %v54 = vld [vmem:[%s0 + $0x130] sm:$0xff]
  %v55 = vld [vmem:[%s0 + $0x138] sm:$0xff]
  %v56 = vld [vmem:[%s0 + $0x140] sm:$0xff]
  %v57 = vld [vmem:[%s0 + $0x148] sm:$0xff]
  %v58 = vld [vmem:[%s0 + $0x150] sm:$0xff]
  %v59 = vld [vmem:[%s0 + $0x158] sm:$0xff]
  %v60 = vld [vmem:[%s0 + $0x160] sm:$0xff]
  %v61 = vld [vmem:[%s0 + $0x168] sm:$0xff]
  %v62 = vld [vmem:[%s0 + $0x170] sm:$0xff]
  %v63 = vld [vmem:[%s0 + $0x178] sm:$0xff]
  %v64 = vld [vmem:[%s0 + $0x180] sm:$0xff]
  %v65 = vld [vmem:[%s0 + $0x188] sm:$0xff]
  %v66 = vld [vmem:[%s0 + $0x190] sm:$0xff]
  %v67 = vld [vmem:[%s0 + $0x198] sm:$0xff]
  %v68 = vld [vmem:[%s0 + $0x1a0] sm:$0xff]
  %v69 = vld [vmem:[%s0 + $0x1a8] sm:$0xff]
  %v70 = vld [vmem:[%s0 + $0x1b0] sm:$0xff]
  %v71 = vld [vmem:[%s0 + $0x1b8] sm:$0xff]
  %v72 = vld [vmem:[%s0 + $0x1c0] sm:$0xff]
  %v73 = vld [vmem:[%s0 + $0x1c8] sm:$0xff]
  %v74 = vld [vmem:[%s0 + $0x1d0] sm:$0xff]
  %v75 = vld [vmem:[%s0 + $0x1d8] sm:$0xff]
  %v76 = vld [vmem:[%s0 + $0x1e0] sm:$0xff]
  %v77 = vld [vmem:[%s0 + $0x1e8] sm:$0xff]
  %v78 = vld [vmem:[%s0 + $0x1f0] sm:$0xff]
  %v79 = vld [vmem:[%s0 + $0x1f8] sm:$0xff]
  %v80 = vld [vmem:[%s0 + $0x200] sm:$0xff]
  %v81 = vld [vmem:[%s0 + $0x208] sm:$0xff]
  %v82 = vld [vmem:[%s0 + $0x210] sm:$0xff]
  %v83 = vld [vmem:[%s0 + $0x218] sm:$0xff]
  %v84 = vld [vmem:[%s0 + $0x220] sm:$0xff]
  %v85 = vld [vmem:[%s0 + $0x228] sm:$0xff]
  %v86 = vld [vmem:[%s0 + $0x230] sm:$0xff]
  %v87 = vld [vmem:[%s0 + $0x238] sm:$0xff]
  %v88 = vld [vmem:[%s0 + $0x240] sm:$0xff]
  %v89 = vld [vmem:[%s0 + $0x248] sm:$0xff]
  %v90 = vld [vmem:[%s0 + $0x250] sm:$0xff]
  %v91 = vld [vmem:[%s0 + $0x258] sm:$0xff]
  %v92 = vld [vmem:[%s0 + $0x260] sm:$0xff]
  %v93 = vld [vmem:[%s0 + $0x268] sm:$0xff]
  %v94 = vld [vmem:[%s0 + $0x270] sm:$0xff]
  %v95 = vld [vmem:[%s0 + $0x278] sm:$0xff]
  %v96 = vld [vmem:[%s0 + $0x280] sm:$0xff]
  %v97 = vld [vmem:[%s0 + $0x288] sm:$0xff]
  %v98 = vld [vmem:[%s0 + $0x290] sm:$0xff]
  %v99 = vld [vmem:[%s0 + $0x298] sm:$0xff]
  %v100 = vld [vmem:[%s0 + $0x2a0] sm:$0xff]
  %v101 = vld [vmem:[%s0 + $0x2a8] sm:$0xff]
  %v102 = vld [vmem:[%s0 + $0x2b0] sm:$0xff]
  %v103 = vld [vmem:[%s0 + $0x2b8] sm:$0xff]
  %v104 = vld [vmem:[%s0 + $0x2c0] sm:$0xff]
  %v105 = vld [vmem:[%s0 + $0x2c8] sm:$0xff]
  %v106 = vld [vmem:[%s0 + $0x2d0] sm:$0xff]
  %v107 = vld [vmem:[%s0 + $0x2d8] sm:$0xff]
  %v108 = vld [vmem:[%s0 + $0x2e0] sm:$0xff]
  %v109 = vld [vmem:[%s0 + $0x2e8] sm:$0xff]
  %v110 = vld [vmem:[%s0 + $0x2f0] sm:$0xff]
  %v111 = vld [vmem:[%s0 + $0x2f8] sm:$0xff]
  %v112 = vld [vmem:[%s0 + $0x300] sm:$0xff]
  %v113 = vld [vmem:[%s0 + $0x308] sm:$0xff]
  %v114 = vld [vmem:[%s0 + $0x310] sm:$0xff]
  %v115 = vld [vmem:[%s0 + $0x318] sm:$0xff]
  %v116 = vld [vmem:[%s0 + $0x320] sm:$0xff]
  %v117 = vld [vmem:[%s0 + $0x328] sm:$0xff]
  %v118 = vld [vmem:[%s0 + $0x330] sm:$0xff]
  %v119 = vld [vmem:[%s0 + $0x338] sm:$0xff]
  %v120 = vld [vmem:[%s0 + $0x340] sm:$0xff]
  %v121 = vld [vmem:[%s0 + $0x348] sm:$0xff]
  %v122 = vld [vmem:[%s0 + $0x350] sm:$0xff]
  %v123 = vld [vmem:[%s0 + $0x358] sm:$0xff]
  %v124 = vld [vmem:[%s0 + $0x360] sm:$0xff]
  %v125 = vld [vmem:[%s0 + $0x368] sm:$0xff]
  %v126 = vld [vmem:[%s0 + $0x370] sm:$0xff]
  %v127 = vld [vmem:[%s0 + $0x378] sm:$0xff]
  %v128 = vld [vmem:[%s0 + $0x380] sm:$0xff]
  %v129 = vld [vmem:[%s0 + $0x388] sm:$0xff]
  %v130 = vld [vmem:[%s0 + $0x390] sm:$0xff]
  %v131 = vld [vmem:[%s0 + $0x398] sm:$0xff]
  %v132 = vld [vmem:[%s0 + $0x3a0] sm:$0xff]
  %v133 = vld [vmem:[%s0 + $0x3a8] sm:$0xff]
  %v134 = vld [vmem:[%s0 + $0x3b0] sm:$0xff]
  %v135 = vld [vmem:[%s0 + $0x3b8] sm:$0xff]
  %v136 = vld [vmem:[%s0 + $0x3c0] sm:$0xff]
  %v137 = vld [vmem:[%s0 + $0x3c8] sm:$0xff]
  %v138 = vld [vmem:[%s0 + $0x3d0] sm:$0xff]
  %v139 = vld [vmem:[%s0 + $0x3d8] sm:$0xff]
  %v140 = vld [vmem:[%s0 + $0x3e0] sm:$0xff]
  %v141 = vld [vmem:[%s0 + $0x3e8] sm:$0xff]
  %v142 = vld [vmem:[%s0 + $0x3f0] sm:$0xff]
  %v143 = vld [vmem:[%s0 + $0x3f8] sm:$0xff]
  %v144 = vld [vmem:[%s0 + $0x400] sm:$0xff]
  %v145 = vld [vmem:[%s0 + $0x408] sm:$0xff]
  %v146 = vld [vmem:[%s0 + $0x410] sm:$0xff]
  %v147 = vld [vmem:[%s0 + $0x418] sm:$0xff]
  %v148 = vld [vmem:[%s0 + $0x420] sm:$0xff]
  %v149 = vld [vmem:[%s0 + $0x428] sm:$0xff]
  %v150 = vld [vmem:[%s0 + $0x430] sm:$0xff]
  %v151 = vld [vmem:[%s0 + $0x438] sm:$0xff]
  %v152 = vld [vmem:[%s0 + $0x440] sm:$0xff]
  %v153 = vld [vmem:[%s0 + $0x448] sm:$0xff]
  %v154 = vld [vmem:[%s0 + $0x450] sm:$0xff]
  %v155 = vld [vmem:[%s0 + $0x458] sm:$0xff]
  %v156 = vld [vmem:[%s0 + $0x460] sm:$0xff]
  %v157 = vld [vmem:[%s0 + $0x468] sm:$0xff]
  %v158 = vld [vmem:[%s0 + $0x470] sm:$0xff]
  %v159 = vld [vmem:[%s0 + $0x478] sm:$0xff]
  %v160 = vld [vmem:[%s0 + $0x480] sm:$0xff]
  %v161 = vld [vmem:[%s0 + $0x488] sm:$0xff]
  %v162 = vld [vmem:[%s0 + $0x490] sm:$0xff]
  %v163 = vld [vmem:[%s0 + $0x498] sm:$0xff]
  %v164 = vld [vmem:[%s0 + $0x4a0] sm:$0xff]
  %v165 = vld [vmem:[%s0 + $0x4a8] sm:$0xff]
  %v166 = vld [vmem:[%s0 + $0x4b0] sm:$0xff]
  %v167 = vld [vmem:[%s0 + $0x4b8] sm:$0xff]
  %v168 = vld [vmem:[%s0 + $0x4c0] sm:$0xff]
  %v169 = vld [vmem:[%s0 + $0x4c8] sm:$0xff]
  %v170 = vld [vmem:[%s0 + $0x4d0] sm:$0xff]
  %v171 = vld [vmem:[%s0 + $0x4d8] sm:$0xff]
  %v172 = vld [vmem:[%s0 + $0x4e0] sm:$0xff]
  %v173 = vld [vmem:[%s0 + $0x4e8] sm:$0xff]
  %v174 = vld [vmem:[%s0 + $0x4f0] sm:$0xff]
  %v175 = vld [vmem:[%s0 + $0x4f8] sm:$0xff]
  %v176 = vld [vmem:[%s0 + $0x500] sm:$0xff]
  %v177 = vld [vmem:[%s0 + $0x508] sm:$0xff]
  %v178 = vld [vmem:[%s0 + $0x510] sm:$0xff]
  %v179 = vld [vmem:[%s0 + $0x518] sm:$0xff]
  %v180 = vld [vmem:[%s0 + $0x520] sm:$0xff]
  %v181 = vld [vmem:[%s0 + $0x528] sm:$0xff]
  %v182 = vld [vmem:[%s0 + $0x530] sm:$0xff]
  %v183 = vld [vmem:[%s0 + $0x538] sm:$0xff]
  %v184 = vld [vmem:[%s0 + $0x540] sm:$0xff]
  %v185 = vld [vmem:[%s0 + $0x548] sm:$0xff]
  %v186 = vld [vmem:[%s0 + $0x550] sm:$0xff]
  %v187 = vld [vmem:[%s0 + $0x558] sm:$0xff]
  %v188 = vld [vmem:[%s0 + $0x560] sm:$0xff]
  %v189 = vld [vmem:[%s0 + $0x568] sm:$0xff]
  %v190 = vld [vmem:[%s0 + $0x570] sm:$0xff]
  %v191 = vld [vmem:[%s0 + $0x578] sm:$0xff]
  %v192 = vld [vmem:[%s0 + $0x580] sm:$0xff]
  %v193 = vld [vmem:[%s0 + $0x588] sm:$0xff]
  %v194 = vld [vmem:[%s0 + $0x590] sm:$0xff]
  %v195 = vld [vmem:[%s0 + $0x598] sm:$0xff]
  %v196 = vld [vmem:[%s0 + $0x5a0] sm:$0xff]
  %v197 = vld [vmem:[%s0 + $0x5a8] sm:$0xff]
  %v198 = vld [vmem:[%s0 + $0x5b0] sm:$0xff]
  %v199 = vld [vmem:[%s0 + $0x5b8] sm:$0xff]
  %v200 = vld [vmem:[%s0 + $0x5c0] sm:$0xff]
  %v201 = vld [vmem:[%s0 + $0x5c8] sm:$0xff]
  %v202 = vld [vmem:[%s0 + $0x5d0] sm:$0xff]
  %v203 = vld [vmem:[%s0 + $0x5d8] sm:$0xff]
  %v204 = vld [vmem:[%s0 + $0x5e0] sm:$0xff]
  %v205 = vld [vmem:[%s0 + $0x5e8] sm:$0xff]
  %v206 = vld [vmem:[%s0 + $0x5f0] sm:$0xff]
  %v207 = vld [vmem:[%s0 + $0x5f8] sm:$0xff]
  %v208 = vld [vmem:[%s0 + $0x600] sm:$0xff]
  %v209 = vld [vmem:[%s0 + $0x608] sm:$0xff]
  %v210 = vld [vmem:[%s0 + $0x610] sm:$0xff]
  %v211 = vld [vmem:[%s0 + $0x618] sm:$0xff]
  %v212 = vld [vmem:[%s0 + $0x620] sm:$0xff]
  %v213 = vld [vmem:[%s0 + $0x628] sm:$0xff]
  %v214 = vld [vmem:[%s0 + $0x630] sm:$0xff]
  %v215 = vld [vmem:[%s0 + $0x638] sm:$0xff]
  %v216 = vld [vmem:[%s0 + $0x640] sm:$0xff]
  %v217 = vld [vmem:[%s0 + $0x648] sm:$0xff]
  %v218 = vld [vmem:[%s0 + $0x650] sm:$0xff]
  %v219 = vld [vmem:[%s0 + $0x658] sm:$0xff]
  %v220 = vld [vmem:[%s0 + $0x660] sm:$0xff]
  %v221 = vld [vmem:[%s0 + $0x668] sm:$0xff]
  %v222 = vld [vmem:[%s0 + $0x670] sm:$0xff]
  %v223 = vld [vmem:[%s0 + $0x678] sm:$0xff]
  %v224 = vld [vmem:[%s0 + $0x680] sm:$0xff]
  %v225 = vld [vmem:[%s0 + $0x688] sm:$0xff]
  %v226 = vld [vmem:[%s0 + $0x690] sm:$0xff]
  %v227 = vld [vmem:[%s0 + $0x698] sm:$0xff]
  %v228 = vld [vmem:[%s0 + $0x6a0] sm:$0xff]
  %v229 = vld [vmem:[%s0 + $0x6a8] sm:$0xff]
  %v230 = vld [vmem:[%s0 + $0x6b0] sm:$0xff]
  %v231 = vld [vmem:[%s0 + $0x6b8] sm:$0xff]
  %v232 = vld [vmem:[%s0 + $0x6c0] sm:$0xff]
  %v233 = vld [vmem:[%s0 + $0x6c8] sm:$0xff]
  %v234 = vld [vmem:[%s0 + $0x6d0] sm:$0xff]
  %v235 = vld [vmem:[%s0 + $0x6d8] sm:$0xff]
  %v236 = vld [vmem:[%s0 + $0x6e0] sm:$0xff]
  %v237 = vld [vmem:[%s0 + $0x6e8] sm:$0xff]
  %v238 = vld [vmem:[%s0 + $0x6f0] sm:$0xff]
  %v239 = vld [vmem:[%s0 + $0x6f8] sm:$0xff]
  %v240 = vld [vmem:[%s0 + $0x700] sm:$0xff]
  %v241 = vld [vmem:[%s0 + $0x708] sm:$0xff]
  %v242 = vld [vmem:[%s0 + $0x710] sm:$0xff]
  %v243 = vld [vmem:[%s0 + $0x718] sm:$0xff]
  %v244 = vld [vmem:[%s0 + $0x720] sm:$0xff]
  %v245 = vld [vmem:[%s0 + $0x728] sm:$0xff]
  %v246 = vld [vmem:[%s0 + $0x730] sm:$0xff]
  %v247 = vld [vmem:[%s0 + $0x738] sm:$0xff]
  %v248 = vld [vmem:[%s0 + $0x740] sm:$0xff]
  %v249 = vld [vmem:[%s0 + $0x748] sm:$0xff]
  %v250 = vld [vmem:[%s0 + $0x750] sm:$0xff]
  %v251 = vld [vmem:[%s0 + $0x758] sm:$0xff]
  %v252 = vld [vmem:[%s0 + $0x760] sm:$0xff]
  %v253 = vld [vmem:[%s0 + $0x768] sm:$0xff]
  %v254 = vld [vmem:[%s0 + $0x770] sm:$0xff]
  %v255 = vld [vmem:[%s0 + $0x778] sm:$0xff]
  %v256 = vld [vmem:[%s0 + $0x780] sm:$0xff]
  %v257 = vld [vmem:[%s0 + $0x788] sm:$0xff]
  %v258 = vld [vmem:[%s0 + $0x790] sm:$0xff]
  %v259 = vld [vmem:[%s0 + $0x798] sm:$0xff]
  %v260 = vld [vmem:[%s0 + $0x7a0] sm:$0xff]
  %v261 = vld [vmem:[%s0 + $0x7a8] sm:$0xff]
  %v262 = vld [vmem:[%s0 + $0x7b0] sm:$0xff]
  %v263 = vld [vmem:[%s0 + $0x7b8] sm:$0xff]
  %v264 = vld [vmem:[%s0 + $0x7c0] sm:$0xff]
  %v265 = vld [vmem:[%s0 + $0x7c8] sm:$0xff]
  %v266 = vld [vmem:[%s0 + $0x7d0] sm:$0xff]
  %v267 = vld [vmem:[%s0 + $0x7d8] sm:$0xff]
  %v268 = vld [vmem:[%s0 + $0x7e0] sm:$0xff]
  %v269 = vld [vmem:[%s0 + $0x7e8] sm:$0xff]
  %v270 = vld [vmem:[%s0 + $0x7f0] sm:$0xff]
  %v271 = vld [vmem:[%s0 + $0x7f8] sm:$0xff]
  %v272 = vld [vmem:[%s0 + $0x800] sm:$0xff]
  %v273 = vld [vmem:[%s0 + $0x808] sm:$0xff]
  %v274 = vld [vmem:[%s0 + $0x810] sm:$0xff]
  %v275 = vld [vmem:[%s0 + $0x818] sm:$0xff]
  %v276 = vld [vmem:[%s0 + $0x820] sm:$0xff]
  %v277 = vld [vmem:[%s0 + $0x828] sm:$0xff]
  %v278 = vld [vmem:[%s0 + $0x830] sm:$0xff]
  %v279 = vld [vmem:[%s0 + $0x838] sm:$0xff]
  %v280 = vld [vmem:[%s0 + $0x840] sm:$0xff]
  %v281 = vld [vmem:[%s0 + $0x848] sm:$0xff]
  %v282 = vld [vmem:[%s0 + $0x850] sm:$0xff]
  %v283 = vld [vmem:[%s0 + $0x858] sm:$0xff]
  %v284 = vld [vmem:[%s0 + $0x860] sm:$0xff]
  %v285 = vld [vmem:[%s0 + $0x868] sm:$0xff]
  %v286 = vld [vmem:[%s0 + $0x870] sm:$0xff]
  %v287 = vld [vmem:[%s0 + $0x878] sm:$0xff]
  %v288 = vld [vmem:[%s0 + $0x880] sm:$0xff]
  %v289 = vld [vmem:[%s0 + $0x888] sm:$0xff]
  %v290 = vld [vmem:[%s0 + $0x890] sm:$0xff]
  %v291 = vld [vmem:[%s0 + $0x898] sm:$0xff]
  %v292 = vld [vmem:[%s0 + $0x8a0] sm:$0xff]
  %v293 = vld [vmem:[%s0 + $0x8a8] sm:$0xff]
  %v294 = vld [vmem:[%s0 + $0x8b0] sm:$0xff]
  %v295 = vld [vmem:[%s0 + $0x8b8] sm:$0xff]
  %v296 = vld [vmem:[%s0 + $0x8c0] sm:$0xff]
  %v297 = vld [vmem:[%s0 + $0x8c8] sm:$0xff]
  %v298 = vld [vmem:[%s0 + $0x8d0] sm:$0xff]
  %v299 = vld [vmem:[%s0 + $0x8d8] sm:$0xff]
  %v300 = vld [vmem:[%s0 + $0x8e0] sm:$0xff]
  %v301 = vld [vmem:[%s0 + $0x8e8] sm:$0xff]
  %v302 = vld [vmem:[%s0 + $0x8f0] sm:$0xff]
  %v303 = vld [vmem:[%s0 + $0x8f8] sm:$0xff]
  %v304 = vld [vmem:[%s0 + $0x900] sm:$0xff]
  %v305 = vld [vmem:[%s0 + $0x908] sm:$0xff]
  %v306 = vld [vmem:[%s0 + $0x910] sm:$0xff]
  %v307 = vld [vmem:[%s0 + $0x918] sm:$0xff]
  %v308 = vld [vmem:[%s0 + $0x920] sm:$0xff]
  %v309 = vld [vmem:[%s0 + $0x928] sm:$0xff]
  %v310 = vld [vmem:[%s0 + $0x930] sm:$0xff]
  %v311 = vld [vmem:[%s0 + $0x938] sm:$0xff]
  %v312 = vld [vmem:[%s0 + $0x940] sm:$0xff]
  %v313 = vld [vmem:[%s0 + $0x948] sm:$0xff]
  %v314 = vld [vmem:[%s0 + $0x950] sm:$0xff]
  %v315 = vld [vmem:[%s0 + $0x958] sm:$0xff]
  %v316 = vld [vmem:[%s0 + $0x960] sm:$0xff]
  %v317 = vld [vmem:[%s0 + $0x968] sm:$0xff]
  %v318 = vld [vmem:[%s0 + $0x970] sm:$0xff]
  %v319 = vld [vmem:[%s0 + $0x978] sm:$0xff]
  %v320 = vld [vmem:[%s0 + $0x980] sm:$0xff]
  %v321 = vld [vmem:[%s0 + $0x988] sm:$0xff]
  %v322 = vld [vmem:[%s0 + $0x990] sm:$0xff]
  %v323 = vld [vmem:[%s0 + $0x998] sm:$0xff]
  %v324 = vld [vmem:[%s0 + $0x9a0] sm:$0xff]
  %v325 = vld [vmem:[%s0 + $0x9a8] sm:$0xff]
  %v326 = vld [vmem:[%s0 + $0x9b0] sm:$0xff]
  %v327 = vld [vmem:[%s0 + $0x9b8] sm:$0xff]
  %v328 = vld [vmem:[%s0 + $0x9c0] sm:$0xff]
  %v329 = vld [vmem:[%s0 + $0x9c8] sm:$0xff]
  %v330 = vld [vmem:[%s0 + $0x9d0] sm:$0xff]
  %v331 = vld [vmem:[%s0 + $0x9d8] sm:$0xff]
  %v332 = vld [vmem:[%s0 + $0x9e0] sm:$0xff]
  %v333 = vld [vmem:[%s0 + $0x9e8] sm:$0xff]
  %v334 = vld [vmem:[%s0 + $0x9f0] sm:$0xff]
  %v335 = vld [vmem:[%s0 + $0x9f8] sm:$0xff]
  %v336 = vld [vmem:[%s0 + $0xa00] sm:$0xff]
  %v337 = vld [vmem:[%s0 + $0xa08] sm:$0xff]
  %v338 = vld [vmem:[%s0 + $0xa10] sm:$0xff]
  %v339 = vld [vmem:[%s0 + $0xa18] sm:$0xff]
  %v340 = vld [vmem:[%s0 + $0xa20] sm:$0xff]
  %v341 = vld [vmem:[%s0 + $0xa28] sm:$0xff]
  %v342 = vld [vmem:[%s0 + $0xa30] sm:$0xff]
  %v343 = vld [vmem:[%s0 + $0xa38] sm:$0xff]
  %v344 = vld [vmem:[%s0 + $0xa40] sm:$0xff]
  %v345 = vld [vmem:[%s0 + $0xa48] sm:$0xff]
  %v346 = vld [vmem:[%s0 + $0xa50] sm:$0xff]
  %v347 = vld [vmem:[%s0 + $0xa58] sm:$0xff]
  %v348 = vld [vmem:[%s0 + $0xa60] sm:$0xff]
  %v349 = vld [vmem:[%s0 + $0xa68] sm:$0xff]
  %v350 = vld [vmem:[%s0 + $0xa70] sm:$0xff]
  %v351 = vld [vmem:[%s0 + $0xa78] sm:$0xff]
  %v352 = vld [vmem:[%s0 + $0xa80] sm:$0xff]
  %v353 = vld [vmem:[%s0 + $0xa88] sm:$0xff]
  %v354 = vld [vmem:[%s0 + $0xa90] sm:$0xff]
  %v355 = vld [vmem:[%s0 + $0xa98] sm:$0xff]
  %v356 = vld [vmem:[%s0 + $0xaa0] sm:$0xff]
  %v357 = vld [vmem:[%s0 + $0xaa8] sm:$0xff]
  %v358 = vld [vmem:[%s0 + $0xab0] sm:$0xff]
  %v359 = vld [vmem:[%s0 + $0xab8] sm:$0xff]
  %v360 = vld [vmem:[%s0 + $0xac0] sm:$0xff]
  %v361 = vld [vmem:[%s0 + $0xac8] sm:$0xff]
  %v362 = vld [vmem:[%s0 + $0xad0] sm:$0xff]
  %v363 = vld [vmem:[%s0 + $0xad8] sm:$0xff]
  %v364 = vld [vmem:[%s0 + $0xae0] sm:$0xff]
  %v365 = vld [vmem:[%s0 + $0xae8] sm:$0xff]
  %v366 = vld [vmem:[%s0 + $0xaf0] sm:$0xff]
  %v367 = vld [vmem:[%s0 + $0xaf8] sm:$0xff]
  %v368 = vld [vmem:[%s0 + $0xb00] sm:$0xff]
  %v369 = vld [vmem:[%s0 + $0xb08] sm:$0xff]
  %v370 = vld [vmem:[%s0 + $0xb10] sm:$0xff]
  %v371 = vld [vmem:[%s0 + $0xb18] sm:$0xff]
  %v372 = vld [vmem:[%s0 + $0xb20] sm:$0xff]
  %v373 = vld [vmem:[%s0 + $0xb28] sm:$0xff]
  %v374 = vld [vmem:[%s0 + $0xb30] sm:$0xff]
  %v375 = vld [vmem:[%s0 + $0xb38] sm:$0xff]
  %v376 = vld [vmem:[%s0 + $0xb40] sm:$0xff]
  %v377 = vld [vmem:[%s0 + $0xb48] sm:$0xff]
  %v378 = vld [vmem:[%s0 + $0xb50] sm:$0xff]
  %v379 = vld [vmem:[%s0 + $0xb58] sm:$0xff]
  %v380 = vld [vmem:[%s0 + $0xb60] sm:$0xff]
  %v381 = vld [vmem:[%s0 + $0xb68] sm:$0xff]
  %v382 = vld [vmem:[%s0 + $0xb70] sm:$0xff]
  %v383 = vld [vmem:[%s0 + $0xb78] sm:$0xff]
  %v384 = vld [vmem:[%s0 + $0xb80] sm:$0xff]
  %v385 = vld [vmem:[%s0 + $0xb88] sm:$0xff]
  %v386 = vld [vmem:[%s0 + $0xb90] sm:$0xff]
  %v387 = vld [vmem:[%s0 + $0xb98] sm:$0xff]
  %v388 = vld [vmem:[%s0 + $0xba0] sm:$0xff]
  %v389 = vld [vmem:[%s0 + $0xba8] sm:$0xff]
  %v390 = vld [vmem:[%s0 + $0xbb0] sm:$0xff]
  %v391 = vld [vmem:[%s0 + $0xbb8] sm:$0xff]
  %v392 = vld [vmem:[%s0 + $0xbc0] sm:$0xff]
  %v393 = vld [vmem:[%s0 + $0xbc8] sm:$0xff]
  %v394 = vld [vmem:[%s0 + $0xbd0] sm:$0xff]
  %v395 = vld [vmem:[%s0 + $0xbd8] sm:$0xff]
  %v396 = vld [vmem:[%s0 + $0xbe0] sm:$0xff]
  %v397 = vld [vmem:[%s0 + $0xbe8] sm:$0xff]
  %v398 = vld [vmem:[%s0 + $0xbf0] sm:$0xff]
  %v399 = vld [vmem:[%s0 + $0xbf8] sm:$0xff]
  %v400 = vld [vmem:[%s0 + $0xc00] sm:$0xff]
  %v401 = vld [vmem:[%s0 + $0xc08] sm:$0xff]
  %v402 = vld [vmem:[%s0 + $0xc10] sm:$0xff]
  %v403 = vld [vmem:[%s0 + $0xc18] sm:$0xff]
  %v404 = vld [vmem:[%s0 + $0xc20] sm:$0xff]
  %v405 = vld [vmem:[%s0 + $0xc28] sm:$0xff]
  %v406 = vld [vmem:[%s0 + $0xc30] sm:$0xff]
  %v407 = vld [vmem:[%s0 + $0xc38] sm:$0xff]
  %v408 = vld [vmem:[%s0 + $0xc40] sm:$0xff]
  %v409 = vld [vmem:[%s0 + $0xc48] sm:$0xff]
  %v410 = vld [vmem:[%s0 + $0xc50] sm:$0xff]
  %v411 = vld [vmem:[%s0 + $0xc58] sm:$0xff]
  %v412 = vld [vmem:[%s0 + $0xc60] sm:$0xff]
  %v413 = vld [vmem:[%s0 + $0xc68] sm:$0xff]
  %v414 = vld [vmem:[%s0 + $0xc70] sm:$0xff]
  %v415 = vld [vmem:[%s0 + $0xc78] sm:$0xff]
  %v416 = vld [vmem:[%s0 + $0xc80] sm:$0xff]
  %v417 = vld [vmem:[%s0 + $0xc88] sm:$0xff]
  %v418 = vld [vmem:[%s0 + $0xc90] sm:$0xff]
  %v419 = vld [vmem:[%s0 + $0xc98] sm:$0xff]
  %v420 = vld [vmem:[%s0 + $0xca0] sm:$0xff]
  %v421 = vld [vmem:[%s0 + $0xca8] sm:$0xff]
  %v422 = vld [vmem:[%s0 + $0xcb0] sm:$0xff]
  %v423 = vld [vmem:[%s0 + $0xcb8] sm:$0xff]
  %v424 = vld [vmem:[%s0 + $0xcc0] sm:$0xff]
  %v425 = vld [vmem:[%s0 + $0xcc8] sm:$0xff]
  %v426 = vld [vmem:[%s0 + $0xcd0] sm:$0xff]
  %v427 = vld [vmem:[%s0 + $0xcd8] sm:$0xff]
  %v428 = vld [vmem:[%s0 + $0xce0] sm:$0xff]
  %v429 = vld [vmem:[%s0 + $0xce8] sm:$0xff]
  %v430 = vld [vmem:[%s0 + $0xcf0] sm:$0xff]
  %v431 = vld [vmem:[%s0 + $0xcf8] sm:$0xff]
  %v432 = vld [vmem:[%s0 + $0xd00] sm:$0xff]
  %v433 = vld [vmem:[%s0 + $0xd08] sm:$0xff]
  %v434 = vld [vmem:[%s0 + $0xd10] sm:$0xff]
  %v435 = vld [vmem:[%s0 + $0xd18] sm:$0xff]
  %v436 = vld [vmem:[%s0 + $0xd20] sm:$0xff]
  %v437 = vld [vmem:[%s0 + $0xd28] sm:$0xff]
  %v438 = vld [vmem:[%s0 + $0xd30] sm:$0xff]
  %v439 = vld [vmem:[%s0 + $0xd38] sm:$0xff]
  %v440 = vld [vmem:[%s0 + $0xd40] sm:$0xff]
  %v441 = vld [vmem:[%s0 + $0xd48] sm:$0xff]
  %v442 = vld [vmem:[%s0 + $0xd50] sm:$0xff]
  %v443 = vld [vmem:[%s0 + $0xd58] sm:$0xff]
  %v444 = vld [vmem:[%s0 + $0xd60] sm:$0xff]
  %v445 = vld [vmem:[%s0 + $0xd68] sm:$0xff]
  %v446 = vld [vmem:[%s0 + $0xd70] sm:$0xff]
  %v447 = vld [vmem:[%s0 + $0xd78] sm:$0xff]
  %v448 = vld [vmem:[%s0 + $0xd80] sm:$0xff]
  %v449 = vld [vmem:[%s0 + $0xd88] sm:$0xff]
  %v450 = vld [vmem:[%s0 + $0xd90] sm:$0xff]
  %v451 = vld [vmem:[%s0 + $0xd98] sm:$0xff]
  %v452 = vld [vmem:[%s0 + $0xda0] sm:$0xff]
  %v453 = vld [vmem:[%s0 + $0xda8] sm:$0xff]
  %v454 = vld [vmem:[%s0 + $0xdb0] sm:$0xff]
  %v455 = vld [vmem:[%s0 + $0xdb8] sm:$0xff]
  %v456 = vld [vmem:[%s0 + $0xdc0] sm:$0xff]
  %v457 = vld [vmem:[%s0 + $0xdc8] sm:$0xff]
  %v458 = vld [vmem:[%s0 + $0xdd0] sm:$0xff]
  %v459 = vld [vmem:[%s0 + $0xdd8] sm:$0xff]
  %v460 = vld [vmem:[%s0 + $0xde0] sm:$0xff]
  %v461 = vld [vmem:[%s0 + $0xde8] sm:$0xff]
  %v462 = vld [vmem:[%s0 + $0xdf0] sm:$0xff]
  %v463 = vld [vmem:[%s0 + $0xdf8] sm:$0xff]
  %v464 = vld [vmem:[%s1] sm:$0xff]
  %v465 = vld [vmem:[%s1 + $0x8] sm:$0xff]
  %v466 = vld [vmem:[%s1 + $0x10] sm:$0xff]
  %v467 = vld [vmem:[%s1 + $0x18] sm:$0xff]
  %v468 = vld [vmem:[%s1 + $0x20] sm:$0xff]
  %v469 = vld [vmem:[%s1 + $0x28] sm:$0xff]
  %v470 = vld [vmem:[%s1 + $0x30] sm:$0xff]
  %v471 = vld [vmem:[%s1 + $0x38] sm:$0xff]
  %v472 = vld [vmem:[%s1 + $0x40] sm:$0xff]
  %v473 = vld [vmem:[%s1 + $0x48] sm:$0xff]
  %v474 = vld [vmem:[%s1 + $0x50] sm:$0xff]
  %v475 = vld [vmem:[%s1 + $0x58] sm:$0xff]
  %v476 = vld [vmem:[%s1 + $0x60] sm:$0xff]
  %v477 = vld [vmem:[%s1 + $0x68] sm:$0xff]
  %v478 = vld [vmem:[%s1 + $0x70] sm:$0xff]
  %v479 = vld [vmem:[%s1 + $0x78] sm:$0xff]
  %v480 = vld [vmem:[%s1 + $0x80] sm:$0xff]
  %v481 = vld [vmem:[%s1 + $0x88] sm:$0xff]
  %v482 = vld [vmem:[%s1 + $0x90] sm:$0xff]
  %v483 = vld [vmem:[%s1 + $0x98] sm:$0xff]
  %v484 = vld [vmem:[%s1 + $0xa0] sm:$0xff]
  %v485 = vld [vmem:[%s1 + $0xa8] sm:$0xff]
  %v486 = vld [vmem:[%s1 + $0xb0] sm:$0xff]
  %v487 = vld [vmem:[%s1 + $0xb8] sm:$0xff]
  %v488 = vld [vmem:[%s1 + $0xc0] sm:$0xff]
  %v489 = vld [vmem:[%s1 + $0xc8] sm:$0xff]
  %v490 = vld [vmem:[%s1 + $0xd0] sm:$0xff]
  %v491 = vld [vmem:[%s1 + $0xd8] sm:$0xff]
  %v492 = vld [vmem:[%s1 + $0xe0] sm:$0xff]
  %v493 = vld [vmem:[%s1 + $0xe8] sm:$0xff]
  %v494 = vld [vmem:[%s1 + $0xf0] sm:$0xff]
  %v495 = vld [vmem:[%s1 + $0xf8] sm:$0xff]
  %v496 = vld [vmem:[%s1 + $0x100] sm:$0xff]
  %v497 = vld [vmem:[%s1 + $0x108] sm:$0xff]
  %v498 = vld [vmem:[%s1 + $0x110] sm:$0xff]
  %v499 = vld [vmem:[%s1 + $0x118] sm:$0xff]
  %v500 = vld [vmem:[%s1 + $0x120] sm:$0xff]
  %v501 = vld [vmem:[%s1 + $0x128] sm:$0xff]
  %v502 = vld [vmem:[%s1 + $0x130] sm:$0xff]
  %v503 = vld [vmem:[%s1 + $0x138] sm:$0xff]
  %v504 = vld [vmem:[%s1 + $0x140] sm:$0xff]
  %v505 = vld [vmem:[%s1 + $0x148] sm:$0xff]
  %v506 = vld [vmem:[%s1 + $0x150] sm:$0xff]
  %v507 = vld [vmem:[%s1 + $0x158] sm:$0xff]
  %v508 = vld [vmem:[%s1 + $0x160] sm:$0xff]
  %v509 = vld [vmem:[%s1 + $0x168] sm:$0xff]
  %v510 = vld [vmem:[%s1 + $0x170] sm:$0xff]
  %v511 = vld [vmem:[%s1 + $0x178] sm:$0xff]
  %v512 = vld [vmem:[%s1 + $0x180] sm:$0xff]
  %v513 = vld [vmem:[%s1 + $0x188] sm:$0xff]
  %v514 = vld [vmem:[%s1 + $0x190] sm:$0xff]
  %v515 = vld [vmem:[%s1 + $0x198] sm:$0xff]
  %v516 = vld [vmem:[%s1 + $0x1a0] sm:$0xff]
  %v517 = vld [vmem:[%s1 + $0x1a8] sm:$0xff]
  %v518 = vld [vmem:[%s1 + $0x1b0] sm:$0xff]
  %v519 = vld [vmem:[%s1 + $0x1b8] sm:$0xff]
  %v520 = vld [vmem:[%s1 + $0x1c0] sm:$0xff]
  %v521 = vld [vmem:[%s1 + $0x1c8] sm:$0xff]
  %v522 = vld [vmem:[%s1 + $0x1d0] sm:$0xff]
  %v523 = vld [vmem:[%s1 + $0x1d8] sm:$0xff]
  %v524 = vld [vmem:[%s1 + $0x1e0] sm:$0xff]
  %v525 = vld [vmem:[%s1 + $0x1e8] sm:$0xff]
  %v526 = vld [vmem:[%s1 + $0x1f0] sm:$0xff]
  %v527 = vld [vmem:[%s1 + $0x1f8] sm:$0xff]
  %v528 = vld [vmem:[%s1 + $0x200] sm:$0xff]
  %v529 = vld [vmem:[%s1 + $0x208] sm:$0xff]
  %v530 = vld [vmem:[%s1 + $0x210] sm:$0xff]
  %v531 = vld [vmem:[%s1 + $0x218] sm:$0xff]
  %v532 = vld [vmem:[%s1 + $0x220] sm:$0xff]
  %v533 = vld [vmem:[%s1 + $0x228] sm:$0xff]
  %v534 = vld [vmem:[%s1 + $0x230] sm:$0xff]
  %v535 = vld [vmem:[%s1 + $0x238] sm:$0xff]
  %v536 = vld [vmem:[%s1 + $0x240] sm:$0xff]
  %v537 = vld [vmem:[%s1 + $0x248] sm:$0xff]
  %v538 = vld [vmem:[%s1 + $0x250] sm:$0xff]
  %v539 = vld [vmem:[%s1 + $0x258] sm:$0xff]
  %v540 = vld [vmem:[%s1 + $0x260] sm:$0xff]
  %v541 = vld [vmem:[%s1 + $0x268] sm:$0xff]
  %v542 = vld [vmem:[%s1 + $0x270] sm:$0xff]
  %v543 = vld [vmem:[%s1 + $0x278] sm:$0xff]
  %v544 = vld [vmem:[%s1 + $0x280] sm:$0xff]
  %v545 = vld [vmem:[%s1 + $0x288] sm:$0xff]
  %v546 = vld [vmem:[%s1 + $0x290] sm:$0xff]
  %v547 = vld [vmem:[%s1 + $0x298] sm:$0xff]
  %v548 = vld [vmem:[%s1 + $0x2a0] sm:$0xff]
  %v549 = vld [vmem:[%s1 + $0x2a8] sm:$0xff]
  %v550 = vld [vmem:[%s1 + $0x2b0] sm:$0xff]
  %v551 = vld [vmem:[%s1 + $0x2b8] sm:$0xff]
  %v552 = vld [vmem:[%s1 + $0x2c0] sm:$0xff]
  %v553 = vld [vmem:[%s1 + $0x2c8] sm:$0xff]
  %v554 = vld [vmem:[%s1 + $0x2d0] sm:$0xff]
  %v555 = vld [vmem:[%s1 + $0x2d8] sm:$0xff]
  %v556 = vld [vmem:[%s1 + $0x2e0] sm:$0xff]
  %v557 = vld [vmem:[%s1 + $0x2e8] sm:$0xff]
  %v558 = vld [vmem:[%s1 + $0x2f0] sm:$0xff]
  %v559 = vld [vmem:[%s1 + $0x2f8] sm:$0xff]
  %v560 = vld [vmem:[%s1 + $0x300] sm:$0xff]
  %v561 = vld [vmem:[%s1 + $0x308] sm:$0xff]
  %v562 = vld [vmem:[%s1 + $0x310] sm:$0xff]
  %v563 = vld [vmem:[%s1 + $0x318] sm:$0xff]
  %v564 = vld [vmem:[#allocation2] sm:$0x1]
  %v566 = vlaneseq
  %v567 = vshrl.u32 %v566, 7
  %v568 = vsub.s32 0, %v567
  %v569 = vrot.slane %v564, %v568
  %vm571 = vcmask 261120
  %v573 = vsel %vm571, %v22, 0
  %v576 = vsel %vm571, %v29, 0
  %v579 = vsel %vm571, %v36, 0
  %v582 = vsel %vm571, %v43, 0
  %v585 = vsel %vm571, %v50, 0
  %v588 = vsel %vm571, %v57, 0
  %v591 = vsel %vm571, %v64, 0
  %v594 = vsel %vm571, %v71, 0
  %v597 = vsel %vm571, %v78, 0
  %v600 = vsel %vm571, %v85, 0
  %v603 = vsel %vm571, %v92, 0
  %v606 = vsel %vm571, %v99, 0
  %v609 = vsel %vm571, %v106, 0
  %v612 = vsel %vm571, %v113, 0
  %v615 = vsel %vm571, %v120, 0
  %v618 = vsel %vm571, %v127, 0
  %v621 = vsel %vm571, %v134, 0
  %v624 = vsel %vm571, %v141, 0
  %v627 = vsel %vm571, %v148, 0
  %v630 = vsel %vm571, %v155, 0
  %v633 = vsel %vm571, %v162, 0
  %v636 = vsel %vm571, %v169, 0
  %v639 = vsel %vm571, %v176, 0
  %v642 = vsel %vm571, %v183, 0
  %v645 = vsel %vm571, %v190, 0
  %v648 = vsel %vm571, %v197, 0
  %v651 = vsel %vm571, %v204, 0
  %v654 = vsel %vm571, %v211, 0
  %v657 = vsel %vm571, %v218, 0
  %v660 = vsel %vm571, %v225, 0
  %v663 = vsel %vm571, %v232, 0
  %v666 = vsel %vm571, %v239, 0
  %v669 = vsel %vm571, %v246, 0
  %v672 = vsel %vm571, %v253, 0
  %v675 = vsel %vm571, %v260, 0
  %v678 = vsel %vm571, %v267, 0
  %v681 = vsel %vm571, %v274, 0
  %v684 = vsel %vm571, %v281, 0
  %v687 = vsel %vm571, %v288, 0
  %v690 = vsel %vm571, %v295, 0
  %v693 = vsel %vm571, %v302, 0
  %v696 = vsel %vm571, %v309, 0
  %v699 = vsel %vm571, %v316, 0
  %v702 = vsel %vm571, %v323, 0
  %v705 = vsel %vm571, %v330, 0
  %v708 = vsel %vm571, %v337, 0
  %v711 = vsel %vm571, %v344, 0
  %v714 = vsel %vm571, %v351, 0
  %v717 = vsel %vm571, %v358, 0
  %v720 = vsel %vm571, %v365, 0
  %v723 = vsel %vm571, %v372, 0
  %v726 = vsel %vm571, %v379, 0
  %v729 = vsel %vm571, %v386, 0
  %v732 = vsel %vm571, %v393, 0
  %v735 = vsel %vm571, %v400, 0
  %v738 = vsel %vm571, %v407, 0
  %v741 = vsel %vm571, %v414, 0
  %v744 = vsel %vm571, %v421, 0
  %v747 = vsel %vm571, %v428, 0
  %v750 = vsel %vm571, %v435, 0
  %v753 = vsel %vm571, %v442, 0
  %v756 = vsel %vm571, %v449, 0
  %v759 = vsel %vm571, %v456, 0
  %v762 = vsel %vm571, %v463, 0
  %764 = vmatprep.subr.mxu0 0.0
  %765 = vmatpush1.msra.mxu0 %v464
  %766 = vmatprep.subr.mxu0 0.0
  %767 = vmatpush1.msra.mxu0 %v465
  %768 = vmatprep.subr.mxu0 0.0
  %769 = vmatpush1.msra.mxu0 %v466
  %770 = vmatprep.subr.mxu0 0.0
  %771 = vmatpush1.msra.mxu0 %v467
  %772 = vmatprep.subr.mxu0 0.0
  %773 = vmatpush1.msra.mxu0 %v468
  %774 = vmatprep.subr.mxu0 0.0
  %775 = vmatpush1.msra.mxu0 %v469
  %776 = vmatprep.subr.mxu0 0.0
  %777 = vmatpush1.msra.mxu0 %v470
  %778 = vmatprep.subr.mxu0 0.0
  %779 = vmatpush1.msra.mxu0 %v471
  %780 = vmatprep.subr.mxu0 0.0
  %781 = vmatpush1.msra.mxu0 %v472
  %782 = vmatprep.subr.mxu0 0.0
  %783 = vmatpush1.msra.mxu0 %v473
  %784 = vmatprep.subr.mxu0 0.0
  %785 = vmatpush1.msra.mxu0 %v474
  %786 = vmatprep.subr.mxu0 0.0
  %787 = vmatpush1.msra.mxu0 %v475
  %788 = vmatprep.subr.mxu0 0.0
  %789 = vmatpush1.msra.mxu0 %v476
  %790 = vmatprep.subr.mxu0 0.0
  %791 = vmatpush1.msra.mxu0 %v477
  %792 = vmatprep.subr.mxu0 0.0
  %793 = vmatpush1.msra.mxu0 %v478
  %794 = vmatprep.subr.mxu0 0.0
  %795 = vmatpush1.msra.mxu0 %v479
  %796 = vmatprep.subr.mxu0 0.0
  %797 = vmatpush1.msra.mxu0 %v480
  %798 = vmatprep.subr.mxu0 0.0
  %799 = vmatpush1.msra.mxu0 %v481
  %800 = vmatprep.subr.mxu0 0.0
  %801 = vmatpush1.msra.mxu0 %v482
  %802 = vmatprep.subr.mxu0 0.0
  %803 = vmatpush1.msra.mxu0 %v483
  %804 = vmatprep.subr.mxu0 0.0
  %805 = vmatpush1.msra.mxu0 %v484
  %806 = vmatprep.subr.mxu0 0.0
  %807 = vmatpush1.msra.mxu0 %v485
  %808 = vmatprep.subr.mxu0 0.0
  %809 = vmatpush1.msra.mxu0 %v486
  %810 = vmatprep.subr.mxu0 0.0
  %811 = vmatpush1.msra.mxu0 %v487
  %812 = vmatprep.subr.mxu0 0.0
  %813 = vmatpush1.msra.mxu0 %v488
  %814 = vmatprep.subr.mxu0 0.0
  %815 = vmatpush1.msra.mxu0 %v489
  %816 = vmatprep.subr.mxu0 0.0
  %817 = vmatpush1.msra.mxu0 %v490
  %818 = vmatprep.subr.mxu0 0.0
  %819 = vmatpush1.msra.mxu0 %v491
  %820 = vmatprep.subr.mxu0 0.0
  %821 = vmatpush1.msra.mxu0 %v492
  %822 = vmatprep.subr.mxu0 0.0
  %823 = vmatpush1.msra.mxu0 %v493
  %824 = vmatprep.subr.mxu0 0.0
  %825 = vmatpush1.msra.mxu0 %v494
  %826 = vmatprep.subr.mxu0 0.0
  %827 = vmatpush1.msra.mxu0 %v495
  %828 = vmatprep.mubr.f32.mxu0 %v17
  %829 = vmatmul.mubr.f32.gmra.mrb[0].mxu0 %v16
  %v830 = vpop.f32.mrb[0].mxu0
  %v831 = vadd.f32 %v569, %v830
  %v832 = vpop.f32.mrb[0].mxu0
  %833 = vmatprep.mubr.f32.mxu0 %v24
  %834 = vmatmul.mubr.f32.gmra.mrb[0].mxu0 %v23
  %v835 = vpop.f32.mrb[0].mxu0
  %v836 = vadd.f32 %v569, %v835
  %v837 = vpop.f32.mrb[0].mxu0
  %838 = vmatprep.mubr.f32.mxu0 %v31
  %839 = vmatmul.mubr.f32.gmra.mrb[0].mxu0 %v30
  %v840 = vpop.f32.mrb[0].mxu0
  %v841 = vadd.f32 %v569, %v840
  %v842 = vpop.f32.mrb[0].mxu0
  %843 = vmatprep.mubr.f32.mxu0 %v38
  %844 = vmatmul.mubr.f32.gmra.mrb[0].mxu0 %v37
  %v845 = vpop.f32.mrb[0].mxu0
  %v846 = vadd.f32 %v569, %v845
  %v847 = vpop.f32.mrb[0].mxu0
  %848 = vmatprep.mubr.f32.mxu0 %v45
  %849 = vmatmul.mubr.f32.gmra.mrb[0].mxu0 %v44
  %v850 = vpop.f32.mrb[0].mxu0
  %v851 = vadd.f32 %v569, %v850
  %v852 = vpop.f32.mrb[0].mxu0
  %853 = vmatprep.mubr.f32.mxu0 %v52
  %854 = vmatmul.mubr.f32.gmra.mrb[0].mxu0 %v51
  %v855 = vpop.f32.mrb[0].mxu0
  %v856 = vadd.f32 %v569, %v855
  %v857 = vpop.f32.mrb[0].mxu0
  %858 = vmatprep.mubr.f32.mxu0 %v59
  %859 = vmatmul.mubr.f32.gmra.mrb[0].mxu0 %v58
  %v860 = vpop.f32.mrb[0].mxu0
  %v861 = vadd.f32 %v569, %v860
  %v862 = vpop.f32.mrb[0].mxu0
  %863 = vmatprep.mubr.f32.mxu0 %v66
  %864 = vmatmul.mubr.f32.gmra.mrb[0].mxu0 %v65
  %v865 = vpop.f32.mrb[0].mxu0
  %v866 = vadd.f32 %v569, %v865
  %v867 = vpop.f32.mrb[0].mxu0
  %868 = vmatprep.mubr.f32.mxu0 %v73
  %869 = vmatmul.mubr.f32.gmra.mrb[0].mxu0 %v72
  %v870 = vpop.f32.mrb[0].mxu0
  %v871 = vadd.f32 %v569, %v870
  %v872 = vpop.f32.mrb[0].mxu0
  %873 = vmatprep.mubr.f32.mxu0 %v80
  %874 = vmatmul.mubr.f32.gmra.mrb[0].mxu0 %v79
  %v875 = vpop.f32.mrb[0].mxu0
  %v876 = vadd.f32 %v569, %v875
  %v877 = vpop.f32.mrb[0].mxu0
  %878 = vmatprep.mubr.f32.mxu0 %v87
  %879 = vmatmul.mubr.f32.gmra.mrb[0].mxu0 %v86
  %v880 = vpop.f32.mrb[0].mxu0
  %v881 = vadd.f32 %v569, %v880
  %v882 = vpop.f32.mrb[0].mxu0
  %883 = vmatprep.mubr.f32.mxu0 %v94
  %884 = vmatmul.mubr.f32.gmra.mrb[0].mxu0 %v93
  %v885 = vpop.f32.mrb[0].mxu0
  %v886 = vadd.f32 %v569, %v885
  %v887 = vpop.f32.mrb[0].mxu0
  %888 = vmatprep.mubr.f32.mxu0 %v101
  %889 = vmatmul.mubr.f32.gmra.mrb[0].mxu0 %v100
  %v890 = vpop.f32.mrb[0].mxu0
  %v891 = vadd.f32 %v569, %v890
  %v892 = vpop.f32.mrb[0].mxu0
  %893 = vmatprep.mubr.f32.mxu0 %v108
  %894 = vmatmul.mubr.f32.gmra.mrb[0].mxu0 %v107
  %v895 = vpop.f32.mrb[0].mxu0
  %v896 = vadd.f32 %v569, %v895
  %v897 = vpop.f32.mrb[0].mxu0
  %898 = vmatprep.mubr.f32.mxu0 %v115
  %899 = vmatmul.mubr.f32.gmra.mrb[0].mxu0 %v114
  %v900 = vpop.f32.mrb[0].mxu0
  %v901 = vadd.f32 %v569, %v900
  %v902 = vpop.f32.mrb[0].mxu0
  %903 = vmatprep.mubr.f32.mxu0 %v122
  %904 = vmatmul.mubr.f32.gmra.mrb[0].mxu0 %v121
  %v905 = vpop.f32.mrb[0].mxu0
  %v906 = vadd.f32 %v569, %v905
  %v907 = vpop.f32.mrb[0].mxu0
  %908 = vmatprep.mubr.f32.mxu0 %v129
  %909 = vmatmul.mubr.f32.gmra.mrb[0].mxu0 %v128
  %v910 = vpop.f32.mrb[0].mxu0
  %v911 = vadd.f32 %v569, %v910
  %v912 = vpop.f32.mrb[0].mxu0
  %913 = vmatprep.mubr.f32.mxu0 %v136
  %914 = vmatmul.mubr.f32.gmra.mrb[0].mxu0 %v135
  %v915 = vpop.f32.mrb[0].mxu0
  %v916 = vadd.f32 %v569, %v915
  %v917 = vpop.f32.mrb[0].mxu0
  %918 = vmatprep.mubr.f32.mxu0 %v143
  %919 = vmatmul.mubr.f32.gmra.mrb[0].mxu0 %v142
  %v920 = vpop.f32.mrb[0].mxu0
  %v921 = vadd.f32 %v569, %v920
  %v922 = vpop.f32.mrb[0].mxu0
  %923 = vmatprep.mubr.f32.mxu0 %v150
  %924 = vmatmul.mubr.f32.gmra.mrb[0].mxu0 %v149
  %v925 = vpop.f32.mrb[0].mxu0
  %v926 = vadd.f32 %v569, %v925
  %v927 = vpop.f32.mrb[0].mxu0
  %928 = vmatprep.mubr.f32.mxu0 %v157
  %929 = vmatmul.mubr.f32.gmra.mrb[0].mxu0 %v156
  %v930 = vpop.f32.mrb[0].mxu0
  %v931 = vadd.f32 %v569, %v930
  %v932 = vpop.f32.mrb[0].mxu0
  %933 = vmatprep.mubr.f32.mxu0 %v164
  %934 = vmatmul.mubr.f32.gmra.mrb[0].mxu0 %v163
  %v935 = vpop.f32.mrb[0].mxu0
  %v936 = vadd.f32 %v569, %v935
  %v937 = vpop.f32.mrb[0].mxu0
  %938 = vmatprep.mubr.f32.mxu0 %v171
  %939 = vmatmul.mubr.f32.gmra.mrb[0].mxu0 %v170
  %v940 = vpop.f32.mrb[0].mxu0
  %v941 = vadd.f32 %v569, %v940
  %v942 = vpop.f32.mrb[0].mxu0
  %943 = vmatprep.mubr.f32.mxu0 %v178
  %944 = vmatmul.mubr.f32.gmra.mrb[0].mxu0 %v177
  %v945 = vpop.f32.mrb[0].mxu0
  %v946 = vadd.f32 %v569, %v945
  %v947 = vpop.f32.mrb[0].mxu0
  %948 = vmatprep.mubr.f32.mxu0 %v185
  %949 = vmatmul.mubr.f32.gmra.mrb[0].mxu0 %v184
  %v950 = vpop.f32.mrb[0].mxu0
  %v951 = vadd.f32 %v569, %v950
  %v952 = vpop.f32.mrb[0].mxu0
  %953 = vmatprep.mubr.f32.mxu0 %v192
  %954 = vmatmul.mubr.f32.gmra.mrb[0].mxu0 %v191
  %v955 = vpop.f32.mrb[0].mxu0
  %v956 = vadd.f32 %v569, %v955
  %v957 = vpop.f32.mrb[0].mxu0
  %958 = vmatprep.mubr.f32.mxu0 %v199
  %959 = vmatmul.mubr.f32.gmra.mrb[0].mxu0 %v198
  %v960 = vpop.f32.mrb[0].mxu0
  %v961 = vadd.f32 %v569, %v960
  %v962 = vpop.f32.mrb[0].mxu0
  %963 = vmatprep.mubr.f32.mxu0 %v206
  %964 = vmatmul.mubr.f32.gmra.mrb[0].mxu0 %v205
  %v965 = vpop.f32.mrb[0].mxu0
  %v966 = vadd.f32 %v569, %v965
  %v967 = vpop.f32.mrb[0].mxu0
  %968 = vmatprep.mubr.f32.mxu0 %v213
  %969 = vmatmul.mubr.f32.gmra.mrb[0].mxu0 %v212
  %v970 = vpop.f32.mrb[0].mxu0
  %v971 = vadd.f32 %v569, %v970
  %v972 = vpop.f32.mrb[0].mxu0
  %973 = vmatprep.mubr.f32.mxu0 %v220
  %974 = vmatmul.mubr.f32.gmra.mrb[0].mxu0 %v219
  %v975 = vpop.f32.mrb[0].mxu0
  %v976 = vadd.f32 %v569, %v975
  %v977 = vpop.f32.mrb[0].mxu0
  %978 = vmatprep.mubr.f32.mxu0 %v227
  %979 = vmatmul.mubr.f32.gmra.mrb[0].mxu0 %v226
  %v980 = vpop.f32.mrb[0].mxu0
  %v981 = vadd.f32 %v569, %v980
  %v982 = vpop.f32.mrb[0].mxu0
  %983 = vmatprep.mubr.f32.mxu0 %v234
  %984 = vmatmul.mubr.f32.gmra.mrb[0].mxu0 %v233
  %v985 = vpop.f32.mrb[0].mxu0
  %v986 = vadd.f32 %v569, %v985
  %v987 = vpop.f32.mrb[0].mxu0
  %988 = vmatprep.mubr.f32.mxu0 %v241
  %989 = vmatmul.mubr.f32.gmra.mrb[0].mxu0 %v240
  %v990 = vpop.f32.mrb[0].mxu0
  %v991 = vadd.f32 %v569, %v990
  %v992 = vpop.f32.mrb[0].mxu0
  %993 = vmatprep.mubr.f32.mxu0 %v248
  %994 = vmatmul.mubr.f32.gmra.mrb[0].mxu0 %v247
  %v995 = vpop.f32.mrb[0].mxu0
  %v996 = vadd.f32 %v569, %v995
  %v997 = vpop.f32.mrb[0].mxu0
  %998 = vmatprep.mubr.f32.mxu0 %v255
  %999 = vmatmul.mubr.f32.gmra.mrb[0].mxu0 %v254
  %v1000 = vpop.f32.mrb[0].mxu0
  %v1001 = vadd.f32 %v569, %v1000
  %v1002 = vpop.f32.mrb[0].mxu0
  %1003 = vmatprep.mubr.f32.mxu0 %v262
  %1004 = vmatmul.mubr.f32.gmra.mrb[0].mxu0 %v261
  %v1005 = vpop.f32.mrb[0].mxu0
  %v1006 = vadd.f32 %v569, %v1005
  %v1007 = vpop.f32.mrb[0].mxu0
  %1008 = vmatprep.mubr.f32.mxu0 %v269
  %1009 = vmatmul.mubr.f32.gmra.mrb[0].mxu0 %v268
  %v1010 = vpop.f32.mrb[0].mxu0
  %v1011 = vadd.f32 %v569, %v1010
  %v1012 = vpop.f32.mrb[0].mxu0
  %1013 = vmatprep.mubr.f32.mxu0 %v276
  %1014 = vmatmul.mubr.f32.gmra.mrb[0].mxu0 %v275
  %v1015 = vpop.f32.mrb[0].mxu0
  %v1016 = vadd.f32 %v569, %v1015
  %v1017 = vpop.f32.mrb[0].mxu0
  %1018 = vmatprep.mubr.f32.mxu0 %v283
  %1019 = vmatmul.mubr.f32.gmra.mrb[0].mxu0 %v282
  %v1020 = vpop.f32.mrb[0].mxu0
  %v1021 = vadd.f32 %v569, %v1020
  %v1022 = vpop.f32.mrb[0].mxu0
  %1023 = vmatprep.mubr.f32.mxu0 %v290
  %1024 = vmatmul.mubr.f32.gmra.mrb[0].mxu0 %v289
  %v1025 = vpop.f32.mrb[0].mxu0
  %v1026 = vadd.f32 %v569, %v1025
  %v1027 = vpop.f32.mrb[0].mxu0
  %1028 = vmatprep.mubr.f32.mxu0 %v297
  %1029 = vmatmul.mubr.f32.gmra.mrb[0].mxu0 %v296
  %v1030 = vpop.f32.mrb[0].mxu0
  %v1031 = vadd.f32 %v569, %v1030
  %v1032 = vpop.f32.mrb[0].mxu0
  %1033 = vmatprep.mubr.f32.mxu0 %v304
  %1034 = vmatmul.mubr.f32.gmra.mrb[0].mxu0 %v303
  %v1035 = vpop.f32.mrb[0].mxu0
  %v1036 = vadd.f32 %v569, %v1035
  %v1037 = vpop.f32.mrb[0].mxu0
  %1038 = vmatprep.mubr.f32.mxu0 %v311
  %1039 = vmatmul.mubr.f32.gmra.mrb[0].mxu0 %v310
  %v1040 = vpop.f32.mrb[0].mxu0
  %v1041 = vadd.f32 %v569, %v1040
  %v1042 = vpop.f32.mrb[0].mxu0
  %1043 = vmatprep.mubr.f32.mxu0 %v318
  %1044 = vmatmul.mubr.f32.gmra.mrb[0].mxu0 %v317
  %v1045 = vpop.f32.mrb[0].mxu0
  %v1046 = vadd.f32 %v569, %v1045
  %v1047 = vpop.f32.mrb[0].mxu0
  %1048 = vmatprep.mubr.f32.mxu0 %v325
  %1049 = vmatmul.mubr.f32.gmra.mrb[0].mxu0 %v324
  %v1050 = vpop.f32.mrb[0].mxu0
  %v1051 = vadd.f32 %v569, %v1050
  %v1052 = vpop.f32.mrb[0].mxu0
  %1053 = vmatprep.mubr.f32.mxu0 %v332
  %1054 = vmatmul.mubr.f32.gmra.mrb[0].mxu0 %v331
  %v1055 = vpop.f32.mrb[0].mxu0
  %v1056 = vadd.f32 %v569, %v1055
  %v1057 = vpop.f32.mrb[0].mxu0
  %1058 = vmatprep.mubr.f32.mxu0 %v339
  %1059 = vmatmul.mubr.f32.gmra.mrb[0].mxu0 %v338
  %v1060 = vpop.f32.mrb[0].mxu0
  %v1061 = vadd.f32 %v569, %v1060
  %v1062 = vpop.f32.mrb[0].mxu0
  %1063 = vmatprep.mubr.f32.mxu0 %v346
  %1064 = vmatmul.mubr.f32.gmra.mrb[0].mxu0 %v345
  %v1065 = vpop.f32.mrb[0].mxu0
  %v1066 = vadd.f32 %v569, %v1065
  %v1067 = vpop.f32.mrb[0].mxu0
  %1068 = vmatprep.mubr.f32.mxu0 %v353
  %1069 = vmatmul.mubr.f32.gmra.mrb[0].mxu0 %v352
  %v1070 = vpop.f32.mrb[0].mxu0
  %v1071 = vadd.f32 %v569, %v1070
  %v1072 = vpop.f32.mrb[0].mxu0
  %1073 = vmatprep.mubr.f32.mxu0 %v360
  %1074 = vmatmul.mubr.f32.gmra.mrb[0].mxu0 %v359
  %v1075 = vpop.f32.mrb[0].mxu0
  %v1076 = vadd.f32 %v569, %v1075
  %v1077 = vpop.f32.mrb[0].mxu0
  %1078 = vmatprep.mubr.f32.mxu0 %v367
  %1079 = vmatmul.mubr.f32.gmra.mrb[0].mxu0 %v366
  %v1080 = vpop.f32.mrb[0].mxu0
  %v1081 = vadd.f32 %v569, %v1080
  %v1082 = vpop.f32.mrb[0].mxu0
  %1083 = vmatprep.mubr.f32.mxu0 %v374
  %1084 = vmatmul.mubr.f32.gmra.mrb[0].mxu0 %v373
  %v1085 = vpop.f32.mrb[0].mxu0
  %v1086 = vadd.f32 %v569, %v1085
  %v1087 = vpop.f32.mrb[0].mxu0
  %1088 = vmatprep.mubr.f32.mxu0 %v381
  %1089 = vmatmul.mubr.f32.gmra.mrb[0].mxu0 %v380
  %v1090 = vpop.f32.mrb[0].mxu0
  %v1091 = vadd.f32 %v569, %v1090
  %v1092 = vpop.f32.mrb[0].mxu0
  %1093 = vmatprep.mubr.f32.mxu0 %v388
  %1094 = vmatmul.mubr.f32.gmra.mrb[0].mxu0 %v387
  %v1095 = vpop.f32.mrb[0].mxu0
  %v1096 = vadd.f32 %v569, %v1095
  %v1097 = vpop.f32.mrb[0].mxu0
  %1098 = vmatprep.mubr.f32.mxu0 %v395
  %1099 = vmatmul.mubr.f32.gmra.mrb[0].mxu0 %v394
  %v1100 = vpop.f32.mrb[0].mxu0
  %v1101 = vadd.f32 %v569, %v1100
  %v1102 = vpop.f32.mrb[0].mxu0
  %1103 = vmatprep.mubr.f32.mxu0 %v402
  %1104 = vmatmul.mubr.f32.gmra.mrb[0].mxu0 %v401
  %v1105 = vpop.f32.mrb[0].mxu0
  %v1106 = vadd.f32 %v569, %v1105
  %v1107 = vpop.f32.mrb[0].mxu0
  %1108 = vmatprep.mubr.f32.mxu0 %v409
  %1109 = vmatmul.mubr.f32.gmra.mrb[0].mxu0 %v408
  %v1110 = vpop.f32.mrb[0].mxu0
  %v1111 = vadd.f32 %v569, %v1110
  %v1112 = vpop.f32.mrb[0].mxu0
  %1113 = vmatprep.mubr.f32.mxu0 %v416
  %1114 = vmatmul.mubr.f32.gmra.mrb[0].mxu0 %v415
  %v1115 = vpop.f32.mrb[0].mxu0
  %v1116 = vadd.f32 %v569, %v1115
  %v1117 = vpop.f32.mrb[0].mxu0
  %1118 = vmatprep.mubr.f32.mxu0 %v423
  %1119 = vmatmul.mubr.f32.gmra.mrb[0].mxu0 %v422
  %v1120 = vpop.f32.mrb[0].mxu0
  %v1121 = vadd.f32 %v569, %v1120
  %v1122 = vpop.f32.mrb[0].mxu0
  %1123 = vmatprep.mubr.f32.mxu0 %v430
  %1124 = vmatmul.mubr.f32.gmra.mrb[0].mxu0 %v429
  %v1125 = vpop.f32.mrb[0].mxu0
  %v1126 = vadd.f32 %v569, %v1125
  %v1127 = vpop.f32.mrb[0].mxu0
  %1128 = vmatprep.mubr.f32.mxu0 %v437
  %1129 = vmatmul.mubr.f32.gmra.mrb[0].mxu0 %v436
  %v1130 = vpop.f32.mrb[0].mxu0
  %v1131 = vadd.f32 %v569, %v1130
  %v1132 = vpop.f32.mrb[0].mxu0
  %1133 = vmatprep.mubr.f32.mxu0 %v444
  %1134 = vmatmul.mubr.f32.gmra.mrb[0].mxu0 %v443
  %v1135 = vpop.f32.mrb[0].mxu0
  %v1136 = vadd.f32 %v569, %v1135
  %v1137 = vpop.f32.mrb[0].mxu0
  %1138 = vmatprep.mubr.f32.mxu0 %v451
  %1139 = vmatmul.mubr.f32.gmra.mrb[0].mxu0 %v450
  %v1140 = vpop.f32.mrb[0].mxu0
  %v1141 = vadd.f32 %v569, %v1140
  %v1142 = vpop.f32.mrb[0].mxu0
  %1143 = vmatprep.mubr.f32.mxu0 %v458
  %1144 = vmatmul.mubr.f32.gmra.mrb[0].mxu0 %v457
  %v1145 = vpop.f32.mrb[0].mxu0
  %v1146 = vadd.f32 %v569, %v1145
  %v1147 = vpop.f32.mrb[0].mxu0
  %1148 = vdwg.mxu0
  %1149 = vmatprep.subr.mxu0 0.0
  %1150 = vmatpush1.msra.mxu0 %v496
  %1151 = vmatprep.subr.mxu0 0.0
  %1152 = vmatpush1.msra.mxu0 %v497
  %1153 = vmatprep.subr.mxu0 0.0
  %1154 = vmatpush1.msra.mxu0 %v498
  %1155 = vmatprep.subr.mxu0 0.0
  %1156 = vmatpush1.msra.mxu0 %v499
  %1157 = vmatprep.subr.mxu0 0.0
  %1158 = vmatpush1.msra.mxu0 %v500
  %1159 = vmatprep.subr.mxu0 0.0
  %1160 = vmatpush1.msra.mxu0 %v501
  %1161 = vmatprep.subr.mxu0 0.0
  %1162 = vmatpush1.msra.mxu0 %v502
  %1163 = vmatprep.subr.mxu0 0.0
  %1164 = vmatpush1.msra.mxu0 %v503
  %1165 = vmatprep.subr.mxu0 0.0
  %1166 = vmatpush1.msra.mxu0 %v504
  %1167 = vmatprep.subr.mxu0 0.0
  %1168 = vmatpush1.msra.mxu0 %v505
  %1169 = vmatprep.subr.mxu0 0.0
  %1170 = vmatpush1.msra.mxu0 %v506
  %1171 = vmatprep.subr.mxu0 0.0
  %1172 = vmatpush1.msra.mxu0 %v507
  %1173 = vmatprep.subr.mxu0 0.0
  %1174 = vmatpush1.msra.mxu0 %v508
  %1175 = vmatprep.subr.mxu0 0.0
  %1176 = vmatpush1.msra.mxu0 %v509
  %1177 = vmatprep.subr.mxu0 0.0
  %1178 = vmatpush1.msra.mxu0 %v510
  %1179 = vmatprep.subr.mxu0 0.0
  %1180 = vmatpush1.msra.mxu0 %v511
  %1181 = vmatprep.subr.mxu0 0.0
  %1182 = vmatpush1.msra.mxu0 %v512
  %1183 = vmatprep.subr.mxu0 0.0
  %1184 = vmatpush1.msra.mxu0 %v513
  %1185 = vmatprep.subr.mxu0 0.0
  %1186 = vmatpush1.msra.mxu0 %v514
  %1187 = vmatprep.subr.mxu0 0.0
  %1188 = vmatpush1.msra.mxu0 %v515
  %1189 = vmatprep.subr.mxu0 0.0
  %1190 = vmatpush1.msra.mxu0 %v516
  %1191 = vmatprep.subr.mxu0 0.0
  %1192 = vmatpush1.msra.mxu0 %v517
  %1193 = vmatprep.subr.mxu0 0.0
  %1194 = vmatpush1.msra.mxu0 %v518
  %1195 = vmatprep.subr.mxu0 0.0
  %1196 = vmatpush1.msra.mxu0 %v519
  %1197 = vmatprep.subr.mxu0 0.0
  %1198 = vmatpush1.msra.mxu0 %v520
  %1199 = vmatprep.subr.mxu0 0.0
  %1200 = vmatpush1.msra.mxu0 %v521
  %1201 = vmatprep.subr.mxu0 0.0
  %1202 = vmatpush1.msra.mxu0 %v522
  %1203 = vmatprep.subr.mxu0 0.0
  %1204 = vmatpush1.msra.mxu0 %v523
  %1205 = vmatprep.subr.mxu0 0.0
  %1206 = vmatpush1.msra.mxu0 %v524
  %1207 = vmatprep.subr.mxu0 0.0
  %1208 = vmatpush1.msra.mxu0 %v525
  %1209 = vmatprep.subr.mxu0 0.0
  %1210 = vmatpush1.msra.mxu0 %v526
  %1211 = vmatprep.subr.mxu0 0.0
  %1212 = vmatpush1.msra.mxu0 %v527
  %1213 = vmatprep.mubr.f32.mxu0 %v19
  %1214 = vmatmul.mubr.f32.gmra.mrb[0].mxu0 %v18
  %v1215 = vpop.f32.mrb[0].mxu0
  %v1216 = vadd.f32 %v831, %v1215
  %v1217 = vpop.f32.mrb[0].mxu0
  %1218 = vmatprep.mubr.f32.mxu0 %v26
  %1219 = vmatmul.mubr.f32.gmra.mrb[0].mxu0 %v25
  %v1220 = vpop.f32.mrb[0].mxu0
  %v1221 = vadd.f32 %v836, %v1220
  %v1222 = vpop.f32.mrb[0].mxu0
  %1223 = vmatprep.mubr.f32.mxu0 %v33
  %1224 = vmatmul.mubr.f32.gmra.mrb[0].mxu0 %v32
  %v1225 = vpop.f32.mrb[0].mxu0
  %v1226 = vadd.f32 %v841, %v1225
  %v1227 = vpop.f32.mrb[0].mxu0
  %1228 = vmatprep.mubr.f32.mxu0 %v40
  %1229 = vmatmul.mubr.f32.gmra.mrb[0].mxu0 %v39
  %v1230 = vpop.f32.mrb[0].mxu0
  %v1231 = vadd.f32 %v846, %v1230
  %v1232 = vpop.f32.mrb[0].mxu0
  %1233 = vmatprep.mubr.f32.mxu0 %v47
  %1234 = vmatmul.mubr.f32.gmra.mrb[0].mxu0 %v46
  %v1235 = vpop.f32.mrb[0].mxu0
  %v1236 = vadd.f32 %v851, %v1235
  %v1237 = vpop.f32.mrb[0].mxu0
  %1238 = vmatprep.mubr.f32.mxu0 %v54
  %1239 = vmatmul.mubr.f32.gmra.mrb[0].mxu0 %v53
  %v1240 = vpop.f32.mrb[0].mxu0
  %v1241 = vadd.f32 %v856, %v1240
  %v1242 = vpop.f32.mrb[0].mxu0
  %1243 = vmatprep.mubr.f32.mxu0 %v61
  %1244 = vmatmul.mubr.f32.gmra.mrb[0].mxu0 %v60
  %v1245 = vpop.f32.mrb[0].mxu0
  %v1246 = vadd.f32 %v861, %v1245
  %v1247 = vpop.f32.mrb[0].mxu0
  %1248 = vmatprep.mubr.f32.mxu0 %v68
  %1249 = vmatmul.mubr.f32.gmra.mrb[0].mxu0 %v67
  %v1250 = vpop.f32.mrb[0].mxu0
  %v1251 = vadd.f32 %v866, %v1250
  %v1252 = vpop.f32.mrb[0].mxu0
  %1253 = vmatprep.mubr.f32.mxu0 %v75
  %1254 = vmatmul.mubr.f32.gmra.mrb[0].mxu0 %v74
  %v1255 = vpop.f32.mrb[0].mxu0
  %v1256 = vadd.f32 %v871, %v1255
  %v1257 = vpop.f32.mrb[0].mxu0
  %1258 = vmatprep.mubr.f32.mxu0 %v82
  %1259 = vmatmul.mubr.f32.gmra.mrb[0].mxu0 %v81
  %v1260 = vpop.f32.mrb[0].mxu0
  %v1261 = vadd.f32 %v876, %v1260
  %v1262 = vpop.f32.mrb[0].mxu0
  %1263 = vmatprep.mubr.f32.mxu0 %v89
  %1264 = vmatmul.mubr.f32.gmra.mrb[0].mxu0 %v88
  %v1265 = vpop.f32.mrb[0].mxu0
  %v1266 = vadd.f32 %v881, %v1265
  %v1267 = vpop.f32.mrb[0].mxu0
  %1268 = vmatprep.mubr.f32.mxu0 %v96
  %1269 = vmatmul.mubr.f32.gmra.mrb[0].mxu0 %v95
  %v1270 = vpop.f32.mrb[0].mxu0
  %v1271 = vadd.f32 %v886, %v1270
  %v1272 = vpop.f32.mrb[0].mxu0
  %1273 = vmatprep.mubr.f32.mxu0 %v103
  %1274 = vmatmul.mubr.f32.gmra.mrb[0].mxu0 %v102
  %v1275 = vpop.f32.mrb[0].mxu0
  %v1276 = vadd.f32 %v891, %v1275
  %v1277 = vpop.f32.mrb[0].mxu0
  %1278 = vmatprep.mubr.f32.mxu0 %v110
  %1279 = vmatmul.mubr.f32.gmra.mrb[0].mxu0 %v109
  %v1280 = vpop.f32.mrb[0].mxu0
  %v1281 = vadd.f32 %v896, %v1280
  %v1282 = vpop.f32.mrb[0].mxu0
  %1283 = vmatprep.mubr.f32.mxu0 %v117
  %1284 = vmatmul.mubr.f32.gmra.mrb[0].mxu0 %v116
  %v1285 = vpop.f32.mrb[0].mxu0
  %v1286 = vadd.f32 %v901, %v1285
  %v1287 = vpop.f32.mrb[0].mxu0
  %1288 = vmatprep.mubr.f32.mxu0 %v124
  %1289 = vmatmul.mubr.f32.gmra.mrb[0].mxu0 %v123
  %v1290 = vpop.f32.mrb[0].mxu0
  %v1291 = vadd.f32 %v906, %v1290
  %v1292 = vpop.f32.mrb[0].mxu0
  %1293 = vmatprep.mubr.f32.mxu0 %v131
  %1294 = vmatmul.mubr.f32.gmra.mrb[0].mxu0 %v130
  %v1295 = vpop.f32.mrb[0].mxu0
  %v1296 = vadd.f32 %v911, %v1295
  %v1297 = vpop.f32.mrb[0].mxu0
  %1298 = vmatprep.mubr.f32.mxu0 %v138
  %1299 = vmatmul.mubr.f32.gmra.mrb[0].mxu0 %v137
  %v1300 = vpop.f32.mrb[0].mxu0
  %v1301 = vadd.f32 %v916, %v1300
  %v1302 = vpop.f32.mrb[0].mxu0
  %1303 = vmatprep.mubr.f32.mxu0 %v145
  %1304 = vmatmul.mubr.f32.gmra.mrb[0].mxu0 %v144
  %v1305 = vpop.f32.mrb[0].mxu0
  %v1306 = vadd.f32 %v921, %v1305
  %v1307 = vpop.f32.mrb[0].mxu0
  %1308 = vmatprep.mubr.f32.mxu0 %v152
  %1309 = vmatmul.mubr.f32.gmra.mrb[0].mxu0 %v151
  %v1310 = vpop.f32.mrb[0].mxu0
  %v1311 = vadd.f32 %v926, %v1310
  %v1312 = vpop.f32.mrb[0].mxu0
  %1313 = vmatprep.mubr.f32.mxu0 %v159
  %1314 = vmatmul.mubr.f32.gmra.mrb[0].mxu0 %v158
  %v1315 = vpop.f32.mrb[0].mxu0
  %v1316 = vadd.f32 %v931, %v1315
  %v1317 = vpop.f32.mrb[0].mxu0
  %1318 = vmatprep.mubr.f32.mxu0 %v166
  %1319 = vmatmul.mubr.f32.gmra.mrb[0].mxu0 %v165
  %v1320 = vpop.f32.mrb[0].mxu0
  %v1321 = vadd.f32 %v936, %v1320
  %v1322 = vpop.f32.mrb[0].mxu0
  %1323 = vmatprep.mubr.f32.mxu0 %v173
  %1324 = vmatmul.mubr.f32.gmra.mrb[0].mxu0 %v172
  %v1325 = vpop.f32.mrb[0].mxu0
  %v1326 = vadd.f32 %v941, %v1325
  %v1327 = vpop.f32.mrb[0].mxu0
  %1328 = vmatprep.mubr.f32.mxu0 %v180
  %1329 = vmatmul.mubr.f32.gmra.mrb[0].mxu0 %v179
  %v1330 = vpop.f32.mrb[0].mxu0
  %v1331 = vadd.f32 %v946, %v1330
  %v1332 = vpop.f32.mrb[0].mxu0
  %1333 = vmatprep.mubr.f32.mxu0 %v187
  %1334 = vmatmul.mubr.f32.gmra.mrb[0].mxu0 %v186
  %v1335 = vpop.f32.mrb[0].mxu0
  %v1336 = vadd.f32 %v951, %v1335
  %v1337 = vpop.f32.mrb[0].mxu0
  %1338 = vmatprep.mubr.f32.mxu0 %v194
  %1339 = vmatmul.mubr.f32.gmra.mrb[0].mxu0 %v193
  %v1340 = vpop.f32.mrb[0].mxu0
  %v1341 = vadd.f32 %v956, %v1340
  %v1342 = vpop.f32.mrb[0].mxu0
  %1343 = vmatprep.mubr.f32.mxu0 %v201
  %1344 = vmatmul.mubr.f32.gmra.mrb[0].mxu0 %v200
  %v1345 = vpop.f32.mrb[0].mxu0
  %v1346 = vadd.f32 %v961, %v1345
  %v1347 = vpop.f32.mrb[0].mxu0
  %1348 = vmatprep.mubr.f32.mxu0 %v208
  %1349 = vmatmul.mubr.f32.gmra.mrb[0].mxu0 %v207
  %v1350 = vpop.f32.mrb[0].mxu0
  %v1351 = vadd.f32 %v966, %v1350
  %v1352 = vpop.f32.mrb[0].mxu0
  %1353 = vmatprep.mubr.f32.mxu0 %v215
  %1354 = vmatmul.mubr.f32.gmra.mrb[0].mxu0 %v214
  %v1355 = vpop.f32.mrb[0].mxu0
  %v1356 = vadd.f32 %v971, %v1355
  %v1357 = vpop.f32.mrb[0].mxu0
  %1358 = vmatprep.mubr.f32.mxu0 %v222
  %1359 = vmatmul.mubr.f32.gmra.mrb[0].mxu0 %v221
  %v1360 = vpop.f32.mrb[0].mxu0
  %v1361 = vadd.f32 %v976, %v1360
  %v1362 = vpop.f32.mrb[0].mxu0
  %1363 = vmatprep.mubr.f32.mxu0 %v229
  %1364 = vmatmul.mubr.f32.gmra.mrb[0].mxu0 %v228
  %v1365 = vpop.f32.mrb[0].mxu0
  %v1366 = vadd.f32 %v981, %v1365
  %v1367 = vpop.f32.mrb[0].mxu0
  %1368 = vmatprep.mubr.f32.mxu0 %v236
  %1369 = vmatmul.mubr.f32.gmra.mrb[0].mxu0 %v235
  %v1370 = vpop.f32.mrb[0].mxu0
  %v1371 = vadd.f32 %v986, %v1370
  %v1372 = vpop.f32.mrb[0].mxu0
  %1373 = vmatprep.mubr.f32.mxu0 %v243
  %1374 = vmatmul.mubr.f32.gmra.mrb[0].mxu0 %v242
  %v1375 = vpop.f32.mrb[0].mxu0
  %v1376 = vadd.f32 %v991, %v1375
  %v1377 = vpop.f32.mrb[0].mxu0
  %1378 = vmatprep.mubr.f32.mxu0 %v250
  %1379 = vmatmul.mubr.f32.gmra.mrb[0].mxu0 %v249
  %v1380 = vpop.f32.mrb[0].mxu0
  %v1381 = vadd.f32 %v996, %v1380
  %v1382 = vpop.f32.mrb[0].mxu0
  %1383 = vmatprep.mubr.f32.mxu0 %v257
  %1384 = vmatmul.mubr.f32.gmra.mrb[0].mxu0 %v256
  %v1385 = vpop.f32.mrb[0].mxu0
  %v1386 = vadd.f32 %v1001, %v1385
  %v1387 = vpop.f32.mrb[0].mxu0
  %1388 = vmatprep.mubr.f32.mxu0 %v264
  %1389 = vmatmul.mubr.f32.gmra.mrb[0].mxu0 %v263
  %v1390 = vpop.f32.mrb[0].mxu0
  %v1391 = vadd.f32 %v1006, %v1390
  %v1392 = vpop.f32.mrb[0].mxu0
  %1393 = vmatprep.mubr.f32.mxu0 %v271
  %1394 = vmatmul.mubr.f32.gmra.mrb[0].mxu0 %v270
  %v1395 = vpop.f32.mrb[0].mxu0
  %v1396 = vadd.f32 %v1011, %v1395
  %v1397 = vpop.f32.mrb[0].mxu0
  %1398 = vmatprep.mubr.f32.mxu0 %v278
  %1399 = vmatmul.mubr.f32.gmra.mrb[0].mxu0 %v277
  %v1400 = vpop.f32.mrb[0].mxu0
  %v1401 = vadd.f32 %v1016, %v1400
  %v1402 = vpop.f32.mrb[0].mxu0
  %1403 = vmatprep.mubr.f32.mxu0 %v285
  %1404 = vmatmul.mubr.f32.gmra.mrb[0].mxu0 %v284
  %v1405 = vpop.f32.mrb[0].mxu0
  %v1406 = vadd.f32 %v1021, %v1405
  %v1407 = vpop.f32.mrb[0].mxu0
  %1408 = vmatprep.mubr.f32.mxu0 %v292
  %1409 = vmatmul.mubr.f32.gmra.mrb[0].mxu0 %v291
  %v1410 = vpop.f32.mrb[0].mxu0
  %v1411 = vadd.f32 %v1026, %v1410
  %v1412 = vpop.f32.mrb[0].mxu0
  %1413 = vmatprep.mubr.f32.mxu0 %v299
  %1414 = vmatmul.mubr.f32.gmra.mrb[0].mxu0 %v298
  %v1415 = vpop.f32.mrb[0].mxu0
  %v1416 = vadd.f32 %v1031, %v1415
  %v1417 = vpop.f32.mrb[0].mxu0
  %1418 = vmatprep.mubr.f32.mxu0 %v306
  %1419 = vmatmul.mubr.f32.gmra.mrb[0].mxu0 %v305
  %v1420 = vpop.f32.mrb[0].mxu0
  %v1421 = vadd.f32 %v1036, %v1420
  %v1422 = vpop.f32.mrb[0].mxu0
  %1423 = vmatprep.mubr.f32.mxu0 %v313
  %1424 = vmatmul.mubr.f32.gmra.mrb[0].mxu0 %v312
  %v1425 = vpop.f32.mrb[0].mxu0
  %v1426 = vadd.f32 %v1041, %v1425
  %v1427 = vpop.f32.mrb[0].mxu0
  %1428 = vmatprep.mubr.f32.mxu0 %v320
  %1429 = vmatmul.mubr.f32.gmra.mrb[0].mxu0 %v319
  %v1430 = vpop.f32.mrb[0].mxu0
  %v1431 = vadd.f32 %v1046, %v1430
  %v1432 = vpop.f32.mrb[0].mxu0
  %1433 = vmatprep.mubr.f32.mxu0 %v327
  %1434 = vmatmul.mubr.f32.gmra.mrb[0].mxu0 %v326
  %v1435 = vpop.f32.mrb[0].mxu0
  %v1436 = vadd.f32 %v1051, %v1435
  %v1437 = vpop.f32.mrb[0].mxu0
  %1438 = vmatprep.mubr.f32.mxu0 %v334
  %1439 = vmatmul.mubr.f32.gmra.mrb[0].mxu0 %v333
  %v1440 = vpop.f32.mrb[0].mxu0
  %v1441 = vadd.f32 %v1056, %v1440
  %v1442 = vpop.f32.mrb[0].mxu0
  %1443 = vmatprep.mubr.f32.mxu0 %v341
  %1444 = vmatmul.mubr.f32.gmra.mrb[0].mxu0 %v340
  %v1445 = vpop.f32.mrb[0].mxu0
  %v1446 = vadd.f32 %v1061, %v1445
  %v1447 = vpop.f32.mrb[0].mxu0
  %1448 = vmatprep.mubr.f32.mxu0 %v348
  %1449 = vmatmul.mubr.f32.gmra.mrb[0].mxu0 %v347
  %v1450 = vpop.f32.mrb[0].mxu0
  %v1451 = vadd.f32 %v1066, %v1450
  %v1452 = vpop.f32.mrb[0].mxu0
  %1453 = vmatprep.mubr.f32.mxu0 %v355
  %1454 = vmatmul.mubr.f32.gmra.mrb[0].mxu0 %v354
  %v1455 = vpop.f32.mrb[0].mxu0
  %v1456 = vadd.f32 %v1071, %v1455
  %v1457 = vpop.f32.mrb[0].mxu0
  %1458 = vmatprep.mubr.f32.mxu0 %v362
  %1459 = vmatmul.mubr.f32.gmra.mrb[0].mxu0 %v361
  %v1460 = vpop.f32.mrb[0].mxu0
  %v1461 = vadd.f32 %v1076, %v1460
  %v1462 = vpop.f32.mrb[0].mxu0
  %1463 = vmatprep.mubr.f32.mxu0 %v369
  %1464 = vmatmul.mubr.f32.gmra.mrb[0].mxu0 %v368
  %v1465 = vpop.f32.mrb[0].mxu0
  %v1466 = vadd.f32 %v1081, %v1465
  %v1467 = vpop.f32.mrb[0].mxu0
  %1468 = vmatprep.mubr.f32.mxu0 %v376
  %1469 = vmatmul.mubr.f32.gmra.mrb[0].mxu0 %v375
  %v1470 = vpop.f32.mrb[0].mxu0
  %v1471 = vadd.f32 %v1086, %v1470
  %v1472 = vpop.f32.mrb[0].mxu0
  %1473 = vmatprep.mubr.f32.mxu0 %v383
  %1474 = vmatmul.mubr.f32.gmra.mrb[0].mxu0 %v382
  %v1475 = vpop.f32.mrb[0].mxu0
  %v1476 = vadd.f32 %v1091, %v1475
  %v1477 = vpop.f32.mrb[0].mxu0
  %1478 = vmatprep.mubr.f32.mxu0 %v390
  %1479 = vmatmul.mubr.f32.gmra.mrb[0].mxu0 %v389
  %v1480 = vpop.f32.mrb[0].mxu0
  %v1481 = vadd.f32 %v1096, %v1480
  %v1482 = vpop.f32.mrb[0].mxu0
  %1483 = vmatprep.mubr.f32.mxu0 %v397
  %1484 = vmatmul.mubr.f32.gmra.mrb[0].mxu0 %v396
  %v1485 = vpop.f32.mrb[0].mxu0
  %v1486 = vadd.f32 %v1101, %v1485
  %v1487 = vpop.f32.mrb[0].mxu0
  %1488 = vmatprep.mubr.f32.mxu0 %v404
  %1489 = vmatmul.mubr.f32.gmra.mrb[0].mxu0 %v403
  %v1490 = vpop.f32.mrb[0].mxu0
  %v1491 = vadd.f32 %v1106, %v1490
  %v1492 = vpop.f32.mrb[0].mxu0
  %1493 = vmatprep.mubr.f32.mxu0 %v411
  %1494 = vmatmul.mubr.f32.gmra.mrb[0].mxu0 %v410
  %v1495 = vpop.f32.mrb[0].mxu0
  %v1496 = vadd.f32 %v1111, %v1495
  %v1497 = vpop.f32.mrb[0].mxu0
  %1498 = vmatprep.mubr.f32.mxu0 %v418
  %1499 = vmatmul.mubr.f32.gmra.mrb[0].mxu0 %v417
  %v1500 = vpop.f32.mrb[0].mxu0
  %v1501 = vadd.f32 %v1116, %v1500
  %v1502 = vpop.f32.mrb[0].mxu0
  %1503 = vmatprep.mubr.f32.mxu0 %v425
  %1504 = vmatmul.mubr.f32.gmra.mrb[0].mxu0 %v424
  %v1505 = vpop.f32.mrb[0].mxu0
  %v1506 = vadd.f32 %v1121, %v1505
  %v1507 = vpop.f32.mrb[0].mxu0
  %1508 = vmatprep.mubr.f32.mxu0 %v432
  %1509 = vmatmul.mubr.f32.gmra.mrb[0].mxu0 %v431
  %v1510 = vpop.f32.mrb[0].mxu0
  %v1511 = vadd.f32 %v1126, %v1510
  %v1512 = vpop.f32.mrb[0].mxu0
  %1513 = vmatprep.mubr.f32.mxu0 %v439
  %1514 = vmatmul.mubr.f32.gmra.mrb[0].mxu0 %v438
  %v1515 = vpop.f32.mrb[0].mxu0
  %v1516 = vadd.f32 %v1131, %v1515
  %v1517 = vpop.f32.mrb[0].mxu0
  %1518 = vmatprep.mubr.f32.mxu0 %v446
  %1519 = vmatmul.mubr.f32.gmra.mrb[0].mxu0 %v445
  %v1520 = vpop.f32.mrb[0].mxu0
  %v1521 = vadd.f32 %v1136, %v1520
  %v1522 = vpop.f32.mrb[0].mxu0
  %1523 = vmatprep.mubr.f32.mxu0 %v453
  %1524 = vmatmul.mubr.f32.gmra.mrb[0].mxu0 %v452
  %v1525 = vpop.f32.mrb[0].mxu0
  %v1526 = vadd.f32 %v1141, %v1525
  %v1527 = vpop.f32.mrb[0].mxu0
  %1528 = vmatprep.mubr.f32.mxu0 %v460
  %1529 = vmatmul.mubr.f32.gmra.mrb[0].mxu0 %v459
  %v1530 = vpop.f32.mrb[0].mxu0
  %v1531 = vadd.f32 %v1146, %v1530
  %v1532 = vpop.f32.mrb[0].mxu0
  %1533 = vdwg.mxu0
  %1534 = vmatprep.subr.mxu0 0.0
  %1535 = vmatpush1.msra.mxu0 %v528
  %1536 = vmatprep.subr.mxu0 0.0
  %1537 = vmatpush1.msra.mxu0 %v529
  %1538 = vmatprep.subr.mxu0 0.0
  %1539 = vmatpush1.msra.mxu0 %v530
  %1540 = vmatprep.subr.mxu0 0.0
  %1541 = vmatpush1.msra.mxu0 %v531
  %1542 = vmatprep.subr.mxu0 0.0
  %1543 = vmatpush1.msra.mxu0 %v532
  %1544 = vmatprep.subr.mxu0 0.0
  %1545 = vmatpush1.msra.mxu0 %v533
  %1546 = vmatprep.subr.mxu0 0.0
  %1547 = vmatpush1.msra.mxu0 %v534
  %1548 = vmatprep.subr.mxu0 0.0
  %1549 = vmatpush1.msra.mxu0 %v535
  %1550 = vmatprep.subr.mxu0 0.0
  %1551 = vmatpush1.msra.mxu0 %v536
  %1552 = vmatprep.subr.mxu0 0.0
  %1553 = vmatpush1.msra.mxu0 %v537
  %1554 = vmatprep.subr.mxu0 0.0
  %1555 = vmatpush1.msra.mxu0 %v538
  %1556 = vmatprep.subr.mxu0 0.0
  %1557 = vmatpush1.msra.mxu0 %v539
  %1558 = vmatprep.subr.mxu0 0.0
  %1559 = vmatpush1.msra.mxu0 %v540
  %1560 = vmatprep.subr.mxu0 0.0
  %1561 = vmatpush1.msra.mxu0 %v541
  %1562 = vmatprep.subr.mxu0 0.0
  %1563 = vmatpush1.msra.mxu0 %v542
  %1564 = vmatprep.subr.mxu0 0.0
  %1565 = vmatpush1.msra.mxu0 %v543
  %1566 = vmatprep.subr.mxu0 0.0
  %1567 = vmatpush1.msra.mxu0 %v544
  %1568 = vmatprep.subr.mxu0 0.0
  %1569 = vmatpush1.msra.mxu0 %v545
  %1570 = vmatprep.subr.mxu0 0.0
  %1571 = vmatpush1.msra.mxu0 %v546
  %1572 = vmatprep.subr.mxu0 0.0
  %1573 = vmatpush1.msra.mxu0 %v547
  %1574 = vmatprep.subr.mxu0 0.0
  %1575 = vmatpush1.msra.mxu0 %v548
  %1576 = vmatprep.subr.mxu0 0.0
  %1577 = vmatpush1.msra.mxu0 %v549
  %1578 = vmatprep.subr.mxu0 0.0
  %1579 = vmatpush1.msra.mxu0 %v550
  %1580 = vmatprep.subr.mxu0 0.0
  %1581 = vmatpush1.msra.mxu0 %v551
  %1582 = vmatprep.subr.mxu0 0.0
  %1583 = vmatpush1.msra.mxu0 %v552
  %1584 = vmatprep.subr.mxu0 0.0
  %1585 = vmatpush1.msra.mxu0 %v553
  %1586 = vmatprep.subr.mxu0 0.0
  %1587 = vmatpush1.msra.mxu0 %v554
  %1588 = vmatprep.subr.mxu0 0.0
  %1589 = vmatpush1.msra.mxu0 %v555
  %1590 = vmatprep.subr.mxu0 0.0
  %1591 = vmatpush1.msra.mxu0 %v556
  %1592 = vmatprep.subr.mxu0 0.0
  %1593 = vmatpush1.msra.mxu0 %v557
  %1594 = vmatprep.subr.mxu0 0.0
  %1595 = vmatpush1.msra.mxu0 %v558
  %1596 = vmatprep.subr.mxu0 0.0
  %1597 = vmatpush1.msra.mxu0 %v559
  %1598 = vmatprep.mubr.f32.mxu0 %v21
  %1599 = vmatmul.mubr.f32.gmra.mrb[0].mxu0 %v20
  %v1600 = vpop.f32.mrb[0].mxu0
  %v1601 = vadd.f32 %v1216, %v1600
  %v1602 = vpop.f32.mrb[0].mxu0
  %1603 = vmatprep.mubr.f32.mxu0 %v28
  %1604 = vmatmul.mubr.f32.gmra.mrb[0].mxu0 %v27
  %v1605 = vpop.f32.mrb[0].mxu0
  %v1606 = vadd.f32 %v1221, %v1605
  %v1607 = vpop.f32.mrb[0].mxu0
  %1608 = vmatprep.mubr.f32.mxu0 %v35
  %1609 = vmatmul.mubr.f32.gmra.mrb[0].mxu0 %v34
  %v1610 = vpop.f32.mrb[0].mxu0
  %v1611 = vadd.f32 %v1226, %v1610
  %v1612 = vpop.f32.mrb[0].mxu0
  %1613 = vmatprep.mubr.f32.mxu0 %v42
  %1614 = vmatmul.mubr.f32.gmra.mrb[0].mxu0 %v41
  %v1615 = vpop.f32.mrb[0].mxu0
  %v1616 = vadd.f32 %v1231, %v1615
  %v1617 = vpop.f32.mrb[0].mxu0
  %1618 = vmatprep.mubr.f32.mxu0 %v49
  %1619 = vmatmul.mubr.f32.gmra.mrb[0].mxu0 %v48
  %v1620 = vpop.f32.mrb[0].mxu0
  %v1621 = vadd.f32 %v1236, %v1620
  %v1622 = vpop.f32.mrb[0].mxu0
  %1623 = vmatprep.mubr.f32.mxu0 %v56
  %1624 = vmatmul.mubr.f32.gmra.mrb[0].mxu0 %v55
  %v1625 = vpop.f32.mrb[0].mxu0
  %v1626 = vadd.f32 %v1241, %v1625
  %v1627 = vpop.f32.mrb[0].mxu0
  %1628 = vmatprep.mubr.f32.mxu0 %v63
  %1629 = vmatmul.mubr.f32.gmra.mrb[0].mxu0 %v62
  %v1630 = vpop.f32.mrb[0].mxu0
  %v1631 = vadd.f32 %v1246, %v1630
  %v1632 = vpop.f32.mrb[0].mxu0
  %1633 = vmatprep.mubr.f32.mxu0 %v70
  %1634 = vmatmul.mubr.f32.gmra.mrb[0].mxu0 %v69
  %v1635 = vpop.f32.mrb[0].mxu0
  %v1636 = vadd.f32 %v1251, %v1635
  %v1637 = vpop.f32.mrb[0].mxu0
  %1638 = vmatprep.mubr.f32.mxu0 %v77
  %1639 = vmatmul.mubr.f32.gmra.mrb[0].mxu0 %v76
  %v1640 = vpop.f32.mrb[0].mxu0
  %v1641 = vadd.f32 %v1256, %v1640
  %v1642 = vpop.f32.mrb[0].mxu0
  %1643 = vmatprep.mubr.f32.mxu0 %v84
  %1644 = vmatmul.mubr.f32.gmra.mrb[0].mxu0 %v83
  %v1645 = vpop.f32.mrb[0].mxu0
  %v1646 = vadd.f32 %v1261, %v1645
  %v1647 = vpop.f32.mrb[0].mxu0
  %1648 = vmatprep.mubr.f32.mxu0 %v91
  %1649 = vmatmul.mubr.f32.gmra.mrb[0].mxu0 %v90
  %v1650 = vpop.f32.mrb[0].mxu0
  %v1651 = vadd.f32 %v1266, %v1650
  %v1652 = vpop.f32.mrb[0].mxu0
  %1653 = vmatprep.mubr.f32.mxu0 %v98
  %1654 = vmatmul.mubr.f32.gmra.mrb[0].mxu0 %v97
  %v1655 = vpop.f32.mrb[0].mxu0
  %v1656 = vadd.f32 %v1271, %v1655
  %v1657 = vpop.f32.mrb[0].mxu0
  %1658 = vmatprep.mubr.f32.mxu0 %v105
  %1659 = vmatmul.mubr.f32.gmra.mrb[0].mxu0 %v104
  %v1660 = vpop.f32.mrb[0].mxu0
  %v1661 = vadd.f32 %v1276, %v1660
  %v1662 = vpop.f32.mrb[0].mxu0
  %1663 = vmatprep.mubr.f32.mxu0 %v112
  %1664 = vmatmul.mubr.f32.gmra.mrb[0].mxu0 %v111
  %v1665 = vpop.f32.mrb[0].mxu0
  %v1666 = vadd.f32 %v1281, %v1665
  %v1667 = vpop.f32.mrb[0].mxu0
  %1668 = vmatprep.mubr.f32.mxu0 %v119
  %1669 = vmatmul.mubr.f32.gmra.mrb[0].mxu0 %v118
  %v1670 = vpop.f32.mrb[0].mxu0
  %v1671 = vadd.f32 %v1286, %v1670
  %v1672 = vpop.f32.mrb[0].mxu0
  %1673 = vmatprep.mubr.f32.mxu0 %v126
  %1674 = vmatmul.mubr.f32.gmra.mrb[0].mxu0 %v125
  %v1675 = vpop.f32.mrb[0].mxu0
  %v1676 = vadd.f32 %v1291, %v1675
  %v1677 = vpop.f32.mrb[0].mxu0
  %1678 = vmatprep.mubr.f32.mxu0 %v133
  %1679 = vmatmul.mubr.f32.gmra.mrb[0].mxu0 %v132
  %v1680 = vpop.f32.mrb[0].mxu0
  %v1681 = vadd.f32 %v1296, %v1680
  %v1682 = vpop.f32.mrb[0].mxu0
  %1683 = vmatprep.mubr.f32.mxu0 %v140
  %1684 = vmatmul.mubr.f32.gmra.mrb[0].mxu0 %v139
  %v1685 = vpop.f32.mrb[0].mxu0
  %v1686 = vadd.f32 %v1301, %v1685
  %v1687 = vpop.f32.mrb[0].mxu0
  %1688 = vmatprep.mubr.f32.mxu0 %v147
  %1689 = vmatmul.mubr.f32.gmra.mrb[0].mxu0 %v146
  %v1690 = vpop.f32.mrb[0].mxu0
  %v1691 = vadd.f32 %v1306, %v1690
  %v1692 = vpop.f32.mrb[0].mxu0
  %1693 = vmatprep.mubr.f32.mxu0 %v154
  %1694 = vmatmul.mubr.f32.gmra.mrb[0].mxu0 %v153
  %v1695 = vpop.f32.mrb[0].mxu0
  %v1696 = vadd.f32 %v1311, %v1695
  %v1697 = vpop.f32.mrb[0].mxu0
  %1698 = vmatprep.mubr.f32.mxu0 %v161
  %1699 = vmatmul.mubr.f32.gmra.mrb[0].mxu0 %v160
  %v1700 = vpop.f32.mrb[0].mxu0
  %v1701 = vadd.f32 %v1316, %v1700
  %v1702 = vpop.f32.mrb[0].mxu0
  %1703 = vmatprep.mubr.f32.mxu0 %v168
  %1704 = vmatmul.mubr.f32.gmra.mrb[0].mxu0 %v167
  %v1705 = vpop.f32.mrb[0].mxu0
  %v1706 = vadd.f32 %v1321, %v1705
  %v1707 = vpop.f32.mrb[0].mxu0
  %1708 = vmatprep.mubr.f32.mxu0 %v175
  %1709 = vmatmul.mubr.f32.gmra.mrb[0].mxu0 %v174
  %v1710 = vpop.f32.mrb[0].mxu0
  %v1711 = vadd.f32 %v1326, %v1710
  %v1712 = vpop.f32.mrb[0].mxu0
  %1713 = vmatprep.mubr.f32.mxu0 %v182
  %1714 = vmatmul.mubr.f32.gmra.mrb[0].mxu0 %v181
  %v1715 = vpop.f32.mrb[0].mxu0
  %v1716 = vadd.f32 %v1331, %v1715
  %v1717 = vpop.f32.mrb[0].mxu0
  %1718 = vmatprep.mubr.f32.mxu0 %v189
  %1719 = vmatmul.mubr.f32.gmra.mrb[0].mxu0 %v188
  %v1720 = vpop.f32.mrb[0].mxu0
  %v1721 = vadd.f32 %v1336, %v1720
  %v1722 = vpop.f32.mrb[0].mxu0
  %1723 = vmatprep.mubr.f32.mxu0 %v196
  %1724 = vmatmul.mubr.f32.gmra.mrb[0].mxu0 %v195
  %v1725 = vpop.f32.mrb[0].mxu0
  %v1726 = vadd.f32 %v1341, %v1725
  %v1727 = vpop.f32.mrb[0].mxu0
  %1728 = vmatprep.mubr.f32.mxu0 %v203
  %1729 = vmatmul.mubr.f32.gmra.mrb[0].mxu0 %v202
  %v1730 = vpop.f32.mrb[0].mxu0
  %v1731 = vadd.f32 %v1346, %v1730
  %v1732 = vpop.f32.mrb[0].mxu0
  %1733 = vmatprep.mubr.f32.mxu0 %v210
  %1734 = vmatmul.mubr.f32.gmra.mrb[0].mxu0 %v209
  %v1735 = vpop.f32.mrb[0].mxu0
  %v1736 = vadd.f32 %v1351, %v1735
  %v1737 = vpop.f32.mrb[0].mxu0
  %1738 = vmatprep.mubr.f32.mxu0 %v217
  %1739 = vmatmul.mubr.f32.gmra.mrb[0].mxu0 %v216
  %v1740 = vpop.f32.mrb[0].mxu0
  %v1741 = vadd.f32 %v1356, %v1740
  %v1742 = vpop.f32.mrb[0].mxu0
  %1743 = vmatprep.mubr.f32.mxu0 %v224
  %1744 = vmatmul.mubr.f32.gmra.mrb[0].mxu0 %v223
  %v1745 = vpop.f32.mrb[0].mxu0
  %v1746 = vadd.f32 %v1361, %v1745
  %v1747 = vpop.f32.mrb[0].mxu0
  %1748 = vmatprep.mubr.f32.mxu0 %v231
  %1749 = vmatmul.mubr.f32.gmra.mrb[0].mxu0 %v230
  %v1750 = vpop.f32.mrb[0].mxu0
  %v1751 = vadd.f32 %v1366, %v1750
  %v1752 = vpop.f32.mrb[0].mxu0
  %1753 = vmatprep.mubr.f32.mxu0 %v238
  %1754 = vmatmul.mubr.f32.gmra.mrb[0].mxu0 %v237
  %v1755 = vpop.f32.mrb[0].mxu0
  %v1756 = vadd.f32 %v1371, %v1755
  %v1757 = vpop.f32.mrb[0].mxu0
  %1758 = vmatprep.mubr.f32.mxu0 %v245
  %1759 = vmatmul.mubr.f32.gmra.mrb[0].mxu0 %v244
  %v1760 = vpop.f32.mrb[0].mxu0
  %v1761 = vadd.f32 %v1376, %v1760
  %v1762 = vpop.f32.mrb[0].mxu0
  %1763 = vmatprep.mubr.f32.mxu0 %v252
  %1764 = vmatmul.mubr.f32.gmra.mrb[0].mxu0 %v251
  %v1765 = vpop.f32.mrb[0].mxu0
  %v1766 = vadd.f32 %v1381, %v1765
  %v1767 = vpop.f32.mrb[0].mxu0
  %1768 = vmatprep.mubr.f32.mxu0 %v259
  %1769 = vmatmul.mubr.f32.gmra.mrb[0].mxu0 %v258
  %v1770 = vpop.f32.mrb[0].mxu0
  %v1771 = vadd.f32 %v1386, %v1770
  %v1772 = vpop.f32.mrb[0].mxu0
  %1773 = vmatprep.mubr.f32.mxu0 %v266
  %1774 = vmatmul.mubr.f32.gmra.mrb[0].mxu0 %v265
  %v1775 = vpop.f32.mrb[0].mxu0
  %v1776 = vadd.f32 %v1391, %v1775
  %v1777 = vpop.f32.mrb[0].mxu0
  %1778 = vmatprep.mubr.f32.mxu0 %v273
  %1779 = vmatmul.mubr.f32.gmra.mrb[0].mxu0 %v272
  %v1780 = vpop.f32.mrb[0].mxu0
  %v1781 = vadd.f32 %v1396, %v1780
  %v1782 = vpop.f32.mrb[0].mxu0
  %1783 = vmatprep.mubr.f32.mxu0 %v280
  %1784 = vmatmul.mubr.f32.gmra.mrb[0].mxu0 %v279
  %v1785 = vpop.f32.mrb[0].mxu0
  %v1786 = vadd.f32 %v1401, %v1785
  %v1787 = vpop.f32.mrb[0].mxu0
  %1788 = vmatprep.mubr.f32.mxu0 %v287
  %1789 = vmatmul.mubr.f32.gmra.mrb[0].mxu0 %v286
  %v1790 = vpop.f32.mrb[0].mxu0
  %v1791 = vadd.f32 %v1406, %v1790
  %v1792 = vpop.f32.mrb[0].mxu0
  %1793 = vmatprep.mubr.f32.mxu0 %v294
  %1794 = vmatmul.mubr.f32.gmra.mrb[0].mxu0 %v293
  %v1795 = vpop.f32.mrb[0].mxu0
  %v1796 = vadd.f32 %v1411, %v1795
  %v1797 = vpop.f32.mrb[0].mxu0
  %1798 = vmatprep.mubr.f32.mxu0 %v301
  %1799 = vmatmul.mubr.f32.gmra.mrb[0].mxu0 %v300
  %v1800 = vpop.f32.mrb[0].mxu0
  %v1801 = vadd.f32 %v1416, %v1800
  %v1802 = vpop.f32.mrb[0].mxu0
  %1803 = vmatprep.mubr.f32.mxu0 %v308
  %1804 = vmatmul.mubr.f32.gmra.mrb[0].mxu0 %v307
  %v1805 = vpop.f32.mrb[0].mxu0
  %v1806 = vadd.f32 %v1421, %v1805
  %v1807 = vpop.f32.mrb[0].mxu0
  %1808 = vmatprep.mubr.f32.mxu0 %v315
  %1809 = vmatmul.mubr.f32.gmra.mrb[0].mxu0 %v314
  %v1810 = vpop.f32.mrb[0].mxu0
  %v1811 = vadd.f32 %v1426, %v1810
  %v1812 = vpop.f32.mrb[0].mxu0
  %1813 = vmatprep.mubr.f32.mxu0 %v322
  %1814 = vmatmul.mubr.f32.gmra.mrb[0].mxu0 %v321
  %v1815 = vpop.f32.mrb[0].mxu0
  %v1816 = vadd.f32 %v1431, %v1815
  %v1817 = vpop.f32.mrb[0].mxu0
  %1818 = vmatprep.mubr.f32.mxu0 %v329
  %1819 = vmatmul.mubr.f32.gmra.mrb[0].mxu0 %v328
  %v1820 = vpop.f32.mrb[0].mxu0
  %v1821 = vadd.f32 %v1436, %v1820
  %v1822 = vpop.f32.mrb[0].mxu0
  %1823 = vmatprep.mubr.f32.mxu0 %v336
  %1824 = vmatmul.mubr.f32.gmra.mrb[0].mxu0 %v335
  %v1825 = vpop.f32.mrb[0].mxu0
  %v1826 = vadd.f32 %v1441, %v1825
  %v1827 = vpop.f32.mrb[0].mxu0
  %1828 = vmatprep.mubr.f32.mxu0 %v343
  %1829 = vmatmul.mubr.f32.gmra.mrb[0].mxu0 %v342
  %v1830 = vpop.f32.mrb[0].mxu0
  %v1831 = vadd.f32 %v1446, %v1830
  %v1832 = vpop.f32.mrb[0].mxu0
  %1833 = vmatprep.mubr.f32.mxu0 %v350
  %1834 = vmatmul.mubr.f32.gmra.mrb[0].mxu0 %v349
  %v1835 = vpop.f32.mrb[0].mxu0
  %v1836 = vadd.f32 %v1451, %v1835
  %v1837 = vpop.f32.mrb[0].mxu0
  %1838 = vmatprep.mubr.f32.mxu0 %v357
  %1839 = vmatmul.mubr.f32.gmra.mrb[0].mxu0 %v356
  %v1840 = vpop.f32.mrb[0].mxu0
  %v1841 = vadd.f32 %v1456, %v1840
  %v1842 = vpop.f32.mrb[0].mxu0
  %1843 = vmatprep.mubr.f32.mxu0 %v364
  %1844 = vmatmul.mubr.f32.gmra.mrb[0].mxu0 %v363
  %v1845 = vpop.f32.mrb[0].mxu0
  %v1846 = vadd.f32 %v1461, %v1845
  %v1847 = vpop.f32.mrb[0].mxu0
  %1848 = vmatprep.mubr.f32.mxu0 %v371
  %1849 = vmatmul.mubr.f32.gmra.mrb[0].mxu0 %v370
  %v1850 = vpop.f32.mrb[0].mxu0
  %v1851 = vadd.f32 %v1466, %v1850
  %v1852 = vpop.f32.mrb[0].mxu0
  %1853 = vmatprep.mubr.f32.mxu0 %v378
  %1854 = vmatmul.mubr.f32.gmra.mrb[0].mxu0 %v377
  %v1855 = vpop.f32.mrb[0].mxu0
  %v1856 = vadd.f32 %v1471, %v1855
  %v1857 = vpop.f32.mrb[0].mxu0
  %1858 = vmatprep.mubr.f32.mxu0 %v385
  %1859 = vmatmul.mubr.f32.gmra.mrb[0].mxu0 %v384
  %v1860 = vpop.f32.mrb[0].mxu0
  %v1861 = vadd.f32 %v1476, %v1860
  %v1862 = vpop.f32.mrb[0].mxu0
  %1863 = vmatprep.mubr.f32.mxu0 %v392
  %1864 = vmatmul.mubr.f32.gmra.mrb[0].mxu0 %v391
  %v1865 = vpop.f32.mrb[0].mxu0
  %v1866 = vadd.f32 %v1481, %v1865
  %v1867 = vpop.f32.mrb[0].mxu0
  %1868 = vmatprep.mubr.f32.mxu0 %v399
  %1869 = vmatmul.mubr.f32.gmra.mrb[0].mxu0 %v398
  %v1870 = vpop.f32.mrb[0].mxu0
  %v1871 = vadd.f32 %v1486, %v1870
  %v1872 = vpop.f32.mrb[0].mxu0
  %1873 = vmatprep.mubr.f32.mxu0 %v406
  %1874 = vmatmul.mubr.f32.gmra.mrb[0].mxu0 %v405
  %v1875 = vpop.f32.mrb[0].mxu0
  %v1876 = vadd.f32 %v1491, %v1875
  %v1877 = vpop.f32.mrb[0].mxu0
  %1878 = vmatprep.mubr.f32.mxu0 %v413
  %1879 = vmatmul.mubr.f32.gmra.mrb[0].mxu0 %v412
  %v1880 = vpop.f32.mrb[0].mxu0
  %v1881 = vadd.f32 %v1496, %v1880
  %v1882 = vpop.f32.mrb[0].mxu0
  %1883 = vmatprep.mubr.f32.mxu0 %v420
  %1884 = vmatmul.mubr.f32.gmra.mrb[0].mxu0 %v419
  %v1885 = vpop.f32.mrb[0].mxu0
  %v1886 = vadd.f32 %v1501, %v1885
  %v1887 = vpop.f32.mrb[0].mxu0
  %1888 = vmatprep.mubr.f32.mxu0 %v427
  %1889 = vmatmul.mubr.f32.gmra.mrb[0].mxu0 %v426
  %v1890 = vpop.f32.mrb[0].mxu0
  %v1891 = vadd.f32 %v1506, %v1890
  %v1892 = vpop.f32.mrb[0].mxu0
  %1893 = vmatprep.mubr.f32.mxu0 %v434
  %1894 = vmatmul.mubr.f32.gmra.mrb[0].mxu0 %v433
  %v1895 = vpop.f32.mrb[0].mxu0
  %v1896 = vadd.f32 %v1511, %v1895
  %v1897 = vpop.f32.mrb[0].mxu0
  %1898 = vmatprep.mubr.f32.mxu0 %v441
  %1899 = vmatmul.mubr.f32.gmra.mrb[0].mxu0 %v440
  %v1900 = vpop.f32.mrb[0].mxu0
  %v1901 = vadd.f32 %v1516, %v1900
  %v1902 = vpop.f32.mrb[0].mxu0
  %1903 = vmatprep.mubr.f32.mxu0 %v448
  %1904 = vmatmul.mubr.f32.gmra.mrb[0].mxu0 %v447
  %v1905 = vpop.f32.mrb[0].mxu0
  %v1906 = vadd.f32 %v1521, %v1905
  %v1907 = vpop.f32.mrb[0].mxu0
  %1908 = vmatprep.mubr.f32.mxu0 %v455
  %1909 = vmatmul.mubr.f32.gmra.mrb[0].mxu0 %v454
  %v1910 = vpop.f32.mrb[0].mxu0
  %v1911 = vadd.f32 %v1526, %v1910
  %v1912 = vpop.f32.mrb[0].mxu0
  %1913 = vmatprep.mubr.f32.mxu0 %v462
  %1914 = vmatmul.mubr.f32.gmra.mrb[0].mxu0 %v461
  %v1915 = vpop.f32.mrb[0].mxu0
  %v1916 = vadd.f32 %v1531, %v1915
  %v1917 = vpop.f32.mrb[0].mxu0
  %1918 = vdwg.mxu0
  %1919 = vmatprep.subr.mxu0 0.0
  %1920 = vmatpush1.msra.mxu0 %v560
  %1921 = vmatprep.subr.mxu0 0.0
  %1922 = vmatpush1.msra.mxu0 %v561
  %1923 = vmatprep.subr.mxu0 0.0
  %1924 = vmatpush1.msra.mxu0 %v562
  %1925 = vmatprep.subr.mxu0 0.0
  %1926 = vmatpush1.msra.mxu0 %v563
  %1927 = vmatprep.subr.mxu0 0.0
  %1928 = vmatpush1.msra.mxu0 0.0
  %1929 = vmatprep.subr.mxu0 0.0
  %1930 = vmatpush1.msra.mxu0 0.0
  %1931 = vmatprep.subr.mxu0 0.0
  %1932 = vmatpush1.msra.mxu0 0.0
  %1933 = vmatprep.subr.mxu0 0.0
  %1934 = vmatpush1.msra.mxu0 0.0
  %1935 = vmatprep.subr.mxu0 0.0
  %1936 = vmatpush1.msra.mxu0 0.0
  %1937 = vmatprep.subr.mxu0 0.0
  %1938 = vmatpush1.msra.mxu0 0.0
  %1939 = vmatprep.subr.mxu0 0.0
  %1940 = vmatpush1.msra.mxu0 0.0
  %1941 = vmatprep.subr.mxu0 0.0
  %1942 = vmatpush1.msra.mxu0 0.0
  %1943 = vmatprep.subr.mxu0 0.0
  %1944 = vmatpush1.msra.mxu0 0.0
  %1945 = vmatprep.subr.mxu0 0.0
  %1946 = vmatpush1.msra.mxu0 0.0
  %1947 = vmatprep.subr.mxu0 0.0
  %1948 = vmatpush1.msra.mxu0 0.0
  %1949 = vmatprep.subr.mxu0 0.0
  %1950 = vmatpush1.msra.mxu0 0.0
  %1951 = vmatprep.subr.mxu0 0.0
  %1952 = vmatpush1.msra.mxu0 0.0
  %1953 = vmatprep.subr.mxu0 0.0
  %1954 = vmatpush1.msra.mxu0 0.0
  %1955 = vmatprep.subr.mxu0 0.0
  %1956 = vmatpush1.msra.mxu0 0.0
  %1957 = vmatprep.subr.mxu0 0.0
  %1958 = vmatpush1.msra.mxu0 0.0
  %1959 = vmatprep.subr.mxu0 0.0
  %1960 = vmatpush1.msra.mxu0 0.0
  %1961 = vmatprep.subr.mxu0 0.0
  %1962 = vmatpush1.msra.mxu0 0.0
  %1963 = vmatprep.subr.mxu0 0.0
  %1964 = vmatpush1.msra.mxu0 0.0
  %1965 = vmatprep.subr.mxu0 0.0
  %1966 = vmatpush1.msra.mxu0 0.0
  %1967 = vmatprep.subr.mxu0 0.0
  %1968 = vmatpush1.msra.mxu0 0.0
  %1969 = vmatprep.subr.mxu0 0.0
  %1970 = vmatpush1.msra.mxu0 0.0
  %1971 = vmatprep.subr.mxu0 0.0
  %1972 = vmatpush1.msra.mxu0 0.0
  %1973 = vmatprep.subr.mxu0 0.0
  %1974 = vmatpush1.msra.mxu0 0.0
  %1975 = vmatprep.subr.mxu0 0.0
  %1976 = vmatpush1.msra.mxu0 0.0
  %1977 = vmatprep.subr.mxu0 0.0
  %1978 = vmatpush1.msra.mxu0 0.0
  %1979 = vmatprep.subr.mxu0 0.0
  %1980 = vmatpush1.msra.mxu0 0.0
  %1981 = vmatprep.subr.mxu0 0.0
  %1982 = vmatpush1.msra.mxu0 0.0
  %1983 = vmatprep.mubr.f32.mxu0 0.0
  %1984 = vmatmul.mubr.f32.gmra.mrb[0].mxu0 %v573
  %v1985 = vpop.f32.mrb[0].mxu0
  %v1986 = vadd.f32 %v1601, %v1985
  %v1987 = vpop.f32.mrb[0].mxu0
  %1988 = vmatprep.mubr.f32.mxu0 0.0
  %1989 = vmatmul.mubr.f32.gmra.mrb[0].mxu0 %v576
  %v1990 = vpop.f32.mrb[0].mxu0
  %v1991 = vadd.f32 %v1606, %v1990
  %v1992 = vpop.f32.mrb[0].mxu0
  %1993 = vmatprep.mubr.f32.mxu0 0.0
  %1994 = vmatmul.mubr.f32.gmra.mrb[0].mxu0 %v579
  %v1995 = vpop.f32.mrb[0].mxu0
  %v1996 = vadd.f32 %v1611, %v1995
  %v1997 = vpop.f32.mrb[0].mxu0
  %1998 = vmatprep.mubr.f32.mxu0 0.0
  %1999 = vmatmul.mubr.f32.gmra.mrb[0].mxu0 %v582
  %v2000 = vpop.f32.mrb[0].mxu0
  %v2001 = vadd.f32 %v1616, %v2000
  %v2002 = vpop.f32.mrb[0].mxu0
  %2003 = vmatprep.mubr.f32.mxu0 0.0
  %2004 = vmatmul.mubr.f32.gmra.mrb[0].mxu0 %v585
  %v2005 = vpop.f32.mrb[0].mxu0
  %v2006 = vadd.f32 %v1621, %v2005
  %v2007 = vpop.f32.mrb[0].mxu0
  %2008 = vmatprep.mubr.f32.mxu0 0.0
  %2009 = vmatmul.mubr.f32.gmra.mrb[0].mxu0 %v588
  %v2010 = vpop.f32.mrb[0].mxu0
  %v2011 = vadd.f32 %v1626, %v2010
  %v2012 = vpop.f32.mrb[0].mxu0
  %2013 = vmatprep.mubr.f32.mxu0 0.0
  %2014 = vmatmul.mubr.f32.gmra.mrb[0].mxu0 %v591
  %v2015 = vpop.f32.mrb[0].mxu0
  %v2016 = vadd.f32 %v1631, %v2015
  %v2017 = vpop.f32.mrb[0].mxu0
  %2018 = vmatprep.mubr.f32.mxu0 0.0
  %2019 = vmatmul.mubr.f32.gmra.mrb[0].mxu0 %v594
  %v2020 = vpop.f32.mrb[0].mxu0
  %v2021 = vadd.f32 %v1636, %v2020
  %v2022 = vpop.f32.mrb[0].mxu0
  %2023 = vmatprep.mubr.f32.mxu0 0.0
  %2024 = vmatmul.mubr.f32.gmra.mrb[0].mxu0 %v597
  %v2025 = vpop.f32.mrb[0].mxu0
  %v2026 = vadd.f32 %v1641, %v2025
  %v2027 = vpop.f32.mrb[0].mxu0
  %2028 = vmatprep.mubr.f32.mxu0 0.0
  %2029 = vmatmul.mubr.f32.gmra.mrb[0].mxu0 %v600
  %v2030 = vpop.f32.mrb[0].mxu0
  %v2031 = vadd.f32 %v1646, %v2030
  %v2032 = vpop.f32.mrb[0].mxu0
  %2033 = vmatprep.mubr.f32.mxu0 0.0
  %2034 = vmatmul.mubr.f32.gmra.mrb[0].mxu0 %v603
  %v2035 = vpop.f32.mrb[0].mxu0
  %v2036 = vadd.f32 %v1651, %v2035
  %v2037 = vpop.f32.mrb[0].mxu0
  %2038 = vmatprep.mubr.f32.mxu0 0.0
  %2039 = vmatmul.mubr.f32.gmra.mrb[0].mxu0 %v606
  %v2040 = vpop.f32.mrb[0].mxu0
  %v2041 = vadd.f32 %v1656, %v2040
  %v2042 = vpop.f32.mrb[0].mxu0
  %2043 = vmatprep.mubr.f32.mxu0 0.0
  %2044 = vmatmul.mubr.f32.gmra.mrb[0].mxu0 %v609
  %v2045 = vpop.f32.mrb[0].mxu0
  %v2046 = vadd.f32 %v1661, %v2045
  %v2047 = vpop.f32.mrb[0].mxu0
  %2048 = vmatprep.mubr.f32.mxu0 0.0
  %2049 = vmatmul.mubr.f32.gmra.mrb[0].mxu0 %v612
  %v2050 = vpop.f32.mrb[0].mxu0
  %v2051 = vadd.f32 %v1666, %v2050
  %v2052 = vpop.f32.mrb[0].mxu0
  %2053 = vmatprep.mubr.f32.mxu0 0.0
  %2054 = vmatmul.mubr.f32.gmra.mrb[0].mxu0 %v615
  %v2055 = vpop.f32.mrb[0].mxu0
  %v2056 = vadd.f32 %v1671, %v2055
  %v2057 = vpop.f32.mrb[0].mxu0
  %2058 = vmatprep.mubr.f32.mxu0 0.0
  %2059 = vmatmul.mubr.f32.gmra.mrb[0].mxu0 %v618
  %v2060 = vpop.f32.mrb[0].mxu0
  %v2061 = vadd.f32 %v1676, %v2060
  %v2062 = vpop.f32.mrb[0].mxu0
  %2063 = vmatprep.mubr.f32.mxu0 0.0
  %2064 = vmatmul.mubr.f32.gmra.mrb[0].mxu0 %v621
  %v2065 = vpop.f32.mrb[0].mxu0
  %v2066 = vadd.f32 %v1681, %v2065
  %v2067 = vpop.f32.mrb[0].mxu0
  %2068 = vmatprep.mubr.f32.mxu0 0.0
  %2069 = vmatmul.mubr.f32.gmra.mrb[0].mxu0 %v624
  %v2070 = vpop.f32.mrb[0].mxu0
  %v2071 = vadd.f32 %v1686, %v2070
  %v2072 = vpop.f32.mrb[0].mxu0
  %2073 = vmatprep.mubr.f32.mxu0 0.0
  %2074 = vmatmul.mubr.f32.gmra.mrb[0].mxu0 %v627
  %v2075 = vpop.f32.mrb[0].mxu0
  %v2076 = vadd.f32 %v1691, %v2075
  %v2077 = vpop.f32.mrb[0].mxu0
  %2078 = vmatprep.mubr.f32.mxu0 0.0
  %2079 = vmatmul.mubr.f32.gmra.mrb[0].mxu0 %v630
  %v2080 = vpop.f32.mrb[0].mxu0
  %v2081 = vadd.f32 %v1696, %v2080
  %v2082 = vpop.f32.mrb[0].mxu0
  %2083 = vmatprep.mubr.f32.mxu0 0.0
  %2084 = vmatmul.mubr.f32.gmra.mrb[0].mxu0 %v633
  %v2085 = vpop.f32.mrb[0].mxu0
  %v2086 = vadd.f32 %v1701, %v2085
  %v2087 = vpop.f32.mrb[0].mxu0
  %2088 = vmatprep.mubr.f32.mxu0 0.0
  %2089 = vmatmul.mubr.f32.gmra.mrb[0].mxu0 %v636
  %v2090 = vpop.f32.mrb[0].mxu0
  %v2091 = vadd.f32 %v1706, %v2090
  %v2092 = vpop.f32.mrb[0].mxu0
  %2093 = vmatprep.mubr.f32.mxu0 0.0
  %2094 = vmatmul.mubr.f32.gmra.mrb[0].mxu0 %v639
  %v2095 = vpop.f32.mrb[0].mxu0
  %v2096 = vadd.f32 %v1711, %v2095
  %v2097 = vpop.f32.mrb[0].mxu0
  %2098 = vmatprep.mubr.f32.mxu0 0.0
  %2099 = vmatmul.mubr.f32.gmra.mrb[0].mxu0 %v642
  %v2100 = vpop.f32.mrb[0].mxu0
  %v2101 = vadd.f32 %v1716, %v2100
  %v2102 = vpop.f32.mrb[0].mxu0
  %2103 = vmatprep.mubr.f32.mxu0 0.0
  %2104 = vmatmul.mubr.f32.gmra.mrb[0].mxu0 %v645
  %v2105 = vpop.f32.mrb[0].mxu0
  %v2106 = vadd.f32 %v1721, %v2105
  %v2107 = vpop.f32.mrb[0].mxu0
  %2108 = vmatprep.mubr.f32.mxu0 0.0
  %2109 = vmatmul.mubr.f32.gmra.mrb[0].mxu0 %v648
  %v2110 = vpop.f32.mrb[0].mxu0
  %v2111 = vadd.f32 %v1726, %v2110
  %v2112 = vpop.f32.mrb[0].mxu0
  %2113 = vmatprep.mubr.f32.mxu0 0.0
  %2114 = vmatmul.mubr.f32.gmra.mrb[0].mxu0 %v651
  %v2115 = vpop.f32.mrb[0].mxu0
  %v2116 = vadd.f32 %v1731, %v2115
  %v2117 = vpop.f32.mrb[0].mxu0
  %2118 = vmatprep.mubr.f32.mxu0 0.0
  %2119 = vmatmul.mubr.f32.gmra.mrb[0].mxu0 %v654
  %v2120 = vpop.f32.mrb[0].mxu0
  %v2121 = vadd.f32 %v1736, %v2120
  %v2122 = vpop.f32.mrb[0].mxu0
  %2123 = vmatprep.mubr.f32.mxu0 0.0
  %2124 = vmatmul.mubr.f32.gmra.mrb[0].mxu0 %v657
  %v2125 = vpop.f32.mrb[0].mxu0
  %v2126 = vadd.f32 %v1741, %v2125
  %v2127 = vpop.f32.mrb[0].mxu0
  %2128 = vmatprep.mubr.f32.mxu0 0.0
  %2129 = vmatmul.mubr.f32.gmra.mrb[0].mxu0 %v660
  %v2130 = vpop.f32.mrb[0].mxu0
  %v2131 = vadd.f32 %v1746, %v2130
  %v2132 = vpop.f32.mrb[0].mxu0
  %2133 = vmatprep.mubr.f32.mxu0 0.0
  %2134 = vmatmul.mubr.f32.gmra.mrb[0].mxu0 %v663
  %v2135 = vpop.f32.mrb[0].mxu0
  %v2136 = vadd.f32 %v1751, %v2135
  %v2137 = vpop.f32.mrb[0].mxu0
  %2138 = vmatprep.mubr.f32.mxu0 0.0
  %2139 = vmatmul.mubr.f32.gmra.mrb[0].mxu0 %v666
  %v2140 = vpop.f32.mrb[0].mxu0
  %v2141 = vadd.f32 %v1756, %v2140
  %v2142 = vpop.f32.mrb[0].mxu0
  %2143 = vmatprep.mubr.f32.mxu0 0.0
  %2144 = vmatmul.mubr.f32.gmra.mrb[0].mxu0 %v669
  %v2145 = vpop.f32.mrb[0].mxu0
  %v2146 = vadd.f32 %v1761, %v2145
  %v2147 = vpop.f32.mrb[0].mxu0
  %2148 = vmatprep.mubr.f32.mxu0 0.0
  %2149 = vmatmul.mubr.f32.gmra.mrb[0].mxu0 %v672
  %v2150 = vpop.f32.mrb[0].mxu0
  %v2151 = vadd.f32 %v1766, %v2150
  %v2152 = vpop.f32.mrb[0].mxu0
  %2153 = vmatprep.mubr.f32.mxu0 0.0
  %2154 = vmatmul.mubr.f32.gmra.mrb[0].mxu0 %v675
  %v2155 = vpop.f32.mrb[0].mxu0
  %v2156 = vadd.f32 %v1771, %v2155
  %v2157 = vpop.f32.mrb[0].mxu0
  %2158 = vmatprep.mubr.f32.mxu0 0.0
  %2159 = vmatmul.mubr.f32.gmra.mrb[0].mxu0 %v678
  %v2160 = vpop.f32.mrb[0].mxu0
  %v2161 = vadd.f32 %v1776, %v2160
  %v2162 = vpop.f32.mrb[0].mxu0
  %2163 = vmatprep.mubr.f32.mxu0 0.0
  %2164 = vmatmul.mubr.f32.gmra.mrb[0].mxu0 %v681
  %v2165 = vpop.f32.mrb[0].mxu0
  %v2166 = vadd.f32 %v1781, %v2165
  %v2167 = vpop.f32.mrb[0].mxu0
  %2168 = vmatprep.mubr.f32.mxu0 0.0
  %2169 = vmatmul.mubr.f32.gmra.mrb[0].mxu0 %v684
  %v2170 = vpop.f32.mrb[0].mxu0
  %v2171 = vadd.f32 %v1786, %v2170
  %v2172 = vpop.f32.mrb[0].mxu0
  %2173 = vmatprep.mubr.f32.mxu0 0.0
  %2174 = vmatmul.mubr.f32.gmra.mrb[0].mxu0 %v687
  %v2175 = vpop.f32.mrb[0].mxu0
  %v2176 = vadd.f32 %v1791, %v2175
  %v2177 = vpop.f32.mrb[0].mxu0
  %2178 = vmatprep.mubr.f32.mxu0 0.0
  %2179 = vmatmul.mubr.f32.gmra.mrb[0].mxu0 %v690
  %v2180 = vpop.f32.mrb[0].mxu0
  %v2181 = vadd.f32 %v1796, %v2180
  %v2182 = vpop.f32.mrb[0].mxu0
  %2183 = vmatprep.mubr.f32.mxu0 0.0
  %2184 = vmatmul.mubr.f32.gmra.mrb[0].mxu0 %v693
  %v2185 = vpop.f32.mrb[0].mxu0
  %v2186 = vadd.f32 %v1801, %v2185
  %v2187 = vpop.f32.mrb[0].mxu0
  %2188 = vmatprep.mubr.f32.mxu0 0.0
  %2189 = vmatmul.mubr.f32.gmra.mrb[0].mxu0 %v696
  %v2190 = vpop.f32.mrb[0].mxu0
  %v2191 = vadd.f32 %v1806, %v2190
  %v2192 = vpop.f32.mrb[0].mxu0
  %2193 = vmatprep.mubr.f32.mxu0 0.0
  %2194 = vmatmul.mubr.f32.gmra.mrb[0].mxu0 %v699
  %v2195 = vpop.f32.mrb[0].mxu0
  %v2196 = vadd.f32 %v1811, %v2195
  %v2197 = vpop.f32.mrb[0].mxu0
  %2198 = vmatprep.mubr.f32.mxu0 0.0
  %2199 = vmatmul.mubr.f32.gmra.mrb[0].mxu0 %v702
  %v2200 = vpop.f32.mrb[0].mxu0
  %v2201 = vadd.f32 %v1816, %v2200
  %v2202 = vpop.f32.mrb[0].mxu0
  %2203 = vmatprep.mubr.f32.mxu0 0.0
  %2204 = vmatmul.mubr.f32.gmra.mrb[0].mxu0 %v705
  %v2205 = vpop.f32.mrb[0].mxu0
  %v2206 = vadd.f32 %v1821, %v2205
  %v2207 = vpop.f32.mrb[0].mxu0
  %2208 = vmatprep.mubr.f32.mxu0 0.0
  %2209 = vmatmul.mubr.f32.gmra.mrb[0].mxu0 %v708
  %v2210 = vpop.f32.mrb[0].mxu0
  %v2211 = vadd.f32 %v1826, %v2210
  %v2212 = vpop.f32.mrb[0].mxu0
  %2213 = vmatprep.mubr.f32.mxu0 0.0
  %2214 = vmatmul.mubr.f32.gmra.mrb[0].mxu0 %v711
  %v2215 = vpop.f32.mrb[0].mxu0
  %v2216 = vadd.f32 %v1831, %v2215
  %v2217 = vpop.f32.mrb[0].mxu0
  %2218 = vmatprep.mubr.f32.mxu0 0.0
  %2219 = vmatmul.mubr.f32.gmra.mrb[0].mxu0 %v714
  %v2220 = vpop.f32.mrb[0].mxu0
  %v2221 = vadd.f32 %v1836, %v2220
  %v2222 = vpop.f32.mrb[0].mxu0
  %2223 = vmatprep.mubr.f32.mxu0 0.0
  %2224 = vmatmul.mubr.f32.gmra.mrb[0].mxu0 %v717
  %v2225 = vpop.f32.mrb[0].mxu0
  %v2226 = vadd.f32 %v1841, %v2225
  %v2227 = vpop.f32.mrb[0].mxu0
  %2228 = vmatprep.mubr.f32.mxu0 0.0
  %2229 = vmatmul.mubr.f32.gmra.mrb[0].mxu0 %v720
  %v2230 = vpop.f32.mrb[0].mxu0
  %v2231 = vadd.f32 %v1846, %v2230
  %v2232 = vpop.f32.mrb[0].mxu0
  %2233 = vmatprep.mubr.f32.mxu0 0.0
  %2234 = vmatmul.mubr.f32.gmra.mrb[0].mxu0 %v723
  %v2235 = vpop.f32.mrb[0].mxu0
  %v2236 = vadd.f32 %v1851, %v2235
  %v2237 = vpop.f32.mrb[0].mxu0
  %2238 = vmatprep.mubr.f32.mxu0 0.0
  %2239 = vmatmul.mubr.f32.gmra.mrb[0].mxu0 %v726
  %v2240 = vpop.f32.mrb[0].mxu0
  %v2241 = vadd.f32 %v1856, %v2240
  %v2242 = vpop.f32.mrb[0].mxu0
  %2243 = vmatprep.mubr.f32.mxu0 0.0
  %2244 = vmatmul.mubr.f32.gmra.mrb[0].mxu0 %v729
  %v2245 = vpop.f32.mrb[0].mxu0
  %v2246 = vadd.f32 %v1861, %v2245
  %v2247 = vpop.f32.mrb[0].mxu0
  %2248 = vmatprep.mubr.f32.mxu0 0.0
  %2249 = vmatmul.mubr.f32.gmra.mrb[0].mxu0 %v732
  %v2250 = vpop.f32.mrb[0].mxu0
  %v2251 = vadd.f32 %v1866, %v2250
  %v2252 = vpop.f32.mrb[0].mxu0
  %2253 = vmatprep.mubr.f32.mxu0 0.0
  %2254 = vmatmul.mubr.f32.gmra.mrb[0].mxu0 %v735
  %v2255 = vpop.f32.mrb[0].mxu0
  %v2256 = vadd.f32 %v1871, %v2255
  %v2257 = vpop.f32.mrb[0].mxu0
  %2258 = vmatprep.mubr.f32.mxu0 0.0
  %2259 = vmatmul.mubr.f32.gmra.mrb[0].mxu0 %v738
  %v2260 = vpop.f32.mrb[0].mxu0
  %v2261 = vadd.f32 %v1876, %v2260
  %v2262 = vpop.f32.mrb[0].mxu0
  %2263 = vmatprep.mubr.f32.mxu0 0.0
  %2264 = vmatmul.mubr.f32.gmra.mrb[0].mxu0 %v741
  %v2265 = vpop.f32.mrb[0].mxu0
  %v2266 = vadd.f32 %v1881, %v2265
  %v2267 = vpop.f32.mrb[0].mxu0
  %2268 = vmatprep.mubr.f32.mxu0 0.0
  %2269 = vmatmul.mubr.f32.gmra.mrb[0].mxu0 %v744
  %v2270 = vpop.f32.mrb[0].mxu0
  %v2271 = vadd.f32 %v1886, %v2270
  %v2272 = vpop.f32.mrb[0].mxu0
  %2273 = vmatprep.mubr.f32.mxu0 0.0
  %2274 = vmatmul.mubr.f32.gmra.mrb[0].mxu0 %v747
  %v2275 = vpop.f32.mrb[0].mxu0
  %v2276 = vadd.f32 %v1891, %v2275
  %v2277 = vpop.f32.mrb[0].mxu0
  %2278 = vmatprep.mubr.f32.mxu0 0.0
  %2279 = vmatmul.mubr.f32.gmra.mrb[0].mxu0 %v750
  %v2280 = vpop.f32.mrb[0].mxu0
  %v2281 = vadd.f32 %v1896, %v2280
  %v2282 = vpop.f32.mrb[0].mxu0
  %2283 = vmatprep.mubr.f32.mxu0 0.0
  %2284 = vmatmul.mubr.f32.gmra.mrb[0].mxu0 %v753
  %v2285 = vpop.f32.mrb[0].mxu0
  %v2286 = vadd.f32 %v1901, %v2285
  %v2287 = vpop.f32.mrb[0].mxu0
  %2288 = vmatprep.mubr.f32.mxu0 0.0
  %2289 = vmatmul.mubr.f32.gmra.mrb[0].mxu0 %v756
  %v2290 = vpop.f32.mrb[0].mxu0
  %v2291 = vadd.f32 %v1906, %v2290
  %v2292 = vpop.f32.mrb[0].mxu0
  %2293 = vmatprep.mubr.f32.mxu0 0.0
  %2294 = vmatmul.mubr.f32.gmra.mrb[0].mxu0 %v759
  %v2295 = vpop.f32.mrb[0].mxu0
  %v2296 = vadd.f32 %v1911, %v2295
  %v2297 = vpop.f32.mrb[0].mxu0
  %2298 = vmatprep.mubr.f32.mxu0 0.0
  %2299 = vmatmul.mubr.f32.gmra.mrb[0].mxu0 %v762
  %v2300 = vpop.f32.mrb[0].mxu0
  %v2301 = vadd.f32 %v1916, %v2300
  %v2302 = vpop.f32.mrb[0].mxu0
  %2303 = vdwg.mxu0
  %vm2304 = vcmask 7168
  %2305 = vst.msk [vmem:[%s3] sm:$0xff] %vm2304, %v1986
  %2306 = vst.msk [vmem:[%s3 + $0x8] sm:$0xff] %vm2304, %v1991
  %2307 = vst.msk [vmem:[%s3 + $0x10] sm:$0xff] %vm2304, %v1996
  %2308 = vst.msk [vmem:[%s3 + $0x18] sm:$0xff] %vm2304, %v2001
  %2309 = vst.msk [vmem:[%s3 + $0x20] sm:$0xff] %vm2304, %v2006
  %2310 = vst.msk [vmem:[%s3 + $0x28] sm:$0xff] %vm2304, %v2011
  %2311 = vst.msk [vmem:[%s3 + $0x30] sm:$0xff] %vm2304, %v2016
  %2312 = vst.msk [vmem:[%s3 + $0x38] sm:$0xff] %vm2304, %v2021
  %2313 = vst.msk [vmem:[%s3 + $0x40] sm:$0xff] %vm2304, %v2026
  %2314 = vst.msk [vmem:[%s3 + $0x48] sm:$0xff] %vm2304, %v2031
  %2315 = vst.msk [vmem:[%s3 + $0x50] sm:$0xff] %vm2304, %v2036
  %2316 = vst.msk [vmem:[%s3 + $0x58] sm:$0xff] %vm2304, %v2041
  %2317 = vst.msk [vmem:[%s3 + $0x60] sm:$0xff] %vm2304, %v2046
  %2318 = vst.msk [vmem:[%s3 + $0x68] sm:$0xff] %vm2304, %v2051
  %2319 = vst.msk [vmem:[%s3 + $0x70] sm:$0xff] %vm2304, %v2056
  %2320 = vst.msk [vmem:[%s3 + $0x78] sm:$0xff] %vm2304, %v2061
  %2321 = vst.msk [vmem:[%s3 + $0x80] sm:$0xff] %vm2304, %v2066
  %2322 = vst.msk [vmem:[%s3 + $0x88] sm:$0xff] %vm2304, %v2071
  %2323 = vst.msk [vmem:[%s3 + $0x90] sm:$0xff] %vm2304, %v2076
  %2324 = vst.msk [vmem:[%s3 + $0x98] sm:$0xff] %vm2304, %v2081
  %2325 = vst.msk [vmem:[%s3 + $0xa0] sm:$0xff] %vm2304, %v2086
  %2326 = vst.msk [vmem:[%s3 + $0xa8] sm:$0xff] %vm2304, %v2091
  %2327 = vst.msk [vmem:[%s3 + $0xb0] sm:$0xff] %vm2304, %v2096
  %2328 = vst.msk [vmem:[%s3 + $0xb8] sm:$0xff] %vm2304, %v2101
  %2329 = vst.msk [vmem:[%s3 + $0xc0] sm:$0xff] %vm2304, %v2106
  %2330 = vst.msk [vmem:[%s3 + $0xc8] sm:$0xff] %vm2304, %v2111
  %2331 = vst.msk [vmem:[%s3 + $0xd0] sm:$0xff] %vm2304, %v2116
  %2332 = vst.msk [vmem:[%s3 + $0xd8] sm:$0xff] %vm2304, %v2121
  %2333 = vst.msk [vmem:[%s3 + $0xe0] sm:$0xff] %vm2304, %v2126
  %2334 = vst.msk [vmem:[%s3 + $0xe8] sm:$0xff] %vm2304, %v2131
  %2335 = vst.msk [vmem:[%s3 + $0xf0] sm:$0xff] %vm2304, %v2136
  %2336 = vst.msk [vmem:[%s3 + $0xf8] sm:$0xff] %vm2304, %v2141
  %2337 = vst.msk [vmem:[%s3 + $0x100] sm:$0xff] %vm2304, %v2146
  %2338 = vst.msk [vmem:[%s3 + $0x108] sm:$0xff] %vm2304, %v2151
  %2339 = vst.msk [vmem:[%s3 + $0x110] sm:$0xff] %vm2304, %v2156
  %2340 = vst.msk [vmem:[%s3 + $0x118] sm:$0xff] %vm2304, %v2161
  %2341 = vst.msk [vmem:[%s3 + $0x120] sm:$0xff] %vm2304, %v2166
  %2342 = vst.msk [vmem:[%s3 + $0x128] sm:$0xff] %vm2304, %v2171
  %2343 = vst.msk [vmem:[%s3 + $0x130] sm:$0xff] %vm2304, %v2176
  %2344 = vst.msk [vmem:[%s3 + $0x138] sm:$0xff] %vm2304, %v2181
  %2345 = vst.msk [vmem:[%s3 + $0x140] sm:$0xff] %vm2304, %v2186
  %2346 = vst.msk [vmem:[%s3 + $0x148] sm:$0xff] %vm2304, %v2191
  %2347 = vst.msk [vmem:[%s3 + $0x150] sm:$0xff] %vm2304, %v2196
  %2348 = vst.msk [vmem:[%s3 + $0x158] sm:$0xff] %vm2304, %v2201
  %2349 = vst.msk [vmem:[%s3 + $0x160] sm:$0xff] %vm2304, %v2206
  %2350 = vst.msk [vmem:[%s3 + $0x168] sm:$0xff] %vm2304, %v2211
  %2351 = vst.msk [vmem:[%s3 + $0x170] sm:$0xff] %vm2304, %v2216
  %2352 = vst.msk [vmem:[%s3 + $0x178] sm:$0xff] %vm2304, %v2221
  %2353 = vst.msk [vmem:[%s3 + $0x180] sm:$0xff] %vm2304, %v2226
  %2354 = vst.msk [vmem:[%s3 + $0x188] sm:$0xff] %vm2304, %v2231
  %2355 = vst.msk [vmem:[%s3 + $0x190] sm:$0xff] %vm2304, %v2236
  %2356 = vst.msk [vmem:[%s3 + $0x198] sm:$0xff] %vm2304, %v2241
  %2357 = vst.msk [vmem:[%s3 + $0x1a0] sm:$0xff] %vm2304, %v2246
  %2358 = vst.msk [vmem:[%s3 + $0x1a8] sm:$0xff] %vm2304, %v2251
  %2359 = vst.msk [vmem:[%s3 + $0x1b0] sm:$0xff] %vm2304, %v2256
  %2360 = vst.msk [vmem:[%s3 + $0x1b8] sm:$0xff] %vm2304, %v2261
  %2361 = vst.msk [vmem:[%s3 + $0x1c0] sm:$0xff] %vm2304, %v2266
  %2362 = vst.msk [vmem:[%s3 + $0x1c8] sm:$0xff] %vm2304, %v2271
  %2363 = vst.msk [vmem:[%s3 + $0x1d0] sm:$0xff] %vm2304, %v2276
  %2364 = vst.msk [vmem:[%s3 + $0x1d8] sm:$0xff] %vm2304, %v2281
  %2365 = vst.msk [vmem:[%s3 + $0x1e0] sm:$0xff] %vm2304, %v2286
  %2366 = vst.msk [vmem:[%s3 + $0x1e8] sm:$0xff] %vm2304, %v2291
  %2367 = vst.msk [vmem:[%s3 + $0x1f0] sm:$0xff] %vm2304, %v2296
  %2368 = vst.msk [vmem:[%s3 + $0x1f8] sm:$0xff] %vm2304, %v2301
  // Predicated region
  $region14: #{srcnn_forward.5} parent=0 // pred_check
    _
  $region15: #{srcnn_forward.5} parent=0 // pred_check_branch
    %2370 = sbr.rel (0) target = $region17
  $region16: #{srcnn_forward.5} parent=0 // pred_region
    _
  $region17: #{srcnn_forward.5} parent=0 // pred_fallthru
    _
  // Predicated region
  $region18: #{srcnn_forward.5} parent=0 // pred_check
    _
  $region19: #{srcnn_forward.5} parent=0 // pred_check_branch
    %2372 = sbr.rel (0) target = $region21
  $region20: #{srcnn_forward.5} parent=0 // pred_region
    _
  $region21: #{srcnn_forward.5} parent=0 // pred_fallthru
    _

</llo_original>
